<compile_context>
chip_gen: v7x
topology: tpu7x:2x2x1
jax: 0.10.0
libtpu: 0.0.40
codegen_flags: <defaults>
</compile_context>

<pallas_src>
import functools

import jax
import jax.numpy as jnp
from jax.experimental import pallas as pl
from jax.experimental.pallas import tpu as pltpu


# -----------------------------------------------------------------------------
# Pallas kernels
# -----------------------------------------------------------------------------
def _conv_bn_relu_pool_kernel(xp_ref, w_ref, bias_ref, o_ref, *, k, hh, ho):
    """Fused Conv(kxk, stride 1, pad (k-1)/2) + BN(eval) + ReLU + MaxPool2x2, one sample.

    xp_ref:   (2*hh, Wp*Cin)        bf16  padded rows, even-index rows first, then odd rows.
    w_ref:    (2*k, Wp*Cin, Wo*Cout) bf16 banded conv weights (BN scale folded),
                                          indexed by [dy*2 + q], q = pooled-column parity.
    bias_ref: (1, Wo*Cout)          f32   per-channel fused bias tiled over Wo.
    o_ref:    (ho, Wo*Cout)         bf16  pooled NHWC output rows (lane-dense).
    """
    pooled = None
    for r in range(2):            # row parity inside the 2x2 pooling window
        for q in range(2):        # column parity inside the 2x2 pooling window
            acc = None
            for dy in range(k):   # vertical conv taps (static, unrolled)
                m = r + dy
                start = (m % 2) * hh + m // 2        # row in the even/odd-split layout
                lhs = xp_ref[start:start + ho, :]    # (ho, Wp*Cin) bf16
                part = jnp.dot(lhs, w_ref[dy * 2 + q],
                               preferred_element_type=jnp.float32)
                acc = part if acc is None else acc + part
            pooled = acc if pooled is None else jnp.maximum(pooled, acc)
    # Per-channel bias + ReLU commute with the window max, so the epilogue runs once
    # on the pooled tile (f32).
    out = jnp.maximum(pooled + bias_ref[...], 0.0)
    o_ref[...] = out.astype(o_ref.dtype)


def _linear_kernel(x_ref, w_ref, b_ref, o_ref):
    acc = jnp.dot(x_ref[...], w_ref[...], preferred_element_type=jnp.float32)
    o_ref[...] = (acc + b_ref[...]).astype(o_ref.dtype)


# -----------------------------------------------------------------------------
# Pallas wrappers
# -----------------------------------------------------------------------------
def conv_bn_relu_pool(x_sh, w_banded, bias_tiled):
    """x_sh: (N, 2*hh, Wp*Cin) bf16 (even/odd-split padded rows) -> (N, ho, Wo*Cout) bf16."""
    n, two_hh, wp_cin = x_sh.shape
    two_k, wp_cin2, wo_cout = w_banded.shape
    assert wp_cin2 == wp_cin
    k = two_k // 2
    hh = two_hh // 2
    ho = hh - (k - 1) // 2
    kernel = functools.partial(_conv_bn_relu_pool_kernel, k=k, hh=hh, ho=ho)
    return pl.pallas_call(
        kernel,
        out_shape=jax.ShapeDtypeStruct((n, ho, wo_cout), jnp.bfloat16),
        grid=(n,),
        in_specs=[
            # One sample per grid step (leading dim squeezed).
            pl.BlockSpec((None, two_hh, wp_cin), lambda i: (i, 0, 0)),
            # Weights / bias: constant block index -> stays resident in VMEM across steps.
            pl.BlockSpec((two_k, wp_cin, wo_cout), lambda i: (0, 0, 0)),
            pl.BlockSpec((1, wo_cout), lambda i: (0, 0)),
        ],
        out_specs=pl.BlockSpec((None, ho, wo_cout), lambda i: (i, 0, 0)),
        compiler_params=pltpu.CompilerParams(
            dimension_semantics=("parallel",)),  # batch steps can shard over v7x's 2 TCs
    )(x_sh, w_banded, bias_tiled)


def linear(x, w, bias2d):
    m, _ = x.shape
    _, nout = w.shape
    # Tiny (2 x 5000) @ (5000 x 5): single invocation, full-array blocks.
    return pl.pallas_call(
        _linear_kernel,
        out_shape=jax.ShapeDtypeStruct((m, nout), jnp.float32),
    )(x, w, bias2d)


# -----------------------------------------------------------------------------
# Glue (small, layout-only) and one-time weight preprocessing
# -----------------------------------------------------------------------------
def _split_rows_even_odd(x):
    """(N, Hp, L) -> (N, Hp, L) with even-index rows first, then odd-index rows."""
    n, hp, l = x.shape
    return x.reshape(n, hp // 2, 2, l).transpose(0, 2, 1, 3).reshape(n, hp, l)


def _banded_conv_weights(w_torch, b, gamma, beta, rmean, rvar, w_in, eps=1e-5):
    """Fold BN into the conv and build the (2k, Wp*Cin, Wo*Cout) banded matmul operand.

    w_banded[dy*2 + q, u*Cin + ci, wo*Cout + co] =
        scale[co] * w_torch[co, ci, dy, u - 2*wo - q]   (0 if the tap is out of range)
    so that  conv_scaled[2*ho + r, 2*wo + q, co] = sum_dy xp_rows(r, dy) @ w_banded[dy*2+q].
    """
    cout, cin, k, _ = w_torch.shape
    p = (k - 1) // 2
    wp = w_in + 2 * p
    wo_n = w_in // 2
    scale = gamma / jnp.sqrt(rvar + eps)
    fused_bias = b * scale + (beta - rmean * scale)
    # (kdy, kdx, Cin, Cout), BN scale folded in.
    wk = jnp.transpose(w_torch, (2, 3, 1, 0)) * scale[None, None, None, :]

    u = jnp.arange(wp)[None, :, None]
    wo = jnp.arange(wo_n)[None, None, :]
    q = jnp.arange(2)[:, None, None]
    dx = u - 2 * wo - q                                    # (2, Wp, Wo)
    valid = (dx >= 0) & (dx < k)
    g = wk[:, jnp.clip(dx, 0, k - 1)]                      # (k, 2, Wp, Wo, Cin, Cout)
    g = jnp.where(valid[None, :, :, :, None, None], g, 0.0)
    w_banded = g.transpose(0, 1, 2, 4, 3, 5).reshape(2 * k, wp * cin, wo_n * cout)
    bias_tiled = jnp.tile(fused_bias, wo_n).reshape(1, wo_n * cout)
    return w_banded.astype(jnp.bfloat16), bias_tiled.astype(jnp.float32)


def prepare_params(p, height, width, eps=1e-5):
    """One-time (outside jit) preprocessing of the torch-layout parameters."""
    assert height % 4 == 0 and width % 4 == 0, "two 2x2 maxpools need H, W divisible by 4"
    prep = {}
    prep["cw1"], prep["cb1"] = _banded_conv_weights(
        p["w1"], p["b1"], p["g1"], p["be1"], p["rm1"], p["rv1"], width, eps)
    prep["cw2"], prep["cb2"] = _banded_conv_weights(
        p["w2"], p["b2"], p["g2"], p["be2"], p["rm2"], p["rv2"], width // 2, eps)
    # FC: permute rows from torch's NCHW-flatten order to our NHWC-flatten order,
    # pre-transpose to (fc_in, 5), and cast to bf16 (done once -> no per-call wfc.T copy).
    c2 = p["w2"].shape[0]
    ho2, wo2 = height // 4, width // 4
    assert p["wfc"].shape[1] == c2 * ho2 * wo2, "fc1 hard-codes 25*25 => 100x100 input"
    wfc = p["wfc"].reshape(-1, c2, ho2, wo2)               # (5, C2, Ho2, Wo2)
    prep["wfc"] = wfc.transpose(2, 3, 1, 0).reshape(ho2 * wo2 * c2, -1).astype(jnp.bfloat16)
    prep["bfc"] = p["bfc"].reshape(1, -1).astype(jnp.float32)
    return prep


# -----------------------------------------------------------------------------
# Forward pass
# -----------------------------------------------------------------------------
def fnet_forward(x_nchw, prep):
    n, cin, h, w = x_nchw.shape

    # Stage 1 input glue: NCHW -> lane-dense NHWC rows (H, W*Cin), zero-pad, even/odd split.
    k1 = prep["cw1"].shape[0] // 2
    p1 = (k1 - 1) // 2
    x = jnp.transpose(x_nchw, (0, 2, 3, 1)).reshape(n, h, w * cin)
    x = jnp.pad(x, ((0, 0), (p1, p1), (p1 * cin, p1 * cin)))
    x = _split_rows_even_odd(x).astype(jnp.bfloat16)
    y = conv_bn_relu_pool(x, prep["cw1"], prep["cb1"])      # (N, H/2, (W/2)*C1) bf16

    # Stage 2: the conv-stage output is already NHWC rows; just pad + even/odd split.
    k2 = prep["cw2"].shape[0] // 2
    p2 = (k2 - 1) // 2
    c1 = prep["cb1"].shape[1] // (w // 2)
    y = jnp.pad(y, ((0, 0), (p2, p2), (p2 * c1, p2 * c1)))
    y = _split_rows_even_odd(y)
    y = conv_bn_relu_pool(y, prep["cw2"], prep["cb2"])      # (N, H/4, (W/4)*C2) bf16

    # Flatten in NHWC order (FC weight was pre-permuted to match torch's NCHW flatten).
    flat = y.reshape(n, -1)
    return linear(flat, prep["wfc"], prep["bfc"])


# -----------------------------------------------------------------------------
# Plain-JAX reference (eval-mode module) for a numerical cross-check
# -----------------------------------------------------------------------------
def _reference_forward(x, p, eps=1e-5):
    def stage(x, w, b, g, be, rm, rv):
        pad = (w.shape[2] - 1) // 2
        y = jax.lax.conv_general_dilated(
            x, w, window_strides=(1, 1), padding=[(pad, pad), (pad, pad)],
            dimension_numbers=("NCHW", "OIHW", "NCHW"))
        y = y + b[None, :, None, None]
        scale = g / jnp.sqrt(rv + eps)
        y = scale[None, :, None, None] * (y - rm[None, :, None, None]) + be[None, :, None, None]
        y = jnp.maximum(y, 0.0)
        return jax.lax.reduce_window(y, -jnp.inf, jax.lax.max,
                                     (1, 1, 2, 2), (1, 1, 2, 2), "VALID")
    y = stage(x, p["w1"], p["b1"], p["g1"], p["be1"], p["rm1"], p["rv1"])
    y = stage(y, p["w2"], p["b2"], p["g2"], p["be2"], p["rm2"], p["rv2"])
    flat = y.reshape(y.shape[0], -1)
    return flat @ p["wfc"].T + p["bfc"]


# -----------------------------------------------------------------------------
# Deterministic parameter init (synthetic; same shapes as the torch module)
# -----------------------------------------------------------------------------
def init_params(key, in_ch, out1, out2, k, fc_in, fc_out):
    ks = jax.random.split(key, 10)

    def nrm(kk, shape, s=0.1):
        return s * jax.random.normal(kk, shape, jnp.float32)

    p = {}
    p["w1"] = nrm(ks[0], (out1, in_ch, k, k))
    p["b1"] = nrm(ks[1], (out1,))
    p["g1"] = 1.0 + nrm(ks[2], (out1,))
    p["be1"] = nrm(ks[3], (out1,))
    p["rm1"] = jnp.zeros((out1,), jnp.float32)   # fresh BatchNorm running stats
    p["rv1"] = jnp.ones((out1,), jnp.float32)

    p["w2"] = nrm(ks[4], (out2, out1, k, k))
    p["b2"] = nrm(ks[5], (out2,))
    p["g2"] = 1.0 + nrm(ks[6], (out2,))
    p["be2"] = nrm(ks[7], (out2,))
    p["rm2"] = jnp.zeros((out2,), jnp.float32)
    p["rv2"] = jnp.ones((out2,), jnp.float32)

    p["wfc"] = nrm(ks[8], (fc_out, fc_in), s=0.02)
    p["bfc"] = nrm(ks[9], (fc_out,))
    return p


if __name__ == "__main__":
    key = jax.random.PRNGKey(0)
    in_channel, out_channels1, out_channels2 = 3, 4, 8
    kernel1, pool_kernel, stride = 3, 2, 1
    batch, height, width = 2, 100, 100        # fc1 hard-codes 25*25 => 100x100 input

    kx, kp = jax.random.split(key)
    x = jax.random.normal(kx, (batch, in_channel, height, width), jnp.float32)
    params = init_params(kp, in_channel, out_channels1, out_channels2, kernel1,
                         out_channels2 * 25 * 25, 5)

    prep = prepare_params(params, height, width)   # one-time weight preprocessing
    out = jax.jit(fnet_forward)(x, prep)
    out = jax.block_until_ready(out)

    assert out.shape == (batch, 5), out.shape
    assert bool(jnp.all(jnp.isfinite(out)))

    ref = _reference_forward(x, params)
    err = float(jnp.max(jnp.abs(out - ref)))
    assert err < 5e-2, f"mismatch vs plain-JAX reference: {err}"
    print("KERNEL_OK")
</pallas_src>

<mosaic_0001>
module attributes {stable_mosaic.version = 11 : i64} {
  func.func @_conv_bn_relu_pool_kernel(%arg0: i32, %arg1: memref<1x102x306xbf16, #tpu.memory_space<vmem>>, %arg2: memref<6x306x200xbf16, #tpu.memory_space<vmem>>, %arg3: memref<1x200xf32, #tpu.memory_space<vmem>>, %arg4: memref<1x50x200xbf16, #tpu.memory_space<vmem>>) attributes {dimension_semantics = [#tpu.dimension_semantics<parallel>], iteration_bounds = array<i64: 2>, scalar_prefetch = 0 : i64, scratch_operands = 0 : i64, tpu.core_type = #tpu.core_type<tc>, window_params = [{transform_indices = @transform_0, window_bounds = array<i64: 1, 102, 306>}, {pipeline_mode = #tpu.pipeline_mode<synchronous>, transform_indices = @transform_1, window_bounds = array<i64: 6, 306, 200>}, {pipeline_mode = #tpu.pipeline_mode<synchronous>, transform_indices = @transform_2, window_bounds = array<i64: 1, 200>}, {transform_indices = @transform_3, window_bounds = array<i64: 1, 50, 200>}]} {
    %c0 = arith.constant 0 : index
    %c0_0 = arith.constant 0 : index
    %c0_1 = arith.constant 0 : index
    %0 = vector.load %arg1[%c0, %c0_0, %c0_1] : memref<1x102x306xbf16, #tpu.memory_space<vmem>>, vector<1x50x306xbf16>
    %1 = vector.shape_cast %0 : vector<1x50x306xbf16> to vector<50x306xbf16>
    %c0_2 = arith.constant 0 : index
    %c0_3 = arith.constant 0 : index
    %c0_4 = arith.constant 0 : index
    %2 = vector.load %arg2[%c0_2, %c0_3, %c0_4] : memref<6x306x200xbf16, #tpu.memory_space<vmem>>, vector<1x306x200xbf16>
    %3 = vector.shape_cast %2 : vector<1x306x200xbf16> to vector<306x200xbf16>
    %cst = arith.constant dense<0.000000e+00> : vector<50x200xf32>
    %4 = tpu.matmul %1, %3, %cst {dimension_numbers = #tpu.dot_dimension_numbers<[1], [0], [0], [1], [0, 0, 1, 1], [], []>} : vector<50x306xbf16>, vector<306x200xbf16>, vector<50x200xf32> -> vector<50x200xf32>
    %c0_5 = arith.constant 0 : index
    %c51 = arith.constant 51 : index
    %c0_6 = arith.constant 0 : index
    %5 = vector.load %arg1[%c0_5, %c51, %c0_6] : memref<1x102x306xbf16, #tpu.memory_space<vmem>>, vector<1x50x306xbf16>
    %6 = vector.shape_cast %5 : vector<1x50x306xbf16> to vector<50x306xbf16>
    %c2 = arith.constant 2 : index
    %c0_7 = arith.constant 0 : index
    %c0_8 = arith.constant 0 : index
    %7 = vector.load %arg2[%c2, %c0_7, %c0_8] : memref<6x306x200xbf16, #tpu.memory_space<vmem>>, vector<1x306x200xbf16>
    %8 = vector.shape_cast %7 : vector<1x306x200xbf16> to vector<306x200xbf16>
    %cst_9 = arith.constant dense<0.000000e+00> : vector<50x200xf32>
    %9 = tpu.matmul %6, %8, %cst_9 {dimension_numbers = #tpu.dot_dimension_numbers<[1], [0], [0], [1], [0, 0, 1, 1], [], []>} : vector<50x306xbf16>, vector<306x200xbf16>, vector<50x200xf32> -> vector<50x200xf32>
    %10 = arith.addf %4, %9 : vector<50x200xf32>
    %c0_10 = arith.constant 0 : index
    %c1 = arith.constant 1 : index
    %c0_11 = arith.constant 0 : index
    %11 = vector.load %arg1[%c0_10, %c1, %c0_11] : memref<1x102x306xbf16, #tpu.memory_space<vmem>>, vector<1x50x306xbf16>
    %12 = vector.shape_cast %11 : vector<1x50x306xbf16> to vector<50x306xbf16>
    %c4 = arith.constant 4 : index
    %c0_12 = arith.constant 0 : index
    %c0_13 = arith.constant 0 : index
    %13 = vector.load %arg2[%c4, %c0_12, %c0_13] : memref<6x306x200xbf16, #tpu.memory_space<vmem>>, vector<1x306x200xbf16>
    %14 = vector.shape_cast %13 : vector<1x306x200xbf16> to vector<306x200xbf16>
    %cst_14 = arith.constant dense<0.000000e+00> : vector<50x200xf32>
    %15 = tpu.matmul %12, %14, %cst_14 {dimension_numbers = #tpu.dot_dimension_numbers<[1], [0], [0], [1], [0, 0, 1, 1], [], []>} : vector<50x306xbf16>, vector<306x200xbf16>, vector<50x200xf32> -> vector<50x200xf32>
    %16 = arith.addf %10, %15 : vector<50x200xf32>
    %c0_15 = arith.constant 0 : index
    %c0_16 = arith.constant 0 : index
    %c0_17 = arith.constant 0 : index
    %17 = vector.load %arg1[%c0_15, %c0_16, %c0_17] : memref<1x102x306xbf16, #tpu.memory_space<vmem>>, vector<1x50x306xbf16>
    %18 = vector.shape_cast %17 : vector<1x50x306xbf16> to vector<50x306xbf16>
    %c1_18 = arith.constant 1 : index
    %c0_19 = arith.constant 0 : index
    %c0_20 = arith.constant 0 : index
    %19 = vector.load %arg2[%c1_18, %c0_19, %c0_20] : memref<6x306x200xbf16, #tpu.memory_space<vmem>>, vector<1x306x200xbf16>
    %20 = vector.shape_cast %19 : vector<1x306x200xbf16> to vector<306x200xbf16>
    %cst_21 = arith.constant dense<0.000000e+00> : vector<50x200xf32>
    %21 = tpu.matmul %18, %20, %cst_21 {dimension_numbers = #tpu.dot_dimension_numbers<[1], [0], [0], [1], [0, 0, 1, 1], [], []>} : vector<50x306xbf16>, vector<306x200xbf16>, vector<50x200xf32> -> vector<50x200xf32>
    %c0_22 = arith.constant 0 : index
    %c51_23 = arith.constant 51 : index
    %c0_24 = arith.constant 0 : index
    %22 = vector.load %arg1[%c0_22, %c51_23, %c0_24] : memref<1x102x306xbf16, #tpu.memory_space<vmem>>, vector<1x50x306xbf16>
    %23 = vector.shape_cast %22 : vector<1x50x306xbf16> to vector<50x306xbf16>
    %c3 = arith.constant 3 : index
    %c0_25 = arith.constant 0 : index
    %c0_26 = arith.constant 0 : index
    %24 = vector.load %arg2[%c3, %c0_25, %c0_26] : memref<6x306x200xbf16, #tpu.memory_space<vmem>>, vector<1x306x200xbf16>
    %25 = vector.shape_cast %24 : vector<1x306x200xbf16> to vector<306x200xbf16>
    %cst_27 = arith.constant dense<0.000000e+00> : vector<50x200xf32>
    %26 = tpu.matmul %23, %25, %cst_27 {dimension_numbers = #tpu.dot_dimension_numbers<[1], [0], [0], [1], [0, 0, 1, 1], [], []>} : vector<50x306xbf16>, vector<306x200xbf16>, vector<50x200xf32> -> vector<50x200xf32>
    %27 = arith.addf %21, %26 : vector<50x200xf32>
    %c0_28 = arith.constant 0 : index
    %c1_29 = arith.constant 1 : index
    %c0_30 = arith.constant 0 : index
    %28 = vector.load %arg1[%c0_28, %c1_29, %c0_30] : memref<1x102x306xbf16, #tpu.memory_space<vmem>>, vector<1x50x306xbf16>
    %29 = vector.shape_cast %28 : vector<1x50x306xbf16> to vector<50x306xbf16>
    %c5 = arith.constant 5 : index
    %c0_31 = arith.constant 0 : index
    %c0_32 = arith.constant 0 : index
    %30 = vector.load %arg2[%c5, %c0_31, %c0_32] : memref<6x306x200xbf16, #tpu.memory_space<vmem>>, vector<1x306x200xbf16>
    %31 = vector.shape_cast %30 : vector<1x306x200xbf16> to vector<306x200xbf16>
    %cst_33 = arith.constant dense<0.000000e+00> : vector<50x200xf32>
    %32 = tpu.matmul %29, %31, %cst_33 {dimension_numbers = #tpu.dot_dimension_numbers<[1], [0], [0], [1], [0, 0, 1, 1], [], []>} : vector<50x306xbf16>, vector<306x200xbf16>, vector<50x200xf32> -> vector<50x200xf32>
    %33 = arith.addf %27, %32 : vector<50x200xf32>
    %34 = arith.maximumf %16, %33 : vector<50x200xf32>
    %c0_34 = arith.constant 0 : index
    %c51_35 = arith.constant 51 : index
    %c0_36 = arith.constant 0 : index
    %35 = vector.load %arg1[%c0_34, %c51_35, %c0_36] : memref<1x102x306xbf16, #tpu.memory_space<vmem>>, vector<1x50x306xbf16>
    %36 = vector.shape_cast %35 : vector<1x50x306xbf16> to vector<50x306xbf16>
    %c0_37 = arith.constant 0 : index
    %c0_38 = arith.constant 0 : index
    %c0_39 = arith.constant 0 : index
    %37 = vector.load %arg2[%c0_37, %c0_38, %c0_39] : memref<6x306x200xbf16, #tpu.memory_space<vmem>>, vector<1x306x200xbf16>
    %38 = vector.shape_cast %37 : vector<1x306x200xbf16> to vector<306x200xbf16>
    %cst_40 = arith.constant dense<0.000000e+00> : vector<50x200xf32>
    %39 = tpu.matmul %36, %38, %cst_40 {dimension_numbers = #tpu.dot_dimension_numbers<[1], [0], [0], [1], [0, 0, 1, 1], [], []>} : vector<50x306xbf16>, vector<306x200xbf16>, vector<50x200xf32> -> vector<50x200xf32>
    %c0_41 = arith.constant 0 : index
    %c1_42 = arith.constant 1 : index
    %c0_43 = arith.constant 0 : index
    %40 = vector.load %arg1[%c0_41, %c1_42, %c0_43] : memref<1x102x306xbf16, #tpu.memory_space<vmem>>, vector<1x50x306xbf16>
    %41 = vector.shape_cast %40 : vector<1x50x306xbf16> to vector<50x306xbf16>
    %c2_44 = arith.constant 2 : index
    %c0_45 = arith.constant 0 : index
    %c0_46 = arith.constant 0 : index
    %42 = vector.load %arg2[%c2_44, %c0_45, %c0_46] : memref<6x306x200xbf16, #tpu.memory_space<vmem>>, vector<1x306x200xbf16>
    %43 = vector.shape_cast %42 : vector<1x306x200xbf16> to vector<306x200xbf16>
    %cst_47 = arith.constant dense<0.000000e+00> : vector<50x200xf32>
    %44 = tpu.matmul %41, %43, %cst_47 {dimension_numbers = #tpu.dot_dimension_numbers<[1], [0], [0], [1], [0, 0, 1, 1], [], []>} : vector<50x306xbf16>, vector<306x200xbf16>, vector<50x200xf32> -> vector<50x200xf32>
    %45 = arith.addf %39, %44 : vector<50x200xf32>
    %c0_48 = arith.constant 0 : index
    %c52 = arith.constant 52 : index
    %c0_49 = arith.constant 0 : index
    %46 = vector.load %arg1[%c0_48, %c52, %c0_49] : memref<1x102x306xbf16, #tpu.memory_space<vmem>>, vector<1x50x306xbf16>
    %47 = vector.shape_cast %46 : vector<1x50x306xbf16> to vector<50x306xbf16>
    %c4_50 = arith.constant 4 : index
    %c0_51 = arith.constant 0 : index
    %c0_52 = arith.constant 0 : index
    %48 = vector.load %arg2[%c4_50, %c0_51, %c0_52] : memref<6x306x200xbf16, #tpu.memory_space<vmem>>, vector<1x306x200xbf16>
    %49 = vector.shape_cast %48 : vector<1x306x200xbf16> to vector<306x200xbf16>
    %cst_53 = arith.constant dense<0.000000e+00> : vector<50x200xf32>
    %50 = tpu.matmul %47, %49, %cst_53 {dimension_numbers = #tpu.dot_dimension_numbers<[1], [0], [0], [1], [0, 0, 1, 1], [], []>} : vector<50x306xbf16>, vector<306x200xbf16>, vector<50x200xf32> -> vector<50x200xf32>
    %51 = arith.addf %45, %50 : vector<50x200xf32>
    %52 = arith.maximumf %34, %51 : vector<50x200xf32>
    %c0_54 = arith.constant 0 : index
    %c51_55 = arith.constant 51 : index
    %c0_56 = arith.constant 0 : index
    %53 = vector.load %arg1[%c0_54, %c51_55, %c0_56] : memref<1x102x306xbf16, #tpu.memory_space<vmem>>, vector<1x50x306xbf16>
    %54 = vector.shape_cast %53 : vector<1x50x306xbf16> to vector<50x306xbf16>
    %c1_57 = arith.constant 1 : index
    %c0_58 = arith.constant 0 : index
    %c0_59 = arith.constant 0 : index
    %55 = vector.load %arg2[%c1_57, %c0_58, %c0_59] : memref<6x306x200xbf16, #tpu.memory_space<vmem>>, vector<1x306x200xbf16>
    %56 = vector.shape_cast %55 : vector<1x306x200xbf16> to vector<306x200xbf16>
    %cst_60 = arith.constant dense<0.000000e+00> : vector<50x200xf32>
    %57 = tpu.matmul %54, %56, %cst_60 {dimension_numbers = #tpu.dot_dimension_numbers<[1], [0], [0], [1], [0, 0, 1, 1], [], []>} : vector<50x306xbf16>, vector<306x200xbf16>, vector<50x200xf32> -> vector<50x200xf32>
    %c0_61 = arith.constant 0 : index
    %c1_62 = arith.constant 1 : index
    %c0_63 = arith.constant 0 : index
    %58 = vector.load %arg1[%c0_61, %c1_62, %c0_63] : memref<1x102x306xbf16, #tpu.memory_space<vmem>>, vector<1x50x306xbf16>
    %59 = vector.shape_cast %58 : vector<1x50x306xbf16> to vector<50x306xbf16>
    %c3_64 = arith.constant 3 : index
    %c0_65 = arith.constant 0 : index
    %c0_66 = arith.constant 0 : index
    %60 = vector.load %arg2[%c3_64, %c0_65, %c0_66] : memref<6x306x200xbf16, #tpu.memory_space<vmem>>, vector<1x306x200xbf16>
    %61 = vector.shape_cast %60 : vector<1x306x200xbf16> to vector<306x200xbf16>
    %cst_67 = arith.constant dense<0.000000e+00> : vector<50x200xf32>
    %62 = tpu.matmul %59, %61, %cst_67 {dimension_numbers = #tpu.dot_dimension_numbers<[1], [0], [0], [1], [0, 0, 1, 1], [], []>} : vector<50x306xbf16>, vector<306x200xbf16>, vector<50x200xf32> -> vector<50x200xf32>
    %63 = arith.addf %57, %62 : vector<50x200xf32>
    %c0_68 = arith.constant 0 : index
    %c52_69 = arith.constant 52 : index
    %c0_70 = arith.constant 0 : index
    %64 = vector.load %arg1[%c0_68, %c52_69, %c0_70] : memref<1x102x306xbf16, #tpu.memory_space<vmem>>, vector<1x50x306xbf16>
    %65 = vector.shape_cast %64 : vector<1x50x306xbf16> to vector<50x306xbf16>
    %c5_71 = arith.constant 5 : index
    %c0_72 = arith.constant 0 : index
    %c0_73 = arith.constant 0 : index
    %66 = vector.load %arg2[%c5_71, %c0_72, %c0_73] : memref<6x306x200xbf16, #tpu.memory_space<vmem>>, vector<1x306x200xbf16>
    %67 = vector.shape_cast %66 : vector<1x306x200xbf16> to vector<306x200xbf16>
    %cst_74 = arith.constant dense<0.000000e+00> : vector<50x200xf32>
    %68 = tpu.matmul %65, %67, %cst_74 {dimension_numbers = #tpu.dot_dimension_numbers<[1], [0], [0], [1], [0, 0, 1, 1], [], []>} : vector<50x306xbf16>, vector<306x200xbf16>, vector<50x200xf32> -> vector<50x200xf32>
    %69 = arith.addf %63, %68 : vector<50x200xf32>
    %70 = arith.maximumf %52, %69 : vector<50x200xf32>
    %c0_75 = arith.constant 0 : index
    %c0_76 = arith.constant 0 : index
    %71 = vector.load %arg3[%c0_75, %c0_76] : memref<1x200xf32, #tpu.memory_space<vmem>>, vector<1x200xf32>
    %72 = vector.broadcast %71 : vector<1x200xf32> to vector<50x200xf32>
    %73 = arith.addf %70, %72 : vector<50x200xf32>
    %cst_77 = arith.constant 0.000000e+00 : f32
    %74 = vector.broadcast %cst_77 : f32 to vector<50x200xf32>
    %75 = arith.maximumf %73, %74 : vector<50x200xf32>
    %76 = arith.truncf %75 : vector<50x200xf32> to vector<50x200xbf16>
    %c0_78 = arith.constant 0 : index
    %c0_79 = arith.constant 0 : index
    %c0_80 = arith.constant 0 : index
    %77 = vector.load %arg4[%c0_78, %c0_79, %c0_80] : memref<1x50x200xbf16, #tpu.memory_space<vmem>>, vector<1x50x200xbf16>
    %78 = vector.shape_cast %77 : vector<1x50x200xbf16> to vector<50x200xbf16>
    %79 = vector.shape_cast %76 : vector<50x200xbf16> to vector<1x50x200xbf16>
    tpu.vector_store %arg4[%c0_78, %c0_79, %c0_80], %79 {strides = array<i32>} : memref<1x50x200xbf16, #tpu.memory_space<vmem>>, vector<1x50x200xbf16>,
    return
  }
  func.func @transform_0(%arg0: i32) -> (i32, i32, i32) {
    %c0_i32 = arith.constant 0 : i32
    %c0_i32_0 = arith.constant 0 : i32
    %c0_i32_1 = arith.constant 0 : i32
    return %arg0, %c0_i32, %c0_i32_0 : i32, i32, i32
  }
  func.func @transform_1(%arg0: i32) -> (i32, i32, i32) {
    %c0_i32 = arith.constant 0 : i32
    %c0_i32_0 = arith.constant 0 : i32
    %c0_i32_1 = arith.constant 0 : i32
    %c0_i32_2 = arith.constant 0 : i32
    return %c0_i32, %c0_i32_0, %c0_i32_1 : i32, i32, i32
  }
  func.func @transform_2(%arg0: i32) -> (i32, i32) {
    %c0_i32 = arith.constant 0 : i32
    %c0_i32_0 = arith.constant 0 : i32
    %c0_i32_1 = arith.constant 0 : i32
    return %c0_i32, %c0_i32_0 : i32, i32
  }
  func.func @transform_3(%arg0: i32) -> (i32, i32, i32) {
    %c0_i32 = arith.constant 0 : i32
    %c0_i32_0 = arith.constant 0 : i32
    %c0_i32_1 = arith.constant 0 : i32
    return %arg0, %c0_i32, %c0_i32_0 : i32, i32, i32
  }
}

module attributes {stable_mosaic.version = 11 : i64} {
  func.func @_conv_bn_relu_pool_kernel(%arg0: i32, %arg1: memref<1x52x208xbf16, #tpu.memory_space<vmem>>, %arg2: memref<6x208x200xbf16, #tpu.memory_space<vmem>>, %arg3: memref<1x200xf32, #tpu.memory_space<vmem>>, %arg4: memref<1x25x200xbf16, #tpu.memory_space<vmem>>) attributes {dimension_semantics = [#tpu.dimension_semantics<parallel>], iteration_bounds = array<i64: 2>, scalar_prefetch = 0 : i64, scratch_operands = 0 : i64, tpu.core_type = #tpu.core_type<tc>, window_params = [{transform_indices = @transform_0, window_bounds = array<i64: 1, 52, 208>}, {pipeline_mode = #tpu.pipeline_mode<synchronous>, transform_indices = @transform_1, window_bounds = array<i64: 6, 208, 200>}, {pipeline_mode = #tpu.pipeline_mode<synchronous>, transform_indices = @transform_2, window_bounds = array<i64: 1, 200>}, {transform_indices = @transform_3, window_bounds = array<i64: 1, 25, 200>}]} {
    %c0 = arith.constant 0 : index
    %c0_0 = arith.constant 0 : index
    %c0_1 = arith.constant 0 : index
    %0 = vector.load %arg1[%c0, %c0_0, %c0_1] : memref<1x52x208xbf16, #tpu.memory_space<vmem>>, vector<1x25x208xbf16>
    %1 = vector.shape_cast %0 : vector<1x25x208xbf16> to vector<25x208xbf16>
    %c0_2 = arith.constant 0 : index
    %c0_3 = arith.constant 0 : index
    %c0_4 = arith.constant 0 : index
    %2 = vector.load %arg2[%c0_2, %c0_3, %c0_4] : memref<6x208x200xbf16, #tpu.memory_space<vmem>>, vector<1x208x200xbf16>
    %3 = vector.shape_cast %2 : vector<1x208x200xbf16> to vector<208x200xbf16>
    %cst = arith.constant dense<0.000000e+00> : vector<25x200xf32>
    %4 = tpu.matmul %1, %3, %cst {dimension_numbers = #tpu.dot_dimension_numbers<[1], [0], [0], [1], [0, 0, 1, 1], [], []>} : vector<25x208xbf16>, vector<208x200xbf16>, vector<25x200xf32> -> vector<25x200xf32>
    %c0_5 = arith.constant 0 : index
    %c26 = arith.constant 26 : index
    %c0_6 = arith.constant 0 : index
    %5 = vector.load %arg1[%c0_5, %c26, %c0_6] : memref<1x52x208xbf16, #tpu.memory_space<vmem>>, vector<1x25x208xbf16>
    %6 = vector.shape_cast %5 : vector<1x25x208xbf16> to vector<25x208xbf16>
    %c2 = arith.constant 2 : index
    %c0_7 = arith.constant 0 : index
    %c0_8 = arith.constant 0 : index
    %7 = vector.load %arg2[%c2, %c0_7, %c0_8] : memref<6x208x200xbf16, #tpu.memory_space<vmem>>, vector<1x208x200xbf16>
    %8 = vector.shape_cast %7 : vector<1x208x200xbf16> to vector<208x200xbf16>
    %cst_9 = arith.constant dense<0.000000e+00> : vector<25x200xf32>
    %9 = tpu.matmul %6, %8, %cst_9 {dimension_numbers = #tpu.dot_dimension_numbers<[1], [0], [0], [1], [0, 0, 1, 1], [], []>} : vector<25x208xbf16>, vector<208x200xbf16>, vector<25x200xf32> -> vector<25x200xf32>
    %10 = arith.addf %4, %9 : vector<25x200xf32>
    %c0_10 = arith.constant 0 : index
    %c1 = arith.constant 1 : index
    %c0_11 = arith.constant 0 : index
    %11 = vector.load %arg1[%c0_10, %c1, %c0_11] : memref<1x52x208xbf16, #tpu.memory_space<vmem>>, vector<1x25x208xbf16>
    %12 = vector.shape_cast %11 : vector<1x25x208xbf16> to vector<25x208xbf16>
    %c4 = arith.constant 4 : index
    %c0_12 = arith.constant 0 : index
    %c0_13 = arith.constant 0 : index
    %13 = vector.load %arg2[%c4, %c0_12, %c0_13] : memref<6x208x200xbf16, #tpu.memory_space<vmem>>, vector<1x208x200xbf16>
    %14 = vector.shape_cast %13 : vector<1x208x200xbf16> to vector<208x200xbf16>
    %cst_14 = arith.constant dense<0.000000e+00> : vector<25x200xf32>
    %15 = tpu.matmul %12, %14, %cst_14 {dimension_numbers = #tpu.dot_dimension_numbers<[1], [0], [0], [1], [0, 0, 1, 1], [], []>} : vector<25x208xbf16>, vector<208x200xbf16>, vector<25x200xf32> -> vector<25x200xf32>
    %16 = arith.addf %10, %15 : vector<25x200xf32>
    %c0_15 = arith.constant 0 : index
    %c0_16 = arith.constant 0 : index
    %c0_17 = arith.constant 0 : index
    %17 = vector.load %arg1[%c0_15, %c0_16, %c0_17] : memref<1x52x208xbf16, #tpu.memory_space<vmem>>, vector<1x25x208xbf16>
    %18 = vector.shape_cast %17 : vector<1x25x208xbf16> to vector<25x208xbf16>
    %c1_18 = arith.constant 1 : index
    %c0_19 = arith.constant 0 : index
    %c0_20 = arith.constant 0 : index
    %19 = vector.load %arg2[%c1_18, %c0_19, %c0_20] : memref<6x208x200xbf16, #tpu.memory_space<vmem>>, vector<1x208x200xbf16>
    %20 = vector.shape_cast %19 : vector<1x208x200xbf16> to vector<208x200xbf16>
    %cst_21 = arith.constant dense<0.000000e+00> : vector<25x200xf32>
    %21 = tpu.matmul %18, %20, %cst_21 {dimension_numbers = #tpu.dot_dimension_numbers<[1], [0], [0], [1], [0, 0, 1, 1], [], []>} : vector<25x208xbf16>, vector<208x200xbf16>, vector<25x200xf32> -> vector<25x200xf32>
    %c0_22 = arith.constant 0 : index
    %c26_23 = arith.constant 26 : index
    %c0_24 = arith.constant 0 : index
    %22 = vector.load %arg1[%c0_22, %c26_23, %c0_24] : memref<1x52x208xbf16, #tpu.memory_space<vmem>>, vector<1x25x208xbf16>
    %23 = vector.shape_cast %22 : vector<1x25x208xbf16> to vector<25x208xbf16>
    %c3 = arith.constant 3 : index
    %c0_25 = arith.constant 0 : index
    %c0_26 = arith.constant 0 : index
    %24 = vector.load %arg2[%c3, %c0_25, %c0_26] : memref<6x208x200xbf16, #tpu.memory_space<vmem>>, vector<1x208x200xbf16>
    %25 = vector.shape_cast %24 : vector<1x208x200xbf16> to vector<208x200xbf16>
    %cst_27 = arith.constant dense<0.000000e+00> : vector<25x200xf32>
    %26 = tpu.matmul %23, %25, %cst_27 {dimension_numbers = #tpu.dot_dimension_numbers<[1], [0], [0], [1], [0, 0, 1, 1], [], []>} : vector<25x208xbf16>, vector<208x200xbf16>, vector<25x200xf32> -> vector<25x200xf32>
    %27 = arith.addf %21, %26 : vector<25x200xf32>
    %c0_28 = arith.constant 0 : index
    %c1_29 = arith.constant 1 : index
    %c0_30 = arith.constant 0 : index
    %28 = vector.load %arg1[%c0_28, %c1_29, %c0_30] : memref<1x52x208xbf16, #tpu.memory_space<vmem>>, vector<1x25x208xbf16>
    %29 = vector.shape_cast %28 : vector<1x25x208xbf16> to vector<25x208xbf16>
    %c5 = arith.constant 5 : index
    %c0_31 = arith.constant 0 : index
    %c0_32 = arith.constant 0 : index
    %30 = vector.load %arg2[%c5, %c0_31, %c0_32] : memref<6x208x200xbf16, #tpu.memory_space<vmem>>, vector<1x208x200xbf16>
    %31 = vector.shape_cast %30 : vector<1x208x200xbf16> to vector<208x200xbf16>
    %cst_33 = arith.constant dense<0.000000e+00> : vector<25x200xf32>
    %32 = tpu.matmul %29, %31, %cst_33 {dimension_numbers = #tpu.dot_dimension_numbers<[1], [0], [0], [1], [0, 0, 1, 1], [], []>} : vector<25x208xbf16>, vector<208x200xbf16>, vector<25x200xf32> -> vector<25x200xf32>
    %33 = arith.addf %27, %32 : vector<25x200xf32>
    %34 = arith.maximumf %16, %33 : vector<25x200xf32>
    %c0_34 = arith.constant 0 : index
    %c26_35 = arith.constant 26 : index
    %c0_36 = arith.constant 0 : index
    %35 = vector.load %arg1[%c0_34, %c26_35, %c0_36] : memref<1x52x208xbf16, #tpu.memory_space<vmem>>, vector<1x25x208xbf16>
    %36 = vector.shape_cast %35 : vector<1x25x208xbf16> to vector<25x208xbf16>
    %c0_37 = arith.constant 0 : index
    %c0_38 = arith.constant 0 : index
    %c0_39 = arith.constant 0 : index
    %37 = vector.load %arg2[%c0_37, %c0_38, %c0_39] : memref<6x208x200xbf16, #tpu.memory_space<vmem>>, vector<1x208x200xbf16>
    %38 = vector.shape_cast %37 : vector<1x208x200xbf16> to vector<208x200xbf16>
    %cst_40 = arith.constant dense<0.000000e+00> : vector<25x200xf32>
    %39 = tpu.matmul %36, %38, %cst_40 {dimension_numbers = #tpu.dot_dimension_numbers<[1], [0], [0], [1], [0, 0, 1, 1], [], []>} : vector<25x208xbf16>, vector<208x200xbf16>, vector<25x200xf32> -> vector<25x200xf32>
    %c0_41 = arith.constant 0 : index
    %c1_42 = arith.constant 1 : index
    %c0_43 = arith.constant 0 : index
    %40 = vector.load %arg1[%c0_41, %c1_42, %c0_43] : memref<1x52x208xbf16, #tpu.memory_space<vmem>>, vector<1x25x208xbf16>
    %41 = vector.shape_cast %40 : vector<1x25x208xbf16> to vector<25x208xbf16>
    %c2_44 = arith.constant 2 : index
    %c0_45 = arith.constant 0 : index
    %c0_46 = arith.constant 0 : index
    %42 = vector.load %arg2[%c2_44, %c0_45, %c0_46] : memref<6x208x200xbf16, #tpu.memory_space<vmem>>, vector<1x208x200xbf16>
    %43 = vector.shape_cast %42 : vector<1x208x200xbf16> to vector<208x200xbf16>
    %cst_47 = arith.constant dense<0.000000e+00> : vector<25x200xf32>
    %44 = tpu.matmul %41, %43, %cst_47 {dimension_numbers = #tpu.dot_dimension_numbers<[1], [0], [0], [1], [0, 0, 1, 1], [], []>} : vector<25x208xbf16>, vector<208x200xbf16>, vector<25x200xf32> -> vector<25x200xf32>
    %45 = arith.addf %39, %44 : vector<25x200xf32>
    %c0_48 = arith.constant 0 : index
    %c27 = arith.constant 27 : index
    %c0_49 = arith.constant 0 : index
    %46 = vector.load %arg1[%c0_48, %c27, %c0_49] : memref<1x52x208xbf16, #tpu.memory_space<vmem>>, vector<1x25x208xbf16>
    %47 = vector.shape_cast %46 : vector<1x25x208xbf16> to vector<25x208xbf16>
    %c4_50 = arith.constant 4 : index
    %c0_51 = arith.constant 0 : index
    %c0_52 = arith.constant 0 : index
    %48 = vector.load %arg2[%c4_50, %c0_51, %c0_52] : memref<6x208x200xbf16, #tpu.memory_space<vmem>>, vector<1x208x200xbf16>
    %49 = vector.shape_cast %48 : vector<1x208x200xbf16> to vector<208x200xbf16>
    %cst_53 = arith.constant dense<0.000000e+00> : vector<25x200xf32>
    %50 = tpu.matmul %47, %49, %cst_53 {dimension_numbers = #tpu.dot_dimension_numbers<[1], [0], [0], [1], [0, 0, 1, 1], [], []>} : vector<25x208xbf16>, vector<208x200xbf16>, vector<25x200xf32> -> vector<25x200xf32>
    %51 = arith.addf %45, %50 : vector<25x200xf32>
    %52 = arith.maximumf %34, %51 : vector<25x200xf32>
    %c0_54 = arith.constant 0 : index
    %c26_55 = arith.constant 26 : index
    %c0_56 = arith.constant 0 : index
    %53 = vector.load %arg1[%c0_54, %c26_55, %c0_56] : memref<1x52x208xbf16, #tpu.memory_space<vmem>>, vector<1x25x208xbf16>
    %54 = vector.shape_cast %53 : vector<1x25x208xbf16> to vector<25x208xbf16>
    %c1_57 = arith.constant 1 : index
    %c0_58 = arith.constant 0 : index
    %c0_59 = arith.constant 0 : index
    %55 = vector.load %arg2[%c1_57, %c0_58, %c0_59] : memref<6x208x200xbf16, #tpu.memory_space<vmem>>, vector<1x208x200xbf16>
    %56 = vector.shape_cast %55 : vector<1x208x200xbf16> to vector<208x200xbf16>
    %cst_60 = arith.constant dense<0.000000e+00> : vector<25x200xf32>
    %57 = tpu.matmul %54, %56, %cst_60 {dimension_numbers = #tpu.dot_dimension_numbers<[1], [0], [0], [1], [0, 0, 1, 1], [], []>} : vector<25x208xbf16>, vector<208x200xbf16>, vector<25x200xf32> -> vector<25x200xf32>
    %c0_61 = arith.constant 0 : index
    %c1_62 = arith.constant 1 : index
    %c0_63 = arith.constant 0 : index
    %58 = vector.load %arg1[%c0_61, %c1_62, %c0_63] : memref<1x52x208xbf16, #tpu.memory_space<vmem>>, vector<1x25x208xbf16>
    %59 = vector.shape_cast %58 : vector<1x25x208xbf16> to vector<25x208xbf16>
    %c3_64 = arith.constant 3 : index
    %c0_65 = arith.constant 0 : index
    %c0_66 = arith.constant 0 : index
    %60 = vector.load %arg2[%c3_64, %c0_65, %c0_66] : memref<6x208x200xbf16, #tpu.memory_space<vmem>>, vector<1x208x200xbf16>
    %61 = vector.shape_cast %60 : vector<1x208x200xbf16> to vector<208x200xbf16>
    %cst_67 = arith.constant dense<0.000000e+00> : vector<25x200xf32>
    %62 = tpu.matmul %59, %61, %cst_67 {dimension_numbers = #tpu.dot_dimension_numbers<[1], [0], [0], [1], [0, 0, 1, 1], [], []>} : vector<25x208xbf16>, vector<208x200xbf16>, vector<25x200xf32> -> vector<25x200xf32>
    %63 = arith.addf %57, %62 : vector<25x200xf32>
    %c0_68 = arith.constant 0 : index
    %c27_69 = arith.constant 27 : index
    %c0_70 = arith.constant 0 : index
    %64 = vector.load %arg1[%c0_68, %c27_69, %c0_70] : memref<1x52x208xbf16, #tpu.memory_space<vmem>>, vector<1x25x208xbf16>
    %65 = vector.shape_cast %64 : vector<1x25x208xbf16> to vector<25x208xbf16>
    %c5_71 = arith.constant 5 : index
    %c0_72 = arith.constant 0 : index
    %c0_73 = arith.constant 0 : index
    %66 = vector.load %arg2[%c5_71, %c0_72, %c0_73] : memref<6x208x200xbf16, #tpu.memory_space<vmem>>, vector<1x208x200xbf16>
    %67 = vector.shape_cast %66 : vector<1x208x200xbf16> to vector<208x200xbf16>
    %cst_74 = arith.constant dense<0.000000e+00> : vector<25x200xf32>
    %68 = tpu.matmul %65, %67, %cst_74 {dimension_numbers = #tpu.dot_dimension_numbers<[1], [0], [0], [1], [0, 0, 1, 1], [], []>} : vector<25x208xbf16>, vector<208x200xbf16>, vector<25x200xf32> -> vector<25x200xf32>
    %69 = arith.addf %63, %68 : vector<25x200xf32>
    %70 = arith.maximumf %52, %69 : vector<25x200xf32>
    %c0_75 = arith.constant 0 : index
    %c0_76 = arith.constant 0 : index
    %71 = vector.load %arg3[%c0_75, %c0_76] : memref<1x200xf32, #tpu.memory_space<vmem>>, vector<1x200xf32>
    %72 = vector.broadcast %71 : vector<1x200xf32> to vector<25x200xf32>
    %73 = arith.addf %70, %72 : vector<25x200xf32>
    %cst_77 = arith.constant 0.000000e+00 : f32
    %74 = vector.broadcast %cst_77 : f32 to vector<25x200xf32>
    %75 = arith.maximumf %73, %74 : vector<25x200xf32>
    %76 = arith.truncf %75 : vector<25x200xf32> to vector<25x200xbf16>
    %c0_78 = arith.constant 0 : index
    %c0_79 = arith.constant 0 : index
    %c0_80 = arith.constant 0 : index
    %77 = vector.load %arg4[%c0_78, %c0_79, %c0_80] : memref<1x25x200xbf16, #tpu.memory_space<vmem>>, vector<1x25x200xbf16>
    %78 = vector.shape_cast %77 : vector<1x25x200xbf16> to vector<25x200xbf16>
    %79 = vector.shape_cast %76 : vector<25x200xbf16> to vector<1x25x200xbf16>
    tpu.vector_store %arg4[%c0_78, %c0_79, %c0_80], %79 {strides = array<i32>} : memref<1x25x200xbf16, #tpu.memory_space<vmem>>, vector<1x25x200xbf16>,
    return
  }
  func.func @transform_0(%arg0: i32) -> (i32, i32, i32) {
    %c0_i32 = arith.constant 0 : i32
    %c0_i32_0 = arith.constant 0 : i32
    %c0_i32_1 = arith.constant 0 : i32
    return %arg0, %c0_i32, %c0_i32_0 : i32, i32, i32
  }
  func.func @transform_1(%arg0: i32) -> (i32, i32, i32) {
    %c0_i32 = arith.constant 0 : i32
    %c0_i32_0 = arith.constant 0 : i32
    %c0_i32_1 = arith.constant 0 : i32
    %c0_i32_2 = arith.constant 0 : i32
    return %c0_i32, %c0_i32_0, %c0_i32_1 : i32, i32, i32
  }
  func.func @transform_2(%arg0: i32) -> (i32, i32) {
    %c0_i32 = arith.constant 0 : i32
    %c0_i32_0 = arith.constant 0 : i32
    %c0_i32_1 = arith.constant 0 : i32
    return %c0_i32, %c0_i32_0 : i32, i32
  }
  func.func @transform_3(%arg0: i32) -> (i32, i32, i32) {
    %c0_i32 = arith.constant 0 : i32
    %c0_i32_0 = arith.constant 0 : i32
    %c0_i32_1 = arith.constant 0 : i32
    return %arg0, %c0_i32, %c0_i32_0 : i32, i32, i32
  }
}

module attributes {stable_mosaic.version = 11 : i64} {
  func.func @_linear_kernel(%arg0: memref<2x5000xbf16, #tpu.memory_space<vmem>>, %arg1: memref<5000x5xbf16, #tpu.memory_space<vmem>>, %arg2: memref<1x5xf32, #tpu.memory_space<vmem>>, %arg3: memref<2x5xf32, #tpu.memory_space<vmem>>) attributes {dimension_semantics = [], scalar_prefetch = 0 : i64, scratch_operands = 0 : i64, tpu.core_type = #tpu.core_type<tc>} {
    %c0 = arith.constant 0 : index
    %c0_0 = arith.constant 0 : index
    %0 = vector.load %arg0[%c0, %c0_0] : memref<2x5000xbf16, #tpu.memory_space<vmem>>, vector<2x5000xbf16>
    %c0_1 = arith.constant 0 : index
    %c0_2 = arith.constant 0 : index
    %1 = vector.load %arg1[%c0_1, %c0_2] : memref<5000x5xbf16, #tpu.memory_space<vmem>>, vector<5000x5xbf16>
    %cst = arith.constant dense<0.000000e+00> : vector<2x5xf32>
    %2 = tpu.matmul %0, %1, %cst {dimension_numbers = #tpu.dot_dimension_numbers<[1], [0], [0], [1], [0, 0, 1, 1], [], []>} : vector<2x5000xbf16>, vector<5000x5xbf16>, vector<2x5xf32> -> vector<2x5xf32>
    %c0_3 = arith.constant 0 : index
    %c0_4 = arith.constant 0 : index
    %3 = vector.load %arg2[%c0_3, %c0_4] : memref<1x5xf32, #tpu.memory_space<vmem>>, vector<1x5xf32>
    %4 = vector.broadcast %3 : vector<1x5xf32> to vector<2x5xf32>
    %5 = arith.addf %2, %4 : vector<2x5xf32>
    %c0_5 = arith.constant 0 : index
    %c0_6 = arith.constant 0 : index
    %6 = vector.load %arg3[%c0_5, %c0_6] : memref<2x5xf32, #tpu.memory_space<vmem>>, vector<2x5xf32>
    tpu.vector_store %arg3[%c0_5, %c0_6], %5 {strides = array<i32>} : memref<2x5xf32, #tpu.memory_space<vmem>>, vector<2x5xf32>,
    return
  }
}

</mosaic_0001>

<llo_original>
// kernel: fnet_forward.4
$region0: #{fnet_forward.4}
  #allocation0 [shape = 'u32[]', space=smem, size = 0x4, offset = 0x4, fixed_abs, tag = 'smem constant byte address 0x4 - core index']
  #allocation1 [shape = 'u32[144,128]{1,0:T(1,128)}', space=vmem, size = 0x12000, scoped, tag = 'internal scratch']
  %s0 = inlined_call_operand.vmem [shape: bf16[2,52,208], index: 0, kind: input, shape index: {}]
  %s1 = inlined_call_operand.vmem [shape: bf16[6,208,200], index: 1, kind: input, shape index: {}]
  %s2 = inlined_call_operand.vmem [shape: f32[1,200], index: 2, kind: input, shape index: {}]
  %s3 = inlined_call_operand.vmem [shape: bf16[2,25,200], index: 3, kind: output, shape index: {}]
  %s4 = sld [smem:[#allocation0]]
  $region45: #{fnet_forward.4} parent=0
    _
  %s6 = ssub.s32 1, %s4
  %s7 = scalar_select 0, %s6, %s4
  loop: start=0, step=1, limit=4
  $region2: #{fnet_forward.4} parent=0 // loop_pre_header
    _
  $region3: #{fnet_forward.4} parent=0 // loop_header
    %s9 = sphi 0, %s13
    %p10 = scmp.ge.s32.totalorder %s9, 4
    %s19 = sphi 0, %s21
    %s22 = sphi 0, %s19
    %s23 = sphi 0, %s22
    %s39 = sphi 0, %s23
    %s43 = sphi 0, %s43
    %s45 = sphi 0, %s43
    %s46 = sphi 0, %s45
    %s60 = sphi 0, %s46
    %s64 = sphi 0, %s64
    %s66 = sphi 0, %s64
    %s67 = sphi 0, %s66
    %s81 = sphi 0, %s67
    %s87 = sphi 0, %s89
    %s90 = sphi 0, %s87
    %s91 = sphi 0, %s90
    %s107 = sphi 0, %s91
  $region4: #{fnet_forward.4} parent=0 // loop_header_branch
    %12 = sbr.rel (%p10) target = $region8
  $region5: #{fnet_forward.4} parent=0 // loop_body
    %s14 = ssub.s32 %s9, 1
    %s15 = ssub.s32 %s9, 2
    %s16 = sadd.s32 %s9, 1
    %s17 = ssub.s32 %s9, %s16
    %p18 = scmp.eq.s32.totalorder %s17, 0
    %s20 = sadd.s32 %s19, 1
    %s21 = scalar_select %p18, %s19, %s20
    %p24 = pneg %p18
    %p25 = scmp.eq.s32.totalorder %s9, 1
    %p26 = por %p24, %p25
    %p27 = scmp.ne.s32.totalorder %s19, %s22
    %p28 = scmp.eq.s32.totalorder %s9, 0
    %p29 = por %p27, %p28
    %p30 = scmp.ne.s32.totalorder %s19, %s22
    %p31 = scmp.eq.s32.totalorder %s14, 1
    %p32 = por %p30, %p31
    %p33 = scmp.ne.s32.totalorder %s22, %s23
    %p34 = scmp.eq.s32.totalorder %s14, 0
    %p35 = por %p33, %p34
    %p36 = scmp.ne.s32.totalorder %s22, %s23
    %p37 = scmp.eq.s32.totalorder %s15, 1
    %p38 = por %p36, %p37
    %p40 = scmp.ne.s32.totalorder %s23, %s39
    %p41 = scmp.eq.s32.totalorder %s15, 0
    %p42 = por %p40, %p41
    %s44 = sadd.s32 %s43, 1
    %p47 = scmp.eq.s32.totalorder %s9, 1
    %p48 = scmp.ne.s32.totalorder %s43, %s45
    %p49 = scmp.eq.s32.totalorder %s9, 0
    %p50 = por %p48, %p49
    %p51 = scmp.ne.s32.totalorder %s43, %s45
    %p52 = scmp.eq.s32.totalorder %s14, 1
    %p53 = por %p51, %p52
    %p54 = scmp.ne.s32.totalorder %s45, %s46
    %p55 = scmp.eq.s32.totalorder %s14, 0
    %p56 = por %p54, %p55
    %p57 = scmp.ne.s32.totalorder %s45, %s46
    %p58 = scmp.eq.s32.totalorder %s15, 1
    %p59 = por %p57, %p58
    %p61 = scmp.ne.s32.totalorder %s46, %s60
    %p62 = scmp.eq.s32.totalorder %s15, 0
    %p63 = por %p61, %p62
    %s65 = sadd.s32 %s64, 1
    %p68 = scmp.eq.s32.totalorder %s9, 1
    %p69 = scmp.ne.s32.totalorder %s64, %s66
    %p70 = scmp.eq.s32.totalorder %s9, 0
    %p71 = por %p69, %p70
    %p72 = scmp.ne.s32.totalorder %s64, %s66
    %p73 = scmp.eq.s32.totalorder %s14, 1
    %p74 = por %p72, %p73
    %p75 = scmp.ne.s32.totalorder %s66, %s67
    %p76 = scmp.eq.s32.totalorder %s14, 0
    %p77 = por %p75, %p76
    %p78 = scmp.ne.s32.totalorder %s66, %s67
    %p79 = scmp.eq.s32.totalorder %s15, 1
    %p80 = por %p78, %p79
    %p82 = scmp.ne.s32.totalorder %s67, %s81
    %p83 = scmp.eq.s32.totalorder %s15, 0
    %p84 = por %p82, %p83
    %s85 = ssub.s32 %s9, %s16
    %p86 = scmp.eq.s32.totalorder %s85, 0
    %s88 = sadd.s32 %s87, 1
    %s89 = scalar_select %p86, %s87, %s88
    %p92 = pneg %p86
    %p93 = scmp.eq.s32.totalorder %s9, 1
    %p94 = por %p92, %p93
    %p95 = scmp.ne.s32.totalorder %s87, %s90
    %p96 = scmp.eq.s32.totalorder %s9, 0
    %p97 = por %p95, %p96
    %p98 = scmp.ne.s32.totalorder %s87, %s90
    %p99 = scmp.eq.s32.totalorder %s14, 1
    %p100 = por %p98, %p99
    %p101 = scmp.ne.s32.totalorder %s90, %s91
    %p102 = scmp.eq.s32.totalorder %s14, 0
    %p103 = por %p101, %p102
    %p104 = scmp.ne.s32.totalorder %s90, %s91
    %p105 = scmp.eq.s32.totalorder %s15, 1
    %p106 = por %p104, %p105
    %p108 = scmp.ne.s32.totalorder %s91, %s107
    %p109 = scmp.eq.s32.totalorder %s15, 0
    %p110 = por %p108, %p109
    %p111 = scmp.le.s32.totalorder 1, %s9
    %p112 = scmp.lt.s32.totalorder %s9, 3
    %p113 = pnand %p111, %p112
    %p114 = pneg %p113
    // Predicated region
    $region9: #{fnet_forward.4} parent=5 // pred_check
      _
    $region10: #{fnet_forward.4} parent=5 // pred_check_branch
      %116 = sbr.rel (%p113) target = $region12
    $region11: #{fnet_forward.4} parent=5 // pred_region
      %s117 = ssub.s32 %s9, 1
      // Predicated region
      $region13: #{fnet_forward.4} parent=11 // pred_check
        %p118 = pneg %p56
      $region14: #{fnet_forward.4} parent=11 // pred_check_branch
        %120 = sbr.rel (%p118) target = $region16
      $region15: #{fnet_forward.4} parent=11 // pred_region
        _
      $region16: #{fnet_forward.4} parent=11 // pred_fallthru
        _
      // Predicated region
      $region17: #{fnet_forward.4} parent=11 // pred_check
        %p121 = pneg %p77
      $region18: #{fnet_forward.4} parent=11 // pred_check_branch
        %123 = sbr.rel (%p121) target = $region20
      $region19: #{fnet_forward.4} parent=11 // pred_region
        _
      $region20: #{fnet_forward.4} parent=11 // pred_fallthru
        _
    $region12: #{fnet_forward.4} parent=5 // pred_fallthru
      _
    %p124 = scmp.lt.s32.totalorder %s9, 2
    // Predicated region
    $region21: #{fnet_forward.4} parent=5 // pred_check
      %p125 = pneg %p124
    $region22: #{fnet_forward.4} parent=5 // pred_check_branch
      %127 = sbr.rel (%p125) target = $region24
    $region23: #{fnet_forward.4} parent=5 // pred_region
      // Predicated region
      $region25: #{fnet_forward.4} parent=23 // pred_check
        %p128 = pneg %p29
      $region26: #{fnet_forward.4} parent=23 // pred_check_branch
        %130 = sbr.rel (%p128) target = $region28
      $region27: #{fnet_forward.4} parent=23 // pred_region
        %p131 = scmp.lt.s32.totalorder %s9, 1
        %s132 = scalar_select %p131, %s9, 1
        %s133 = smul.addr %s132, 14
        %s134 = smul.addr %s133, 4
        %s135 = scalar_lea.vmem %s0, %s134
      $region28: #{fnet_forward.4} parent=23 // pred_fallthru
        _
    $region24: #{fnet_forward.4} parent=5 // pred_fallthru
      _
    %p136 = scmp.le.s32.totalorder 1, %s9
    %p137 = scmp.lt.s32.totalorder %s9, 3
    %p138 = pnand %p136, %p137
    %p139 = pneg %p138
    // Predicated region
    $region29: #{fnet_forward.4} parent=5 // pred_check
      _
    $region30: #{fnet_forward.4} parent=5 // pred_check_branch
      %141 = sbr.rel (%p138) target = $region32
    $region31: #{fnet_forward.4} parent=5 // pred_region
      %s142 = ssub.s32 %s9, 1
      %p143 = scmp.lt.s32.totalorder %s14, 1
      %s144 = scalar_select %p143, %s14, 1
      %s145 = smul.addr %s144, 14
      %s146 = smul.addr %s145, 4
      %s147 = scalar_lea.vmem %s0, %s146
      %p148 = pneg %p35
      %p149 = pneg %p32
      %p150 = pneg %p56
      %p151 = pneg %p53
      %p152 = pneg %p77
      %p153 = pneg %p74
      %p154 = pneg %p103
      %p155 = pneg %p100
      %p156 = scmp.lt.s32.totalorder %s14, 1
      %s157 = scalar_select %p156, %s14, 1
      %s158 = smul.addr %s157, 8
      %s159 = smul.addr %s158, 4
      %s160 = scalar_lea.vmem %s3, %s159
      %p161 = scmp.lt.s32.totalorder %s14, 1
      %s162 = scalar_select %p161, %s14, 1
      %s163 = smul.addr %s162, 14
      %s164 = smul.addr %s163, 4
      %s165 = scalar_lea.vmem %s0, %s164
      %p166 = scmp.lt.s32.totalorder %s14, 1
      %s167 = scalar_select %p166, %s14, 1
      %s168 = smul.addr %s167, 8
      %s169 = smul.addr %s168, 4
      %s170 = scalar_lea.vmem %s3, %s169
      %v172 = vld [vmem:[%s165] sm:$0xff]
      %v173 = vld [vmem:[%s165 + $0x8] sm:$0xff]
      %v174 = vld [vmem:[%s165 + $0x10] sm:$0xff]
      %v175 = vld [vmem:[%s165 + $0x18] sm:$0x11]
      %v176 = vld [vmem:[%s1] sm:$0xff]
      %v177 = vld [vmem:[%s1 + $0x8] sm:$0xff]
      %v178 = vld [vmem:[%s1 + $0x10] sm:$0xff]
      %v179 = vld [vmem:[%s1 + $0x18] sm:$0xff]
      %v180 = vld [vmem:[%s1 + $0x20] sm:$0xff]
      %v181 = vld [vmem:[%s1 + $0x28] sm:$0xff]
      %v182 = vld [vmem:[%s1 + $0x30] sm:$0xff]
      %v183 = vld [vmem:[%s1 + $0x38] sm:$0xff]
      %v184 = vld [vmem:[%s1 + $0x40] sm:$0xff]
      %v185 = vld [vmem:[%s1 + $0x48] sm:$0xff]
      %v186 = vld [vmem:[%s1 + $0x50] sm:$0xff]
      %v187 = vld [vmem:[%s1 + $0x58] sm:$0xff]
      %v188 = vld [vmem:[%s1 + $0x60] sm:$0xff]
      %v189 = vld [vmem:[%s1 + $0x68] sm:$0xff]
      %v190 = vld [vmem:[%s1 + $0x70] sm:$0xff]
      %v191 = vld [vmem:[%s1 + $0x78] sm:$0xff]
      %v192 = vld [vmem:[%s1 + $0x80] sm:$0xff]
      %v193 = vld [vmem:[%s1 + $0x88] sm:$0xff]
      %v194 = vld [vmem:[%s1 + $0x90] sm:$0xff]
      %v195 = vld [vmem:[%s1 + $0x98] sm:$0xff]
      %v196 = vld [vmem:[%s1 + $0xa0] sm:$0xff]
      %v197 = vld [vmem:[%s1 + $0xa8] sm:$0xff]
      %v198 = vld [vmem:[%s1 + $0xb0] sm:$0xff]
      %v199 = vld [vmem:[%s1 + $0xb8] sm:$0xff]
      %v200 = vld [vmem:[%s1 + $0xc0] sm:$0xff]
      %v201 = vld [vmem:[%s1 + $0xc8] sm:$0xff]
      %v202 = vld [vmem:[%s165 + $0x18] sm:$0xee]
      %v203 = vld [vmem:[%s165 + $0x20] sm:$0xff]
      %v204 = vld [vmem:[%s165 + $0x28] sm:$0xff]
      %v205 = vld [vmem:[%s165 + $0x30] sm:$0x33]
      %s206 = scalar_lea.vmem %s1, 416
      %v207 = vld [vmem:[%s206] sm:$0xff]
      %v208 = vld [vmem:[%s206 + $0x8] sm:$0xff]
      %v209 = vld [vmem:[%s206 + $0x10] sm:$0xff]
      %v210 = vld [vmem:[%s206 + $0x18] sm:$0xff]
      %v211 = vld [vmem:[%s206 + $0x20] sm:$0xff]
      %v212 = vld [vmem:[%s206 + $0x28] sm:$0xff]
      %v213 = vld [vmem:[%s206 + $0x30] sm:$0xff]
      %v214 = vld [vmem:[%s206 + $0x38] sm:$0xff]
      %v215 = vld [vmem:[%s206 + $0x40] sm:$0xff]
      %v216 = vld [vmem:[%s206 + $0x48] sm:$0xff]
      %v217 = vld [vmem:[%s206 + $0x50] sm:$0xff]
      %v218 = vld [vmem:[%s206 + $0x58] sm:$0xff]
      %v219 = vld [vmem:[%s206 + $0x60] sm:$0xff]
      %v220 = vld [vmem:[%s206 + $0x68] sm:$0xff]
      %v221 = vld [vmem:[%s206 + $0x70] sm:$0xff]
      %v222 = vld [vmem:[%s206 + $0x78] sm:$0xff]
      %v223 = vld [vmem:[%s206 + $0x80] sm:$0xff]
      %v224 = vld [vmem:[%s206 + $0x88] sm:$0xff]
      %v225 = vld [vmem:[%s206 + $0x90] sm:$0xff]
      %v226 = vld [vmem:[%s206 + $0x98] sm:$0xff]
      %v227 = vld [vmem:[%s206 + $0xa0] sm:$0xff]
      %v228 = vld [vmem:[%s206 + $0xa8] sm:$0xff]
      %v229 = vld [vmem:[%s206 + $0xb0] sm:$0xff]
      %v230 = vld [vmem:[%s206 + $0xb8] sm:$0xff]
      %v231 = vld [vmem:[%s206 + $0xc0] sm:$0xff]
      %v232 = vld [vmem:[%s206 + $0xc8] sm:$0xff]
      %v237 = vunpack.c.l.b16 %v202
      %v238 = vunpack.c.h.b16 %v202
      %v239 = vunpack.c.l.b16 %v203
      %v240 = vunpack.c.h.b16 %v203
      %v241 = vunpack.c.l.b16 %v204
      %v242 = vunpack.c.h.b16 %v204
      %v243 = vunpack.c.l.b16 %v205
      %v244 = vunpack.c.h.b16 %v205
      %v245 = vpack.c.b16 %v239, %v237
      %v246 = vpack.c.b16 %v240, %v238
      %v247 = vpack.c.b16 %v243, %v241
      %v248 = vpack.c.b16 %v244, %v242
      %vm249 = vcmask 1046528
      %v250 = vrot.slane %v245, 1
      %v251 = vrot.slane %v247, 1
      %v252 = vsel %vm249, %v250, %v251
      %v253 = vrot.slane %v246, 1
      %v254 = vrot.slane %v248, 1
      %v255 = vsel %vm249, %v253, %v254
      %v284 = vunpack.c.l.b16 %v207
      %v285 = vunpack.c.h.b16 %v207
      %v286 = vunpack.c.l.b16 %v208
      %v287 = vunpack.c.h.b16 %v208
      %v288 = vunpack.c.l.b16 %v209
      %v289 = vunpack.c.h.b16 %v209
      %v290 = vunpack.c.l.b16 %v210
      %v291 = vunpack.c.h.b16 %v210
      %v292 = vunpack.c.l.b16 %v211
      %v293 = vunpack.c.h.b16 %v211
      %v294 = vunpack.c.l.b16 %v212
      %v295 = vunpack.c.h.b16 %v212
      %v296 = vunpack.c.l.b16 %v213
      %v297 = vunpack.c.h.b16 %v213
      %v298 = vunpack.c.l.b16 %v214
      %v299 = vunpack.c.h.b16 %v214
      %v300 = vunpack.c.l.b16 %v215
      %v301 = vunpack.c.h.b16 %v215
      %v302 = vunpack.c.l.b16 %v216
      %v303 = vunpack.c.h.b16 %v216
      %v304 = vunpack.c.l.b16 %v217
      %v305 = vunpack.c.h.b16 %v217
      %v306 = vunpack.c.l.b16 %v218
      %v307 = vunpack.c.h.b16 %v218
      %v308 = vunpack.c.l.b16 %v219
      %v309 = vunpack.c.h.b16 %v219
      %v310 = vunpack.c.l.b16 %v220
      %v311 = vunpack.c.h.b16 %v220
      %v312 = vunpack.c.l.b16 %v221
      %v313 = vunpack.c.h.b16 %v221
      %v314 = vunpack.c.l.b16 %v222
      %v315 = vunpack.c.h.b16 %v222
      %v316 = vunpack.c.l.b16 %v223
      %v317 = vunpack.c.h.b16 %v223
      %v318 = vunpack.c.l.b16 %v224
      %v319 = vunpack.c.h.b16 %v224
      %v320 = vunpack.c.l.b16 %v225
      %v321 = vunpack.c.h.b16 %v225
      %v322 = vunpack.c.l.b16 %v226
      %v323 = vunpack.c.h.b16 %v226
      %v324 = vunpack.c.l.b16 %v227
      %v325 = vunpack.c.h.b16 %v227
      %v326 = vunpack.c.l.b16 %v228
      %v327 = vunpack.c.h.b16 %v228
      %v328 = vunpack.c.l.b16 %v229
      %v329 = vunpack.c.h.b16 %v229
      %v330 = vunpack.c.l.b16 %v230
      %v331 = vunpack.c.h.b16 %v230
      %v332 = vunpack.c.l.b16 %v231
      %v333 = vunpack.c.h.b16 %v231
      %v334 = vunpack.c.l.b16 %v232
      %v335 = vunpack.c.h.b16 %v232
      %v336 = vpack.c.b16 %v286, %v284
      %v337 = vpack.c.b16 %v287, %v285
      %v338 = vpack.c.b16 %v290, %v288
      %v339 = vpack.c.b16 %v291, %v289
      %v340 = vpack.c.b16 %v294, %v292
      %v341 = vpack.c.b16 %v295, %v293
      %v342 = vpack.c.b16 %v298, %v296
      %v343 = vpack.c.b16 %v299, %v297
      %v344 = vpack.c.b16 %v302, %v300
      %v345 = vpack.c.b16 %v303, %v301
      %v346 = vpack.c.b16 %v306, %v304
      %v347 = vpack.c.b16 %v307, %v305
      %v348 = vpack.c.b16 %v310, %v308
      %v349 = vpack.c.b16 %v311, %v309
      %v350 = vpack.c.b16 %v314, %v312
      %v351 = vpack.c.b16 %v315, %v313
      %v352 = vpack.c.b16 %v318, %v316
      %v353 = vpack.c.b16 %v319, %v317
      %v354 = vpack.c.b16 %v322, %v320
      %v355 = vpack.c.b16 %v323, %v321
      %v356 = vpack.c.b16 %v326, %v324
      %v357 = vpack.c.b16 %v327, %v325
      %v358 = vpack.c.b16 %v330, %v328
      %v359 = vpack.c.b16 %v331, %v329
      %v360 = vpack.c.b16 %v334, %v332
      %v361 = vpack.c.b16 %v335, %v333
      %vm388 = vcmask 654336
      %v390 = vsel %vm388, %v255, 0
      %v393 = vsel %vm388, %v254, 0
      %395 = vmatprep.subr.bf16.mxu0 %v337
      %396 = vmatpush1.bf16.msra.mxu0 %v336
      %397 = vmatprep.subr.bf16.mxu0 %v339
      %398 = vmatpush1.bf16.msra.mxu0 %v338
      %399 = vmatprep.subr.bf16.mxu0 %v341
      %400 = vmatpush1.bf16.msra.mxu0 %v340
      %401 = vmatprep.subr.bf16.mxu0 %v343
      %402 = vmatpush1.bf16.msra.mxu0 %v342
      %403 = vmatprep.subr.bf16.mxu0 %v345
      %404 = vmatpush1.bf16.msra.mxu0 %v344
      %405 = vmatprep.subr.bf16.mxu0 %v347
      %406 = vmatpush1.bf16.msra.mxu0 %v346
      %407 = vmatprep.subr.bf16.mxu0 %v349
      %408 = vmatpush1.bf16.msra.mxu0 %v348
      %409 = vmatprep.subr.bf16.mxu0 %v351
      %410 = vmatpush1.bf16.msra.mxu0 %v350
      %411 = vmatprep.subr.bf16.mxu0 %v353
      %412 = vmatpush1.bf16.msra.mxu0 %v352
      %413 = vmatprep.subr.bf16.mxu0 %v355
      %414 = vmatpush1.bf16.msra.mxu0 %v354
      %415 = vmatprep.subr.bf16.mxu0 %v357
      %416 = vmatpush1.bf16.msra.mxu0 %v356
      %417 = vmatprep.subr.bf16.mxu0 %v359
      %418 = vmatpush1.bf16.msra.mxu0 %v358
      %419 = vmatprep.subr.bf16.mxu0 %v361
      %420 = vmatpush1.bf16.msra.mxu0 %v360
      %421 = vmatprep.subr.bf16.mxu0 0
      %422 = vmatpush1.bf16.msra.mxu0 0
      %423 = vmatprep.subr.bf16.mxu0 0
      %424 = vmatpush1.bf16.msra.mxu0 0
      %425 = vmatprep.subr.bf16.mxu0 0
      %426 = vmatpush1.bf16.msra.mxu0 0
      %427 = vmatprep.mubr.bf16.mxu0 %v390
      %428 = vmatmul.mubr.bf16.gmra.mrb[0].mxu0 %v252
      %v429 = vpop.f32.mrb[0].mxu0
      %v430 = vadd.f32 0.0, %v429
      %v431 = vpop.f32.mrb[0].mxu0
      %v432 = vadd.f32 0.0, %v431
      %v433 = vpop.f32.mrb[0].mxu0
      %v434 = vadd.f32 0.0, %v433
      %v435 = vpop.f32.mrb[0].mxu0
      %v436 = vadd.f32 0.0, %v435
      %437 = vmatprep.mubr.bf16.mxu0 %v393
      %438 = vmatmul.mubr.bf16.gmra.mrb[0].mxu0 %v251
      %v439 = vpop.f32.mrb[0].mxu0
      %v440 = vadd.f32 0.0, %v439
      %v441 = vpop.f32.mrb[0].mxu0
      %v442 = vadd.f32 0.0, %v441
      %v443 = vpop.f32.mrb[0].mxu0
      %v444 = vadd.f32 0.0, %v443
      %v445 = vpop.f32.mrb[0].mxu0
      %v446 = vadd.f32 0.0, %v445
      %447 = vdwg.mxu0
      %v452 = vunpack.c.l.b16 %v172
      %v453 = vunpack.c.h.b16 %v172
      %v454 = vunpack.c.l.b16 %v173
      %v455 = vunpack.c.h.b16 %v173
      %v456 = vunpack.c.l.b16 %v174
      %v457 = vunpack.c.h.b16 %v174
      %v458 = vunpack.c.l.b16 %v175
      %v459 = vunpack.c.h.b16 %v175
      %v460 = vpack.c.b16 %v454, %v452
      %v461 = vpack.c.b16 %v455, %v453
      %v462 = vpack.c.b16 %v458, %v456
      %v463 = vpack.c.b16 %v459, %v457
      %v492 = vunpack.c.l.b16 %v176
      %v493 = vunpack.c.h.b16 %v176
      %v494 = vunpack.c.l.b16 %v177
      %v495 = vunpack.c.h.b16 %v177
      %v496 = vunpack.c.l.b16 %v178
      %v497 = vunpack.c.h.b16 %v178
      %v498 = vunpack.c.l.b16 %v179
      %v499 = vunpack.c.h.b16 %v179
      %v500 = vunpack.c.l.b16 %v180
      %v501 = vunpack.c.h.b16 %v180
      %v502 = vunpack.c.l.b16 %v181
      %v503 = vunpack.c.h.b16 %v181
      %v504 = vunpack.c.l.b16 %v182
      %v505 = vunpack.c.h.b16 %v182
      %v506 = vunpack.c.l.b16 %v183
      %v507 = vunpack.c.h.b16 %v183
      %v508 = vunpack.c.l.b16 %v184
      %v509 = vunpack.c.h.b16 %v184
      %v510 = vunpack.c.l.b16 %v185
      %v511 = vunpack.c.h.b16 %v185
      %v512 = vunpack.c.l.b16 %v186
      %v513 = vunpack.c.h.b16 %v186
      %v514 = vunpack.c.l.b16 %v187
      %v515 = vunpack.c.h.b16 %v187
      %v516 = vunpack.c.l.b16 %v188
      %v517 = vunpack.c.h.b16 %v188
      %v518 = vunpack.c.l.b16 %v189
      %v519 = vunpack.c.h.b16 %v189
      %v520 = vunpack.c.l.b16 %v190
      %v521 = vunpack.c.h.b16 %v190
      %v522 = vunpack.c.l.b16 %v191
      %v523 = vunpack.c.h.b16 %v191
      %v524 = vunpack.c.l.b16 %v192
      %v525 = vunpack.c.h.b16 %v192
      %v526 = vunpack.c.l.b16 %v193
      %v527 = vunpack.c.h.b16 %v193
      %v528 = vunpack.c.l.b16 %v194
      %v529 = vunpack.c.h.b16 %v194
      %v530 = vunpack.c.l.b16 %v195
      %v531 = vunpack.c.h.b16 %v195
      %v532 = vunpack.c.l.b16 %v196
      %v533 = vunpack.c.h.b16 %v196
      %v534 = vunpack.c.l.b16 %v197
      %v535 = vunpack.c.h.b16 %v197
      %v536 = vunpack.c.l.b16 %v198
      %v537 = vunpack.c.h.b16 %v198
      %v538 = vunpack.c.l.b16 %v199
      %v539 = vunpack.c.h.b16 %v199
      %v540 = vunpack.c.l.b16 %v200
      %v541 = vunpack.c.h.b16 %v200
      %v542 = vunpack.c.l.b16 %v201
      %v543 = vunpack.c.h.b16 %v201
      %v544 = vpack.c.b16 %v494, %v492
      %v545 = vpack.c.b16 %v495, %v493
      %v546 = vpack.c.b16 %v498, %v496
      %v547 = vpack.c.b16 %v499, %v497
      %v548 = vpack.c.b16 %v502, %v500
      %v549 = vpack.c.b16 %v503, %v501
      %v550 = vpack.c.b16 %v506, %v504
      %v551 = vpack.c.b16 %v507, %v505
      %v552 = vpack.c.b16 %v510, %v508
      %v553 = vpack.c.b16 %v511, %v509
      %v554 = vpack.c.b16 %v514, %v512
      %v555 = vpack.c.b16 %v515, %v513
      %v556 = vpack.c.b16 %v518, %v516
      %v557 = vpack.c.b16 %v519, %v517
      %v558 = vpack.c.b16 %v522, %v520
      %v559 = vpack.c.b16 %v523, %v521
      %v560 = vpack.c.b16 %v526, %v524
      %v561 = vpack.c.b16 %v527, %v525
      %v562 = vpack.c.b16 %v530, %v528
      %v563 = vpack.c.b16 %v531, %v529
      %v564 = vpack.c.b16 %v534, %v532
      %v565 = vpack.c.b16 %v535, %v533
      %v566 = vpack.c.b16 %v538, %v536
      %v567 = vpack.c.b16 %v539, %v537
      %v568 = vpack.c.b16 %v542, %v540
      %v569 = vpack.c.b16 %v543, %v541
      %v597 = vsel %vm388, %v461, 0
      %v600 = vsel %vm388, %v463, 0
      %602 = vmatprep.subr.bf16.mxu0 %v545
      %603 = vmatpush1.bf16.msra.mxu0 %v544
      %604 = vmatprep.subr.bf16.mxu0 %v547
      %605 = vmatpush1.bf16.msra.mxu0 %v546
      %606 = vmatprep.subr.bf16.mxu0 %v549
      %607 = vmatpush1.bf16.msra.mxu0 %v548
      %608 = vmatprep.subr.bf16.mxu0 %v551
      %609 = vmatpush1.bf16.msra.mxu0 %v550
      %610 = vmatprep.subr.bf16.mxu0 %v553
      %611 = vmatpush1.bf16.msra.mxu0 %v552
      %612 = vmatprep.subr.bf16.mxu0 %v555
      %613 = vmatpush1.bf16.msra.mxu0 %v554
      %614 = vmatprep.subr.bf16.mxu0 %v557
      %615 = vmatpush1.bf16.msra.mxu0 %v556
      %616 = vmatprep.subr.bf16.mxu0 %v559
      %617 = vmatpush1.bf16.msra.mxu0 %v558
      %618 = vmatprep.subr.bf16.mxu0 %v561
      %619 = vmatpush1.bf16.msra.mxu0 %v560
      %620 = vmatprep.subr.bf16.mxu0 %v563
      %621 = vmatpush1.bf16.msra.mxu0 %v562
      %622 = vmatprep.subr.bf16.mxu0 %v565
      %623 = vmatpush1.bf16.msra.mxu0 %v564
      %624 = vmatprep.subr.bf16.mxu0 %v567
      %625 = vmatpush1.bf16.msra.mxu0 %v566
      %626 = vmatprep.subr.bf16.mxu0 %v569
      %627 = vmatpush1.bf16.msra.mxu0 %v568
      %628 = vmatprep.subr.bf16.mxu0 0
      %629 = vmatpush1.bf16.msra.mxu0 0
      %630 = vmatprep.subr.bf16.mxu0 0
      %631 = vmatpush1.bf16.msra.mxu0 0
      %632 = vmatprep.subr.bf16.mxu0 0
      %633 = vmatpush1.bf16.msra.mxu0 0
      %634 = vmatprep.mubr.bf16.mxu0 %v597
      %635 = vmatmul.mubr.bf16.gmra.mrb[0].mxu0 %v460
      %v636 = vpop.f32.mrb[0].mxu0
      %v637 = vadd.f32 %v430, %v636
      %v638 = vpop.f32.mrb[0].mxu0
      %v639 = vadd.f32 %v432, %v638
      %v640 = vpop.f32.mrb[0].mxu0
      %v641 = vadd.f32 %v434, %v640
      %v642 = vpop.f32.mrb[0].mxu0
      %v643 = vadd.f32 %v436, %v642
      %644 = vmatprep.mubr.bf16.mxu0 %v600
      %645 = vmatmul.mubr.bf16.gmra.mrb[0].mxu0 %v462
      %v646 = vpop.f32.mrb[0].mxu0
      %v647 = vadd.f32 %v440, %v646
      %v648 = vpop.f32.mrb[0].mxu0
      %v649 = vadd.f32 %v442, %v648
      %v650 = vpop.f32.mrb[0].mxu0
      %v651 = vadd.f32 %v444, %v650
      %v652 = vpop.f32.mrb[0].mxu0
      %v653 = vadd.f32 %v446, %v652
      %654 = vdwg.mxu0
      %s655 = scalar_lea.vmem %s1, 832
      %v656 = vld [vmem:[%s655] sm:$0xff]
      %v657 = vld [vmem:[%s655 + $0x8] sm:$0xff]
      %v658 = vld [vmem:[%s655 + $0x10] sm:$0xff]
      %v659 = vld [vmem:[%s655 + $0x18] sm:$0xff]
      %v660 = vld [vmem:[%s655 + $0x20] sm:$0xff]
      %v661 = vld [vmem:[%s655 + $0x28] sm:$0xff]
      %v662 = vld [vmem:[%s655 + $0x30] sm:$0xff]
      %v663 = vld [vmem:[%s655 + $0x38] sm:$0xff]
      %v664 = vld [vmem:[%s655 + $0x40] sm:$0xff]
      %v665 = vld [vmem:[%s655 + $0x48] sm:$0xff]
      %v666 = vld [vmem:[%s655 + $0x50] sm:$0xff]
      %v667 = vld [vmem:[%s655 + $0x58] sm:$0xff]
      %v668 = vld [vmem:[%s655 + $0x60] sm:$0xff]
      %v669 = vld [vmem:[%s655 + $0x68] sm:$0xff]
      %v670 = vld [vmem:[%s655 + $0x70] sm:$0xff]
      %v671 = vld [vmem:[%s655 + $0x78] sm:$0xff]
      %v672 = vld [vmem:[%s655 + $0x80] sm:$0xff]
      %v673 = vld [vmem:[%s655 + $0x88] sm:$0xff]
      %v674 = vld [vmem:[%s655 + $0x90] sm:$0xff]
      %v675 = vld [vmem:[%s655 + $0x98] sm:$0xff]
      %v676 = vld [vmem:[%s655 + $0xa0] sm:$0xff]
      %v677 = vld [vmem:[%s655 + $0xa8] sm:$0xff]
      %v678 = vld [vmem:[%s655 + $0xb0] sm:$0xff]
      %v679 = vld [vmem:[%s655 + $0xb8] sm:$0xff]
      %v680 = vld [vmem:[%s655 + $0xc0] sm:$0xff]
      %v681 = vld [vmem:[%s655 + $0xc8] sm:$0xff]
      %vm682 = vsmask.f32 7424
      %v684 = vshrl.u32 %v460, 16
      %v686 = vshll.u32 %v460, 16
      %v688 = vrot.slane %v686, 1
      %v689 = vor.u32 %v684, %v688
      %v691 = vshll.u32 %v462, 16
      %v693 = vrot.slane %v691, 1
      %v694 = vsel %vm682, %v689, %v693
      %v695 = vshrl.u32 %v461, 16
      %v697 = vshll.u32 %v461, 16
      %v699 = vrot.slane %v697, 1
      %v700 = vor.u32 %v695, %v699
      %v701 = vshll.u32 %v463, 16
      %v703 = vrot.slane %v701, 1
      %v704 = vsel %vm682, %v700, %v703
      %v705 = vshrl.u32 %v462, 16
      %v707 = vor.u32 %v705, %v693
      %v708 = vshrl.u32 %v463, 16
      %v710 = vor.u32 %v708, %v703
      %v739 = vunpack.c.l.b16 %v656
      %v740 = vunpack.c.h.b16 %v656
      %v741 = vunpack.c.l.b16 %v657
      %v742 = vunpack.c.h.b16 %v657
      %v743 = vunpack.c.l.b16 %v658
      %v744 = vunpack.c.h.b16 %v658
      %v745 = vunpack.c.l.b16 %v659
      %v746 = vunpack.c.h.b16 %v659
      %v747 = vunpack.c.l.b16 %v660
      %v748 = vunpack.c.h.b16 %v660
      %v749 = vunpack.c.l.b16 %v661
      %v750 = vunpack.c.h.b16 %v661
      %v751 = vunpack.c.l.b16 %v662
      %v752 = vunpack.c.h.b16 %v662
      %v753 = vunpack.c.l.b16 %v663
      %v754 = vunpack.c.h.b16 %v663
      %v755 = vunpack.c.l.b16 %v664
      %v756 = vunpack.c.h.b16 %v664
      %v757 = vunpack.c.l.b16 %v665
      %v758 = vunpack.c.h.b16 %v665
      %v759 = vunpack.c.l.b16 %v666
      %v760 = vunpack.c.h.b16 %v666
      %v761 = vunpack.c.l.b16 %v667
      %v762 = vunpack.c.h.b16 %v667
      %v763 = vunpack.c.l.b16 %v668
      %v764 = vunpack.c.h.b16 %v668
      %v765 = vunpack.c.l.b16 %v669
      %v766 = vunpack.c.h.b16 %v669
      %v767 = vunpack.c.l.b16 %v670
      %v768 = vunpack.c.h.b16 %v670
      %v769 = vunpack.c.l.b16 %v671
      %v770 = vunpack.c.h.b16 %v671
      %v771 = vunpack.c.l.b16 %v672
      %v772 = vunpack.c.h.b16 %v672
      %v773 = vunpack.c.l.b16 %v673
      %v774 = vunpack.c.h.b16 %v673
      %v775 = vunpack.c.l.b16 %v674
      %v776 = vunpack.c.h.b16 %v674
      %v777 = vunpack.c.l.b16 %v675
      %v778 = vunpack.c.h.b16 %v675
      %v779 = vunpack.c.l.b16 %v676
      %v780 = vunpack.c.h.b16 %v676
      %v781 = vunpack.c.l.b16 %v677
      %v782 = vunpack.c.h.b16 %v677
      %v783 = vunpack.c.l.b16 %v678
      %v784 = vunpack.c.h.b16 %v678
      %v785 = vunpack.c.l.b16 %v679
      %v786 = vunpack.c.h.b16 %v679
      %v787 = vunpack.c.l.b16 %v680
      %v788 = vunpack.c.h.b16 %v680
      %v789 = vunpack.c.l.b16 %v681
      %v790 = vunpack.c.h.b16 %v681
      %v791 = vpack.c.b16 %v741, %v739
      %v792 = vpack.c.b16 %v742, %v740
      %v793 = vpack.c.b16 %v745, %v743
      %v794 = vpack.c.b16 %v746, %v744
      %v795 = vpack.c.b16 %v749, %v747
      %v796 = vpack.c.b16 %v750, %v748
      %v797 = vpack.c.b16 %v753, %v751
      %v798 = vpack.c.b16 %v754, %v752
      %v799 = vpack.c.b16 %v757, %v755
      %v800 = vpack.c.b16 %v758, %v756
      %v801 = vpack.c.b16 %v761, %v759
      %v802 = vpack.c.b16 %v762, %v760
      %v803 = vpack.c.b16 %v765, %v763
      %v804 = vpack.c.b16 %v766, %v764
      %v805 = vpack.c.b16 %v769, %v767
      %v806 = vpack.c.b16 %v770, %v768
      %v807 = vpack.c.b16 %v773, %v771
      %v808 = vpack.c.b16 %v774, %v772
      %v809 = vpack.c.b16 %v777, %v775
      %v810 = vpack.c.b16 %v778, %v776
      %v811 = vpack.c.b16 %v781, %v779
      %v812 = vpack.c.b16 %v782, %v780
      %v813 = vpack.c.b16 %v785, %v783
      %v814 = vpack.c.b16 %v786, %v784
      %v815 = vpack.c.b16 %v789, %v787
      %v816 = vpack.c.b16 %v790, %v788
      %v844 = vsel %vm388, %v704, 0
      %v847 = vsel %vm388, %v710, 0
      %849 = vmatprep.subr.bf16.mxu0 %v792
      %850 = vmatpush1.bf16.msra.mxu0 %v791
      %851 = vmatprep.subr.bf16.mxu0 %v794
      %852 = vmatpush1.bf16.msra.mxu0 %v793
      %853 = vmatprep.subr.bf16.mxu0 %v796
      %854 = vmatpush1.bf16.msra.mxu0 %v795
      %855 = vmatprep.subr.bf16.mxu0 %v798
      %856 = vmatpush1.bf16.msra.mxu0 %v797
      %857 = vmatprep.subr.bf16.mxu0 %v800
      %858 = vmatpush1.bf16.msra.mxu0 %v799
      %859 = vmatprep.subr.bf16.mxu0 %v802
      %860 = vmatpush1.bf16.msra.mxu0 %v801
      %861 = vmatprep.subr.bf16.mxu0 %v804
      %862 = vmatpush1.bf16.msra.mxu0 %v803
      %863 = vmatprep.subr.bf16.mxu0 %v806
      %864 = vmatpush1.bf16.msra.mxu0 %v805
      %865 = vmatprep.subr.bf16.mxu0 %v808
      %866 = vmatpush1.bf16.msra.mxu0 %v807
      %867 = vmatprep.subr.bf16.mxu0 %v810
      %868 = vmatpush1.bf16.msra.mxu0 %v809
      %869 = vmatprep.subr.bf16.mxu0 %v812
      %870 = vmatpush1.bf16.msra.mxu0 %v811
      %871 = vmatprep.subr.bf16.mxu0 %v814
      %872 = vmatpush1.bf16.msra.mxu0 %v813
      %873 = vmatprep.subr.bf16.mxu0 %v816
      %874 = vmatpush1.bf16.msra.mxu0 %v815
      %875 = vmatprep.subr.bf16.mxu0 0
      %876 = vmatpush1.bf16.msra.mxu0 0
      %877 = vmatprep.subr.bf16.mxu0 0
      %878 = vmatpush1.bf16.msra.mxu0 0
      %879 = vmatprep.subr.bf16.mxu0 0
      %880 = vmatpush1.bf16.msra.mxu0 0
      %881 = vmatprep.mubr.bf16.mxu0 %v844
      %882 = vmatmul.mubr.bf16.gmra.mrb[0].mxu0 %v694
      %v883 = vpop.f32.mrb[0].mxu0
      %v884 = vadd.f32 0.0, %v883
      %v885 = vpop.f32.mrb[0].mxu0
      %v886 = vadd.f32 0.0, %v885
      %v887 = vpop.f32.mrb[0].mxu0
      %v888 = vadd.f32 0.0, %v887
      %v889 = vpop.f32.mrb[0].mxu0
      %v890 = vadd.f32 0.0, %v889
      %891 = vmatprep.mubr.bf16.mxu0 %v847
      %892 = vmatmul.mubr.bf16.gmra.mrb[0].mxu0 %v707
      %v893 = vpop.f32.mrb[0].mxu0
      %v894 = vadd.f32 0.0, %v893
      %v895 = vpop.f32.mrb[0].mxu0
      %v896 = vadd.f32 0.0, %v895
      %v897 = vpop.f32.mrb[0].mxu0
      %v898 = vadd.f32 0.0, %v897
      %v899 = vpop.f32.mrb[0].mxu0
      %v900 = vadd.f32 0.0, %v899
      %901 = vdwg.mxu0
      %v902 = vadd.f32 %v637, %v884
      %v903 = vadd.f32 %v639, %v886
      %v904 = vadd.f32 %v641, %v888
      %v905 = vadd.f32 %v643, %v890
      %v906 = vadd.f32 %v647, %v894
      %v907 = vadd.f32 %v649, %v896
      %v908 = vadd.f32 %v651, %v898
      %v909 = vadd.f32 %v653, %v900
      %s910 = scalar_lea.vmem %s1, 208
      %v911 = vld [vmem:[%s910] sm:$0xff]
      %v912 = vld [vmem:[%s910 + $0x8] sm:$0xff]
      %v913 = vld [vmem:[%s910 + $0x10] sm:$0xff]
      %v914 = vld [vmem:[%s910 + $0x18] sm:$0xff]
      %v915 = vld [vmem:[%s910 + $0x20] sm:$0xff]
      %v916 = vld [vmem:[%s910 + $0x28] sm:$0xff]
      %v917 = vld [vmem:[%s910 + $0x30] sm:$0xff]
      %v918 = vld [vmem:[%s910 + $0x38] sm:$0xff]
      %v919 = vld [vmem:[%s910 + $0x40] sm:$0xff]
      %v920 = vld [vmem:[%s910 + $0x48] sm:$0xff]
      %v921 = vld [vmem:[%s910 + $0x50] sm:$0xff]
      %v922 = vld [vmem:[%s910 + $0x58] sm:$0xff]
      %v923 = vld [vmem:[%s910 + $0x60] sm:$0xff]
      %v924 = vld [vmem:[%s910 + $0x68] sm:$0xff]
      %v925 = vld [vmem:[%s910 + $0x70] sm:$0xff]
      %v926 = vld [vmem:[%s910 + $0x78] sm:$0xff]
      %v927 = vld [vmem:[%s910 + $0x80] sm:$0xff]
      %v928 = vld [vmem:[%s910 + $0x88] sm:$0xff]
      %v929 = vld [vmem:[%s910 + $0x90] sm:$0xff]
      %v930 = vld [vmem:[%s910 + $0x98] sm:$0xff]
      %v931 = vld [vmem:[%s910 + $0xa0] sm:$0xff]
      %v932 = vld [vmem:[%s910 + $0xa8] sm:$0xff]
      %v933 = vld [vmem:[%s910 + $0xb0] sm:$0xff]
      %v934 = vld [vmem:[%s910 + $0xb8] sm:$0xff]
      %v935 = vld [vmem:[%s910 + $0xc0] sm:$0xff]
      %v936 = vld [vmem:[%s910 + $0xc8] sm:$0xff]
      %s937 = scalar_lea.vmem %s1, 624
      %v938 = vld [vmem:[%s937] sm:$0xff]
      %v939 = vld [vmem:[%s937 + $0x8] sm:$0xff]
      %v940 = vld [vmem:[%s937 + $0x10] sm:$0xff]
      %v941 = vld [vmem:[%s937 + $0x18] sm:$0xff]
      %v942 = vld [vmem:[%s937 + $0x20] sm:$0xff]
      %v943 = vld [vmem:[%s937 + $0x28] sm:$0xff]
      %v944 = vld [vmem:[%s937 + $0x30] sm:$0xff]
      %v945 = vld [vmem:[%s937 + $0x38] sm:$0xff]
      %v946 = vld [vmem:[%s937 + $0x40] sm:$0xff]
      %v947 = vld [vmem:[%s937 + $0x48] sm:$0xff]
      %v948 = vld [vmem:[%s937 + $0x50] sm:$0xff]
      %v949 = vld [vmem:[%s937 + $0x58] sm:$0xff]
      %v950 = vld [vmem:[%s937 + $0x60] sm:$0xff]
      %v951 = vld [vmem:[%s937 + $0x68] sm:$0xff]
      %v952 = vld [vmem:[%s937 + $0x70] sm:$0xff]
      %v953 = vld [vmem:[%s937 + $0x78] sm:$0xff]
      %v954 = vld [vmem:[%s937 + $0x80] sm:$0xff]
      %v955 = vld [vmem:[%s937 + $0x88] sm:$0xff]
      %v956 = vld [vmem:[%s937 + $0x90] sm:$0xff]
      %v957 = vld [vmem:[%s937 + $0x98] sm:$0xff]
      %v958 = vld [vmem:[%s937 + $0xa0] sm:$0xff]
      %v959 = vld [vmem:[%s937 + $0xa8] sm:$0xff]
      %v960 = vld [vmem:[%s937 + $0xb0] sm:$0xff]
      %v961 = vld [vmem:[%s937 + $0xb8] sm:$0xff]
      %v962 = vld [vmem:[%s937 + $0xc0] sm:$0xff]
      %v963 = vld [vmem:[%s937 + $0xc8] sm:$0xff]
      %v990 = vunpack.c.l.b16 %v938
      %v991 = vunpack.c.h.b16 %v938
      %v992 = vunpack.c.l.b16 %v939
      %v993 = vunpack.c.h.b16 %v939
      %v994 = vunpack.c.l.b16 %v940
      %v995 = vunpack.c.h.b16 %v940
      %v996 = vunpack.c.l.b16 %v941
      %v997 = vunpack.c.h.b16 %v941
      %v998 = vunpack.c.l.b16 %v942
      %v999 = vunpack.c.h.b16 %v942
      %v1000 = vunpack.c.l.b16 %v943
      %v1001 = vunpack.c.h.b16 %v943
      %v1002 = vunpack.c.l.b16 %v944
      %v1003 = vunpack.c.h.b16 %v944
      %v1004 = vunpack.c.l.b16 %v945
      %v1005 = vunpack.c.h.b16 %v945
      %v1006 = vunpack.c.l.b16 %v946
      %v1007 = vunpack.c.h.b16 %v946
      %v1008 = vunpack.c.l.b16 %v947
      %v1009 = vunpack.c.h.b16 %v947
      %v1010 = vunpack.c.l.b16 %v948
      %v1011 = vunpack.c.h.b16 %v948
      %v1012 = vunpack.c.l.b16 %v949
      %v1013 = vunpack.c.h.b16 %v949
      %v1014 = vunpack.c.l.b16 %v950
      %v1015 = vunpack.c.h.b16 %v950
      %v1016 = vunpack.c.l.b16 %v951
      %v1017 = vunpack.c.h.b16 %v951
      %v1018 = vunpack.c.l.b16 %v952
      %v1019 = vunpack.c.h.b16 %v952
      %v1020 = vunpack.c.l.b16 %v953
      %v1021 = vunpack.c.h.b16 %v953
      %v1022 = vunpack.c.l.b16 %v954
      %v1023 = vunpack.c.h.b16 %v954
      %v1024 = vunpack.c.l.b16 %v955
      %v1025 = vunpack.c.h.b16 %v955
      %v1026 = vunpack.c.l.b16 %v956
      %v1027 = vunpack.c.h.b16 %v956
      %v1028 = vunpack.c.l.b16 %v957
      %v1029 = vunpack.c.h.b16 %v957
      %v1030 = vunpack.c.l.b16 %v958
      %v1031 = vunpack.c.h.b16 %v958
      %v1032 = vunpack.c.l.b16 %v959
      %v1033 = vunpack.c.h.b16 %v959
      %v1034 = vunpack.c.l.b16 %v960
      %v1035 = vunpack.c.h.b16 %v960
      %v1036 = vunpack.c.l.b16 %v961
      %v1037 = vunpack.c.h.b16 %v961
      %v1038 = vunpack.c.l.b16 %v962
      %v1039 = vunpack.c.h.b16 %v962
      %v1040 = vunpack.c.l.b16 %v963
      %v1041 = vunpack.c.h.b16 %v963
      %v1042 = vpack.c.b16 %v992, %v990
      %v1043 = vpack.c.b16 %v993, %v991
      %v1044 = vpack.c.b16 %v996, %v994
      %v1045 = vpack.c.b16 %v997, %v995
      %v1046 = vpack.c.b16 %v1000, %v998
      %v1047 = vpack.c.b16 %v1001, %v999
      %v1048 = vpack.c.b16 %v1004, %v1002
      %v1049 = vpack.c.b16 %v1005, %v1003
      %v1050 = vpack.c.b16 %v1008, %v1006
      %v1051 = vpack.c.b16 %v1009, %v1007
      %v1052 = vpack.c.b16 %v1012, %v1010
      %v1053 = vpack.c.b16 %v1013, %v1011
      %v1054 = vpack.c.b16 %v1016, %v1014
      %v1055 = vpack.c.b16 %v1017, %v1015
      %v1056 = vpack.c.b16 %v1020, %v1018
      %v1057 = vpack.c.b16 %v1021, %v1019
      %v1058 = vpack.c.b16 %v1024, %v1022
      %v1059 = vpack.c.b16 %v1025, %v1023
      %v1060 = vpack.c.b16 %v1028, %v1026
      %v1061 = vpack.c.b16 %v1029, %v1027
      %v1062 = vpack.c.b16 %v1032, %v1030
      %v1063 = vpack.c.b16 %v1033, %v1031
      %v1064 = vpack.c.b16 %v1036, %v1034
      %v1065 = vpack.c.b16 %v1037, %v1035
      %v1066 = vpack.c.b16 %v1040, %v1038
      %v1067 = vpack.c.b16 %v1041, %v1039
      %1094 = vmatprep.subr.bf16.mxu0 %v1043
      %1095 = vmatpush1.bf16.msra.mxu0 %v1042
      %1096 = vmatprep.subr.bf16.mxu0 %v1045
      %1097 = vmatpush1.bf16.msra.mxu0 %v1044
      %1098 = vmatprep.subr.bf16.mxu0 %v1047
      %1099 = vmatpush1.bf16.msra.mxu0 %v1046
      %1100 = vmatprep.subr.bf16.mxu0 %v1049
      %1101 = vmatpush1.bf16.msra.mxu0 %v1048
      %1102 = vmatprep.subr.bf16.mxu0 %v1051
      %1103 = vmatpush1.bf16.msra.mxu0 %v1050
      %1104 = vmatprep.subr.bf16.mxu0 %v1053
      %1105 = vmatpush1.bf16.msra.mxu0 %v1052
      %1106 = vmatprep.subr.bf16.mxu0 %v1055
      %1107 = vmatpush1.bf16.msra.mxu0 %v1054
      %1108 = vmatprep.subr.bf16.mxu0 %v1057
      %1109 = vmatpush1.bf16.msra.mxu0 %v1056
      %1110 = vmatprep.subr.bf16.mxu0 %v1059
      %1111 = vmatpush1.bf16.msra.mxu0 %v1058
      %1112 = vmatprep.subr.bf16.mxu0 %v1061
      %1113 = vmatpush1.bf16.msra.mxu0 %v1060
      %1114 = vmatprep.subr.bf16.mxu0 %v1063
      %1115 = vmatpush1.bf16.msra.mxu0 %v1062
      %1116 = vmatprep.subr.bf16.mxu0 %v1065
      %1117 = vmatpush1.bf16.msra.mxu0 %v1064
      %1118 = vmatprep.subr.bf16.mxu0 %v1067
      %1119 = vmatpush1.bf16.msra.mxu0 %v1066
      %1120 = vmatprep.subr.bf16.mxu0 0
      %1121 = vmatpush1.bf16.msra.mxu0 0
      %1122 = vmatprep.subr.bf16.mxu0 0
      %1123 = vmatpush1.bf16.msra.mxu0 0
      %1124 = vmatprep.subr.bf16.mxu0 0
      %1125 = vmatpush1.bf16.msra.mxu0 0
      %1126 = vmatprep.mubr.bf16.mxu0 %v390
      %1127 = vmatmul.mubr.bf16.gmra.mrb[0].mxu0 %v252
      %v1128 = vpop.f32.mrb[0].mxu0
      %v1129 = vadd.f32 0.0, %v1128
      %v1130 = vpop.f32.mrb[0].mxu0
      %v1131 = vadd.f32 0.0, %v1130
      %v1132 = vpop.f32.mrb[0].mxu0
      %v1133 = vadd.f32 0.0, %v1132
      %v1134 = vpop.f32.mrb[0].mxu0
      %v1135 = vadd.f32 0.0, %v1134
      %1136 = vmatprep.mubr.bf16.mxu0 %v393
      %1137 = vmatmul.mubr.bf16.gmra.mrb[0].mxu0 %v251
      %v1138 = vpop.f32.mrb[0].mxu0
      %v1139 = vadd.f32 0.0, %v1138
      %v1140 = vpop.f32.mrb[0].mxu0
      %v1141 = vadd.f32 0.0, %v1140
      %v1142 = vpop.f32.mrb[0].mxu0
      %v1143 = vadd.f32 0.0, %v1142
      %v1144 = vpop.f32.mrb[0].mxu0
      %v1145 = vadd.f32 0.0, %v1144
      %1146 = vdwg.mxu0
      %v1173 = vunpack.c.l.b16 %v911
      %v1174 = vunpack.c.h.b16 %v911
      %v1175 = vunpack.c.l.b16 %v912
      %v1176 = vunpack.c.h.b16 %v912
      %v1177 = vunpack.c.l.b16 %v913
      %v1178 = vunpack.c.h.b16 %v913
      %v1179 = vunpack.c.l.b16 %v914
      %v1180 = vunpack.c.h.b16 %v914
      %v1181 = vunpack.c.l.b16 %v915
      %v1182 = vunpack.c.h.b16 %v915
      %v1183 = vunpack.c.l.b16 %v916
      %v1184 = vunpack.c.h.b16 %v916
      %v1185 = vunpack.c.l.b16 %v917
      %v1186 = vunpack.c.h.b16 %v917
      %v1187 = vunpack.c.l.b16 %v918
      %v1188 = vunpack.c.h.b16 %v918
      %v1189 = vunpack.c.l.b16 %v919
      %v1190 = vunpack.c.h.b16 %v919
      %v1191 = vunpack.c.l.b16 %v920
      %v1192 = vunpack.c.h.b16 %v920
      %v1193 = vunpack.c.l.b16 %v921
      %v1194 = vunpack.c.h.b16 %v921
      %v1195 = vunpack.c.l.b16 %v922
      %v1196 = vunpack.c.h.b16 %v922
      %v1197 = vunpack.c.l.b16 %v923
      %v1198 = vunpack.c.h.b16 %v923
      %v1199 = vunpack.c.l.b16 %v924
      %v1200 = vunpack.c.h.b16 %v924
      %v1201 = vunpack.c.l.b16 %v925
      %v1202 = vunpack.c.h.b16 %v925
      %v1203 = vunpack.c.l.b16 %v926
      %v1204 = vunpack.c.h.b16 %v926
      %v1205 = vunpack.c.l.b16 %v927
      %v1206 = vunpack.c.h.b16 %v927
      %v1207 = vunpack.c.l.b16 %v928
      %v1208 = vunpack.c.h.b16 %v928
      %v1209 = vunpack.c.l.b16 %v929
      %v1210 = vunpack.c.h.b16 %v929
      %v1211 = vunpack.c.l.b16 %v930
      %v1212 = vunpack.c.h.b16 %v930
      %v1213 = vunpack.c.l.b16 %v931
      %v1214 = vunpack.c.h.b16 %v931
      %v1215 = vunpack.c.l.b16 %v932
      %v1216 = vunpack.c.h.b16 %v932
      %v1217 = vunpack.c.l.b16 %v933
      %v1218 = vunpack.c.h.b16 %v933
      %v1219 = vunpack.c.l.b16 %v934
      %v1220 = vunpack.c.h.b16 %v934
      %v1221 = vunpack.c.l.b16 %v935
      %v1222 = vunpack.c.h.b16 %v935
      %v1223 = vunpack.c.l.b16 %v936
      %v1224 = vunpack.c.h.b16 %v936
      %v1225 = vpack.c.b16 %v1175, %v1173
      %v1226 = vpack.c.b16 %v1176, %v1174
      %v1227 = vpack.c.b16 %v1179, %v1177
      %v1228 = vpack.c.b16 %v1180, %v1178
      %v1229 = vpack.c.b16 %v1183, %v1181
      %v1230 = vpack.c.b16 %v1184, %v1182
      %v1231 = vpack.c.b16 %v1187, %v1185
      %v1232 = vpack.c.b16 %v1188, %v1186
      %v1233 = vpack.c.b16 %v1191, %v1189
      %v1234 = vpack.c.b16 %v1192, %v1190
      %v1235 = vpack.c.b16 %v1195, %v1193
      %v1236 = vpack.c.b16 %v1196, %v1194
      %v1237 = vpack.c.b16 %v1199, %v1197
      %v1238 = vpack.c.b16 %v1200, %v1198
      %v1239 = vpack.c.b16 %v1203, %v1201
      %v1240 = vpack.c.b16 %v1204, %v1202
      %v1241 = vpack.c.b16 %v1207, %v1205
      %v1242 = vpack.c.b16 %v1208, %v1206
      %v1243 = vpack.c.b16 %v1211, %v1209
      %v1244 = vpack.c.b16 %v1212, %v1210
      %v1245 = vpack.c.b16 %v1215, %v1213
      %v1246 = vpack.c.b16 %v1216, %v1214
      %v1247 = vpack.c.b16 %v1219, %v1217
      %v1248 = vpack.c.b16 %v1220, %v1218
      %v1249 = vpack.c.b16 %v1223, %v1221
      %v1250 = vpack.c.b16 %v1224, %v1222
      %1277 = vmatprep.subr.bf16.mxu0 %v1226
      %1278 = vmatpush1.bf16.msra.mxu0 %v1225
      %1279 = vmatprep.subr.bf16.mxu0 %v1228
      %1280 = vmatpush1.bf16.msra.mxu0 %v1227
      %1281 = vmatprep.subr.bf16.mxu0 %v1230
      %1282 = vmatpush1.bf16.msra.mxu0 %v1229
      %1283 = vmatprep.subr.bf16.mxu0 %v1232
      %1284 = vmatpush1.bf16.msra.mxu0 %v1231
      %1285 = vmatprep.subr.bf16.mxu0 %v1234
      %1286 = vmatpush1.bf16.msra.mxu0 %v1233
      %1287 = vmatprep.subr.bf16.mxu0 %v1236
      %1288 = vmatpush1.bf16.msra.mxu0 %v1235
      %1289 = vmatprep.subr.bf16.mxu0 %v1238
      %1290 = vmatpush1.bf16.msra.mxu0 %v1237
      %1291 = vmatprep.subr.bf16.mxu0 %v1240
      %1292 = vmatpush1.bf16.msra.mxu0 %v1239
      %1293 = vmatprep.subr.bf16.mxu0 %v1242
      %1294 = vmatpush1.bf16.msra.mxu0 %v1241
      %1295 = vmatprep.subr.bf16.mxu0 %v1244
      %1296 = vmatpush1.bf16.msra.mxu0 %v1243
      %1297 = vmatprep.subr.bf16.mxu0 %v1246
      %1298 = vmatpush1.bf16.msra.mxu0 %v1245
      %1299 = vmatprep.subr.bf16.mxu0 %v1248
      %1300 = vmatpush1.bf16.msra.mxu0 %v1247
      %1301 = vmatprep.subr.bf16.mxu0 %v1250
      %1302 = vmatpush1.bf16.msra.mxu0 %v1249
      %1303 = vmatprep.subr.bf16.mxu0 0
      %1304 = vmatpush1.bf16.msra.mxu0 0
      %1305 = vmatprep.subr.bf16.mxu0 0
      %1306 = vmatpush1.bf16.msra.mxu0 0
      %1307 = vmatprep.subr.bf16.mxu0 0
      %1308 = vmatpush1.bf16.msra.mxu0 0
      %1309 = vmatprep.mubr.bf16.mxu0 %v597
      %1310 = vmatmul.mubr.bf16.gmra.mrb[0].mxu0 %v460
      %v1311 = vpop.f32.mrb[0].mxu0
      %v1312 = vadd.f32 %v1129, %v1311
      %v1313 = vpop.f32.mrb[0].mxu0
      %v1314 = vadd.f32 %v1131, %v1313
      %v1315 = vpop.f32.mrb[0].mxu0
      %v1316 = vadd.f32 %v1133, %v1315
      %v1317 = vpop.f32.mrb[0].mxu0
      %v1318 = vadd.f32 %v1135, %v1317
      %1319 = vmatprep.mubr.bf16.mxu0 %v600
      %1320 = vmatmul.mubr.bf16.gmra.mrb[0].mxu0 %v462
      %v1321 = vpop.f32.mrb[0].mxu0
      %v1322 = vadd.f32 %v1139, %v1321
      %v1323 = vpop.f32.mrb[0].mxu0
      %v1324 = vadd.f32 %v1141, %v1323
      %v1325 = vpop.f32.mrb[0].mxu0
      %v1326 = vadd.f32 %v1143, %v1325
      %v1327 = vpop.f32.mrb[0].mxu0
      %v1328 = vadd.f32 %v1145, %v1327
      %1329 = vdwg.mxu0
      %s1330 = scalar_lea.vmem %s1, 1040
      %v1331 = vld [vmem:[%s1330] sm:$0xff]
      %v1332 = vld [vmem:[%s1330 + $0x8] sm:$0xff]
      %v1333 = vld [vmem:[%s1330 + $0x10] sm:$0xff]
      %v1334 = vld [vmem:[%s1330 + $0x18] sm:$0xff]
      %v1335 = vld [vmem:[%s1330 + $0x20] sm:$0xff]
      %v1336 = vld [vmem:[%s1330 + $0x28] sm:$0xff]
      %v1337 = vld [vmem:[%s1330 + $0x30] sm:$0xff]
      %v1338 = vld [vmem:[%s1330 + $0x38] sm:$0xff]
      %v1339 = vld [vmem:[%s1330 + $0x40] sm:$0xff]
      %v1340 = vld [vmem:[%s1330 + $0x48] sm:$0xff]
      %v1341 = vld [vmem:[%s1330 + $0x50] sm:$0xff]
      %v1342 = vld [vmem:[%s1330 + $0x58] sm:$0xff]
      %v1343 = vld [vmem:[%s1330 + $0x60] sm:$0xff]
      %v1344 = vld [vmem:[%s1330 + $0x68] sm:$0xff]
      %v1345 = vld [vmem:[%s1330 + $0x70] sm:$0xff]
      %v1346 = vld [vmem:[%s1330 + $0x78] sm:$0xff]
      %v1347 = vld [vmem:[%s1330 + $0x80] sm:$0xff]
      %v1348 = vld [vmem:[%s1330 + $0x88] sm:$0xff]
      %v1349 = vld [vmem:[%s1330 + $0x90] sm:$0xff]
      %v1350 = vld [vmem:[%s1330 + $0x98] sm:$0xff]
      %v1351 = vld [vmem:[%s1330 + $0xa0] sm:$0xff]
      %v1352 = vld [vmem:[%s1330 + $0xa8] sm:$0xff]
      %v1353 = vld [vmem:[%s1330 + $0xb0] sm:$0xff]
      %v1354 = vld [vmem:[%s1330 + $0xb8] sm:$0xff]
      %v1355 = vld [vmem:[%s1330 + $0xc0] sm:$0xff]
      %v1356 = vld [vmem:[%s1330 + $0xc8] sm:$0xff]
      %v1383 = vunpack.c.l.b16 %v1331
      %v1384 = vunpack.c.h.b16 %v1331
      %v1385 = vunpack.c.l.b16 %v1332
      %v1386 = vunpack.c.h.b16 %v1332
      %v1387 = vunpack.c.l.b16 %v1333
      %v1388 = vunpack.c.h.b16 %v1333
      %v1389 = vunpack.c.l.b16 %v1334
      %v1390 = vunpack.c.h.b16 %v1334
      %v1391 = vunpack.c.l.b16 %v1335
      %v1392 = vunpack.c.h.b16 %v1335
      %v1393 = vunpack.c.l.b16 %v1336
      %v1394 = vunpack.c.h.b16 %v1336
      %v1395 = vunpack.c.l.b16 %v1337
      %v1396 = vunpack.c.h.b16 %v1337
      %v1397 = vunpack.c.l.b16 %v1338
      %v1398 = vunpack.c.h.b16 %v1338
      %v1399 = vunpack.c.l.b16 %v1339
      %v1400 = vunpack.c.h.b16 %v1339
      %v1401 = vunpack.c.l.b16 %v1340
      %v1402 = vunpack.c.h.b16 %v1340
      %v1403 = vunpack.c.l.b16 %v1341
      %v1404 = vunpack.c.h.b16 %v1341
      %v1405 = vunpack.c.l.b16 %v1342
      %v1406 = vunpack.c.h.b16 %v1342
      %v1407 = vunpack.c.l.b16 %v1343
      %v1408 = vunpack.c.h.b16 %v1343
      %v1409 = vunpack.c.l.b16 %v1344
      %v1410 = vunpack.c.h.b16 %v1344
      %v1411 = vunpack.c.l.b16 %v1345
      %v1412 = vunpack.c.h.b16 %v1345
      %v1413 = vunpack.c.l.b16 %v1346
      %v1414 = vunpack.c.h.b16 %v1346
      %v1415 = vunpack.c.l.b16 %v1347
      %v1416 = vunpack.c.h.b16 %v1347
      %v1417 = vunpack.c.l.b16 %v1348
      %v1418 = vunpack.c.h.b16 %v1348
      %v1419 = vunpack.c.l.b16 %v1349
      %v1420 = vunpack.c.h.b16 %v1349
      %v1421 = vunpack.c.l.b16 %v1350
      %v1422 = vunpack.c.h.b16 %v1350
      %v1423 = vunpack.c.l.b16 %v1351
      %v1424 = vunpack.c.h.b16 %v1351
      %v1425 = vunpack.c.l.b16 %v1352
      %v1426 = vunpack.c.h.b16 %v1352
      %v1427 = vunpack.c.l.b16 %v1353
      %v1428 = vunpack.c.h.b16 %v1353
      %v1429 = vunpack.c.l.b16 %v1354
      %v1430 = vunpack.c.h.b16 %v1354
      %v1431 = vunpack.c.l.b16 %v1355
      %v1432 = vunpack.c.h.b16 %v1355
      %v1433 = vunpack.c.l.b16 %v1356
      %v1434 = vunpack.c.h.b16 %v1356
      %v1435 = vpack.c.b16 %v1385, %v1383
      %v1436 = vpack.c.b16 %v1386, %v1384
      %v1437 = vpack.c.b16 %v1389, %v1387
      %v1438 = vpack.c.b16 %v1390, %v1388
      %v1439 = vpack.c.b16 %v1393, %v1391
      %v1440 = vpack.c.b16 %v1394, %v1392
      %v1441 = vpack.c.b16 %v1397, %v1395
      %v1442 = vpack.c.b16 %v1398, %v1396
      %v1443 = vpack.c.b16 %v1401, %v1399
      %v1444 = vpack.c.b16 %v1402, %v1400
      %v1445 = vpack.c.b16 %v1405, %v1403
      %v1446 = vpack.c.b16 %v1406, %v1404
      %v1447 = vpack.c.b16 %v1409, %v1407
      %v1448 = vpack.c.b16 %v1410, %v1408
      %v1449 = vpack.c.b16 %v1413, %v1411
      %v1450 = vpack.c.b16 %v1414, %v1412
      %v1451 = vpack.c.b16 %v1417, %v1415
      %v1452 = vpack.c.b16 %v1418, %v1416
      %v1453 = vpack.c.b16 %v1421, %v1419
      %v1454 = vpack.c.b16 %v1422, %v1420
      %v1455 = vpack.c.b16 %v1425, %v1423
      %v1456 = vpack.c.b16 %v1426, %v1424
      %v1457 = vpack.c.b16 %v1429, %v1427
      %v1458 = vpack.c.b16 %v1430, %v1428
      %v1459 = vpack.c.b16 %v1433, %v1431
      %v1460 = vpack.c.b16 %v1434, %v1432
      %1487 = vmatprep.subr.bf16.mxu0 %v1436
      %1488 = vmatpush1.bf16.msra.mxu0 %v1435
      %1489 = vmatprep.subr.bf16.mxu0 %v1438
      %1490 = vmatpush1.bf16.msra.mxu0 %v1437
      %1491 = vmatprep.subr.bf16.mxu0 %v1440
      %1492 = vmatpush1.bf16.msra.mxu0 %v1439
      %1493 = vmatprep.subr.bf16.mxu0 %v1442
      %1494 = vmatpush1.bf16.msra.mxu0 %v1441
      %1495 = vmatprep.subr.bf16.mxu0 %v1444
      %1496 = vmatpush1.bf16.msra.mxu0 %v1443
      %1497 = vmatprep.subr.bf16.mxu0 %v1446
      %1498 = vmatpush1.bf16.msra.mxu0 %v1445
      %1499 = vmatprep.subr.bf16.mxu0 %v1448
      %1500 = vmatpush1.bf16.msra.mxu0 %v1447
      %1501 = vmatprep.subr.bf16.mxu0 %v1450
      %1502 = vmatpush1.bf16.msra.mxu0 %v1449
      %1503 = vmatprep.subr.bf16.mxu0 %v1452
      %1504 = vmatpush1.bf16.msra.mxu0 %v1451
      %1505 = vmatprep.subr.bf16.mxu0 %v1454
      %1506 = vmatpush1.bf16.msra.mxu0 %v1453
      %1507 = vmatprep.subr.bf16.mxu0 %v1456
      %1508 = vmatpush1.bf16.msra.mxu0 %v1455
      %1509 = vmatprep.subr.bf16.mxu0 %v1458
      %1510 = vmatpush1.bf16.msra.mxu0 %v1457
      %1511 = vmatprep.subr.bf16.mxu0 %v1460
      %1512 = vmatpush1.bf16.msra.mxu0 %v1459
      %1513 = vmatprep.subr.bf16.mxu0 0
      %1514 = vmatpush1.bf16.msra.mxu0 0
      %1515 = vmatprep.subr.bf16.mxu0 0
      %1516 = vmatpush1.bf16.msra.mxu0 0
      %1517 = vmatprep.subr.bf16.mxu0 0
      %1518 = vmatpush1.bf16.msra.mxu0 0
      %1519 = vmatprep.mubr.bf16.mxu0 %v844
      %1520 = vmatmul.mubr.bf16.gmra.mrb[0].mxu0 %v694
      %v1521 = vpop.f32.mrb[0].mxu0
      %v1522 = vadd.f32 0.0, %v1521
      %v1523 = vpop.f32.mrb[0].mxu0
      %v1524 = vadd.f32 0.0, %v1523
      %v1525 = vpop.f32.mrb[0].mxu0
      %v1526 = vadd.f32 0.0, %v1525
      %v1527 = vpop.f32.mrb[0].mxu0
      %v1528 = vadd.f32 0.0, %v1527
      %1529 = vmatprep.mubr.bf16.mxu0 %v847
      %1530 = vmatmul.mubr.bf16.gmra.mrb[0].mxu0 %v707
      %v1531 = vpop.f32.mrb[0].mxu0
      %v1532 = vadd.f32 0.0, %v1531
      %v1533 = vpop.f32.mrb[0].mxu0
      %v1534 = vadd.f32 0.0, %v1533
      %v1535 = vpop.f32.mrb[0].mxu0
      %v1536 = vadd.f32 0.0, %v1535
      %v1537 = vpop.f32.mrb[0].mxu0
      %v1538 = vadd.f32 0.0, %v1537
      %1539 = vdwg.mxu0
      %v1540 = vadd.f32 %v1312, %v1522
      %v1541 = vadd.f32 %v1314, %v1524
      %v1542 = vadd.f32 %v1316, %v1526
      %v1543 = vadd.f32 %v1318, %v1528
      %v1544 = vadd.f32 %v1322, %v1532
      %v1545 = vadd.f32 %v1324, %v1534
      %v1546 = vadd.f32 %v1326, %v1536
      %v1547 = vadd.f32 %v1328, %v1538
      %v1548 = vmax.f32 %v902, %v1540
      %v1549 = vmax.f32 %v903, %v1541
      %v1550 = vmax.f32 %v904, %v1542
      %v1551 = vmax.f32 %v905, %v1543
      %v1552 = vmax.f32 %v906, %v1544
      %v1553 = vmax.f32 %v907, %v1545
      %v1554 = vmax.f32 %v908, %v1546
      %v1555 = vmax.f32 %v909, %v1547
      %1556 = vmatprep.subr.bf16.mxu0 %v337
      %1557 = vmatpush1.bf16.msra.mxu0 %v336
      %1558 = vmatprep.subr.bf16.mxu0 %v339
      %1559 = vmatpush1.bf16.msra.mxu0 %v338
      %1560 = vmatprep.subr.bf16.mxu0 %v341
      %1561 = vmatpush1.bf16.msra.mxu0 %v340
      %1562 = vmatprep.subr.bf16.mxu0 %v343
      %1563 = vmatpush1.bf16.msra.mxu0 %v342
      %1564 = vmatprep.subr.bf16.mxu0 %v345
      %1565 = vmatpush1.bf16.msra.mxu0 %v344
      %1566 = vmatprep.subr.bf16.mxu0 %v347
      %1567 = vmatpush1.bf16.msra.mxu0 %v346
      %1568 = vmatprep.subr.bf16.mxu0 %v349
      %1569 = vmatpush1.bf16.msra.mxu0 %v348
      %1570 = vmatprep.subr.bf16.mxu0 %v351
      %1571 = vmatpush1.bf16.msra.mxu0 %v350
      %1572 = vmatprep.subr.bf16.mxu0 %v353
      %1573 = vmatpush1.bf16.msra.mxu0 %v352
      %1574 = vmatprep.subr.bf16.mxu0 %v355
      %1575 = vmatpush1.bf16.msra.mxu0 %v354
      %1576 = vmatprep.subr.bf16.mxu0 %v357
      %1577 = vmatpush1.bf16.msra.mxu0 %v356
      %1578 = vmatprep.subr.bf16.mxu0 %v359
      %1579 = vmatpush1.bf16.msra.mxu0 %v358
      %1580 = vmatprep.subr.bf16.mxu0 %v361
      %1581 = vmatpush1.bf16.msra.mxu0 %v360
      %1582 = vmatprep.subr.bf16.mxu0 0
      %1583 = vmatpush1.bf16.msra.mxu0 0
      %1584 = vmatprep.subr.bf16.mxu0 0
      %1585 = vmatpush1.bf16.msra.mxu0 0
      %1586 = vmatprep.subr.bf16.mxu0 0
      %1587 = vmatpush1.bf16.msra.mxu0 0
      %1588 = vmatprep.mubr.bf16.mxu0 %v844
      %1589 = vmatmul.mubr.bf16.gmra.mrb[0].mxu0 %v694
      %v1590 = vpop.f32.mrb[0].mxu0
      %v1591 = vadd.f32 0.0, %v1590
      %v1592 = vpop.f32.mrb[0].mxu0
      %v1593 = vadd.f32 0.0, %v1592
      %v1594 = vpop.f32.mrb[0].mxu0
      %v1595 = vadd.f32 0.0, %v1594
      %v1596 = vpop.f32.mrb[0].mxu0
      %v1597 = vadd.f32 0.0, %v1596
      %1598 = vmatprep.mubr.bf16.mxu0 %v847
      %1599 = vmatmul.mubr.bf16.gmra.mrb[0].mxu0 %v707
      %v1600 = vpop.f32.mrb[0].mxu0
      %v1601 = vadd.f32 0.0, %v1600
      %v1602 = vpop.f32.mrb[0].mxu0
      %v1603 = vadd.f32 0.0, %v1602
      %v1604 = vpop.f32.mrb[0].mxu0
      %v1605 = vadd.f32 0.0, %v1604
      %v1606 = vpop.f32.mrb[0].mxu0
      %v1607 = vadd.f32 0.0, %v1606
      %1608 = vdwg.mxu0
      %1609 = vmatprep.subr.bf16.mxu0 %v545
      %1610 = vmatpush1.bf16.msra.mxu0 %v544
      %1611 = vmatprep.subr.bf16.mxu0 %v547
      %1612 = vmatpush1.bf16.msra.mxu0 %v546
      %1613 = vmatprep.subr.bf16.mxu0 %v549
      %1614 = vmatpush1.bf16.msra.mxu0 %v548
      %1615 = vmatprep.subr.bf16.mxu0 %v551
      %1616 = vmatpush1.bf16.msra.mxu0 %v550
      %1617 = vmatprep.subr.bf16.mxu0 %v553
      %1618 = vmatpush1.bf16.msra.mxu0 %v552
      %1619 = vmatprep.subr.bf16.mxu0 %v555
      %1620 = vmatpush1.bf16.msra.mxu0 %v554
      %1621 = vmatprep.subr.bf16.mxu0 %v557
      %1622 = vmatpush1.bf16.msra.mxu0 %v556
      %1623 = vmatprep.subr.bf16.mxu0 %v559
      %1624 = vmatpush1.bf16.msra.mxu0 %v558
      %1625 = vmatprep.subr.bf16.mxu0 %v561
      %1626 = vmatpush1.bf16.msra.mxu0 %v560
      %1627 = vmatprep.subr.bf16.mxu0 %v563
      %1628 = vmatpush1.bf16.msra.mxu0 %v562
      %1629 = vmatprep.subr.bf16.mxu0 %v565
      %1630 = vmatpush1.bf16.msra.mxu0 %v564
      %1631 = vmatprep.subr.bf16.mxu0 %v567
      %1632 = vmatpush1.bf16.msra.mxu0 %v566
      %1633 = vmatprep.subr.bf16.mxu0 %v569
      %1634 = vmatpush1.bf16.msra.mxu0 %v568
      %1635 = vmatprep.subr.bf16.mxu0 0
      %1636 = vmatpush1.bf16.msra.mxu0 0
      %1637 = vmatprep.subr.bf16.mxu0 0
      %1638 = vmatpush1.bf16.msra.mxu0 0
      %1639 = vmatprep.subr.bf16.mxu0 0
      %1640 = vmatpush1.bf16.msra.mxu0 0
      %1641 = vmatprep.mubr.bf16.mxu0 %v390
      %1642 = vmatmul.mubr.bf16.gmra.mrb[0].mxu0 %v252
      %v1643 = vpop.f32.mrb[0].mxu0
      %v1644 = vadd.f32 %v1591, %v1643
      %v1645 = vpop.f32.mrb[0].mxu0
      %v1646 = vadd.f32 %v1593, %v1645
      %v1647 = vpop.f32.mrb[0].mxu0
      %v1648 = vadd.f32 %v1595, %v1647
      %v1649 = vpop.f32.mrb[0].mxu0
      %v1650 = vadd.f32 %v1597, %v1649
      %1651 = vmatprep.mubr.bf16.mxu0 %v393
      %1652 = vmatmul.mubr.bf16.gmra.mrb[0].mxu0 %v251
      %v1653 = vpop.f32.mrb[0].mxu0
      %v1654 = vadd.f32 %v1601, %v1653
      %v1655 = vpop.f32.mrb[0].mxu0
      %v1656 = vadd.f32 %v1603, %v1655
      %v1657 = vpop.f32.mrb[0].mxu0
      %v1658 = vadd.f32 %v1605, %v1657
      %v1659 = vpop.f32.mrb[0].mxu0
      %v1660 = vadd.f32 %v1607, %v1659
      %1661 = vdwg.mxu0
      %vm1662 = vsmask.f32 6400
      %v1664 = vshrl.u32 %v245, 16
      %v1666 = vrot.slane %v1664, 1
      %v1667 = vshll.u32 %v245, 16
      %v1669 = vrot.slane %v1667, 2
      %v1670 = vor.u32 %v1666, %v1669
      %v1672 = vshrl.u32 %v247, 16
      %v1674 = vrot.slane %v1672, 1
      %v1675 = vshll.u32 %v247, 16
      %v1677 = vrot.slane %v1675, 2
      %v1678 = vor.u32 %v1674, %v1677
      %v1679 = vsel %vm1662, %v1670, %v1678
      %v1681 = vshrl.u32 %v246, 16
      %v1683 = vrot.slane %v1681, 1
      %v1684 = vshll.u32 %v246, 16
      %v1686 = vrot.slane %v1684, 2
      %v1687 = vor.u32 %v1683, %v1686
      %v1689 = vshrl.u32 %v248, 16
      %v1691 = vrot.slane %v1689, 1
      %v1692 = vshll.u32 %v248, 16
      %v1694 = vrot.slane %v1692, 2
      %v1695 = vor.u32 %v1691, %v1694
      %v1696 = vsel %vm1662, %v1687, %v1695
      %v1700 = vsel %vm388, %v1696, 0
      %v1703 = vsel %vm388, %v1695, 0
      %1705 = vmatprep.subr.bf16.mxu0 %v792
      %1706 = vmatpush1.bf16.msra.mxu0 %v791
      %1707 = vmatprep.subr.bf16.mxu0 %v794
      %1708 = vmatpush1.bf16.msra.mxu0 %v793
      %1709 = vmatprep.subr.bf16.mxu0 %v796
      %1710 = vmatpush1.bf16.msra.mxu0 %v795
      %1711 = vmatprep.subr.bf16.mxu0 %v798
      %1712 = vmatpush1.bf16.msra.mxu0 %v797
      %1713 = vmatprep.subr.bf16.mxu0 %v800
      %1714 = vmatpush1.bf16.msra.mxu0 %v799
      %1715 = vmatprep.subr.bf16.mxu0 %v802
      %1716 = vmatpush1.bf16.msra.mxu0 %v801
      %1717 = vmatprep.subr.bf16.mxu0 %v804
      %1718 = vmatpush1.bf16.msra.mxu0 %v803
      %1719 = vmatprep.subr.bf16.mxu0 %v806
      %1720 = vmatpush1.bf16.msra.mxu0 %v805
      %1721 = vmatprep.subr.bf16.mxu0 %v808
      %1722 = vmatpush1.bf16.msra.mxu0 %v807
      %1723 = vmatprep.subr.bf16.mxu0 %v810
      %1724 = vmatpush1.bf16.msra.mxu0 %v809
      %1725 = vmatprep.subr.bf16.mxu0 %v812
      %1726 = vmatpush1.bf16.msra.mxu0 %v811
      %1727 = vmatprep.subr.bf16.mxu0 %v814
      %1728 = vmatpush1.bf16.msra.mxu0 %v813
      %1729 = vmatprep.subr.bf16.mxu0 %v816
      %1730 = vmatpush1.bf16.msra.mxu0 %v815
      %1731 = vmatprep.subr.bf16.mxu0 0
      %1732 = vmatpush1.bf16.msra.mxu0 0
      %1733 = vmatprep.subr.bf16.mxu0 0
      %1734 = vmatpush1.bf16.msra.mxu0 0
      %1735 = vmatprep.subr.bf16.mxu0 0
      %1736 = vmatpush1.bf16.msra.mxu0 0
      %1737 = vmatprep.mubr.bf16.mxu0 %v1700
      %1738 = vmatmul.mubr.bf16.gmra.mrb[0].mxu0 %v1679
      %v1739 = vpop.f32.mrb[0].mxu0
      %v1740 = vadd.f32 0.0, %v1739
      %v1741 = vpop.f32.mrb[0].mxu0
      %v1742 = vadd.f32 0.0, %v1741
      %v1743 = vpop.f32.mrb[0].mxu0
      %v1744 = vadd.f32 0.0, %v1743
      %v1745 = vpop.f32.mrb[0].mxu0
      %v1746 = vadd.f32 0.0, %v1745
      %1747 = vmatprep.mubr.bf16.mxu0 %v1703
      %1748 = vmatmul.mubr.bf16.gmra.mrb[0].mxu0 %v1678
      %v1749 = vpop.f32.mrb[0].mxu0
      %v1750 = vadd.f32 0.0, %v1749
      %v1751 = vpop.f32.mrb[0].mxu0
      %v1752 = vadd.f32 0.0, %v1751
      %v1753 = vpop.f32.mrb[0].mxu0
      %v1754 = vadd.f32 0.0, %v1753
      %v1755 = vpop.f32.mrb[0].mxu0
      %v1756 = vadd.f32 0.0, %v1755
      %1757 = vdwg.mxu0
      %v1758 = vadd.f32 %v1644, %v1740
      %v1759 = vadd.f32 %v1646, %v1742
      %v1760 = vadd.f32 %v1648, %v1744
      %v1761 = vadd.f32 %v1650, %v1746
      %v1762 = vadd.f32 %v1654, %v1750
      %v1763 = vadd.f32 %v1656, %v1752
      %v1764 = vadd.f32 %v1658, %v1754
      %v1765 = vadd.f32 %v1660, %v1756
      %v1766 = vmax.f32 %v1548, %v1758
      %v1767 = vmax.f32 %v1549, %v1759
      %v1768 = vmax.f32 %v1550, %v1760
      %v1769 = vmax.f32 %v1551, %v1761
      %v1770 = vmax.f32 %v1552, %v1762
      %v1771 = vmax.f32 %v1553, %v1763
      %v1772 = vmax.f32 %v1554, %v1764
      %v1773 = vmax.f32 %v1555, %v1765
      %1774 = vmatprep.subr.bf16.mxu0 %v1043
      %1775 = vmatpush1.bf16.msra.mxu0 %v1042
      %1776 = vmatprep.subr.bf16.mxu0 %v1045
      %1777 = vmatpush1.bf16.msra.mxu0 %v1044
      %1778 = vmatprep.subr.bf16.mxu0 %v1047
      %1779 = vmatpush1.bf16.msra.mxu0 %v1046
      %1780 = vmatprep.subr.bf16.mxu0 %v1049
      %1781 = vmatpush1.bf16.msra.mxu0 %v1048
      %1782 = vmatprep.subr.bf16.mxu0 %v1051
      %1783 = vmatpush1.bf16.msra.mxu0 %v1050
      %1784 = vmatprep.subr.bf16.mxu0 %v1053
      %1785 = vmatpush1.bf16.msra.mxu0 %v1052
      %1786 = vmatprep.subr.bf16.mxu0 %v1055
      %1787 = vmatpush1.bf16.msra.mxu0 %v1054
      %1788 = vmatprep.subr.bf16.mxu0 %v1057
      %1789 = vmatpush1.bf16.msra.mxu0 %v1056
      %1790 = vmatprep.subr.bf16.mxu0 %v1059
      %1791 = vmatpush1.bf16.msra.mxu0 %v1058
      %1792 = vmatprep.subr.bf16.mxu0 %v1061
      %1793 = vmatpush1.bf16.msra.mxu0 %v1060
      %1794 = vmatprep.subr.bf16.mxu0 %v1063
      %1795 = vmatpush1.bf16.msra.mxu0 %v1062
      %1796 = vmatprep.subr.bf16.mxu0 %v1065
      %1797 = vmatpush1.bf16.msra.mxu0 %v1064
      %1798 = vmatprep.subr.bf16.mxu0 %v1067
      %1799 = vmatpush1.bf16.msra.mxu0 %v1066
      %1800 = vmatprep.subr.bf16.mxu0 0
      %1801 = vmatpush1.bf16.msra.mxu0 0
      %1802 = vmatprep.subr.bf16.mxu0 0
      %1803 = vmatpush1.bf16.msra.mxu0 0
      %1804 = vmatprep.subr.bf16.mxu0 0
      %1805 = vmatpush1.bf16.msra.mxu0 0
      %1806 = vmatprep.mubr.bf16.mxu0 %v844
      %1807 = vmatmul.mubr.bf16.gmra.mrb[0].mxu0 %v694
      %v1808 = vpop.f32.mrb[0].mxu0
      %v1809 = vadd.f32 0.0, %v1808
      %v1810 = vpop.f32.mrb[0].mxu0
      %v1811 = vadd.f32 0.0, %v1810
      %v1812 = vpop.f32.mrb[0].mxu0
      %v1813 = vadd.f32 0.0, %v1812
      %v1814 = vpop.f32.mrb[0].mxu0
      %v1815 = vadd.f32 0.0, %v1814
      %1816 = vmatprep.mubr.bf16.mxu0 %v847
      %1817 = vmatmul.mubr.bf16.gmra.mrb[0].mxu0 %v707
      %v1818 = vpop.f32.mrb[0].mxu0
      %v1819 = vadd.f32 0.0, %v1818
      %v1820 = vpop.f32.mrb[0].mxu0
      %v1821 = vadd.f32 0.0, %v1820
      %v1822 = vpop.f32.mrb[0].mxu0
      %v1823 = vadd.f32 0.0, %v1822
      %v1824 = vpop.f32.mrb[0].mxu0
      %v1825 = vadd.f32 0.0, %v1824
      %1826 = vdwg.mxu0
      %1827 = vmatprep.subr.bf16.mxu0 %v1226
      %1828 = vmatpush1.bf16.msra.mxu0 %v1225
      %1829 = vmatprep.subr.bf16.mxu0 %v1228
      %1830 = vmatpush1.bf16.msra.mxu0 %v1227
      %1831 = vmatprep.subr.bf16.mxu0 %v1230
      %1832 = vmatpush1.bf16.msra.mxu0 %v1229
      %1833 = vmatprep.subr.bf16.mxu0 %v1232
      %1834 = vmatpush1.bf16.msra.mxu0 %v1231
      %1835 = vmatprep.subr.bf16.mxu0 %v1234
      %1836 = vmatpush1.bf16.msra.mxu0 %v1233
      %1837 = vmatprep.subr.bf16.mxu0 %v1236
      %1838 = vmatpush1.bf16.msra.mxu0 %v1235
      %1839 = vmatprep.subr.bf16.mxu0 %v1238
      %1840 = vmatpush1.bf16.msra.mxu0 %v1237
      %1841 = vmatprep.subr.bf16.mxu0 %v1240
      %1842 = vmatpush1.bf16.msra.mxu0 %v1239
      %1843 = vmatprep.subr.bf16.mxu0 %v1242
      %1844 = vmatpush1.bf16.msra.mxu0 %v1241
      %1845 = vmatprep.subr.bf16.mxu0 %v1244
      %1846 = vmatpush1.bf16.msra.mxu0 %v1243
      %1847 = vmatprep.subr.bf16.mxu0 %v1246
      %1848 = vmatpush1.bf16.msra.mxu0 %v1245
      %1849 = vmatprep.subr.bf16.mxu0 %v1248
      %1850 = vmatpush1.bf16.msra.mxu0 %v1247
      %1851 = vmatprep.subr.bf16.mxu0 %v1250
      %1852 = vmatpush1.bf16.msra.mxu0 %v1249
      %1853 = vmatprep.subr.bf16.mxu0 0
      %1854 = vmatpush1.bf16.msra.mxu0 0
      %1855 = vmatprep.subr.bf16.mxu0 0
      %1856 = vmatpush1.bf16.msra.mxu0 0
      %1857 = vmatprep.subr.bf16.mxu0 0
      %1858 = vmatpush1.bf16.msra.mxu0 0
      %1859 = vmatprep.mubr.bf16.mxu0 %v390
      %1860 = vmatmul.mubr.bf16.gmra.mrb[0].mxu0 %v252
      %v1861 = vpop.f32.mrb[0].mxu0
      %v1862 = vadd.f32 %v1809, %v1861
      %v1863 = vpop.f32.mrb[0].mxu0
      %v1864 = vadd.f32 %v1811, %v1863
      %v1865 = vpop.f32.mrb[0].mxu0
      %v1866 = vadd.f32 %v1813, %v1865
      %v1867 = vpop.f32.mrb[0].mxu0
      %v1868 = vadd.f32 %v1815, %v1867
      %1869 = vmatprep.mubr.bf16.mxu0 %v393
      %1870 = vmatmul.mubr.bf16.gmra.mrb[0].mxu0 %v251
      %v1871 = vpop.f32.mrb[0].mxu0
      %v1872 = vadd.f32 %v1819, %v1871
      %v1873 = vpop.f32.mrb[0].mxu0
      %v1874 = vadd.f32 %v1821, %v1873
      %v1875 = vpop.f32.mrb[0].mxu0
      %v1876 = vadd.f32 %v1823, %v1875
      %v1877 = vpop.f32.mrb[0].mxu0
      %v1878 = vadd.f32 %v1825, %v1877
      %1879 = vdwg.mxu0
      %1880 = vmatprep.subr.bf16.mxu0 %v1436
      %1881 = vmatpush1.bf16.msra.mxu0 %v1435
      %1882 = vmatprep.subr.bf16.mxu0 %v1438
      %1883 = vmatpush1.bf16.msra.mxu0 %v1437
      %1884 = vmatprep.subr.bf16.mxu0 %v1440
      %1885 = vmatpush1.bf16.msra.mxu0 %v1439
      %1886 = vmatprep.subr.bf16.mxu0 %v1442
      %1887 = vmatpush1.bf16.msra.mxu0 %v1441
      %1888 = vmatprep.subr.bf16.mxu0 %v1444
      %1889 = vmatpush1.bf16.msra.mxu0 %v1443
      %1890 = vmatprep.subr.bf16.mxu0 %v1446
      %1891 = vmatpush1.bf16.msra.mxu0 %v1445
      %1892 = vmatprep.subr.bf16.mxu0 %v1448
      %1893 = vmatpush1.bf16.msra.mxu0 %v1447
      %1894 = vmatprep.subr.bf16.mxu0 %v1450
      %1895 = vmatpush1.bf16.msra.mxu0 %v1449
      %1896 = vmatprep.subr.bf16.mxu0 %v1452
      %1897 = vmatpush1.bf16.msra.mxu0 %v1451
      %1898 = vmatprep.subr.bf16.mxu0 %v1454
      %1899 = vmatpush1.bf16.msra.mxu0 %v1453
      %1900 = vmatprep.subr.bf16.mxu0 %v1456
      %1901 = vmatpush1.bf16.msra.mxu0 %v1455
      %1902 = vmatprep.subr.bf16.mxu0 %v1458
      %1903 = vmatpush1.bf16.msra.mxu0 %v1457
      %1904 = vmatprep.subr.bf16.mxu0 %v1460
      %1905 = vmatpush1.bf16.msra.mxu0 %v1459
      %1906 = vmatprep.subr.bf16.mxu0 0
      %1907 = vmatpush1.bf16.msra.mxu0 0
      %1908 = vmatprep.subr.bf16.mxu0 0
      %1909 = vmatpush1.bf16.msra.mxu0 0
      %1910 = vmatprep.subr.bf16.mxu0 0
      %1911 = vmatpush1.bf16.msra.mxu0 0
      %1912 = vmatprep.mubr.bf16.mxu0 %v1700
      %1913 = vmatmul.mubr.bf16.gmra.mrb[0].mxu0 %v1679
      %v1914 = vpop.f32.mrb[0].mxu0
      %v1915 = vadd.f32 0.0, %v1914
      %v1916 = vpop.f32.mrb[0].mxu0
      %v1917 = vadd.f32 0.0, %v1916
      %v1918 = vpop.f32.mrb[0].mxu0
      %v1919 = vadd.f32 0.0, %v1918
      %v1920 = vpop.f32.mrb[0].mxu0
      %v1921 = vadd.f32 0.0, %v1920
      %1922 = vmatprep.mubr.bf16.mxu0 %v1703
      %1923 = vmatmul.mubr.bf16.gmra.mrb[0].mxu0 %v1678
      %v1924 = vpop.f32.mrb[0].mxu0
      %v1925 = vadd.f32 0.0, %v1924
      %v1926 = vpop.f32.mrb[0].mxu0
      %v1927 = vadd.f32 0.0, %v1926
      %v1928 = vpop.f32.mrb[0].mxu0
      %v1929 = vadd.f32 0.0, %v1928
      %v1930 = vpop.f32.mrb[0].mxu0
      %v1931 = vadd.f32 0.0, %v1930
      %1932 = vdwg.mxu0
      %v1933 = vadd.f32 %v1862, %v1915
      %v1934 = vadd.f32 %v1864, %v1917
      %v1935 = vadd.f32 %v1866, %v1919
      %v1936 = vadd.f32 %v1868, %v1921
      %v1937 = vadd.f32 %v1872, %v1925
      %v1938 = vadd.f32 %v1874, %v1927
      %v1939 = vadd.f32 %v1876, %v1929
      %v1940 = vadd.f32 %v1878, %v1931
      %v1941 = vmax.f32 %v1766, %v1933
      %v1942 = vmax.f32 %v1767, %v1934
      %v1943 = vmax.f32 %v1768, %v1935
      %v1944 = vmax.f32 %v1769, %v1936
      %v1945 = vmax.f32 %v1770, %v1937
      %v1946 = vmax.f32 %v1771, %v1938
      %v1947 = vmax.f32 %v1772, %v1939
      %v1948 = vmax.f32 %v1773, %v1940
      %v1949 = vld [vmem:[%s2] sm:$0x3]
      %v1951 = vlaneseq
      %v1952 = vshrl.u32 %v1951, 7
      %v1953 = vsub.s32 0, %v1952
      %v1954 = vrot.slane %v1949, %v1953
      %v1955 = vlaneseq
      %v1956 = vshrl.u32 %v1955, 7
      %v1957 = vsub.s32 1, %v1956
      %v1958 = vrot.slane %v1949, %v1957
      %v1961 = vadd.f32 %v1941, %v1954
      %v1962 = vadd.f32 %v1942, %v1958
      %v1963 = vadd.f32 %v1943, %v1954
      %v1964 = vadd.f32 %v1944, %v1958
      %v1965 = vadd.f32 %v1945, %v1954
      %v1966 = vadd.f32 %v1946, %v1958
      %v1967 = vadd.f32 %v1947, %v1954
      %v1968 = vadd.f32 %v1948, %v1958
      %v1969 = vmax.f32 %v1961, 0.0
      %v1970 = vmax.f32 %v1962, 0.0
      %v1971 = vmax.f32 %v1963, 0.0
      %v1972 = vmax.f32 %v1964, 0.0
      %v1973 = vmax.f32 %v1965, 0.0
      %v1974 = vmax.f32 %v1966, 0.0
      %v1975 = vmax.f32 %v1967, 0.0
      %v1976 = vmax.f32 %v1968, 0.0
      %v1977 = vpack.c.bf16 %v1971, %v1969
      %v1978 = vpack.c.bf16 %v1972, %v1970
      %v1979 = vpack.c.bf16 %v1975, %v1973
      %v1980 = vpack.c.bf16 %v1976, %v1974
      %v1985 = vunpack.c.l.b16 %v1977
      %v1986 = vunpack.c.l.b16 %v1978
      %v1987 = vunpack.c.h.b16 %v1977
      %v1988 = vunpack.c.h.b16 %v1978
      %v1989 = vunpack.c.l.b16 %v1979
      %v1990 = vunpack.c.l.b16 %v1980
      %v1991 = vunpack.c.h.b16 %v1979
      %v1992 = vunpack.c.h.b16 %v1980
      %v1993 = vpack.c.b16 %v1986, %v1985
      %v1994 = vpack.c.b16 %v1988, %v1987
      %v1995 = vpack.c.b16 %v1990, %v1989
      %v1996 = vpack.c.b16 %v1992, %v1991
      %vm2001 = vcmask 1043456
      %vm2002 = vcmask 588804
      %vm2003 = vmor %vm2002, %vm2001
      %2004 = vst.msk [vmem:[%s170] sm:$0xff] %vm2003, %v1993
      %2005 = vst.msk [vmem:[%s170 + $0x8] sm:$0xff] %vm2003, %v1994
      %2006 = vst.msk [vmem:[%s170 + $0x10] sm:$0xff] %vm2003, %v1995
      %vm2007 = vcmask 1040384
      %vm2008 = vsmask.f32 256
      %vm2009 = vmand %vm2007, %vm2008
      %vm2010 = vcmask 585732
      %vm2011 = vsmask.f32 4352
      %vm2012 = vmand %vm2010, %vm2011
      %vm2013 = vmor %vm2012, %vm2009
      %v2014 = vld [vmem:[%s170 + $0x18] sm:$0x11]
      %v2015 = vsel %vm2013, %v1996, %v2014
      %2016 = vst [vmem:[%s170 + $0x18] sm:$0x11] %v2015
      %p2017 = scmp.lt.s32.totalorder %s14, 1
      %s2018 = scalar_select %p2017, %s14, 1
      %s2019 = smul.addr %s2018, 8
      %s2020 = smul.addr %s2019, 4
      %s2021 = scalar_lea.vmem %s3, %s2020
      // Predicated region
      $region33: #{fnet_forward.4} parent=31 // pred_check
        %p2022 = pneg %p100
      $region34: #{fnet_forward.4} parent=31 // pred_check_branch
        %2024 = sbr.rel (%p2022) target = $region36
      $region35: #{fnet_forward.4} parent=31 // pred_region
        _
      $region36: #{fnet_forward.4} parent=31 // pred_fallthru
        _
    $region32: #{fnet_forward.4} parent=5 // pred_fallthru
      _
    %p2025 = scmp.le.s32.totalorder 2, %s9
    // Predicated region
    $region37: #{fnet_forward.4} parent=5 // pred_check
      %p2026 = pneg %p2025
    $region38: #{fnet_forward.4} parent=5 // pred_check_branch
      %2028 = sbr.rel (%p2026) target = $region40
    $region39: #{fnet_forward.4} parent=5 // pred_region
      %s2029 = ssub.s32 %s9, 2
      // Predicated region
      $region41: #{fnet_forward.4} parent=39 // pred_check
        %p2030 = pneg %p106
      $region42: #{fnet_forward.4} parent=39 // pred_check_branch
        %2032 = sbr.rel (%p2030) target = $region44
      $region43: #{fnet_forward.4} parent=39 // pred_region
        %p2033 = scmp.lt.s32.totalorder %s15, 1
        %s2034 = scalar_select %p2033, %s15, 1
        %s2035 = smul.addr %s2034, 8
        %s2036 = smul.addr %s2035, 4
        %s2037 = scalar_lea.vmem %s3, %s2036
      $region44: #{fnet_forward.4} parent=39 // pred_fallthru
        _
    $region40: #{fnet_forward.4} parent=5 // pred_fallthru
      _
  $region6: #{fnet_forward.4} parent=0 // loop_footer
    %s13 = sadd.s32 1, %s9
  $region7: #{fnet_forward.4} parent=0 // loop_footer_branch
    %8 = sbr.rel target = $region3
  $region8: #{fnet_forward.4} parent=0 // loop_exit
    _

// kernel: fnet_forward.3
$region0: #{fnet_forward.3}
  #allocation0 [shape = 'u32[]', space=smem, size = 0x4, offset = 0x4, fixed_abs, tag = 'smem constant byte address 0x4 - core index']
  #allocation1 [shape = 'u32[144,128]{1,0:T(1,128)}', space=vmem, size = 0x12000, scoped, tag = 'internal scratch']
  %s0 = inlined_call_operand.vmem [shape: bf16[2,102,306], index: 0, kind: input, shape index: {}]
  %s1 = inlined_call_operand.vmem [shape: bf16[6,306,200], index: 1, kind: input, shape index: {}]
  %s2 = inlined_call_operand.vmem [shape: f32[1,200], index: 2, kind: input, shape index: {}]
  %s3 = inlined_call_operand.vmem [shape: bf16[2,50,200], index: 3, kind: output, shape index: {}]
  %s4 = sld [smem:[#allocation0]]
  $region45: #{fnet_forward.3} parent=0
    _
  %s6 = ssub.s32 1, %s4
  %s7 = scalar_select 0, %s6, %s4
  loop: start=0, step=1, limit=4
  $region2: #{fnet_forward.3} parent=0 // loop_pre_header
    _
  $region3: #{fnet_forward.3} parent=0 // loop_header
    %s9 = sphi 0, %s13
    %p10 = scmp.ge.s32.totalorder %s9, 4
    %s19 = sphi 0, %s21
    %s22 = sphi 0, %s19
    %s23 = sphi 0, %s22
    %s39 = sphi 0, %s23
    %s43 = sphi 0, %s43
    %s45 = sphi 0, %s43
    %s46 = sphi 0, %s45
    %s60 = sphi 0, %s46
    %s64 = sphi 0, %s64
    %s66 = sphi 0, %s64
    %s67 = sphi 0, %s66
    %s81 = sphi 0, %s67
    %s87 = sphi 0, %s89
    %s90 = sphi 0, %s87
    %s91 = sphi 0, %s90
    %s107 = sphi 0, %s91
  $region4: #{fnet_forward.3} parent=0 // loop_header_branch
    %12 = sbr.rel (%p10) target = $region8
  $region5: #{fnet_forward.3} parent=0 // loop_body
    %s14 = ssub.s32 %s9, 1
    %s15 = ssub.s32 %s9, 2
    %s16 = sadd.s32 %s9, 1
    %s17 = ssub.s32 %s9, %s16
    %p18 = scmp.eq.s32.totalorder %s17, 0
    %s20 = sadd.s32 %s19, 1
    %s21 = scalar_select %p18, %s19, %s20
    %p24 = pneg %p18
    %p25 = scmp.eq.s32.totalorder %s9, 1
    %p26 = por %p24, %p25
    %p27 = scmp.ne.s32.totalorder %s19, %s22
    %p28 = scmp.eq.s32.totalorder %s9, 0
    %p29 = por %p27, %p28
    %p30 = scmp.ne.s32.totalorder %s19, %s22
    %p31 = scmp.eq.s32.totalorder %s14, 1
    %p32 = por %p30, %p31
    %p33 = scmp.ne.s32.totalorder %s22, %s23
    %p34 = scmp.eq.s32.totalorder %s14, 0
    %p35 = por %p33, %p34
    %p36 = scmp.ne.s32.totalorder %s22, %s23
    %p37 = scmp.eq.s32.totalorder %s15, 1
    %p38 = por %p36, %p37
    %p40 = scmp.ne.s32.totalorder %s23, %s39
    %p41 = scmp.eq.s32.totalorder %s15, 0
    %p42 = por %p40, %p41
    %s44 = sadd.s32 %s43, 1
    %p47 = scmp.eq.s32.totalorder %s9, 1
    %p48 = scmp.ne.s32.totalorder %s43, %s45
    %p49 = scmp.eq.s32.totalorder %s9, 0
    %p50 = por %p48, %p49
    %p51 = scmp.ne.s32.totalorder %s43, %s45
    %p52 = scmp.eq.s32.totalorder %s14, 1
    %p53 = por %p51, %p52
    %p54 = scmp.ne.s32.totalorder %s45, %s46
    %p55 = scmp.eq.s32.totalorder %s14, 0
    %p56 = por %p54, %p55
    %p57 = scmp.ne.s32.totalorder %s45, %s46
    %p58 = scmp.eq.s32.totalorder %s15, 1
    %p59 = por %p57, %p58
    %p61 = scmp.ne.s32.totalorder %s46, %s60
    %p62 = scmp.eq.s32.totalorder %s15, 0
    %p63 = por %p61, %p62
    %s65 = sadd.s32 %s64, 1
    %p68 = scmp.eq.s32.totalorder %s9, 1
    %p69 = scmp.ne.s32.totalorder %s64, %s66
    %p70 = scmp.eq.s32.totalorder %s9, 0
    %p71 = por %p69, %p70
    %p72 = scmp.ne.s32.totalorder %s64, %s66
    %p73 = scmp.eq.s32.totalorder %s14, 1
    %p74 = por %p72, %p73
    %p75 = scmp.ne.s32.totalorder %s66, %s67
    %p76 = scmp.eq.s32.totalorder %s14, 0
    %p77 = por %p75, %p76
    %p78 = scmp.ne.s32.totalorder %s66, %s67
    %p79 = scmp.eq.s32.totalorder %s15, 1
    %p80 = por %p78, %p79
    %p82 = scmp.ne.s32.totalorder %s67, %s81
    %p83 = scmp.eq.s32.totalorder %s15, 0
    %p84 = por %p82, %p83
    %s85 = ssub.s32 %s9, %s16
    %p86 = scmp.eq.s32.totalorder %s85, 0
    %s88 = sadd.s32 %s87, 1
    %s89 = scalar_select %p86, %s87, %s88
    %p92 = pneg %p86
    %p93 = scmp.eq.s32.totalorder %s9, 1
    %p94 = por %p92, %p93
    %p95 = scmp.ne.s32.totalorder %s87, %s90
    %p96 = scmp.eq.s32.totalorder %s9, 0
    %p97 = por %p95, %p96
    %p98 = scmp.ne.s32.totalorder %s87, %s90
    %p99 = scmp.eq.s32.totalorder %s14, 1
    %p100 = por %p98, %p99
    %p101 = scmp.ne.s32.totalorder %s90, %s91
    %p102 = scmp.eq.s32.totalorder %s14, 0
    %p103 = por %p101, %p102
    %p104 = scmp.ne.s32.totalorder %s90, %s91
    %p105 = scmp.eq.s32.totalorder %s15, 1
    %p106 = por %p104, %p105
    %p108 = scmp.ne.s32.totalorder %s91, %s107
    %p109 = scmp.eq.s32.totalorder %s15, 0
    %p110 = por %p108, %p109
    %p111 = scmp.le.s32.totalorder 1, %s9
    %p112 = scmp.lt.s32.totalorder %s9, 3
    %p113 = pnand %p111, %p112
    %p114 = pneg %p113
    // Predicated region
    $region9: #{fnet_forward.3} parent=5 // pred_check
      _
    $region10: #{fnet_forward.3} parent=5 // pred_check_branch
      %116 = sbr.rel (%p113) target = $region12
    $region11: #{fnet_forward.3} parent=5 // pred_region
      %s117 = ssub.s32 %s9, 1
      // Predicated region
      $region13: #{fnet_forward.3} parent=11 // pred_check
        %p118 = pneg %p56
      $region14: #{fnet_forward.3} parent=11 // pred_check_branch
        %120 = sbr.rel (%p118) target = $region16
      $region15: #{fnet_forward.3} parent=11 // pred_region
        _
      $region16: #{fnet_forward.3} parent=11 // pred_fallthru
        _
      // Predicated region
      $region17: #{fnet_forward.3} parent=11 // pred_check
        %p121 = pneg %p77
      $region18: #{fnet_forward.3} parent=11 // pred_check_branch
        %123 = sbr.rel (%p121) target = $region20
      $region19: #{fnet_forward.3} parent=11 // pred_region
        _
      $region20: #{fnet_forward.3} parent=11 // pred_fallthru
        _
    $region12: #{fnet_forward.3} parent=5 // pred_fallthru
      _
    %p124 = scmp.lt.s32.totalorder %s9, 2
    // Predicated region
    $region21: #{fnet_forward.3} parent=5 // pred_check
      %p125 = pneg %p124
    $region22: #{fnet_forward.3} parent=5 // pred_check_branch
      %127 = sbr.rel (%p125) target = $region24
    $region23: #{fnet_forward.3} parent=5 // pred_region
      // Predicated region
      $region25: #{fnet_forward.3} parent=23 // pred_check
        %p128 = pneg %p29
      $region26: #{fnet_forward.3} parent=23 // pred_check_branch
        %130 = sbr.rel (%p128) target = $region28
      $region27: #{fnet_forward.3} parent=23 // pred_region
        %p131 = scmp.lt.s32.totalorder %s9, 1
        %s132 = scalar_select %p131, %s9, 1
        %s133 = smul.addr %s132, 39
        %s134 = smul.addr %s133, 4
        %s135 = scalar_lea.vmem %s0, %s134
      $region28: #{fnet_forward.3} parent=23 // pred_fallthru
        _
    $region24: #{fnet_forward.3} parent=5 // pred_fallthru
      _
    %p136 = scmp.le.s32.totalorder 1, %s9
    %p137 = scmp.lt.s32.totalorder %s9, 3
    %p138 = pnand %p136, %p137
    %p139 = pneg %p138
    // Predicated region
    $region29: #{fnet_forward.3} parent=5 // pred_check
      _
    $region30: #{fnet_forward.3} parent=5 // pred_check_branch
      %141 = sbr.rel (%p138) target = $region32
    $region31: #{fnet_forward.3} parent=5 // pred_region
      %s142 = ssub.s32 %s9, 1
      %p143 = scmp.lt.s32.totalorder %s14, 1
      %s144 = scalar_select %p143, %s14, 1
      %s145 = smul.addr %s144, 39
      %s146 = smul.addr %s145, 4
      %s147 = scalar_lea.vmem %s0, %s146
      %p148 = pneg %p35
      %p149 = pneg %p32
      %p150 = pneg %p56
      %p151 = pneg %p53
      %p152 = pneg %p77
      %p153 = pneg %p74
      %p154 = pneg %p103
      %p155 = pneg %p100
      %p156 = scmp.lt.s32.totalorder %s14, 1
      %s157 = scalar_select %p156, %s14, 1
      %s158 = smul.addr %s157, 14
      %s159 = smul.addr %s158, 4
      %s160 = scalar_lea.vmem %s3, %s159
      %p161 = scmp.lt.s32.totalorder %s14, 1
      %s162 = scalar_select %p161, %s14, 1
      %s163 = smul.addr %s162, 39
      %s164 = smul.addr %s163, 4
      %s165 = scalar_lea.vmem %s0, %s164
      %p166 = scmp.lt.s32.totalorder %s14, 1
      %s167 = scalar_select %p166, %s14, 1
      %s168 = smul.addr %s167, 14
      %s169 = smul.addr %s168, 4
      %s170 = scalar_lea.vmem %s3, %s169
      %v172 = vld [vmem:[%s165] sm:$0xff]
      %v173 = vld [vmem:[%s165 + $0x8] sm:$0xf]
      %v174 = vld [vmem:[%s165 + $0xc] sm:$0xff]
      %v175 = vld [vmem:[%s165 + $0x14] sm:$0xf]
      %v176 = vld [vmem:[%s165 + $0x18] sm:$0xff]
      %v177 = vld [vmem:[%s165 + $0x20] sm:$0xf]
      %v178 = vld [vmem:[%s165 + $0x24] sm:$0xff]
      %v179 = vld [vmem:[%s165 + $0x2c] sm:$0xf]
      %v180 = vld [vmem:[%s165 + $0x30] sm:$0xff]
      %v181 = vld [vmem:[%s165 + $0x38] sm:$0xf]
      %v182 = vld [vmem:[%s165 + $0x3c] sm:$0xff]
      %v183 = vld [vmem:[%s165 + $0x44] sm:$0xf]
      %v184 = vld [vmem:[%s165 + $0x48] sm:$0x11]
      %v185 = vld [vmem:[%s165 + $0x50] sm:$0x1]
      %v186 = vld [vmem:[%s1] sm:$0xff]
      %v187 = vld [vmem:[%s1 + $0x8] sm:$0xff]
      %v188 = vld [vmem:[%s1 + $0x10] sm:$0xff]
      %v189 = vld [vmem:[%s1 + $0x18] sm:$0xff]
      %v190 = vld [vmem:[%s1 + $0x20] sm:$0xff]
      %v191 = vld [vmem:[%s1 + $0x28] sm:$0xff]
      %v192 = vld [vmem:[%s1 + $0x30] sm:$0xff]
      %v193 = vld [vmem:[%s1 + $0x38] sm:$0xff]
      %v194 = vld [vmem:[%s1 + $0x40] sm:$0xff]
      %v195 = vld [vmem:[%s1 + $0x48] sm:$0xff]
      %v196 = vld [vmem:[%s1 + $0x50] sm:$0xff]
      %v197 = vld [vmem:[%s1 + $0x58] sm:$0xff]
      %v198 = vld [vmem:[%s1 + $0x60] sm:$0xff]
      %v199 = vld [vmem:[%s1 + $0x68] sm:$0xff]
      %v200 = vld [vmem:[%s1 + $0x70] sm:$0xff]
      %v201 = vld [vmem:[%s1 + $0x78] sm:$0xff]
      %v202 = vld [vmem:[%s1 + $0x80] sm:$0xff]
      %v203 = vld [vmem:[%s1 + $0x88] sm:$0xff]
      %v204 = vld [vmem:[%s1 + $0x90] sm:$0xff]
      %v205 = vld [vmem:[%s1 + $0x98] sm:$0xff]
      %v206 = vld [vmem:[%s1 + $0xa0] sm:$0xff]
      %v207 = vld [vmem:[%s1 + $0xa8] sm:$0xff]
      %v208 = vld [vmem:[%s1 + $0xb0] sm:$0xff]
      %v209 = vld [vmem:[%s1 + $0xb8] sm:$0xff]
      %v210 = vld [vmem:[%s1 + $0xc0] sm:$0xff]
      %v211 = vld [vmem:[%s1 + $0xc8] sm:$0xff]
      %v212 = vld [vmem:[%s1 + $0xd0] sm:$0xff]
      %v213 = vld [vmem:[%s1 + $0xd8] sm:$0xff]
      %v214 = vld [vmem:[%s1 + $0xe0] sm:$0xff]
      %v215 = vld [vmem:[%s1 + $0xe8] sm:$0xff]
      %v216 = vld [vmem:[%s1 + $0xf0] sm:$0xff]
      %v217 = vld [vmem:[%s1 + $0xf8] sm:$0xff]
      %v218 = vld [vmem:[%s1 + $0x100] sm:$0xff]
      %v219 = vld [vmem:[%s1 + $0x108] sm:$0xff]
      %v220 = vld [vmem:[%s1 + $0x110] sm:$0xff]
      %v221 = vld [vmem:[%s1 + $0x118] sm:$0xff]
      %v222 = vld [vmem:[%s1 + $0x120] sm:$0xff]
      %v223 = vld [vmem:[%s1 + $0x128] sm:$0xff]
      %v224 = vld [vmem:[%s1 + $0x130] sm:$0x11]
      %v225 = vld [vmem:[%s165 + $0x48] sm:$0xee]
      %v226 = vld [vmem:[%s165 + $0x50] sm:$0xe]
      %v227 = vld [vmem:[%s165 + $0x54] sm:$0xff]
      %v228 = vld [vmem:[%s165 + $0x5c] sm:$0xf]
      %v229 = vld [vmem:[%s165 + $0x60] sm:$0xff]
      %v230 = vld [vmem:[%s165 + $0x68] sm:$0xf]
      %v231 = vld [vmem:[%s165 + $0x6c] sm:$0xff]
      %v232 = vld [vmem:[%s165 + $0x74] sm:$0xf]
      %v233 = vld [vmem:[%s165 + $0x78] sm:$0xff]
      %v234 = vld [vmem:[%s165 + $0x80] sm:$0xf]
      %v235 = vld [vmem:[%s165 + $0x84] sm:$0xff]
      %v236 = vld [vmem:[%s165 + $0x8c] sm:$0xf]
      %v237 = vld [vmem:[%s165 + $0x90] sm:$0x77]
      %v238 = vld [vmem:[%s165 + $0x98] sm:$0x7]
      %s239 = scalar_lea.vmem %s1, 624
      %v240 = vld [vmem:[%s239] sm:$0xff]
      %v241 = vld [vmem:[%s239 + $0x8] sm:$0xff]
      %v242 = vld [vmem:[%s239 + $0x10] sm:$0xff]
      %v243 = vld [vmem:[%s239 + $0x18] sm:$0xff]
      %v244 = vld [vmem:[%s239 + $0x20] sm:$0xff]
      %v245 = vld [vmem:[%s239 + $0x28] sm:$0xff]
      %v246 = vld [vmem:[%s239 + $0x30] sm:$0xff]
      %v247 = vld [vmem:[%s239 + $0x38] sm:$0xff]
      %v248 = vld [vmem:[%s239 + $0x40] sm:$0xff]
      %v249 = vld [vmem:[%s239 + $0x48] sm:$0xff]
      %v250 = vld [vmem:[%s239 + $0x50] sm:$0xff]
      %v251 = vld [vmem:[%s239 + $0x58] sm:$0xff]
      %v252 = vld [vmem:[%s239 + $0x60] sm:$0xff]
      %v253 = vld [vmem:[%s239 + $0x68] sm:$0xff]
      %v254 = vld [vmem:[%s239 + $0x70] sm:$0xff]
      %v255 = vld [vmem:[%s239 + $0x78] sm:$0xff]
      %v256 = vld [vmem:[%s239 + $0x80] sm:$0xff]
      %v257 = vld [vmem:[%s239 + $0x88] sm:$0xff]
      %v258 = vld [vmem:[%s239 + $0x90] sm:$0xff]
      %v259 = vld [vmem:[%s239 + $0x98] sm:$0xff]
      %v260 = vld [vmem:[%s239 + $0xa0] sm:$0xff]
      %v261 = vld [vmem:[%s239 + $0xa8] sm:$0xff]
      %v262 = vld [vmem:[%s239 + $0xb0] sm:$0xff]
      %v263 = vld [vmem:[%s239 + $0xb8] sm:$0xff]
      %v264 = vld [vmem:[%s239 + $0xc0] sm:$0xff]
      %v265 = vld [vmem:[%s239 + $0xc8] sm:$0xff]
      %v266 = vld [vmem:[%s239 + $0xd0] sm:$0xff]
      %v267 = vld [vmem:[%s239 + $0xd8] sm:$0xff]
      %v268 = vld [vmem:[%s239 + $0xe0] sm:$0xff]
      %v269 = vld [vmem:[%s239 + $0xe8] sm:$0xff]
      %v270 = vld [vmem:[%s239 + $0xf0] sm:$0xff]
      %v271 = vld [vmem:[%s239 + $0xf8] sm:$0xff]
      %v272 = vld [vmem:[%s239 + $0x100] sm:$0xff]
      %v273 = vld [vmem:[%s239 + $0x108] sm:$0xff]
      %v274 = vld [vmem:[%s239 + $0x110] sm:$0xff]
      %v275 = vld [vmem:[%s239 + $0x118] sm:$0xff]
      %v276 = vld [vmem:[%s239 + $0x120] sm:$0xff]
      %v277 = vld [vmem:[%s239 + $0x128] sm:$0xff]
      %v278 = vld [vmem:[%s239 + $0x130] sm:$0x11]
      %v293 = vunpack.c.l.b16 %v225
      %v294 = vunpack.c.h.b16 %v225
      %v295 = vunpack.c.l.b16 %v226
      %v296 = vunpack.c.l.b16 %v227
      %v297 = vunpack.c.h.b16 %v227
      %v298 = vunpack.c.l.b16 %v228
      %v299 = vunpack.c.l.b16 %v229
      %v300 = vunpack.c.h.b16 %v229
      %v301 = vunpack.c.l.b16 %v230
      %v302 = vunpack.c.l.b16 %v231
      %v303 = vunpack.c.h.b16 %v231
      %v304 = vunpack.c.l.b16 %v232
      %v305 = vunpack.c.l.b16 %v233
      %v306 = vunpack.c.h.b16 %v233
      %v307 = vunpack.c.l.b16 %v234
      %v308 = vunpack.c.l.b16 %v235
      %v309 = vunpack.c.h.b16 %v235
      %v310 = vunpack.c.l.b16 %v236
      %v311 = vunpack.c.l.b16 %v237
      %v312 = vunpack.c.h.b16 %v237
      %v313 = vunpack.c.l.b16 %v238
      %v314 = vpack.c.b16 %v296, %v293
      %v315 = vpack.c.b16 %v297, %v294
      %v316 = vpack.c.b16 %v298, %v295
      %v317 = vpack.c.b16 %v302, %v299
      %v318 = vpack.c.b16 %v303, %v300
      %v319 = vpack.c.b16 %v304, %v301
      %v320 = vpack.c.b16 %v308, %v305
      %v321 = vpack.c.b16 %v309, %v306
      %v322 = vpack.c.b16 %v310, %v307
      %v323 = vpack.c.b16 %v311, %v311
      %v324 = vpack.c.b16 %v312, %v312
      %v325 = vpack.c.b16 %v313, %v313
      %vm326 = vsmask.f32 6400
      %v328 = vshrl.u32 %v314, 16
      %v330 = vrot.slane %v328, 1
      %v331 = vshll.u32 %v314, 16
      %v333 = vrot.slane %v331, 2
      %v334 = vor.u32 %v330, %v333
      %v336 = vshrl.u32 %v317, 16
      %v338 = vrot.slane %v336, 1
      %v339 = vshll.u32 %v317, 16
      %v341 = vrot.slane %v339, 2
      %v342 = vor.u32 %v338, %v341
      %v343 = vsel %vm326, %v334, %v342
      %v345 = vshrl.u32 %v315, 16
      %v347 = vrot.slane %v345, 1
      %v348 = vshll.u32 %v315, 16
      %v350 = vrot.slane %v348, 2
      %v351 = vor.u32 %v347, %v350
      %v353 = vshrl.u32 %v318, 16
      %v355 = vrot.slane %v353, 1
      %v356 = vshll.u32 %v318, 16
      %v358 = vrot.slane %v356, 2
      %v359 = vor.u32 %v355, %v358
      %v360 = vsel %vm326, %v351, %v359
      %v362 = vshrl.u32 %v316, 16
      %v364 = vrot.slane %v362, 1
      %v365 = vshll.u32 %v316, 16
      %v367 = vrot.slane %v365, 2
      %v368 = vor.u32 %v364, %v367
      %v370 = vshrl.u32 %v319, 16
      %v372 = vrot.slane %v370, 1
      %v373 = vshll.u32 %v319, 16
      %v375 = vrot.slane %v373, 2
      %v376 = vor.u32 %v372, %v375
      %v377 = vsel %vm326, %v368, %v376
      %v379 = vshrl.u32 %v320, 16
      %v381 = vrot.slane %v379, 1
      %v382 = vshll.u32 %v320, 16
      %v384 = vrot.slane %v382, 2
      %v385 = vor.u32 %v381, %v384
      %v386 = vsel %vm326, %v342, %v385
      %v388 = vshrl.u32 %v321, 16
      %v390 = vrot.slane %v388, 1
      %v391 = vshll.u32 %v321, 16
      %v393 = vrot.slane %v391, 2
      %v394 = vor.u32 %v390, %v393
      %v395 = vsel %vm326, %v359, %v394
      %v397 = vshrl.u32 %v322, 16
      %v399 = vrot.slane %v397, 1
      %v400 = vshll.u32 %v322, 16
      %v402 = vrot.slane %v400, 2
      %v403 = vor.u32 %v399, %v402
      %v404 = vsel %vm326, %v376, %v403
      %v406 = vshrl.u32 %v323, 16
      %v408 = vrot.slane %v406, 1
      %v409 = vshll.u32 %v323, 16
      %v411 = vrot.slane %v409, 2
      %v412 = vor.u32 %v408, %v411
      %v413 = vsel %vm326, %v385, %v412
      %v415 = vshrl.u32 %v324, 16
      %v417 = vrot.slane %v415, 1
      %v418 = vshll.u32 %v324, 16
      %v420 = vrot.slane %v418, 2
      %v421 = vor.u32 %v417, %v420
      %v422 = vsel %vm326, %v394, %v421
      %v424 = vshrl.u32 %v325, 16
      %v426 = vrot.slane %v424, 1
      %v427 = vshll.u32 %v325, 16
      %v429 = vrot.slane %v427, 2
      %v430 = vor.u32 %v426, %v429
      %v431 = vsel %vm326, %v403, %v430
      %v479 = vunpack.c.l.b16 %v240
      %v480 = vunpack.c.h.b16 %v240
      %v481 = vunpack.c.l.b16 %v241
      %v482 = vunpack.c.h.b16 %v241
      %v483 = vunpack.c.l.b16 %v242
      %v484 = vunpack.c.h.b16 %v242
      %v485 = vunpack.c.l.b16 %v243
      %v486 = vunpack.c.h.b16 %v243
      %v487 = vunpack.c.l.b16 %v244
      %v488 = vunpack.c.h.b16 %v244
      %v489 = vunpack.c.l.b16 %v245
      %v490 = vunpack.c.h.b16 %v245
      %v491 = vunpack.c.l.b16 %v246
      %v492 = vunpack.c.h.b16 %v246
      %v493 = vunpack.c.l.b16 %v247
      %v494 = vunpack.c.h.b16 %v247
      %v495 = vunpack.c.l.b16 %v248
      %v496 = vunpack.c.h.b16 %v248
      %v497 = vunpack.c.l.b16 %v249
      %v498 = vunpack.c.h.b16 %v249
      %v499 = vunpack.c.l.b16 %v250
      %v500 = vunpack.c.h.b16 %v250
      %v501 = vunpack.c.l.b16 %v251
      %v502 = vunpack.c.h.b16 %v251
      %v503 = vunpack.c.l.b16 %v252
      %v504 = vunpack.c.h.b16 %v252
      %v505 = vunpack.c.l.b16 %v253
      %v506 = vunpack.c.h.b16 %v253
      %v507 = vunpack.c.l.b16 %v254
      %v508 = vunpack.c.h.b16 %v254
      %v509 = vunpack.c.l.b16 %v255
      %v510 = vunpack.c.h.b16 %v255
      %v511 = vunpack.c.l.b16 %v256
      %v512 = vunpack.c.h.b16 %v256
      %v513 = vunpack.c.l.b16 %v257
      %v514 = vunpack.c.h.b16 %v257
      %v515 = vunpack.c.l.b16 %v258
      %v516 = vunpack.c.h.b16 %v258
      %v517 = vunpack.c.l.b16 %v259
      %v518 = vunpack.c.h.b16 %v259
      %v519 = vunpack.c.l.b16 %v260
      %v520 = vunpack.c.h.b16 %v260
      %v521 = vunpack.c.l.b16 %v261
      %v522 = vunpack.c.h.b16 %v261
      %v523 = vunpack.c.l.b16 %v262
      %v524 = vunpack.c.h.b16 %v262
      %v525 = vunpack.c.l.b16 %v263
      %v526 = vunpack.c.h.b16 %v263
      %v527 = vunpack.c.l.b16 %v264
      %v528 = vunpack.c.h.b16 %v264
      %v529 = vunpack.c.l.b16 %v265
      %v530 = vunpack.c.h.b16 %v265
      %v531 = vunpack.c.l.b16 %v266
      %v532 = vunpack.c.h.b16 %v266
      %v533 = vunpack.c.l.b16 %v267
      %v534 = vunpack.c.h.b16 %v267
      %v535 = vunpack.c.l.b16 %v268
      %v536 = vunpack.c.h.b16 %v268
      %v537 = vunpack.c.l.b16 %v269
      %v538 = vunpack.c.h.b16 %v269
      %v539 = vunpack.c.l.b16 %v270
      %v540 = vunpack.c.h.b16 %v270
      %v541 = vunpack.c.l.b16 %v271
      %v542 = vunpack.c.h.b16 %v271
      %v543 = vunpack.c.l.b16 %v272
      %v544 = vunpack.c.h.b16 %v272
      %v545 = vunpack.c.l.b16 %v273
      %v546 = vunpack.c.h.b16 %v273
      %v547 = vunpack.c.l.b16 %v274
      %v548 = vunpack.c.h.b16 %v274
      %v549 = vunpack.c.l.b16 %v275
      %v550 = vunpack.c.h.b16 %v275
      %v551 = vunpack.c.l.b16 %v276
      %v552 = vunpack.c.h.b16 %v276
      %v553 = vunpack.c.l.b16 %v277
      %v554 = vunpack.c.h.b16 %v277
      %v555 = vunpack.c.l.b16 %v278
      %v556 = vunpack.c.h.b16 %v278
      %v557 = vpack.c.b16 %v481, %v479
      %v558 = vpack.c.b16 %v482, %v480
      %v559 = vpack.c.b16 %v485, %v483
      %v560 = vpack.c.b16 %v486, %v484
      %v561 = vpack.c.b16 %v489, %v487
      %v562 = vpack.c.b16 %v490, %v488
      %v563 = vpack.c.b16 %v493, %v491
      %v564 = vpack.c.b16 %v494, %v492
      %v565 = vpack.c.b16 %v497, %v495
      %v566 = vpack.c.b16 %v498, %v496
      %v567 = vpack.c.b16 %v501, %v499
      %v568 = vpack.c.b16 %v502, %v500
      %v569 = vpack.c.b16 %v505, %v503
      %v570 = vpack.c.b16 %v506, %v504
      %v571 = vpack.c.b16 %v509, %v507
      %v572 = vpack.c.b16 %v510, %v508
      %v573 = vpack.c.b16 %v513, %v511
      %v574 = vpack.c.b16 %v514, %v512
      %v575 = vpack.c.b16 %v517, %v515
      %v576 = vpack.c.b16 %v518, %v516
      %v577 = vpack.c.b16 %v521, %v519
      %v578 = vpack.c.b16 %v522, %v520
      %v579 = vpack.c.b16 %v525, %v523
      %v580 = vpack.c.b16 %v526, %v524
      %v581 = vpack.c.b16 %v529, %v527
      %v582 = vpack.c.b16 %v530, %v528
      %v583 = vpack.c.b16 %v533, %v531
      %v584 = vpack.c.b16 %v534, %v532
      %v585 = vpack.c.b16 %v537, %v535
      %v586 = vpack.c.b16 %v538, %v536
      %v587 = vpack.c.b16 %v541, %v539
      %v588 = vpack.c.b16 %v542, %v540
      %v589 = vpack.c.b16 %v545, %v543
      %v590 = vpack.c.b16 %v546, %v544
      %v591 = vpack.c.b16 %v549, %v547
      %v592 = vpack.c.b16 %v550, %v548
      %v593 = vpack.c.b16 %v553, %v551
      %v594 = vpack.c.b16 %v554, %v552
      %v595 = vpack.c.b16 %v555, %v555
      %v596 = vpack.c.b16 %v556, %v556
      %vm635 = vcmask 408576
      %v637 = vsel %vm635, %v377, 0
      %v640 = vsel %vm635, %v404, 0
      %v643 = vsel %vm635, %v431, 0
      %v646 = vsel %vm635, %v430, 0
      %vm648 = vcmask 1040384
      %v650 = vsel %vm648, %v595, 0
      %v653 = vsel %vm648, %v596, 0
      %655 = vmatprep.subr.bf16.mxu0 %v558
      %656 = vmatpush1.bf16.msra.mxu0 %v557
      %657 = vmatprep.subr.bf16.mxu0 %v560
      %658 = vmatpush1.bf16.msra.mxu0 %v559
      %659 = vmatprep.subr.bf16.mxu0 %v562
      %660 = vmatpush1.bf16.msra.mxu0 %v561
      %661 = vmatprep.subr.bf16.mxu0 %v564
      %662 = vmatpush1.bf16.msra.mxu0 %v563
      %663 = vmatprep.subr.bf16.mxu0 %v566
      %664 = vmatpush1.bf16.msra.mxu0 %v565
      %665 = vmatprep.subr.bf16.mxu0 %v568
      %666 = vmatpush1.bf16.msra.mxu0 %v567
      %667 = vmatprep.subr.bf16.mxu0 %v570
      %668 = vmatpush1.bf16.msra.mxu0 %v569
      %669 = vmatprep.subr.bf16.mxu0 %v572
      %670 = vmatpush1.bf16.msra.mxu0 %v571
      %671 = vmatprep.subr.bf16.mxu0 %v574
      %672 = vmatpush1.bf16.msra.mxu0 %v573
      %673 = vmatprep.subr.bf16.mxu0 %v576
      %674 = vmatpush1.bf16.msra.mxu0 %v575
      %675 = vmatprep.subr.bf16.mxu0 %v578
      %676 = vmatpush1.bf16.msra.mxu0 %v577
      %677 = vmatprep.subr.bf16.mxu0 %v580
      %678 = vmatpush1.bf16.msra.mxu0 %v579
      %679 = vmatprep.subr.bf16.mxu0 %v582
      %680 = vmatpush1.bf16.msra.mxu0 %v581
      %681 = vmatprep.subr.bf16.mxu0 %v584
      %682 = vmatpush1.bf16.msra.mxu0 %v583
      %683 = vmatprep.subr.bf16.mxu0 %v586
      %684 = vmatpush1.bf16.msra.mxu0 %v585
      %685 = vmatprep.subr.bf16.mxu0 %v588
      %686 = vmatpush1.bf16.msra.mxu0 %v587
      %687 = vmatprep.mubr.bf16.mxu0 %v360
      %688 = vmatmul.mubr.bf16.gmra.mrb[0].mxu0 %v343
      %v689 = vpop.f32.mrb[0].mxu0
      %v690 = vadd.f32 0.0, %v689
      %v691 = vpop.f32.mrb[0].mxu0
      %v692 = vadd.f32 0.0, %v691
      %v693 = vpop.f32.mrb[0].mxu0
      %v694 = vadd.f32 0.0, %v693
      %v695 = vpop.f32.mrb[0].mxu0
      %v696 = vadd.f32 0.0, %v695
      %697 = vmatprep.mubr.bf16.mxu0 %v395
      %698 = vmatmul.mubr.bf16.gmra.mrb[0].mxu0 %v386
      %v699 = vpop.f32.mrb[0].mxu0
      %v700 = vadd.f32 0.0, %v699
      %v701 = vpop.f32.mrb[0].mxu0
      %v702 = vadd.f32 0.0, %v701
      %v703 = vpop.f32.mrb[0].mxu0
      %v704 = vadd.f32 0.0, %v703
      %v705 = vpop.f32.mrb[0].mxu0
      %v706 = vadd.f32 0.0, %v705
      %707 = vmatprep.mubr.bf16.mxu0 %v422
      %708 = vmatmul.mubr.bf16.gmra.mrb[0].mxu0 %v413
      %v709 = vpop.f32.mrb[0].mxu0
      %v710 = vadd.f32 0.0, %v709
      %v711 = vpop.f32.mrb[0].mxu0
      %v712 = vadd.f32 0.0, %v711
      %v713 = vpop.f32.mrb[0].mxu0
      %v714 = vadd.f32 0.0, %v713
      %v715 = vpop.f32.mrb[0].mxu0
      %v716 = vadd.f32 0.0, %v715
      %717 = vmatprep.mubr.bf16.mxu0 %v421
      %718 = vmatmul.mubr.bf16.gmra.mrb[0].mxu0 %v412
      %v719 = vpop.f32.mrb[0].mxu0
      %v720 = vadd.f32 0.0, %v719
      %v721 = vpop.f32.mrb[0].mxu0
      %v722 = vadd.f32 0.0, %v721
      %v723 = vpop.f32.mrb[0].mxu0
      %v724 = vpop.f32.mrb[0].mxu0
      %725 = vdwg.mxu0
      %726 = vmatprep.subr.bf16.mxu0 %v590
      %727 = vmatpush1.bf16.msra.mxu0 %v589
      %728 = vmatprep.subr.bf16.mxu0 %v592
      %729 = vmatpush1.bf16.msra.mxu0 %v591
      %730 = vmatprep.subr.bf16.mxu0 %v594
      %731 = vmatpush1.bf16.msra.mxu0 %v593
      %732 = vmatprep.subr.bf16.mxu0 %v653
      %733 = vmatpush1.bf16.msra.mxu0 %v650
      %734 = vmatprep.subr.bf16.mxu0 0
      %735 = vmatpush1.bf16.msra.mxu0 0
      %736 = vmatprep.subr.bf16.mxu0 0
      %737 = vmatpush1.bf16.msra.mxu0 0
      %738 = vmatprep.subr.bf16.mxu0 0
      %739 = vmatpush1.bf16.msra.mxu0 0
      %740 = vmatprep.subr.bf16.mxu0 0
      %741 = vmatpush1.bf16.msra.mxu0 0
      %742 = vmatprep.subr.bf16.mxu0 0
      %743 = vmatpush1.bf16.msra.mxu0 0
      %744 = vmatprep.subr.bf16.mxu0 0
      %745 = vmatpush1.bf16.msra.mxu0 0
      %746 = vmatprep.subr.bf16.mxu0 0
      %747 = vmatpush1.bf16.msra.mxu0 0
      %748 = vmatprep.subr.bf16.mxu0 0
      %749 = vmatpush1.bf16.msra.mxu0 0
      %750 = vmatprep.subr.bf16.mxu0 0
      %751 = vmatpush1.bf16.msra.mxu0 0
      %752 = vmatprep.subr.bf16.mxu0 0
      %753 = vmatpush1.bf16.msra.mxu0 0
      %754 = vmatprep.subr.bf16.mxu0 0
      %755 = vmatpush1.bf16.msra.mxu0 0
      %756 = vmatprep.subr.bf16.mxu0 0
      %757 = vmatpush1.bf16.msra.mxu0 0
      %758 = vmatprep.mubr.bf16.mxu0 0
      %759 = vmatmul.mubr.bf16.gmra.mrb[0].mxu0 %v637
      %v760 = vpop.f32.mrb[0].mxu0
      %v761 = vadd.f32 %v690, %v760
      %v762 = vpop.f32.mrb[0].mxu0
      %v763 = vadd.f32 %v692, %v762
      %v764 = vpop.f32.mrb[0].mxu0
      %v765 = vadd.f32 %v694, %v764
      %v766 = vpop.f32.mrb[0].mxu0
      %v767 = vadd.f32 %v696, %v766
      %768 = vmatprep.mubr.bf16.mxu0 0
      %769 = vmatmul.mubr.bf16.gmra.mrb[0].mxu0 %v640
      %v770 = vpop.f32.mrb[0].mxu0
      %v771 = vadd.f32 %v700, %v770
      %v772 = vpop.f32.mrb[0].mxu0
      %v773 = vadd.f32 %v702, %v772
      %v774 = vpop.f32.mrb[0].mxu0
      %v775 = vadd.f32 %v704, %v774
      %v776 = vpop.f32.mrb[0].mxu0
      %v777 = vadd.f32 %v706, %v776
      %778 = vmatprep.mubr.bf16.mxu0 0
      %779 = vmatmul.mubr.bf16.gmra.mrb[0].mxu0 %v643
      %v780 = vpop.f32.mrb[0].mxu0
      %v781 = vadd.f32 %v710, %v780
      %v782 = vpop.f32.mrb[0].mxu0
      %v783 = vadd.f32 %v712, %v782
      %v784 = vpop.f32.mrb[0].mxu0
      %v785 = vadd.f32 %v714, %v784
      %v786 = vpop.f32.mrb[0].mxu0
      %v787 = vadd.f32 %v716, %v786
      %788 = vmatprep.mubr.bf16.mxu0 0
      %789 = vmatmul.mubr.bf16.gmra.mrb[0].mxu0 %v646
      %v790 = vpop.f32.mrb[0].mxu0
      %v791 = vadd.f32 %v720, %v790
      %v792 = vpop.f32.mrb[0].mxu0
      %v793 = vadd.f32 %v722, %v792
      %v794 = vpop.f32.mrb[0].mxu0
      %v795 = vpop.f32.mrb[0].mxu0
      %796 = vdwg.mxu0
      %v811 = vunpack.c.l.b16 %v172
      %v812 = vunpack.c.h.b16 %v172
      %v813 = vunpack.c.l.b16 %v173
      %v814 = vunpack.c.l.b16 %v174
      %v815 = vunpack.c.h.b16 %v174
      %v816 = vunpack.c.l.b16 %v175
      %v817 = vunpack.c.l.b16 %v176
      %v818 = vunpack.c.h.b16 %v176
      %v819 = vunpack.c.l.b16 %v177
      %v820 = vunpack.c.l.b16 %v178
      %v821 = vunpack.c.h.b16 %v178
      %v822 = vunpack.c.l.b16 %v179
      %v823 = vunpack.c.l.b16 %v180
      %v824 = vunpack.c.h.b16 %v180
      %v825 = vunpack.c.l.b16 %v181
      %v826 = vunpack.c.l.b16 %v182
      %v827 = vunpack.c.h.b16 %v182
      %v828 = vunpack.c.l.b16 %v183
      %v829 = vunpack.c.l.b16 %v184
      %v830 = vunpack.c.h.b16 %v184
      %v831 = vunpack.c.l.b16 %v185
      %v832 = vpack.c.b16 %v814, %v811
      %v833 = vpack.c.b16 %v815, %v812
      %v834 = vpack.c.b16 %v816, %v813
      %v835 = vpack.c.b16 %v820, %v817
      %v836 = vpack.c.b16 %v821, %v818
      %v837 = vpack.c.b16 %v822, %v819
      %v838 = vpack.c.b16 %v826, %v823
      %v839 = vpack.c.b16 %v827, %v824
      %v840 = vpack.c.b16 %v828, %v825
      %v841 = vpack.c.b16 %v829, %v829
      %v842 = vpack.c.b16 %v830, %v830
      %v843 = vpack.c.b16 %v831, %v831
      %v891 = vunpack.c.l.b16 %v186
      %v892 = vunpack.c.h.b16 %v186
      %v893 = vunpack.c.l.b16 %v187
      %v894 = vunpack.c.h.b16 %v187
      %v895 = vunpack.c.l.b16 %v188
      %v896 = vunpack.c.h.b16 %v188
      %v897 = vunpack.c.l.b16 %v189
      %v898 = vunpack.c.h.b16 %v189
      %v899 = vunpack.c.l.b16 %v190
      %v900 = vunpack.c.h.b16 %v190
      %v901 = vunpack.c.l.b16 %v191
      %v902 = vunpack.c.h.b16 %v191
      %v903 = vunpack.c.l.b16 %v192
      %v904 = vunpack.c.h.b16 %v192
      %v905 = vunpack.c.l.b16 %v193
      %v906 = vunpack.c.h.b16 %v193
      %v907 = vunpack.c.l.b16 %v194
      %v908 = vunpack.c.h.b16 %v194
      %v909 = vunpack.c.l.b16 %v195
      %v910 = vunpack.c.h.b16 %v195
      %v911 = vunpack.c.l.b16 %v196
      %v912 = vunpack.c.h.b16 %v196
      %v913 = vunpack.c.l.b16 %v197
      %v914 = vunpack.c.h.b16 %v197
      %v915 = vunpack.c.l.b16 %v198
      %v916 = vunpack.c.h.b16 %v198
      %v917 = vunpack.c.l.b16 %v199
      %v918 = vunpack.c.h.b16 %v199
      %v919 = vunpack.c.l.b16 %v200
      %v920 = vunpack.c.h.b16 %v200
      %v921 = vunpack.c.l.b16 %v201
      %v922 = vunpack.c.h.b16 %v201
      %v923 = vunpack.c.l.b16 %v202
      %v924 = vunpack.c.h.b16 %v202
      %v925 = vunpack.c.l.b16 %v203
      %v926 = vunpack.c.h.b16 %v203
      %v927 = vunpack.c.l.b16 %v204
      %v928 = vunpack.c.h.b16 %v204
      %v929 = vunpack.c.l.b16 %v205
      %v930 = vunpack.c.h.b16 %v205
      %v931 = vunpack.c.l.b16 %v206
      %v932 = vunpack.c.h.b16 %v206
      %v933 = vunpack.c.l.b16 %v207
      %v934 = vunpack.c.h.b16 %v207
      %v935 = vunpack.c.l.b16 %v208
      %v936 = vunpack.c.h.b16 %v208
      %v937 = vunpack.c.l.b16 %v209
      %v938 = vunpack.c.h.b16 %v209
      %v939 = vunpack.c.l.b16 %v210
      %v940 = vunpack.c.h.b16 %v210
      %v941 = vunpack.c.l.b16 %v211
      %v942 = vunpack.c.h.b16 %v211
      %v943 = vunpack.c.l.b16 %v212
      %v944 = vunpack.c.h.b16 %v212
      %v945 = vunpack.c.l.b16 %v213
      %v946 = vunpack.c.h.b16 %v213
      %v947 = vunpack.c.l.b16 %v214
      %v948 = vunpack.c.h.b16 %v214
      %v949 = vunpack.c.l.b16 %v215
      %v950 = vunpack.c.h.b16 %v215
      %v951 = vunpack.c.l.b16 %v216
      %v952 = vunpack.c.h.b16 %v216
      %v953 = vunpack.c.l.b16 %v217
      %v954 = vunpack.c.h.b16 %v217
      %v955 = vunpack.c.l.b16 %v218
      %v956 = vunpack.c.h.b16 %v218
      %v957 = vunpack.c.l.b16 %v219
      %v958 = vunpack.c.h.b16 %v219
      %v959 = vunpack.c.l.b16 %v220
      %v960 = vunpack.c.h.b16 %v220
      %v961 = vunpack.c.l.b16 %v221
      %v962 = vunpack.c.h.b16 %v221
      %v963 = vunpack.c.l.b16 %v222
      %v964 = vunpack.c.h.b16 %v222
      %v965 = vunpack.c.l.b16 %v223
      %v966 = vunpack.c.h.b16 %v223
      %v967 = vunpack.c.l.b16 %v224
      %v968 = vunpack.c.h.b16 %v224
      %v969 = vpack.c.b16 %v893, %v891
      %v970 = vpack.c.b16 %v894, %v892
      %v971 = vpack.c.b16 %v897, %v895
      %v972 = vpack.c.b16 %v898, %v896
      %v973 = vpack.c.b16 %v901, %v899
      %v974 = vpack.c.b16 %v902, %v900
      %v975 = vpack.c.b16 %v905, %v903
      %v976 = vpack.c.b16 %v906, %v904
      %v977 = vpack.c.b16 %v909, %v907
      %v978 = vpack.c.b16 %v910, %v908
      %v979 = vpack.c.b16 %v913, %v911
      %v980 = vpack.c.b16 %v914, %v912
      %v981 = vpack.c.b16 %v917, %v915
      %v982 = vpack.c.b16 %v918, %v916
      %v983 = vpack.c.b16 %v921, %v919
      %v984 = vpack.c.b16 %v922, %v920
      %v985 = vpack.c.b16 %v925, %v923
      %v986 = vpack.c.b16 %v926, %v924
      %v987 = vpack.c.b16 %v929, %v927
      %v988 = vpack.c.b16 %v930, %v928
      %v989 = vpack.c.b16 %v933, %v931
      %v990 = vpack.c.b16 %v934, %v932
      %v991 = vpack.c.b16 %v937, %v935
      %v992 = vpack.c.b16 %v938, %v936
      %v993 = vpack.c.b16 %v941, %v939
      %v994 = vpack.c.b16 %v942, %v940
      %v995 = vpack.c.b16 %v945, %v943
      %v996 = vpack.c.b16 %v946, %v944
      %v997 = vpack.c.b16 %v949, %v947
      %v998 = vpack.c.b16 %v950, %v948
      %v999 = vpack.c.b16 %v953, %v951
      %v1000 = vpack.c.b16 %v954, %v952
      %v1001 = vpack.c.b16 %v957, %v955
      %v1002 = vpack.c.b16 %v958, %v956
      %v1003 = vpack.c.b16 %v961, %v959
      %v1004 = vpack.c.b16 %v962, %v960
      %v1005 = vpack.c.b16 %v965, %v963
      %v1006 = vpack.c.b16 %v966, %v964
      %v1007 = vpack.c.b16 %v967, %v967
      %v1008 = vpack.c.b16 %v968, %v968
      %v1048 = vsel %vm635, %v834, 0
      %v1051 = vsel %vm635, %v837, 0
      %v1054 = vsel %vm635, %v840, 0
      %v1057 = vsel %vm635, %v843, 0
      %v1060 = vsel %vm648, %v1007, 0
      %v1063 = vsel %vm648, %v1008, 0
      %1065 = vmatprep.subr.bf16.mxu0 %v970
      %1066 = vmatpush1.bf16.msra.mxu0 %v969
      %1067 = vmatprep.subr.bf16.mxu0 %v972
      %1068 = vmatpush1.bf16.msra.mxu0 %v971
      %1069 = vmatprep.subr.bf16.mxu0 %v974
      %1070 = vmatpush1.bf16.msra.mxu0 %v973
      %1071 = vmatprep.subr.bf16.mxu0 %v976
      %1072 = vmatpush1.bf16.msra.mxu0 %v975
      %1073 = vmatprep.subr.bf16.mxu0 %v978
      %1074 = vmatpush1.bf16.msra.mxu0 %v977
      %1075 = vmatprep.subr.bf16.mxu0 %v980
      %1076 = vmatpush1.bf16.msra.mxu0 %v979
      %1077 = vmatprep.subr.bf16.mxu0 %v982
      %1078 = vmatpush1.bf16.msra.mxu0 %v981
      %1079 = vmatprep.subr.bf16.mxu0 %v984
      %1080 = vmatpush1.bf16.msra.mxu0 %v983
      %1081 = vmatprep.subr.bf16.mxu0 %v986
      %1082 = vmatpush1.bf16.msra.mxu0 %v985
      %1083 = vmatprep.subr.bf16.mxu0 %v988
      %1084 = vmatpush1.bf16.msra.mxu0 %v987
      %1085 = vmatprep.subr.bf16.mxu0 %v990
      %1086 = vmatpush1.bf16.msra.mxu0 %v989
      %1087 = vmatprep.subr.bf16.mxu0 %v992
      %1088 = vmatpush1.bf16.msra.mxu0 %v991
      %1089 = vmatprep.subr.bf16.mxu0 %v994
      %1090 = vmatpush1.bf16.msra.mxu0 %v993
      %1091 = vmatprep.subr.bf16.mxu0 %v996
      %1092 = vmatpush1.bf16.msra.mxu0 %v995
      %1093 = vmatprep.subr.bf16.mxu0 %v998
      %1094 = vmatpush1.bf16.msra.mxu0 %v997
      %1095 = vmatprep.subr.bf16.mxu0 %v1000
      %1096 = vmatpush1.bf16.msra.mxu0 %v999
      %1097 = vmatprep.mubr.bf16.mxu0 %v833
      %1098 = vmatmul.mubr.bf16.gmra.mrb[0].mxu0 %v832
      %v1099 = vpop.f32.mrb[0].mxu0
      %v1100 = vadd.f32 %v761, %v1099
      %v1101 = vpop.f32.mrb[0].mxu0
      %v1102 = vadd.f32 %v763, %v1101
      %v1103 = vpop.f32.mrb[0].mxu0
      %v1104 = vadd.f32 %v765, %v1103
      %v1105 = vpop.f32.mrb[0].mxu0
      %v1106 = vadd.f32 %v767, %v1105
      %1107 = vmatprep.mubr.bf16.mxu0 %v836
      %1108 = vmatmul.mubr.bf16.gmra.mrb[0].mxu0 %v835
      %v1109 = vpop.f32.mrb[0].mxu0
      %v1110 = vadd.f32 %v771, %v1109
      %v1111 = vpop.f32.mrb[0].mxu0
      %v1112 = vadd.f32 %v773, %v1111
      %v1113 = vpop.f32.mrb[0].mxu0
      %v1114 = vadd.f32 %v775, %v1113
      %v1115 = vpop.f32.mrb[0].mxu0
      %v1116 = vadd.f32 %v777, %v1115
      %1117 = vmatprep.mubr.bf16.mxu0 %v839
      %1118 = vmatmul.mubr.bf16.gmra.mrb[0].mxu0 %v838
      %v1119 = vpop.f32.mrb[0].mxu0
      %v1120 = vadd.f32 %v781, %v1119
      %v1121 = vpop.f32.mrb[0].mxu0
      %v1122 = vadd.f32 %v783, %v1121
      %v1123 = vpop.f32.mrb[0].mxu0
      %v1124 = vadd.f32 %v785, %v1123
      %v1125 = vpop.f32.mrb[0].mxu0
      %v1126 = vadd.f32 %v787, %v1125
      %1127 = vmatprep.mubr.bf16.mxu0 %v842
      %1128 = vmatmul.mubr.bf16.gmra.mrb[0].mxu0 %v841
      %v1129 = vpop.f32.mrb[0].mxu0
      %v1130 = vadd.f32 %v791, %v1129
      %v1131 = vpop.f32.mrb[0].mxu0
      %v1132 = vadd.f32 %v793, %v1131
      %v1133 = vpop.f32.mrb[0].mxu0
      %v1134 = vpop.f32.mrb[0].mxu0
      %1135 = vdwg.mxu0
      %1136 = vmatprep.subr.bf16.mxu0 %v1002
      %1137 = vmatpush1.bf16.msra.mxu0 %v1001
      %1138 = vmatprep.subr.bf16.mxu0 %v1004
      %1139 = vmatpush1.bf16.msra.mxu0 %v1003
      %1140 = vmatprep.subr.bf16.mxu0 %v1006
      %1141 = vmatpush1.bf16.msra.mxu0 %v1005
      %1142 = vmatprep.subr.bf16.mxu0 %v1063
      %1143 = vmatpush1.bf16.msra.mxu0 %v1060
      %1144 = vmatprep.subr.bf16.mxu0 0
      %1145 = vmatpush1.bf16.msra.mxu0 0
      %1146 = vmatprep.subr.bf16.mxu0 0
      %1147 = vmatpush1.bf16.msra.mxu0 0
      %1148 = vmatprep.subr.bf16.mxu0 0
      %1149 = vmatpush1.bf16.msra.mxu0 0
      %1150 = vmatprep.subr.bf16.mxu0 0
      %1151 = vmatpush1.bf16.msra.mxu0 0
      %1152 = vmatprep.subr.bf16.mxu0 0
      %1153 = vmatpush1.bf16.msra.mxu0 0
      %1154 = vmatprep.subr.bf16.mxu0 0
      %1155 = vmatpush1.bf16.msra.mxu0 0
      %1156 = vmatprep.subr.bf16.mxu0 0
      %1157 = vmatpush1.bf16.msra.mxu0 0
      %1158 = vmatprep.subr.bf16.mxu0 0
      %1159 = vmatpush1.bf16.msra.mxu0 0
      %1160 = vmatprep.subr.bf16.mxu0 0
      %1161 = vmatpush1.bf16.msra.mxu0 0
      %1162 = vmatprep.subr.bf16.mxu0 0
      %1163 = vmatpush1.bf16.msra.mxu0 0
      %1164 = vmatprep.subr.bf16.mxu0 0
      %1165 = vmatpush1.bf16.msra.mxu0 0
      %1166 = vmatprep.subr.bf16.mxu0 0
      %1167 = vmatpush1.bf16.msra.mxu0 0
      %1168 = vmatprep.mubr.bf16.mxu0 0
      %1169 = vmatmul.mubr.bf16.gmra.mrb[0].mxu0 %v1048
      %v1170 = vpop.f32.mrb[0].mxu0
      %v1171 = vadd.f32 %v1100, %v1170
      %v1172 = vpop.f32.mrb[0].mxu0
      %v1173 = vadd.f32 %v1102, %v1172
      %v1174 = vpop.f32.mrb[0].mxu0
      %v1175 = vadd.f32 %v1104, %v1174
      %v1176 = vpop.f32.mrb[0].mxu0
      %v1177 = vadd.f32 %v1106, %v1176
      %1178 = vmatprep.mubr.bf16.mxu0 0
      %1179 = vmatmul.mubr.bf16.gmra.mrb[0].mxu0 %v1051
      %v1180 = vpop.f32.mrb[0].mxu0
      %v1181 = vadd.f32 %v1110, %v1180
      %v1182 = vpop.f32.mrb[0].mxu0
      %v1183 = vadd.f32 %v1112, %v1182
      %v1184 = vpop.f32.mrb[0].mxu0
      %v1185 = vadd.f32 %v1114, %v1184
      %v1186 = vpop.f32.mrb[0].mxu0
      %v1187 = vadd.f32 %v1116, %v1186
      %1188 = vmatprep.mubr.bf16.mxu0 0
      %1189 = vmatmul.mubr.bf16.gmra.mrb[0].mxu0 %v1054
      %v1190 = vpop.f32.mrb[0].mxu0
      %v1191 = vadd.f32 %v1120, %v1190
      %v1192 = vpop.f32.mrb[0].mxu0
      %v1193 = vadd.f32 %v1122, %v1192
      %v1194 = vpop.f32.mrb[0].mxu0
      %v1195 = vadd.f32 %v1124, %v1194
      %v1196 = vpop.f32.mrb[0].mxu0
      %v1197 = vadd.f32 %v1126, %v1196
      %1198 = vmatprep.mubr.bf16.mxu0 0
      %1199 = vmatmul.mubr.bf16.gmra.mrb[0].mxu0 %v1057
      %v1200 = vpop.f32.mrb[0].mxu0
      %v1201 = vadd.f32 %v1130, %v1200
      %v1202 = vpop.f32.mrb[0].mxu0
      %v1203 = vadd.f32 %v1132, %v1202
      %v1204 = vpop.f32.mrb[0].mxu0
      %v1205 = vpop.f32.mrb[0].mxu0
      %1206 = vdwg.mxu0
      %v1207 = vld [vmem:[%s165 + $0x48] sm:$0x33]
      %v1208 = vld [vmem:[%s165 + $0x50] sm:$0x3]
      %s1209 = scalar_lea.vmem %s1, 1248
      %v1210 = vld [vmem:[%s1209] sm:$0xff]
      %v1211 = vld [vmem:[%s1209 + $0x8] sm:$0xff]
      %v1212 = vld [vmem:[%s1209 + $0x10] sm:$0xff]
      %v1213 = vld [vmem:[%s1209 + $0x18] sm:$0xff]
      %v1214 = vld [vmem:[%s1209 + $0x20] sm:$0xff]
      %v1215 = vld [vmem:[%s1209 + $0x28] sm:$0xff]
      %v1216 = vld [vmem:[%s1209 + $0x30] sm:$0xff]
      %v1217 = vld [vmem:[%s1209 + $0x38] sm:$0xff]
      %v1218 = vld [vmem:[%s1209 + $0x40] sm:$0xff]
      %v1219 = vld [vmem:[%s1209 + $0x48] sm:$0xff]
      %v1220 = vld [vmem:[%s1209 + $0x50] sm:$0xff]
      %v1221 = vld [vmem:[%s1209 + $0x58] sm:$0xff]
      %v1222 = vld [vmem:[%s1209 + $0x60] sm:$0xff]
      %v1223 = vld [vmem:[%s1209 + $0x68] sm:$0xff]
      %v1224 = vld [vmem:[%s1209 + $0x70] sm:$0xff]
      %v1225 = vld [vmem:[%s1209 + $0x78] sm:$0xff]
      %v1226 = vld [vmem:[%s1209 + $0x80] sm:$0xff]
      %v1227 = vld [vmem:[%s1209 + $0x88] sm:$0xff]
      %v1228 = vld [vmem:[%s1209 + $0x90] sm:$0xff]
      %v1229 = vld [vmem:[%s1209 + $0x98] sm:$0xff]
      %v1230 = vld [vmem:[%s1209 + $0xa0] sm:$0xff]
      %v1231 = vld [vmem:[%s1209 + $0xa8] sm:$0xff]
      %v1232 = vld [vmem:[%s1209 + $0xb0] sm:$0xff]
      %v1233 = vld [vmem:[%s1209 + $0xb8] sm:$0xff]
      %v1234 = vld [vmem:[%s1209 + $0xc0] sm:$0xff]
      %v1235 = vld [vmem:[%s1209 + $0xc8] sm:$0xff]
      %v1236 = vld [vmem:[%s1209 + $0xd0] sm:$0xff]
      %v1237 = vld [vmem:[%s1209 + $0xd8] sm:$0xff]
      %v1238 = vld [vmem:[%s1209 + $0xe0] sm:$0xff]
      %v1239 = vld [vmem:[%s1209 + $0xe8] sm:$0xff]
      %v1240 = vld [vmem:[%s1209 + $0xf0] sm:$0xff]
      %v1241 = vld [vmem:[%s1209 + $0xf8] sm:$0xff]
      %v1242 = vld [vmem:[%s1209 + $0x100] sm:$0xff]
      %v1243 = vld [vmem:[%s1209 + $0x108] sm:$0xff]
      %v1244 = vld [vmem:[%s1209 + $0x110] sm:$0xff]
      %v1245 = vld [vmem:[%s1209 + $0x118] sm:$0xff]
      %v1246 = vld [vmem:[%s1209 + $0x120] sm:$0xff]
      %v1247 = vld [vmem:[%s1209 + $0x128] sm:$0xff]
      %v1248 = vld [vmem:[%s1209 + $0x130] sm:$0x11]
      %v1251 = vunpack.c.l.b16 %v1207
      %v1252 = vunpack.c.h.b16 %v1207
      %v1253 = vunpack.c.l.b16 %v1208
      %v1254 = vpack.c.b16 %v1251, %v1251
      %v1255 = vpack.c.b16 %v1252, %v1252
      %v1256 = vpack.c.b16 %v1253, %v1253
      %vm1257 = vsmask.f32 7424
      %v1259 = vshrl.u32 %v832, 16
      %v1261 = vshll.u32 %v832, 16
      %v1263 = vrot.slane %v1261, 1
      %v1264 = vor.u32 %v1259, %v1263
      %v1266 = vshll.u32 %v835, 16
      %v1268 = vrot.slane %v1266, 1
      %v1269 = vsel %vm1257, %v1264, %v1268
      %v1271 = vshrl.u32 %v833, 16
      %v1273 = vshll.u32 %v833, 16
      %v1275 = vrot.slane %v1273, 1
      %v1276 = vor.u32 %v1271, %v1275
      %v1278 = vshll.u32 %v836, 16
      %v1280 = vrot.slane %v1278, 1
      %v1281 = vsel %vm1257, %v1276, %v1280
      %v1282 = vshrl.u32 %v834, 16
      %v1284 = vshll.u32 %v834, 16
      %v1286 = vrot.slane %v1284, 1
      %v1287 = vor.u32 %v1282, %v1286
      %v1288 = vshll.u32 %v837, 16
      %v1290 = vrot.slane %v1288, 1
      %v1291 = vsel %vm1257, %v1287, %v1290
      %v1292 = vshrl.u32 %v835, 16
      %v1294 = vor.u32 %v1292, %v1268
      %v1296 = vshll.u32 %v838, 16
      %v1298 = vrot.slane %v1296, 1
      %v1299 = vsel %vm1257, %v1294, %v1298
      %v1300 = vshrl.u32 %v836, 16
      %v1302 = vor.u32 %v1300, %v1280
      %v1304 = vshll.u32 %v839, 16
      %v1306 = vrot.slane %v1304, 1
      %v1307 = vsel %vm1257, %v1302, %v1306
      %v1308 = vshrl.u32 %v837, 16
      %v1310 = vor.u32 %v1308, %v1290
      %v1311 = vshll.u32 %v840, 16
      %v1313 = vrot.slane %v1311, 1
      %v1314 = vsel %vm1257, %v1310, %v1313
      %v1315 = vshrl.u32 %v838, 16
      %v1317 = vor.u32 %v1315, %v1298
      %v1319 = vshll.u32 %v1254, 16
      %v1321 = vrot.slane %v1319, 1
      %v1322 = vsel %vm1257, %v1317, %v1321
      %v1323 = vshrl.u32 %v839, 16
      %v1325 = vor.u32 %v1323, %v1306
      %v1327 = vshll.u32 %v1255, 16
      %v1329 = vrot.slane %v1327, 1
      %v1330 = vsel %vm1257, %v1325, %v1329
      %v1331 = vshrl.u32 %v840, 16
      %v1333 = vor.u32 %v1331, %v1313
      %v1335 = vshll.u32 %v1256, 16
      %v1337 = vrot.slane %v1335, 1
      %v1338 = vsel %vm1257, %v1333, %v1337
      %v1339 = vshrl.u32 %v1254, 16
      %v1341 = vor.u32 %v1339, %v1321
      %v1342 = vshrl.u32 %v1255, 16
      %v1344 = vor.u32 %v1342, %v1329
      %v1345 = vshrl.u32 %v1256, 16
      %v1347 = vor.u32 %v1345, %v1337
      %v1395 = vunpack.c.l.b16 %v1210
      %v1396 = vunpack.c.h.b16 %v1210
      %v1397 = vunpack.c.l.b16 %v1211
      %v1398 = vunpack.c.h.b16 %v1211
      %v1399 = vunpack.c.l.b16 %v1212
      %v1400 = vunpack.c.h.b16 %v1212
      %v1401 = vunpack.c.l.b16 %v1213
      %v1402 = vunpack.c.h.b16 %v1213
      %v1403 = vunpack.c.l.b16 %v1214
      %v1404 = vunpack.c.h.b16 %v1214
      %v1405 = vunpack.c.l.b16 %v1215
      %v1406 = vunpack.c.h.b16 %v1215
      %v1407 = vunpack.c.l.b16 %v1216
      %v1408 = vunpack.c.h.b16 %v1216
      %v1409 = vunpack.c.l.b16 %v1217
      %v1410 = vunpack.c.h.b16 %v1217
      %v1411 = vunpack.c.l.b16 %v1218
      %v1412 = vunpack.c.h.b16 %v1218
      %v1413 = vunpack.c.l.b16 %v1219
      %v1414 = vunpack.c.h.b16 %v1219
      %v1415 = vunpack.c.l.b16 %v1220
      %v1416 = vunpack.c.h.b16 %v1220
      %v1417 = vunpack.c.l.b16 %v1221
      %v1418 = vunpack.c.h.b16 %v1221
      %v1419 = vunpack.c.l.b16 %v1222
      %v1420 = vunpack.c.h.b16 %v1222
      %v1421 = vunpack.c.l.b16 %v1223
      %v1422 = vunpack.c.h.b16 %v1223
      %v1423 = vunpack.c.l.b16 %v1224
      %v1424 = vunpack.c.h.b16 %v1224
      %v1425 = vunpack.c.l.b16 %v1225
      %v1426 = vunpack.c.h.b16 %v1225
      %v1427 = vunpack.c.l.b16 %v1226
      %v1428 = vunpack.c.h.b16 %v1226
      %v1429 = vunpack.c.l.b16 %v1227
      %v1430 = vunpack.c.h.b16 %v1227
      %v1431 = vunpack.c.l.b16 %v1228
      %v1432 = vunpack.c.h.b16 %v1228
      %v1433 = vunpack.c.l.b16 %v1229
      %v1434 = vunpack.c.h.b16 %v1229
      %v1435 = vunpack.c.l.b16 %v1230
      %v1436 = vunpack.c.h.b16 %v1230
      %v1437 = vunpack.c.l.b16 %v1231
      %v1438 = vunpack.c.h.b16 %v1231
      %v1439 = vunpack.c.l.b16 %v1232
      %v1440 = vunpack.c.h.b16 %v1232
      %v1441 = vunpack.c.l.b16 %v1233
      %v1442 = vunpack.c.h.b16 %v1233
      %v1443 = vunpack.c.l.b16 %v1234
      %v1444 = vunpack.c.h.b16 %v1234
      %v1445 = vunpack.c.l.b16 %v1235
      %v1446 = vunpack.c.h.b16 %v1235
      %v1447 = vunpack.c.l.b16 %v1236
      %v1448 = vunpack.c.h.b16 %v1236
      %v1449 = vunpack.c.l.b16 %v1237
      %v1450 = vunpack.c.h.b16 %v1237
      %v1451 = vunpack.c.l.b16 %v1238
      %v1452 = vunpack.c.h.b16 %v1238
      %v1453 = vunpack.c.l.b16 %v1239
      %v1454 = vunpack.c.h.b16 %v1239
      %v1455 = vunpack.c.l.b16 %v1240
      %v1456 = vunpack.c.h.b16 %v1240
      %v1457 = vunpack.c.l.b16 %v1241
      %v1458 = vunpack.c.h.b16 %v1241
      %v1459 = vunpack.c.l.b16 %v1242
      %v1460 = vunpack.c.h.b16 %v1242
      %v1461 = vunpack.c.l.b16 %v1243
      %v1462 = vunpack.c.h.b16 %v1243
      %v1463 = vunpack.c.l.b16 %v1244
      %v1464 = vunpack.c.h.b16 %v1244
      %v1465 = vunpack.c.l.b16 %v1245
      %v1466 = vunpack.c.h.b16 %v1245
      %v1467 = vunpack.c.l.b16 %v1246
      %v1468 = vunpack.c.h.b16 %v1246
      %v1469 = vunpack.c.l.b16 %v1247
      %v1470 = vunpack.c.h.b16 %v1247
      %v1471 = vunpack.c.l.b16 %v1248
      %v1472 = vunpack.c.h.b16 %v1248
      %v1473 = vpack.c.b16 %v1397, %v1395
      %v1474 = vpack.c.b16 %v1398, %v1396
      %v1475 = vpack.c.b16 %v1401, %v1399
      %v1476 = vpack.c.b16 %v1402, %v1400
      %v1477 = vpack.c.b16 %v1405, %v1403
      %v1478 = vpack.c.b16 %v1406, %v1404
      %v1479 = vpack.c.b16 %v1409, %v1407
      %v1480 = vpack.c.b16 %v1410, %v1408
      %v1481 = vpack.c.b16 %v1413, %v1411
      %v1482 = vpack.c.b16 %v1414, %v1412
      %v1483 = vpack.c.b16 %v1417, %v1415
      %v1484 = vpack.c.b16 %v1418, %v1416
      %v1485 = vpack.c.b16 %v1421, %v1419
      %v1486 = vpack.c.b16 %v1422, %v1420
      %v1487 = vpack.c.b16 %v1425, %v1423
      %v1488 = vpack.c.b16 %v1426, %v1424
      %v1489 = vpack.c.b16 %v1429, %v1427
      %v1490 = vpack.c.b16 %v1430, %v1428
      %v1491 = vpack.c.b16 %v1433, %v1431
      %v1492 = vpack.c.b16 %v1434, %v1432
      %v1493 = vpack.c.b16 %v1437, %v1435
      %v1494 = vpack.c.b16 %v1438, %v1436
      %v1495 = vpack.c.b16 %v1441, %v1439
      %v1496 = vpack.c.b16 %v1442, %v1440
      %v1497 = vpack.c.b16 %v1445, %v1443
      %v1498 = vpack.c.b16 %v1446, %v1444
      %v1499 = vpack.c.b16 %v1449, %v1447
      %v1500 = vpack.c.b16 %v1450, %v1448
      %v1501 = vpack.c.b16 %v1453, %v1451
      %v1502 = vpack.c.b16 %v1454, %v1452
      %v1503 = vpack.c.b16 %v1457, %v1455
      %v1504 = vpack.c.b16 %v1458, %v1456
      %v1505 = vpack.c.b16 %v1461, %v1459
      %v1506 = vpack.c.b16 %v1462, %v1460
      %v1507 = vpack.c.b16 %v1465, %v1463
      %v1508 = vpack.c.b16 %v1466, %v1464
      %v1509 = vpack.c.b16 %v1469, %v1467
      %v1510 = vpack.c.b16 %v1470, %v1468
      %v1511 = vpack.c.b16 %v1471, %v1471
      %v1512 = vpack.c.b16 %v1472, %v1472
      %v1552 = vsel %vm635, %v1291, 0
      %v1555 = vsel %vm635, %v1314, 0
      %v1558 = vsel %vm635, %v1338, 0
      %v1561 = vsel %vm635, %v1347, 0
      %v1564 = vsel %vm648, %v1511, 0
      %v1567 = vsel %vm648, %v1512, 0
      %1569 = vmatprep.subr.bf16.mxu0 %v1474
      %1570 = vmatpush1.bf16.msra.mxu0 %v1473
      %1571 = vmatprep.subr.bf16.mxu0 %v1476
      %1572 = vmatpush1.bf16.msra.mxu0 %v1475
      %1573 = vmatprep.subr.bf16.mxu0 %v1478
      %1574 = vmatpush1.bf16.msra.mxu0 %v1477
      %1575 = vmatprep.subr.bf16.mxu0 %v1480
      %1576 = vmatpush1.bf16.msra.mxu0 %v1479
      %1577 = vmatprep.subr.bf16.mxu0 %v1482
      %1578 = vmatpush1.bf16.msra.mxu0 %v1481
      %1579 = vmatprep.subr.bf16.mxu0 %v1484
      %1580 = vmatpush1.bf16.msra.mxu0 %v1483
      %1581 = vmatprep.subr.bf16.mxu0 %v1486
      %1582 = vmatpush1.bf16.msra.mxu0 %v1485
      %1583 = vmatprep.subr.bf16.mxu0 %v1488
      %1584 = vmatpush1.bf16.msra.mxu0 %v1487
      %1585 = vmatprep.subr.bf16.mxu0 %v1490
      %1586 = vmatpush1.bf16.msra.mxu0 %v1489
      %1587 = vmatprep.subr.bf16.mxu0 %v1492
      %1588 = vmatpush1.bf16.msra.mxu0 %v1491
      %1589 = vmatprep.subr.bf16.mxu0 %v1494
      %1590 = vmatpush1.bf16.msra.mxu0 %v1493
      %1591 = vmatprep.subr.bf16.mxu0 %v1496
      %1592 = vmatpush1.bf16.msra.mxu0 %v1495
      %1593 = vmatprep.subr.bf16.mxu0 %v1498
      %1594 = vmatpush1.bf16.msra.mxu0 %v1497
      %1595 = vmatprep.subr.bf16.mxu0 %v1500
      %1596 = vmatpush1.bf16.msra.mxu0 %v1499
      %1597 = vmatprep.subr.bf16.mxu0 %v1502
      %1598 = vmatpush1.bf16.msra.mxu0 %v1501
      %1599 = vmatprep.subr.bf16.mxu0 %v1504
      %1600 = vmatpush1.bf16.msra.mxu0 %v1503
      %1601 = vmatprep.mubr.bf16.mxu0 %v1281
      %1602 = vmatmul.mubr.bf16.gmra.mrb[0].mxu0 %v1269
      %v1603 = vpop.f32.mrb[0].mxu0
      %v1604 = vadd.f32 0.0, %v1603
      %v1605 = vpop.f32.mrb[0].mxu0
      %v1606 = vadd.f32 0.0, %v1605
      %v1607 = vpop.f32.mrb[0].mxu0
      %v1608 = vadd.f32 0.0, %v1607
      %v1609 = vpop.f32.mrb[0].mxu0
      %v1610 = vadd.f32 0.0, %v1609
      %1611 = vmatprep.mubr.bf16.mxu0 %v1307
      %1612 = vmatmul.mubr.bf16.gmra.mrb[0].mxu0 %v1299
      %v1613 = vpop.f32.mrb[0].mxu0
      %v1614 = vadd.f32 0.0, %v1613
      %v1615 = vpop.f32.mrb[0].mxu0
      %v1616 = vadd.f32 0.0, %v1615
      %v1617 = vpop.f32.mrb[0].mxu0
      %v1618 = vadd.f32 0.0, %v1617
      %v1619 = vpop.f32.mrb[0].mxu0
      %v1620 = vadd.f32 0.0, %v1619
      %1621 = vmatprep.mubr.bf16.mxu0 %v1330
      %1622 = vmatmul.mubr.bf16.gmra.mrb[0].mxu0 %v1322
      %v1623 = vpop.f32.mrb[0].mxu0
      %v1624 = vadd.f32 0.0, %v1623
      %v1625 = vpop.f32.mrb[0].mxu0
      %v1626 = vadd.f32 0.0, %v1625
      %v1627 = vpop.f32.mrb[0].mxu0
      %v1628 = vadd.f32 0.0, %v1627
      %v1629 = vpop.f32.mrb[0].mxu0
      %v1630 = vadd.f32 0.0, %v1629
      %1631 = vmatprep.mubr.bf16.mxu0 %v1344
      %1632 = vmatmul.mubr.bf16.gmra.mrb[0].mxu0 %v1341
      %v1633 = vpop.f32.mrb[0].mxu0
      %v1634 = vadd.f32 0.0, %v1633
      %v1635 = vpop.f32.mrb[0].mxu0
      %v1636 = vadd.f32 0.0, %v1635
      %v1637 = vpop.f32.mrb[0].mxu0
      %v1638 = vpop.f32.mrb[0].mxu0
      %1639 = vdwg.mxu0
      %1640 = vmatprep.subr.bf16.mxu0 %v1506
      %1641 = vmatpush1.bf16.msra.mxu0 %v1505
      %1642 = vmatprep.subr.bf16.mxu0 %v1508
      %1643 = vmatpush1.bf16.msra.mxu0 %v1507
      %1644 = vmatprep.subr.bf16.mxu0 %v1510
      %1645 = vmatpush1.bf16.msra.mxu0 %v1509
      %1646 = vmatprep.subr.bf16.mxu0 %v1567
      %1647 = vmatpush1.bf16.msra.mxu0 %v1564
      %1648 = vmatprep.subr.bf16.mxu0 0
      %1649 = vmatpush1.bf16.msra.mxu0 0
      %1650 = vmatprep.subr.bf16.mxu0 0
      %1651 = vmatpush1.bf16.msra.mxu0 0
      %1652 = vmatprep.subr.bf16.mxu0 0
      %1653 = vmatpush1.bf16.msra.mxu0 0
      %1654 = vmatprep.subr.bf16.mxu0 0
      %1655 = vmatpush1.bf16.msra.mxu0 0
      %1656 = vmatprep.subr.bf16.mxu0 0
      %1657 = vmatpush1.bf16.msra.mxu0 0
      %1658 = vmatprep.subr.bf16.mxu0 0
      %1659 = vmatpush1.bf16.msra.mxu0 0
      %1660 = vmatprep.subr.bf16.mxu0 0
      %1661 = vmatpush1.bf16.msra.mxu0 0
      %1662 = vmatprep.subr.bf16.mxu0 0
      %1663 = vmatpush1.bf16.msra.mxu0 0
      %1664 = vmatprep.subr.bf16.mxu0 0
      %1665 = vmatpush1.bf16.msra.mxu0 0
      %1666 = vmatprep.subr.bf16.mxu0 0
      %1667 = vmatpush1.bf16.msra.mxu0 0
      %1668 = vmatprep.subr.bf16.mxu0 0
      %1669 = vmatpush1.bf16.msra.mxu0 0
      %1670 = vmatprep.subr.bf16.mxu0 0
      %1671 = vmatpush1.bf16.msra.mxu0 0
      %1672 = vmatprep.mubr.bf16.mxu0 0
      %1673 = vmatmul.mubr.bf16.gmra.mrb[0].mxu0 %v1552
      %v1674 = vpop.f32.mrb[0].mxu0
      %v1675 = vadd.f32 %v1604, %v1674
      %v1676 = vpop.f32.mrb[0].mxu0
      %v1677 = vadd.f32 %v1606, %v1676
      %v1678 = vpop.f32.mrb[0].mxu0
      %v1679 = vadd.f32 %v1608, %v1678
      %v1680 = vpop.f32.mrb[0].mxu0
      %v1681 = vadd.f32 %v1610, %v1680
      %1682 = vmatprep.mubr.bf16.mxu0 0
      %1683 = vmatmul.mubr.bf16.gmra.mrb[0].mxu0 %v1555
      %v1684 = vpop.f32.mrb[0].mxu0
      %v1685 = vadd.f32 %v1614, %v1684
      %v1686 = vpop.f32.mrb[0].mxu0
      %v1687 = vadd.f32 %v1616, %v1686
      %v1688 = vpop.f32.mrb[0].mxu0
      %v1689 = vadd.f32 %v1618, %v1688
      %v1690 = vpop.f32.mrb[0].mxu0
      %v1691 = vadd.f32 %v1620, %v1690
      %1692 = vmatprep.mubr.bf16.mxu0 0
      %1693 = vmatmul.mubr.bf16.gmra.mrb[0].mxu0 %v1558
      %v1694 = vpop.f32.mrb[0].mxu0
      %v1695 = vadd.f32 %v1624, %v1694
      %v1696 = vpop.f32.mrb[0].mxu0
      %v1697 = vadd.f32 %v1626, %v1696
      %v1698 = vpop.f32.mrb[0].mxu0
      %v1699 = vadd.f32 %v1628, %v1698
      %v1700 = vpop.f32.mrb[0].mxu0
      %v1701 = vadd.f32 %v1630, %v1700
      %1702 = vmatprep.mubr.bf16.mxu0 0
      %1703 = vmatmul.mubr.bf16.gmra.mrb[0].mxu0 %v1561
      %v1704 = vpop.f32.mrb[0].mxu0
      %v1705 = vadd.f32 %v1634, %v1704
      %v1706 = vpop.f32.mrb[0].mxu0
      %v1707 = vadd.f32 %v1636, %v1706
      %v1708 = vpop.f32.mrb[0].mxu0
      %v1709 = vpop.f32.mrb[0].mxu0
      %1710 = vdwg.mxu0
      %v1711 = vadd.f32 %v1171, %v1675
      %v1712 = vadd.f32 %v1173, %v1677
      %v1713 = vadd.f32 %v1175, %v1679
      %v1714 = vadd.f32 %v1177, %v1681
      %v1715 = vadd.f32 %v1181, %v1685
      %v1716 = vadd.f32 %v1183, %v1687
      %v1717 = vadd.f32 %v1185, %v1689
      %v1718 = vadd.f32 %v1187, %v1691
      %v1719 = vadd.f32 %v1191, %v1695
      %v1720 = vadd.f32 %v1193, %v1697
      %v1721 = vadd.f32 %v1195, %v1699
      %v1722 = vadd.f32 %v1197, %v1701
      %v1723 = vadd.f32 %v1201, %v1705
      %v1724 = vadd.f32 %v1203, %v1707
      %s1725 = scalar_lea.vmem %s1, 312
      %v1726 = vld [vmem:[%s1725] sm:$0xff]
      %v1727 = vld [vmem:[%s1725 + $0x8] sm:$0xff]
      %v1728 = vld [vmem:[%s1725 + $0x10] sm:$0xff]
      %v1729 = vld [vmem:[%s1725 + $0x18] sm:$0xff]
      %v1730 = vld [vmem:[%s1725 + $0x20] sm:$0xff]
      %v1731 = vld [vmem:[%s1725 + $0x28] sm:$0xff]
      %v1732 = vld [vmem:[%s1725 + $0x30] sm:$0xff]
      %v1733 = vld [vmem:[%s1725 + $0x38] sm:$0xff]
      %v1734 = vld [vmem:[%s1725 + $0x40] sm:$0xff]
      %v1735 = vld [vmem:[%s1725 + $0x48] sm:$0xff]
      %v1736 = vld [vmem:[%s1725 + $0x50] sm:$0xff]
      %v1737 = vld [vmem:[%s1725 + $0x58] sm:$0xff]
      %v1738 = vld [vmem:[%s1725 + $0x60] sm:$0xff]
      %v1739 = vld [vmem:[%s1725 + $0x68] sm:$0xff]
      %v1740 = vld [vmem:[%s1725 + $0x70] sm:$0xff]
      %v1741 = vld [vmem:[%s1725 + $0x78] sm:$0xff]
      %v1742 = vld [vmem:[%s1725 + $0x80] sm:$0xff]
      %v1743 = vld [vmem:[%s1725 + $0x88] sm:$0xff]
      %v1744 = vld [vmem:[%s1725 + $0x90] sm:$0xff]
      %v1745 = vld [vmem:[%s1725 + $0x98] sm:$0xff]
      %v1746 = vld [vmem:[%s1725 + $0xa0] sm:$0xff]
      %v1747 = vld [vmem:[%s1725 + $0xa8] sm:$0xff]
      %v1748 = vld [vmem:[%s1725 + $0xb0] sm:$0xff]
      %v1749 = vld [vmem:[%s1725 + $0xb8] sm:$0xff]
      %v1750 = vld [vmem:[%s1725 + $0xc0] sm:$0xff]
      %v1751 = vld [vmem:[%s1725 + $0xc8] sm:$0xff]
      %v1752 = vld [vmem:[%s1725 + $0xd0] sm:$0xff]
      %v1753 = vld [vmem:[%s1725 + $0xd8] sm:$0xff]
      %v1754 = vld [vmem:[%s1725 + $0xe0] sm:$0xff]
      %v1755 = vld [vmem:[%s1725 + $0xe8] sm:$0xff]
      %v1756 = vld [vmem:[%s1725 + $0xf0] sm:$0xff]
      %v1757 = vld [vmem:[%s1725 + $0xf8] sm:$0xff]
      %v1758 = vld [vmem:[%s1725 + $0x100] sm:$0xff]
      %v1759 = vld [vmem:[%s1725 + $0x108] sm:$0xff]
      %v1760 = vld [vmem:[%s1725 + $0x110] sm:$0xff]
      %v1761 = vld [vmem:[%s1725 + $0x118] sm:$0xff]
      %v1762 = vld [vmem:[%s1725 + $0x120] sm:$0xff]
      %v1763 = vld [vmem:[%s1725 + $0x128] sm:$0xff]
      %v1764 = vld [vmem:[%s1725 + $0x130] sm:$0x11]
      %s1765 = scalar_lea.vmem %s1, 936
      %v1766 = vld [vmem:[%s1765] sm:$0xff]
      %v1767 = vld [vmem:[%s1765 + $0x8] sm:$0xff]
      %v1768 = vld [vmem:[%s1765 + $0x10] sm:$0xff]
      %v1769 = vld [vmem:[%s1765 + $0x18] sm:$0xff]
      %v1770 = vld [vmem:[%s1765 + $0x20] sm:$0xff]
      %v1771 = vld [vmem:[%s1765 + $0x28] sm:$0xff]
      %v1772 = vld [vmem:[%s1765 + $0x30] sm:$0xff]
      %v1773 = vld [vmem:[%s1765 + $0x38] sm:$0xff]
      %v1774 = vld [vmem:[%s1765 + $0x40] sm:$0xff]
      %v1775 = vld [vmem:[%s1765 + $0x48] sm:$0xff]
      %v1776 = vld [vmem:[%s1765 + $0x50] sm:$0xff]
      %v1777 = vld [vmem:[%s1765 + $0x58] sm:$0xff]
      %v1778 = vld [vmem:[%s1765 + $0x60] sm:$0xff]
      %v1779 = vld [vmem:[%s1765 + $0x68] sm:$0xff]
      %v1780 = vld [vmem:[%s1765 + $0x70] sm:$0xff]
      %v1781 = vld [vmem:[%s1765 + $0x78] sm:$0xff]
      %v1782 = vld [vmem:[%s1765 + $0x80] sm:$0xff]
      %v1783 = vld [vmem:[%s1765 + $0x88] sm:$0xff]
      %v1784 = vld [vmem:[%s1765 + $0x90] sm:$0xff]
      %v1785 = vld [vmem:[%s1765 + $0x98] sm:$0xff]
      %v1786 = vld [vmem:[%s1765 + $0xa0] sm:$0xff]
      %v1787 = vld [vmem:[%s1765 + $0xa8] sm:$0xff]
      %v1788 = vld [vmem:[%s1765 + $0xb0] sm:$0xff]
      %v1789 = vld [vmem:[%s1765 + $0xb8] sm:$0xff]
      %v1790 = vld [vmem:[%s1765 + $0xc0] sm:$0xff]
      %v1791 = vld [vmem:[%s1765 + $0xc8] sm:$0xff]
      %v1792 = vld [vmem:[%s1765 + $0xd0] sm:$0xff]
      %v1793 = vld [vmem:[%s1765 + $0xd8] sm:$0xff]
      %v1794 = vld [vmem:[%s1765 + $0xe0] sm:$0xff]
      %v1795 = vld [vmem:[%s1765 + $0xe8] sm:$0xff]
      %v1796 = vld [vmem:[%s1765 + $0xf0] sm:$0xff]
      %v1797 = vld [vmem:[%s1765 + $0xf8] sm:$0xff]
      %v1798 = vld [vmem:[%s1765 + $0x100] sm:$0xff]
      %v1799 = vld [vmem:[%s1765 + $0x108] sm:$0xff]
      %v1800 = vld [vmem:[%s1765 + $0x110] sm:$0xff]
      %v1801 = vld [vmem:[%s1765 + $0x118] sm:$0xff]
      %v1802 = vld [vmem:[%s1765 + $0x120] sm:$0xff]
      %v1803 = vld [vmem:[%s1765 + $0x128] sm:$0xff]
      %v1804 = vld [vmem:[%s1765 + $0x130] sm:$0x11]
      %v1844 = vunpack.c.l.b16 %v1766
      %v1845 = vunpack.c.h.b16 %v1766
      %v1846 = vunpack.c.l.b16 %v1767
      %v1847 = vunpack.c.h.b16 %v1767
      %v1848 = vunpack.c.l.b16 %v1768
      %v1849 = vunpack.c.h.b16 %v1768
      %v1850 = vunpack.c.l.b16 %v1769
      %v1851 = vunpack.c.h.b16 %v1769
      %v1852 = vunpack.c.l.b16 %v1770
      %v1853 = vunpack.c.h.b16 %v1770
      %v1854 = vunpack.c.l.b16 %v1771
      %v1855 = vunpack.c.h.b16 %v1771
      %v1856 = vunpack.c.l.b16 %v1772
      %v1857 = vunpack.c.h.b16 %v1772
      %v1858 = vunpack.c.l.b16 %v1773
      %v1859 = vunpack.c.h.b16 %v1773
      %v1860 = vunpack.c.l.b16 %v1774
      %v1861 = vunpack.c.h.b16 %v1774
      %v1862 = vunpack.c.l.b16 %v1775
      %v1863 = vunpack.c.h.b16 %v1775
      %v1864 = vunpack.c.l.b16 %v1776
      %v1865 = vunpack.c.h.b16 %v1776
      %v1866 = vunpack.c.l.b16 %v1777
      %v1867 = vunpack.c.h.b16 %v1777
      %v1868 = vunpack.c.l.b16 %v1778
      %v1869 = vunpack.c.h.b16 %v1778
      %v1870 = vunpack.c.l.b16 %v1779
      %v1871 = vunpack.c.h.b16 %v1779
      %v1872 = vunpack.c.l.b16 %v1780
      %v1873 = vunpack.c.h.b16 %v1780
      %v1874 = vunpack.c.l.b16 %v1781
      %v1875 = vunpack.c.h.b16 %v1781
      %v1876 = vunpack.c.l.b16 %v1782
      %v1877 = vunpack.c.h.b16 %v1782
      %v1878 = vunpack.c.l.b16 %v1783
      %v1879 = vunpack.c.h.b16 %v1783
      %v1880 = vunpack.c.l.b16 %v1784
      %v1881 = vunpack.c.h.b16 %v1784
      %v1882 = vunpack.c.l.b16 %v1785
      %v1883 = vunpack.c.h.b16 %v1785
      %v1884 = vunpack.c.l.b16 %v1786
      %v1885 = vunpack.c.h.b16 %v1786
      %v1886 = vunpack.c.l.b16 %v1787
      %v1887 = vunpack.c.h.b16 %v1787
      %v1888 = vunpack.c.l.b16 %v1788
      %v1889 = vunpack.c.h.b16 %v1788
      %v1890 = vunpack.c.l.b16 %v1789
      %v1891 = vunpack.c.h.b16 %v1789
      %v1892 = vunpack.c.l.b16 %v1790
      %v1893 = vunpack.c.h.b16 %v1790
      %v1894 = vunpack.c.l.b16 %v1791
      %v1895 = vunpack.c.h.b16 %v1791
      %v1896 = vunpack.c.l.b16 %v1792
      %v1897 = vunpack.c.h.b16 %v1792
      %v1898 = vunpack.c.l.b16 %v1793
      %v1899 = vunpack.c.h.b16 %v1793
      %v1900 = vunpack.c.l.b16 %v1794
      %v1901 = vunpack.c.h.b16 %v1794
      %v1902 = vunpack.c.l.b16 %v1795
      %v1903 = vunpack.c.h.b16 %v1795
      %v1904 = vunpack.c.l.b16 %v1796
      %v1905 = vunpack.c.h.b16 %v1796
      %v1906 = vunpack.c.l.b16 %v1797
      %v1907 = vunpack.c.h.b16 %v1797
      %v1908 = vunpack.c.l.b16 %v1798
      %v1909 = vunpack.c.h.b16 %v1798
      %v1910 = vunpack.c.l.b16 %v1799
      %v1911 = vunpack.c.h.b16 %v1799
      %v1912 = vunpack.c.l.b16 %v1800
      %v1913 = vunpack.c.h.b16 %v1800
      %v1914 = vunpack.c.l.b16 %v1801
      %v1915 = vunpack.c.h.b16 %v1801
      %v1916 = vunpack.c.l.b16 %v1802
      %v1917 = vunpack.c.h.b16 %v1802
      %v1918 = vunpack.c.l.b16 %v1803
      %v1919 = vunpack.c.h.b16 %v1803
      %v1920 = vunpack.c.l.b16 %v1804
      %v1921 = vunpack.c.h.b16 %v1804
      %v1922 = vpack.c.b16 %v1846, %v1844
      %v1923 = vpack.c.b16 %v1847, %v1845
      %v1924 = vpack.c.b16 %v1850, %v1848
      %v1925 = vpack.c.b16 %v1851, %v1849
      %v1926 = vpack.c.b16 %v1854, %v1852
      %v1927 = vpack.c.b16 %v1855, %v1853
      %v1928 = vpack.c.b16 %v1858, %v1856
      %v1929 = vpack.c.b16 %v1859, %v1857
      %v1930 = vpack.c.b16 %v1862, %v1860
      %v1931 = vpack.c.b16 %v1863, %v1861
      %v1932 = vpack.c.b16 %v1866, %v1864
      %v1933 = vpack.c.b16 %v1867, %v1865
      %v1934 = vpack.c.b16 %v1870, %v1868
      %v1935 = vpack.c.b16 %v1871, %v1869
      %v1936 = vpack.c.b16 %v1874, %v1872
      %v1937 = vpack.c.b16 %v1875, %v1873
      %v1938 = vpack.c.b16 %v1878, %v1876
      %v1939 = vpack.c.b16 %v1879, %v1877
      %v1940 = vpack.c.b16 %v1882, %v1880
      %v1941 = vpack.c.b16 %v1883, %v1881
      %v1942 = vpack.c.b16 %v1886, %v1884
      %v1943 = vpack.c.b16 %v1887, %v1885
      %v1944 = vpack.c.b16 %v1890, %v1888
      %v1945 = vpack.c.b16 %v1891, %v1889
      %v1946 = vpack.c.b16 %v1894, %v1892
      %v1947 = vpack.c.b16 %v1895, %v1893
      %v1948 = vpack.c.b16 %v1898, %v1896
      %v1949 = vpack.c.b16 %v1899, %v1897
      %v1950 = vpack.c.b16 %v1902, %v1900
      %v1951 = vpack.c.b16 %v1903, %v1901
      %v1952 = vpack.c.b16 %v1906, %v1904
      %v1953 = vpack.c.b16 %v1907, %v1905
      %v1954 = vpack.c.b16 %v1910, %v1908
      %v1955 = vpack.c.b16 %v1911, %v1909
      %v1956 = vpack.c.b16 %v1914, %v1912
      %v1957 = vpack.c.b16 %v1915, %v1913
      %v1958 = vpack.c.b16 %v1918, %v1916
      %v1959 = vpack.c.b16 %v1919, %v1917
      %v1960 = vpack.c.b16 %v1920, %v1920
      %v1961 = vpack.c.b16 %v1921, %v1921
      %v2001 = vsel %vm648, %v1960, 0
      %v2004 = vsel %vm648, %v1961, 0
      %2006 = vmatprep.subr.bf16.mxu0 %v1923
      %2007 = vmatpush1.bf16.msra.mxu0 %v1922
      %2008 = vmatprep.subr.bf16.mxu0 %v1925
      %2009 = vmatpush1.bf16.msra.mxu0 %v1924
      %2010 = vmatprep.subr.bf16.mxu0 %v1927
      %2011 = vmatpush1.bf16.msra.mxu0 %v1926
      %2012 = vmatprep.subr.bf16.mxu0 %v1929
      %2013 = vmatpush1.bf16.msra.mxu0 %v1928
      %2014 = vmatprep.subr.bf16.mxu0 %v1931
      %2015 = vmatpush1.bf16.msra.mxu0 %v1930
      %2016 = vmatprep.subr.bf16.mxu0 %v1933
      %2017 = vmatpush1.bf16.msra.mxu0 %v1932
      %2018 = vmatprep.subr.bf16.mxu0 %v1935
      %2019 = vmatpush1.bf16.msra.mxu0 %v1934
      %2020 = vmatprep.subr.bf16.mxu0 %v1937
      %2021 = vmatpush1.bf16.msra.mxu0 %v1936
      %2022 = vmatprep.subr.bf16.mxu0 %v1939
      %2023 = vmatpush1.bf16.msra.mxu0 %v1938
      %2024 = vmatprep.subr.bf16.mxu0 %v1941
      %2025 = vmatpush1.bf16.msra.mxu0 %v1940
      %2026 = vmatprep.subr.bf16.mxu0 %v1943
      %2027 = vmatpush1.bf16.msra.mxu0 %v1942
      %2028 = vmatprep.subr.bf16.mxu0 %v1945
      %2029 = vmatpush1.bf16.msra.mxu0 %v1944
      %2030 = vmatprep.subr.bf16.mxu0 %v1947
      %2031 = vmatpush1.bf16.msra.mxu0 %v1946
      %2032 = vmatprep.subr.bf16.mxu0 %v1949
      %2033 = vmatpush1.bf16.msra.mxu0 %v1948
      %2034 = vmatprep.subr.bf16.mxu0 %v1951
      %2035 = vmatpush1.bf16.msra.mxu0 %v1950
      %2036 = vmatprep.subr.bf16.mxu0 %v1953
      %2037 = vmatpush1.bf16.msra.mxu0 %v1952
      %2038 = vmatprep.mubr.bf16.mxu0 %v360
      %2039 = vmatmul.mubr.bf16.gmra.mrb[0].mxu0 %v343
      %v2040 = vpop.f32.mrb[0].mxu0
      %v2041 = vadd.f32 0.0, %v2040
      %v2042 = vpop.f32.mrb[0].mxu0
      %v2043 = vadd.f32 0.0, %v2042
      %v2044 = vpop.f32.mrb[0].mxu0
      %v2045 = vadd.f32 0.0, %v2044
      %v2046 = vpop.f32.mrb[0].mxu0
      %v2047 = vadd.f32 0.0, %v2046
      %2048 = vmatprep.mubr.bf16.mxu0 %v395
      %2049 = vmatmul.mubr.bf16.gmra.mrb[0].mxu0 %v386
      %v2050 = vpop.f32.mrb[0].mxu0
      %v2051 = vadd.f32 0.0, %v2050
      %v2052 = vpop.f32.mrb[0].mxu0
      %v2053 = vadd.f32 0.0, %v2052
      %v2054 = vpop.f32.mrb[0].mxu0
      %v2055 = vadd.f32 0.0, %v2054
      %v2056 = vpop.f32.mrb[0].mxu0
      %v2057 = vadd.f32 0.0, %v2056
      %2058 = vmatprep.mubr.bf16.mxu0 %v422
      %2059 = vmatmul.mubr.bf16.gmra.mrb[0].mxu0 %v413
      %v2060 = vpop.f32.mrb[0].mxu0
      %v2061 = vadd.f32 0.0, %v2060
      %v2062 = vpop.f32.mrb[0].mxu0
      %v2063 = vadd.f32 0.0, %v2062
      %v2064 = vpop.f32.mrb[0].mxu0
      %v2065 = vadd.f32 0.0, %v2064
      %v2066 = vpop.f32.mrb[0].mxu0
      %v2067 = vadd.f32 0.0, %v2066
      %2068 = vmatprep.mubr.bf16.mxu0 %v421
      %2069 = vmatmul.mubr.bf16.gmra.mrb[0].mxu0 %v412
      %v2070 = vpop.f32.mrb[0].mxu0
      %v2071 = vadd.f32 0.0, %v2070
      %v2072 = vpop.f32.mrb[0].mxu0
      %v2073 = vadd.f32 0.0, %v2072
      %v2074 = vpop.f32.mrb[0].mxu0
      %v2075 = vpop.f32.mrb[0].mxu0
      %2076 = vdwg.mxu0
      %2077 = vmatprep.subr.bf16.mxu0 %v1955
      %2078 = vmatpush1.bf16.msra.mxu0 %v1954
      %2079 = vmatprep.subr.bf16.mxu0 %v1957
      %2080 = vmatpush1.bf16.msra.mxu0 %v1956
      %2081 = vmatprep.subr.bf16.mxu0 %v1959
      %2082 = vmatpush1.bf16.msra.mxu0 %v1958
      %2083 = vmatprep.subr.bf16.mxu0 %v2004
      %2084 = vmatpush1.bf16.msra.mxu0 %v2001
      %2085 = vmatprep.subr.bf16.mxu0 0
      %2086 = vmatpush1.bf16.msra.mxu0 0
      %2087 = vmatprep.subr.bf16.mxu0 0
      %2088 = vmatpush1.bf16.msra.mxu0 0
      %2089 = vmatprep.subr.bf16.mxu0 0
      %2090 = vmatpush1.bf16.msra.mxu0 0
      %2091 = vmatprep.subr.bf16.mxu0 0
      %2092 = vmatpush1.bf16.msra.mxu0 0
      %2093 = vmatprep.subr.bf16.mxu0 0
      %2094 = vmatpush1.bf16.msra.mxu0 0
      %2095 = vmatprep.subr.bf16.mxu0 0
      %2096 = vmatpush1.bf16.msra.mxu0 0
      %2097 = vmatprep.subr.bf16.mxu0 0
      %2098 = vmatpush1.bf16.msra.mxu0 0
      %2099 = vmatprep.subr.bf16.mxu0 0
      %2100 = vmatpush1.bf16.msra.mxu0 0
      %2101 = vmatprep.subr.bf16.mxu0 0
      %2102 = vmatpush1.bf16.msra.mxu0 0
      %2103 = vmatprep.subr.bf16.mxu0 0
      %2104 = vmatpush1.bf16.msra.mxu0 0
      %2105 = vmatprep.subr.bf16.mxu0 0
      %2106 = vmatpush1.bf16.msra.mxu0 0
      %2107 = vmatprep.subr.bf16.mxu0 0
      %2108 = vmatpush1.bf16.msra.mxu0 0
      %2109 = vmatprep.mubr.bf16.mxu0 0
      %2110 = vmatmul.mubr.bf16.gmra.mrb[0].mxu0 %v637
      %v2111 = vpop.f32.mrb[0].mxu0
      %v2112 = vadd.f32 %v2041, %v2111
      %v2113 = vpop.f32.mrb[0].mxu0
      %v2114 = vadd.f32 %v2043, %v2113
      %v2115 = vpop.f32.mrb[0].mxu0
      %v2116 = vadd.f32 %v2045, %v2115
      %v2117 = vpop.f32.mrb[0].mxu0
      %v2118 = vadd.f32 %v2047, %v2117
      %2119 = vmatprep.mubr.bf16.mxu0 0
      %2120 = vmatmul.mubr.bf16.gmra.mrb[0].mxu0 %v640
      %v2121 = vpop.f32.mrb[0].mxu0
      %v2122 = vadd.f32 %v2051, %v2121
      %v2123 = vpop.f32.mrb[0].mxu0
      %v2124 = vadd.f32 %v2053, %v2123
      %v2125 = vpop.f32.mrb[0].mxu0
      %v2126 = vadd.f32 %v2055, %v2125
      %v2127 = vpop.f32.mrb[0].mxu0
      %v2128 = vadd.f32 %v2057, %v2127
      %2129 = vmatprep.mubr.bf16.mxu0 0
      %2130 = vmatmul.mubr.bf16.gmra.mrb[0].mxu0 %v643
      %v2131 = vpop.f32.mrb[0].mxu0
      %v2132 = vadd.f32 %v2061, %v2131
      %v2133 = vpop.f32.mrb[0].mxu0
      %v2134 = vadd.f32 %v2063, %v2133
      %v2135 = vpop.f32.mrb[0].mxu0
      %v2136 = vadd.f32 %v2065, %v2135
      %v2137 = vpop.f32.mrb[0].mxu0
      %v2138 = vadd.f32 %v2067, %v2137
      %2139 = vmatprep.mubr.bf16.mxu0 0
      %2140 = vmatmul.mubr.bf16.gmra.mrb[0].mxu0 %v646
      %v2141 = vpop.f32.mrb[0].mxu0
      %v2142 = vadd.f32 %v2071, %v2141
      %v2143 = vpop.f32.mrb[0].mxu0
      %v2144 = vadd.f32 %v2073, %v2143
      %v2145 = vpop.f32.mrb[0].mxu0
      %v2146 = vpop.f32.mrb[0].mxu0
      %2147 = vdwg.mxu0
      %v2187 = vunpack.c.l.b16 %v1726
      %v2188 = vunpack.c.h.b16 %v1726
      %v2189 = vunpack.c.l.b16 %v1727
      %v2190 = vunpack.c.h.b16 %v1727
      %v2191 = vunpack.c.l.b16 %v1728
      %v2192 = vunpack.c.h.b16 %v1728
      %v2193 = vunpack.c.l.b16 %v1729
      %v2194 = vunpack.c.h.b16 %v1729
      %v2195 = vunpack.c.l.b16 %v1730
      %v2196 = vunpack.c.h.b16 %v1730
      %v2197 = vunpack.c.l.b16 %v1731
      %v2198 = vunpack.c.h.b16 %v1731
      %v2199 = vunpack.c.l.b16 %v1732
      %v2200 = vunpack.c.h.b16 %v1732
      %v2201 = vunpack.c.l.b16 %v1733
      %v2202 = vunpack.c.h.b16 %v1733
      %v2203 = vunpack.c.l.b16 %v1734
      %v2204 = vunpack.c.h.b16 %v1734
      %v2205 = vunpack.c.l.b16 %v1735
      %v2206 = vunpack.c.h.b16 %v1735
      %v2207 = vunpack.c.l.b16 %v1736
      %v2208 = vunpack.c.h.b16 %v1736
      %v2209 = vunpack.c.l.b16 %v1737
      %v2210 = vunpack.c.h.b16 %v1737
      %v2211 = vunpack.c.l.b16 %v1738
      %v2212 = vunpack.c.h.b16 %v1738
      %v2213 = vunpack.c.l.b16 %v1739
      %v2214 = vunpack.c.h.b16 %v1739
      %v2215 = vunpack.c.l.b16 %v1740
      %v2216 = vunpack.c.h.b16 %v1740
      %v2217 = vunpack.c.l.b16 %v1741
      %v2218 = vunpack.c.h.b16 %v1741
      %v2219 = vunpack.c.l.b16 %v1742
      %v2220 = vunpack.c.h.b16 %v1742
      %v2221 = vunpack.c.l.b16 %v1743
      %v2222 = vunpack.c.h.b16 %v1743
      %v2223 = vunpack.c.l.b16 %v1744
      %v2224 = vunpack.c.h.b16 %v1744
      %v2225 = vunpack.c.l.b16 %v1745
      %v2226 = vunpack.c.h.b16 %v1745
      %v2227 = vunpack.c.l.b16 %v1746
      %v2228 = vunpack.c.h.b16 %v1746
      %v2229 = vunpack.c.l.b16 %v1747
      %v2230 = vunpack.c.h.b16 %v1747
      %v2231 = vunpack.c.l.b16 %v1748
      %v2232 = vunpack.c.h.b16 %v1748
      %v2233 = vunpack.c.l.b16 %v1749
      %v2234 = vunpack.c.h.b16 %v1749
      %v2235 = vunpack.c.l.b16 %v1750
      %v2236 = vunpack.c.h.b16 %v1750
      %v2237 = vunpack.c.l.b16 %v1751
      %v2238 = vunpack.c.h.b16 %v1751
      %v2239 = vunpack.c.l.b16 %v1752
      %v2240 = vunpack.c.h.b16 %v1752
      %v2241 = vunpack.c.l.b16 %v1753
      %v2242 = vunpack.c.h.b16 %v1753
      %v2243 = vunpack.c.l.b16 %v1754
      %v2244 = vunpack.c.h.b16 %v1754
      %v2245 = vunpack.c.l.b16 %v1755
      %v2246 = vunpack.c.h.b16 %v1755
      %v2247 = vunpack.c.l.b16 %v1756
      %v2248 = vunpack.c.h.b16 %v1756
      %v2249 = vunpack.c.l.b16 %v1757
      %v2250 = vunpack.c.h.b16 %v1757
      %v2251 = vunpack.c.l.b16 %v1758
      %v2252 = vunpack.c.h.b16 %v1758
      %v2253 = vunpack.c.l.b16 %v1759
      %v2254 = vunpack.c.h.b16 %v1759
      %v2255 = vunpack.c.l.b16 %v1760
      %v2256 = vunpack.c.h.b16 %v1760
      %v2257 = vunpack.c.l.b16 %v1761
      %v2258 = vunpack.c.h.b16 %v1761
      %v2259 = vunpack.c.l.b16 %v1762
      %v2260 = vunpack.c.h.b16 %v1762
      %v2261 = vunpack.c.l.b16 %v1763
      %v2262 = vunpack.c.h.b16 %v1763
      %v2263 = vunpack.c.l.b16 %v1764
      %v2264 = vunpack.c.h.b16 %v1764
      %v2265 = vpack.c.b16 %v2189, %v2187
      %v2266 = vpack.c.b16 %v2190, %v2188
      %v2267 = vpack.c.b16 %v2193, %v2191
      %v2268 = vpack.c.b16 %v2194, %v2192
      %v2269 = vpack.c.b16 %v2197, %v2195
      %v2270 = vpack.c.b16 %v2198, %v2196
      %v2271 = vpack.c.b16 %v2201, %v2199
      %v2272 = vpack.c.b16 %v2202, %v2200
      %v2273 = vpack.c.b16 %v2205, %v2203
      %v2274 = vpack.c.b16 %v2206, %v2204
      %v2275 = vpack.c.b16 %v2209, %v2207
      %v2276 = vpack.c.b16 %v2210, %v2208
      %v2277 = vpack.c.b16 %v2213, %v2211
      %v2278 = vpack.c.b16 %v2214, %v2212
      %v2279 = vpack.c.b16 %v2217, %v2215
      %v2280 = vpack.c.b16 %v2218, %v2216
      %v2281 = vpack.c.b16 %v2221, %v2219
      %v2282 = vpack.c.b16 %v2222, %v2220
      %v2283 = vpack.c.b16 %v2225, %v2223
      %v2284 = vpack.c.b16 %v2226, %v2224
      %v2285 = vpack.c.b16 %v2229, %v2227
      %v2286 = vpack.c.b16 %v2230, %v2228
      %v2287 = vpack.c.b16 %v2233, %v2231
      %v2288 = vpack.c.b16 %v2234, %v2232
      %v2289 = vpack.c.b16 %v2237, %v2235
      %v2290 = vpack.c.b16 %v2238, %v2236
      %v2291 = vpack.c.b16 %v2241, %v2239
      %v2292 = vpack.c.b16 %v2242, %v2240
      %v2293 = vpack.c.b16 %v2245, %v2243
      %v2294 = vpack.c.b16 %v2246, %v2244
      %v2295 = vpack.c.b16 %v2249, %v2247
      %v2296 = vpack.c.b16 %v2250, %v2248
      %v2297 = vpack.c.b16 %v2253, %v2251
      %v2298 = vpack.c.b16 %v2254, %v2252
      %v2299 = vpack.c.b16 %v2257, %v2255
      %v2300 = vpack.c.b16 %v2258, %v2256
      %v2301 = vpack.c.b16 %v2261, %v2259
      %v2302 = vpack.c.b16 %v2262, %v2260
      %v2303 = vpack.c.b16 %v2263, %v2263
      %v2304 = vpack.c.b16 %v2264, %v2264
      %v2344 = vsel %vm648, %v2303, 0
      %v2347 = vsel %vm648, %v2304, 0
      %2349 = vmatprep.subr.bf16.mxu0 %v2266
      %2350 = vmatpush1.bf16.msra.mxu0 %v2265
      %2351 = vmatprep.subr.bf16.mxu0 %v2268
      %2352 = vmatpush1.bf16.msra.mxu0 %v2267
      %2353 = vmatprep.subr.bf16.mxu0 %v2270
      %2354 = vmatpush1.bf16.msra.mxu0 %v2269
      %2355 = vmatprep.subr.bf16.mxu0 %v2272
      %2356 = vmatpush1.bf16.msra.mxu0 %v2271
      %2357 = vmatprep.subr.bf16.mxu0 %v2274
      %2358 = vmatpush1.bf16.msra.mxu0 %v2273
      %2359 = vmatprep.subr.bf16.mxu0 %v2276
      %2360 = vmatpush1.bf16.msra.mxu0 %v2275
      %2361 = vmatprep.subr.bf16.mxu0 %v2278
      %2362 = vmatpush1.bf16.msra.mxu0 %v2277
      %2363 = vmatprep.subr.bf16.mxu0 %v2280
      %2364 = vmatpush1.bf16.msra.mxu0 %v2279
      %2365 = vmatprep.subr.bf16.mxu0 %v2282
      %2366 = vmatpush1.bf16.msra.mxu0 %v2281
      %2367 = vmatprep.subr.bf16.mxu0 %v2284
      %2368 = vmatpush1.bf16.msra.mxu0 %v2283
      %2369 = vmatprep.subr.bf16.mxu0 %v2286
      %2370 = vmatpush1.bf16.msra.mxu0 %v2285
      %2371 = vmatprep.subr.bf16.mxu0 %v2288
      %2372 = vmatpush1.bf16.msra.mxu0 %v2287
      %2373 = vmatprep.subr.bf16.mxu0 %v2290
      %2374 = vmatpush1.bf16.msra.mxu0 %v2289
      %2375 = vmatprep.subr.bf16.mxu0 %v2292
      %2376 = vmatpush1.bf16.msra.mxu0 %v2291
      %2377 = vmatprep.subr.bf16.mxu0 %v2294
      %2378 = vmatpush1.bf16.msra.mxu0 %v2293
      %2379 = vmatprep.subr.bf16.mxu0 %v2296
      %2380 = vmatpush1.bf16.msra.mxu0 %v2295
      %2381 = vmatprep.mubr.bf16.mxu0 %v833
      %2382 = vmatmul.mubr.bf16.gmra.mrb[0].mxu0 %v832
      %v2383 = vpop.f32.mrb[0].mxu0
      %v2384 = vadd.f32 %v2112, %v2383
      %v2385 = vpop.f32.mrb[0].mxu0
      %v2386 = vadd.f32 %v2114, %v2385
      %v2387 = vpop.f32.mrb[0].mxu0
      %v2388 = vadd.f32 %v2116, %v2387
      %v2389 = vpop.f32.mrb[0].mxu0
      %v2390 = vadd.f32 %v2118, %v2389
      %2391 = vmatprep.mubr.bf16.mxu0 %v836
      %2392 = vmatmul.mubr.bf16.gmra.mrb[0].mxu0 %v835
      %v2393 = vpop.f32.mrb[0].mxu0
      %v2394 = vadd.f32 %v2122, %v2393
      %v2395 = vpop.f32.mrb[0].mxu0
      %v2396 = vadd.f32 %v2124, %v2395
      %v2397 = vpop.f32.mrb[0].mxu0
      %v2398 = vadd.f32 %v2126, %v2397
      %v2399 = vpop.f32.mrb[0].mxu0
      %v2400 = vadd.f32 %v2128, %v2399
      %2401 = vmatprep.mubr.bf16.mxu0 %v839
      %2402 = vmatmul.mubr.bf16.gmra.mrb[0].mxu0 %v838
      %v2403 = vpop.f32.mrb[0].mxu0
      %v2404 = vadd.f32 %v2132, %v2403
      %v2405 = vpop.f32.mrb[0].mxu0
      %v2406 = vadd.f32 %v2134, %v2405
      %v2407 = vpop.f32.mrb[0].mxu0
      %v2408 = vadd.f32 %v2136, %v2407
      %v2409 = vpop.f32.mrb[0].mxu0
      %v2410 = vadd.f32 %v2138, %v2409
      %2411 = vmatprep.mubr.bf16.mxu0 %v842
      %2412 = vmatmul.mubr.bf16.gmra.mrb[0].mxu0 %v841
      %v2413 = vpop.f32.mrb[0].mxu0
      %v2414 = vadd.f32 %v2142, %v2413
      %v2415 = vpop.f32.mrb[0].mxu0
      %v2416 = vadd.f32 %v2144, %v2415
      %v2417 = vpop.f32.mrb[0].mxu0
      %v2418 = vpop.f32.mrb[0].mxu0
      %2419 = vdwg.mxu0
      %2420 = vmatprep.subr.bf16.mxu0 %v2298
      %2421 = vmatpush1.bf16.msra.mxu0 %v2297
      %2422 = vmatprep.subr.bf16.mxu0 %v2300
      %2423 = vmatpush1.bf16.msra.mxu0 %v2299
      %2424 = vmatprep.subr.bf16.mxu0 %v2302
      %2425 = vmatpush1.bf16.msra.mxu0 %v2301
      %2426 = vmatprep.subr.bf16.mxu0 %v2347
      %2427 = vmatpush1.bf16.msra.mxu0 %v2344
      %2428 = vmatprep.subr.bf16.mxu0 0
      %2429 = vmatpush1.bf16.msra.mxu0 0
      %2430 = vmatprep.subr.bf16.mxu0 0
      %2431 = vmatpush1.bf16.msra.mxu0 0
      %2432 = vmatprep.subr.bf16.mxu0 0
      %2433 = vmatpush1.bf16.msra.mxu0 0
      %2434 = vmatprep.subr.bf16.mxu0 0
      %2435 = vmatpush1.bf16.msra.mxu0 0
      %2436 = vmatprep.subr.bf16.mxu0 0
      %2437 = vmatpush1.bf16.msra.mxu0 0
      %2438 = vmatprep.subr.bf16.mxu0 0
      %2439 = vmatpush1.bf16.msra.mxu0 0
      %2440 = vmatprep.subr.bf16.mxu0 0
      %2441 = vmatpush1.bf16.msra.mxu0 0
      %2442 = vmatprep.subr.bf16.mxu0 0
      %2443 = vmatpush1.bf16.msra.mxu0 0
      %2444 = vmatprep.subr.bf16.mxu0 0
      %2445 = vmatpush1.bf16.msra.mxu0 0
      %2446 = vmatprep.subr.bf16.mxu0 0
      %2447 = vmatpush1.bf16.msra.mxu0 0
      %2448 = vmatprep.subr.bf16.mxu0 0
      %2449 = vmatpush1.bf16.msra.mxu0 0
      %2450 = vmatprep.subr.bf16.mxu0 0
      %2451 = vmatpush1.bf16.msra.mxu0 0
      %2452 = vmatprep.mubr.bf16.mxu0 0
      %2453 = vmatmul.mubr.bf16.gmra.mrb[0].mxu0 %v1048
      %v2454 = vpop.f32.mrb[0].mxu0
      %v2455 = vadd.f32 %v2384, %v2454
      %v2456 = vpop.f32.mrb[0].mxu0
      %v2457 = vadd.f32 %v2386, %v2456
      %v2458 = vpop.f32.mrb[0].mxu0
      %v2459 = vadd.f32 %v2388, %v2458
      %v2460 = vpop.f32.mrb[0].mxu0
      %v2461 = vadd.f32 %v2390, %v2460
      %2462 = vmatprep.mubr.bf16.mxu0 0
      %2463 = vmatmul.mubr.bf16.gmra.mrb[0].mxu0 %v1051
      %v2464 = vpop.f32.mrb[0].mxu0
      %v2465 = vadd.f32 %v2394, %v2464
      %v2466 = vpop.f32.mrb[0].mxu0
      %v2467 = vadd.f32 %v2396, %v2466
      %v2468 = vpop.f32.mrb[0].mxu0
      %v2469 = vadd.f32 %v2398, %v2468
      %v2470 = vpop.f32.mrb[0].mxu0
      %v2471 = vadd.f32 %v2400, %v2470
      %2472 = vmatprep.mubr.bf16.mxu0 0
      %2473 = vmatmul.mubr.bf16.gmra.mrb[0].mxu0 %v1054
      %v2474 = vpop.f32.mrb[0].mxu0
      %v2475 = vadd.f32 %v2404, %v2474
      %v2476 = vpop.f32.mrb[0].mxu0
      %v2477 = vadd.f32 %v2406, %v2476
      %v2478 = vpop.f32.mrb[0].mxu0
      %v2479 = vadd.f32 %v2408, %v2478
      %v2480 = vpop.f32.mrb[0].mxu0
      %v2481 = vadd.f32 %v2410, %v2480
      %2482 = vmatprep.mubr.bf16.mxu0 0
      %2483 = vmatmul.mubr.bf16.gmra.mrb[0].mxu0 %v1057
      %v2484 = vpop.f32.mrb[0].mxu0
      %v2485 = vadd.f32 %v2414, %v2484
      %v2486 = vpop.f32.mrb[0].mxu0
      %v2487 = vadd.f32 %v2416, %v2486
      %v2488 = vpop.f32.mrb[0].mxu0
      %v2489 = vpop.f32.mrb[0].mxu0
      %2490 = vdwg.mxu0
      %s2491 = scalar_lea.vmem %s1, 1560
      %v2492 = vld [vmem:[%s2491] sm:$0xff]
      %v2493 = vld [vmem:[%s2491 + $0x8] sm:$0xff]
      %v2494 = vld [vmem:[%s2491 + $0x10] sm:$0xff]
      %v2495 = vld [vmem:[%s2491 + $0x18] sm:$0xff]
      %v2496 = vld [vmem:[%s2491 + $0x20] sm:$0xff]
      %v2497 = vld [vmem:[%s2491 + $0x28] sm:$0xff]
      %v2498 = vld [vmem:[%s2491 + $0x30] sm:$0xff]
      %v2499 = vld [vmem:[%s2491 + $0x38] sm:$0xff]
      %v2500 = vld [vmem:[%s2491 + $0x40] sm:$0xff]
      %v2501 = vld [vmem:[%s2491 + $0x48] sm:$0xff]
      %v2502 = vld [vmem:[%s2491 + $0x50] sm:$0xff]
      %v2503 = vld [vmem:[%s2491 + $0x58] sm:$0xff]
      %v2504 = vld [vmem:[%s2491 + $0x60] sm:$0xff]
      %v2505 = vld [vmem:[%s2491 + $0x68] sm:$0xff]
      %v2506 = vld [vmem:[%s2491 + $0x70] sm:$0xff]
      %v2507 = vld [vmem:[%s2491 + $0x78] sm:$0xff]
      %v2508 = vld [vmem:[%s2491 + $0x80] sm:$0xff]
      %v2509 = vld [vmem:[%s2491 + $0x88] sm:$0xff]
      %v2510 = vld [vmem:[%s2491 + $0x90] sm:$0xff]
      %v2511 = vld [vmem:[%s2491 + $0x98] sm:$0xff]
      %v2512 = vld [vmem:[%s2491 + $0xa0] sm:$0xff]
      %v2513 = vld [vmem:[%s2491 + $0xa8] sm:$0xff]
      %v2514 = vld [vmem:[%s2491 + $0xb0] sm:$0xff]
      %v2515 = vld [vmem:[%s2491 + $0xb8] sm:$0xff]
      %v2516 = vld [vmem:[%s2491 + $0xc0] sm:$0xff]
      %v2517 = vld [vmem:[%s2491 + $0xc8] sm:$0xff]
      %v2518 = vld [vmem:[%s2491 + $0xd0] sm:$0xff]
      %v2519 = vld [vmem:[%s2491 + $0xd8] sm:$0xff]
      %v2520 = vld [vmem:[%s2491 + $0xe0] sm:$0xff]
      %v2521 = vld [vmem:[%s2491 + $0xe8] sm:$0xff]
      %v2522 = vld [vmem:[%s2491 + $0xf0] sm:$0xff]
      %v2523 = vld [vmem:[%s2491 + $0xf8] sm:$0xff]
      %v2524 = vld [vmem:[%s2491 + $0x100] sm:$0xff]
      %v2525 = vld [vmem:[%s2491 + $0x108] sm:$0xff]
      %v2526 = vld [vmem:[%s2491 + $0x110] sm:$0xff]
      %v2527 = vld [vmem:[%s2491 + $0x118] sm:$0xff]
      %v2528 = vld [vmem:[%s2491 + $0x120] sm:$0xff]
      %v2529 = vld [vmem:[%s2491 + $0x128] sm:$0xff]
      %v2530 = vld [vmem:[%s2491 + $0x130] sm:$0x11]
      %v2570 = vunpack.c.l.b16 %v2492
      %v2571 = vunpack.c.h.b16 %v2492
      %v2572 = vunpack.c.l.b16 %v2493
      %v2573 = vunpack.c.h.b16 %v2493
      %v2574 = vunpack.c.l.b16 %v2494
      %v2575 = vunpack.c.h.b16 %v2494
      %v2576 = vunpack.c.l.b16 %v2495
      %v2577 = vunpack.c.h.b16 %v2495
      %v2578 = vunpack.c.l.b16 %v2496
      %v2579 = vunpack.c.h.b16 %v2496
      %v2580 = vunpack.c.l.b16 %v2497
      %v2581 = vunpack.c.h.b16 %v2497
      %v2582 = vunpack.c.l.b16 %v2498
      %v2583 = vunpack.c.h.b16 %v2498
      %v2584 = vunpack.c.l.b16 %v2499
      %v2585 = vunpack.c.h.b16 %v2499
      %v2586 = vunpack.c.l.b16 %v2500
      %v2587 = vunpack.c.h.b16 %v2500
      %v2588 = vunpack.c.l.b16 %v2501
      %v2589 = vunpack.c.h.b16 %v2501
      %v2590 = vunpack.c.l.b16 %v2502
      %v2591 = vunpack.c.h.b16 %v2502
      %v2592 = vunpack.c.l.b16 %v2503
      %v2593 = vunpack.c.h.b16 %v2503
      %v2594 = vunpack.c.l.b16 %v2504
      %v2595 = vunpack.c.h.b16 %v2504
      %v2596 = vunpack.c.l.b16 %v2505
      %v2597 = vunpack.c.h.b16 %v2505
      %v2598 = vunpack.c.l.b16 %v2506
      %v2599 = vunpack.c.h.b16 %v2506
      %v2600 = vunpack.c.l.b16 %v2507
      %v2601 = vunpack.c.h.b16 %v2507
      %v2602 = vunpack.c.l.b16 %v2508
      %v2603 = vunpack.c.h.b16 %v2508
      %v2604 = vunpack.c.l.b16 %v2509
      %v2605 = vunpack.c.h.b16 %v2509
      %v2606 = vunpack.c.l.b16 %v2510
      %v2607 = vunpack.c.h.b16 %v2510
      %v2608 = vunpack.c.l.b16 %v2511
      %v2609 = vunpack.c.h.b16 %v2511
      %v2610 = vunpack.c.l.b16 %v2512
      %v2611 = vunpack.c.h.b16 %v2512
      %v2612 = vunpack.c.l.b16 %v2513
      %v2613 = vunpack.c.h.b16 %v2513
      %v2614 = vunpack.c.l.b16 %v2514
      %v2615 = vunpack.c.h.b16 %v2514
      %v2616 = vunpack.c.l.b16 %v2515
      %v2617 = vunpack.c.h.b16 %v2515
      %v2618 = vunpack.c.l.b16 %v2516
      %v2619 = vunpack.c.h.b16 %v2516
      %v2620 = vunpack.c.l.b16 %v2517
      %v2621 = vunpack.c.h.b16 %v2517
      %v2622 = vunpack.c.l.b16 %v2518
      %v2623 = vunpack.c.h.b16 %v2518
      %v2624 = vunpack.c.l.b16 %v2519
      %v2625 = vunpack.c.h.b16 %v2519
      %v2626 = vunpack.c.l.b16 %v2520
      %v2627 = vunpack.c.h.b16 %v2520
      %v2628 = vunpack.c.l.b16 %v2521
      %v2629 = vunpack.c.h.b16 %v2521
      %v2630 = vunpack.c.l.b16 %v2522
      %v2631 = vunpack.c.h.b16 %v2522
      %v2632 = vunpack.c.l.b16 %v2523
      %v2633 = vunpack.c.h.b16 %v2523
      %v2634 = vunpack.c.l.b16 %v2524
      %v2635 = vunpack.c.h.b16 %v2524
      %v2636 = vunpack.c.l.b16 %v2525
      %v2637 = vunpack.c.h.b16 %v2525
      %v2638 = vunpack.c.l.b16 %v2526
      %v2639 = vunpack.c.h.b16 %v2526
      %v2640 = vunpack.c.l.b16 %v2527
      %v2641 = vunpack.c.h.b16 %v2527
      %v2642 = vunpack.c.l.b16 %v2528
      %v2643 = vunpack.c.h.b16 %v2528
      %v2644 = vunpack.c.l.b16 %v2529
      %v2645 = vunpack.c.h.b16 %v2529
      %v2646 = vunpack.c.l.b16 %v2530
      %v2647 = vunpack.c.h.b16 %v2530
      %v2648 = vpack.c.b16 %v2572, %v2570
      %v2649 = vpack.c.b16 %v2573, %v2571
      %v2650 = vpack.c.b16 %v2576, %v2574
      %v2651 = vpack.c.b16 %v2577, %v2575
      %v2652 = vpack.c.b16 %v2580, %v2578
      %v2653 = vpack.c.b16 %v2581, %v2579
      %v2654 = vpack.c.b16 %v2584, %v2582
      %v2655 = vpack.c.b16 %v2585, %v2583
      %v2656 = vpack.c.b16 %v2588, %v2586
      %v2657 = vpack.c.b16 %v2589, %v2587
      %v2658 = vpack.c.b16 %v2592, %v2590
      %v2659 = vpack.c.b16 %v2593, %v2591
      %v2660 = vpack.c.b16 %v2596, %v2594
      %v2661 = vpack.c.b16 %v2597, %v2595
      %v2662 = vpack.c.b16 %v2600, %v2598
      %v2663 = vpack.c.b16 %v2601, %v2599
      %v2664 = vpack.c.b16 %v2604, %v2602
      %v2665 = vpack.c.b16 %v2605, %v2603
      %v2666 = vpack.c.b16 %v2608, %v2606
      %v2667 = vpack.c.b16 %v2609, %v2607
      %v2668 = vpack.c.b16 %v2612, %v2610
      %v2669 = vpack.c.b16 %v2613, %v2611
      %v2670 = vpack.c.b16 %v2616, %v2614
      %v2671 = vpack.c.b16 %v2617, %v2615
      %v2672 = vpack.c.b16 %v2620, %v2618
      %v2673 = vpack.c.b16 %v2621, %v2619
      %v2674 = vpack.c.b16 %v2624, %v2622
      %v2675 = vpack.c.b16 %v2625, %v2623
      %v2676 = vpack.c.b16 %v2628, %v2626
      %v2677 = vpack.c.b16 %v2629, %v2627
      %v2678 = vpack.c.b16 %v2632, %v2630
      %v2679 = vpack.c.b16 %v2633, %v2631
      %v2680 = vpack.c.b16 %v2636, %v2634
      %v2681 = vpack.c.b16 %v2637, %v2635
      %v2682 = vpack.c.b16 %v2640, %v2638
      %v2683 = vpack.c.b16 %v2641, %v2639
      %v2684 = vpack.c.b16 %v2644, %v2642
      %v2685 = vpack.c.b16 %v2645, %v2643
      %v2686 = vpack.c.b16 %v2646, %v2646
      %v2687 = vpack.c.b16 %v2647, %v2647
      %v2727 = vsel %vm648, %v2686, 0
      %v2730 = vsel %vm648, %v2687, 0
      %2732 = vmatprep.subr.bf16.mxu0 %v2649
      %2733 = vmatpush1.bf16.msra.mxu0 %v2648
      %2734 = vmatprep.subr.bf16.mxu0 %v2651
      %2735 = vmatpush1.bf16.msra.mxu0 %v2650
      %2736 = vmatprep.subr.bf16.mxu0 %v2653
      %2737 = vmatpush1.bf16.msra.mxu0 %v2652
      %2738 = vmatprep.subr.bf16.mxu0 %v2655
      %2739 = vmatpush1.bf16.msra.mxu0 %v2654
      %2740 = vmatprep.subr.bf16.mxu0 %v2657
      %2741 = vmatpush1.bf16.msra.mxu0 %v2656
      %2742 = vmatprep.subr.bf16.mxu0 %v2659
      %2743 = vmatpush1.bf16.msra.mxu0 %v2658
      %2744 = vmatprep.subr.bf16.mxu0 %v2661
      %2745 = vmatpush1.bf16.msra.mxu0 %v2660
      %2746 = vmatprep.subr.bf16.mxu0 %v2663
      %2747 = vmatpush1.bf16.msra.mxu0 %v2662
      %2748 = vmatprep.subr.bf16.mxu0 %v2665
      %2749 = vmatpush1.bf16.msra.mxu0 %v2664
      %2750 = vmatprep.subr.bf16.mxu0 %v2667
      %2751 = vmatpush1.bf16.msra.mxu0 %v2666
      %2752 = vmatprep.subr.bf16.mxu0 %v2669
      %2753 = vmatpush1.bf16.msra.mxu0 %v2668
      %2754 = vmatprep.subr.bf16.mxu0 %v2671
      %2755 = vmatpush1.bf16.msra.mxu0 %v2670
      %2756 = vmatprep.subr.bf16.mxu0 %v2673
      %2757 = vmatpush1.bf16.msra.mxu0 %v2672
      %2758 = vmatprep.subr.bf16.mxu0 %v2675
      %2759 = vmatpush1.bf16.msra.mxu0 %v2674
      %2760 = vmatprep.subr.bf16.mxu0 %v2677
      %2761 = vmatpush1.bf16.msra.mxu0 %v2676
      %2762 = vmatprep.subr.bf16.mxu0 %v2679
      %2763 = vmatpush1.bf16.msra.mxu0 %v2678
      %2764 = vmatprep.mubr.bf16.mxu0 %v1281
      %2765 = vmatmul.mubr.bf16.gmra.mrb[0].mxu0 %v1269
      %v2766 = vpop.f32.mrb[0].mxu0
      %v2767 = vadd.f32 0.0, %v2766
      %v2768 = vpop.f32.mrb[0].mxu0
      %v2769 = vadd.f32 0.0, %v2768
      %v2770 = vpop.f32.mrb[0].mxu0
      %v2771 = vadd.f32 0.0, %v2770
      %v2772 = vpop.f32.mrb[0].mxu0
      %v2773 = vadd.f32 0.0, %v2772
      %2774 = vmatprep.mubr.bf16.mxu0 %v1307
      %2775 = vmatmul.mubr.bf16.gmra.mrb[0].mxu0 %v1299
      %v2776 = vpop.f32.mrb[0].mxu0
      %v2777 = vadd.f32 0.0, %v2776
      %v2778 = vpop.f32.mrb[0].mxu0
      %v2779 = vadd.f32 0.0, %v2778
      %v2780 = vpop.f32.mrb[0].mxu0
      %v2781 = vadd.f32 0.0, %v2780
      %v2782 = vpop.f32.mrb[0].mxu0
      %v2783 = vadd.f32 0.0, %v2782
      %2784 = vmatprep.mubr.bf16.mxu0 %v1330
      %2785 = vmatmul.mubr.bf16.gmra.mrb[0].mxu0 %v1322
      %v2786 = vpop.f32.mrb[0].mxu0
      %v2787 = vadd.f32 0.0, %v2786
      %v2788 = vpop.f32.mrb[0].mxu0
      %v2789 = vadd.f32 0.0, %v2788
      %v2790 = vpop.f32.mrb[0].mxu0
      %v2791 = vadd.f32 0.0, %v2790
      %v2792 = vpop.f32.mrb[0].mxu0
      %v2793 = vadd.f32 0.0, %v2792
      %2794 = vmatprep.mubr.bf16.mxu0 %v1344
      %2795 = vmatmul.mubr.bf16.gmra.mrb[0].mxu0 %v1341
      %v2796 = vpop.f32.mrb[0].mxu0
      %v2797 = vadd.f32 0.0, %v2796
      %v2798 = vpop.f32.mrb[0].mxu0
      %v2799 = vadd.f32 0.0, %v2798
      %v2800 = vpop.f32.mrb[0].mxu0
      %v2801 = vpop.f32.mrb[0].mxu0
      %2802 = vdwg.mxu0
      %2803 = vmatprep.subr.bf16.mxu0 %v2681
      %2804 = vmatpush1.bf16.msra.mxu0 %v2680
      %2805 = vmatprep.subr.bf16.mxu0 %v2683
      %2806 = vmatpush1.bf16.msra.mxu0 %v2682
      %2807 = vmatprep.subr.bf16.mxu0 %v2685
      %2808 = vmatpush1.bf16.msra.mxu0 %v2684
      %2809 = vmatprep.subr.bf16.mxu0 %v2730
      %2810 = vmatpush1.bf16.msra.mxu0 %v2727
      %2811 = vmatprep.subr.bf16.mxu0 0
      %2812 = vmatpush1.bf16.msra.mxu0 0
      %2813 = vmatprep.subr.bf16.mxu0 0
      %2814 = vmatpush1.bf16.msra.mxu0 0
      %2815 = vmatprep.subr.bf16.mxu0 0
      %2816 = vmatpush1.bf16.msra.mxu0 0
      %2817 = vmatprep.subr.bf16.mxu0 0
      %2818 = vmatpush1.bf16.msra.mxu0 0
      %2819 = vmatprep.subr.bf16.mxu0 0
      %2820 = vmatpush1.bf16.msra.mxu0 0
      %2821 = vmatprep.subr.bf16.mxu0 0
      %2822 = vmatpush1.bf16.msra.mxu0 0
      %2823 = vmatprep.subr.bf16.mxu0 0
      %2824 = vmatpush1.bf16.msra.mxu0 0
      %2825 = vmatprep.subr.bf16.mxu0 0
      %2826 = vmatpush1.bf16.msra.mxu0 0
      %2827 = vmatprep.subr.bf16.mxu0 0
      %2828 = vmatpush1.bf16.msra.mxu0 0
      %2829 = vmatprep.subr.bf16.mxu0 0
      %2830 = vmatpush1.bf16.msra.mxu0 0
      %2831 = vmatprep.subr.bf16.mxu0 0
      %2832 = vmatpush1.bf16.msra.mxu0 0
      %2833 = vmatprep.subr.bf16.mxu0 0
      %2834 = vmatpush1.bf16.msra.mxu0 0
      %2835 = vmatprep.mubr.bf16.mxu0 0
      %2836 = vmatmul.mubr.bf16.gmra.mrb[0].mxu0 %v1552
      %v2837 = vpop.f32.mrb[0].mxu0
      %v2838 = vadd.f32 %v2767, %v2837
      %v2839 = vpop.f32.mrb[0].mxu0
      %v2840 = vadd.f32 %v2769, %v2839
      %v2841 = vpop.f32.mrb[0].mxu0
      %v2842 = vadd.f32 %v2771, %v2841
      %v2843 = vpop.f32.mrb[0].mxu0
      %v2844 = vadd.f32 %v2773, %v2843
      %2845 = vmatprep.mubr.bf16.mxu0 0
      %2846 = vmatmul.mubr.bf16.gmra.mrb[0].mxu0 %v1555
      %v2847 = vpop.f32.mrb[0].mxu0
      %v2848 = vadd.f32 %v2777, %v2847
      %v2849 = vpop.f32.mrb[0].mxu0
      %v2850 = vadd.f32 %v2779, %v2849
      %v2851 = vpop.f32.mrb[0].mxu0
      %v2852 = vadd.f32 %v2781, %v2851
      %v2853 = vpop.f32.mrb[0].mxu0
      %v2854 = vadd.f32 %v2783, %v2853
      %2855 = vmatprep.mubr.bf16.mxu0 0
      %2856 = vmatmul.mubr.bf16.gmra.mrb[0].mxu0 %v1558
      %v2857 = vpop.f32.mrb[0].mxu0
      %v2858 = vadd.f32 %v2787, %v2857
      %v2859 = vpop.f32.mrb[0].mxu0
      %v2860 = vadd.f32 %v2789, %v2859
      %v2861 = vpop.f32.mrb[0].mxu0
      %v2862 = vadd.f32 %v2791, %v2861
      %v2863 = vpop.f32.mrb[0].mxu0
      %v2864 = vadd.f32 %v2793, %v2863
      %2865 = vmatprep.mubr.bf16.mxu0 0
      %2866 = vmatmul.mubr.bf16.gmra.mrb[0].mxu0 %v1561
      %v2867 = vpop.f32.mrb[0].mxu0
      %v2868 = vadd.f32 %v2797, %v2867
      %v2869 = vpop.f32.mrb[0].mxu0
      %v2870 = vadd.f32 %v2799, %v2869
      %v2871 = vpop.f32.mrb[0].mxu0
      %v2872 = vpop.f32.mrb[0].mxu0
      %2873 = vdwg.mxu0
      %v2874 = vadd.f32 %v2455, %v2838
      %v2875 = vadd.f32 %v2457, %v2840
      %v2876 = vadd.f32 %v2459, %v2842
      %v2877 = vadd.f32 %v2461, %v2844
      %v2878 = vadd.f32 %v2465, %v2848
      %v2879 = vadd.f32 %v2467, %v2850
      %v2880 = vadd.f32 %v2469, %v2852
      %v2881 = vadd.f32 %v2471, %v2854
      %v2882 = vadd.f32 %v2475, %v2858
      %v2883 = vadd.f32 %v2477, %v2860
      %v2884 = vadd.f32 %v2479, %v2862
      %v2885 = vadd.f32 %v2481, %v2864
      %v2886 = vadd.f32 %v2485, %v2868
      %v2887 = vadd.f32 %v2487, %v2870
      %v2888 = vmax.f32 %v1711, %v2874
      %v2889 = vmax.f32 %v1712, %v2875
      %v2890 = vmax.f32 %v1713, %v2876
      %v2891 = vmax.f32 %v1714, %v2877
      %v2892 = vmax.f32 %v1715, %v2878
      %v2893 = vmax.f32 %v1716, %v2879
      %v2894 = vmax.f32 %v1717, %v2880
      %v2895 = vmax.f32 %v1718, %v2881
      %v2896 = vmax.f32 %v1719, %v2882
      %v2897 = vmax.f32 %v1720, %v2883
      %v2898 = vmax.f32 %v1721, %v2884
      %v2899 = vmax.f32 %v1722, %v2885
      %v2900 = vmax.f32 %v1723, %v2886
      %v2901 = vmax.f32 %v1724, %v2887
      %2902 = vmatprep.subr.bf16.mxu0 %v558
      %2903 = vmatpush1.bf16.msra.mxu0 %v557
      %2904 = vmatprep.subr.bf16.mxu0 %v560
      %2905 = vmatpush1.bf16.msra.mxu0 %v559
      %2906 = vmatprep.subr.bf16.mxu0 %v562
      %2907 = vmatpush1.bf16.msra.mxu0 %v561
      %2908 = vmatprep.subr.bf16.mxu0 %v564
      %2909 = vmatpush1.bf16.msra.mxu0 %v563
      %2910 = vmatprep.subr.bf16.mxu0 %v566
      %2911 = vmatpush1.bf16.msra.mxu0 %v565
      %2912 = vmatprep.subr.bf16.mxu0 %v568
      %2913 = vmatpush1.bf16.msra.mxu0 %v567
      %2914 = vmatprep.subr.bf16.mxu0 %v570
      %2915 = vmatpush1.bf16.msra.mxu0 %v569
      %2916 = vmatprep.subr.bf16.mxu0 %v572
      %2917 = vmatpush1.bf16.msra.mxu0 %v571
      %2918 = vmatprep.subr.bf16.mxu0 %v574
      %2919 = vmatpush1.bf16.msra.mxu0 %v573
      %2920 = vmatprep.subr.bf16.mxu0 %v576
      %2921 = vmatpush1.bf16.msra.mxu0 %v575
      %2922 = vmatprep.subr.bf16.mxu0 %v578
      %2923 = vmatpush1.bf16.msra.mxu0 %v577
      %2924 = vmatprep.subr.bf16.mxu0 %v580
      %2925 = vmatpush1.bf16.msra.mxu0 %v579
      %2926 = vmatprep.subr.bf16.mxu0 %v582
      %2927 = vmatpush1.bf16.msra.mxu0 %v581
      %2928 = vmatprep.subr.bf16.mxu0 %v584
      %2929 = vmatpush1.bf16.msra.mxu0 %v583
      %2930 = vmatprep.subr.bf16.mxu0 %v586
      %2931 = vmatpush1.bf16.msra.mxu0 %v585
      %2932 = vmatprep.subr.bf16.mxu0 %v588
      %2933 = vmatpush1.bf16.msra.mxu0 %v587
      %2934 = vmatprep.mubr.bf16.mxu0 %v1281
      %2935 = vmatmul.mubr.bf16.gmra.mrb[0].mxu0 %v1269
      %v2936 = vpop.f32.mrb[0].mxu0
      %v2937 = vadd.f32 0.0, %v2936
      %v2938 = vpop.f32.mrb[0].mxu0
      %v2939 = vadd.f32 0.0, %v2938
      %v2940 = vpop.f32.mrb[0].mxu0
      %v2941 = vadd.f32 0.0, %v2940
      %v2942 = vpop.f32.mrb[0].mxu0
      %v2943 = vadd.f32 0.0, %v2942
      %2944 = vmatprep.mubr.bf16.mxu0 %v1307
      %2945 = vmatmul.mubr.bf16.gmra.mrb[0].mxu0 %v1299
      %v2946 = vpop.f32.mrb[0].mxu0
      %v2947 = vadd.f32 0.0, %v2946
      %v2948 = vpop.f32.mrb[0].mxu0
      %v2949 = vadd.f32 0.0, %v2948
      %v2950 = vpop.f32.mrb[0].mxu0
      %v2951 = vadd.f32 0.0, %v2950
      %v2952 = vpop.f32.mrb[0].mxu0
      %v2953 = vadd.f32 0.0, %v2952
      %2954 = vmatprep.mubr.bf16.mxu0 %v1330
      %2955 = vmatmul.mubr.bf16.gmra.mrb[0].mxu0 %v1322
      %v2956 = vpop.f32.mrb[0].mxu0
      %v2957 = vadd.f32 0.0, %v2956
      %v2958 = vpop.f32.mrb[0].mxu0
      %v2959 = vadd.f32 0.0, %v2958
      %v2960 = vpop.f32.mrb[0].mxu0
      %v2961 = vadd.f32 0.0, %v2960
      %v2962 = vpop.f32.mrb[0].mxu0
      %v2963 = vadd.f32 0.0, %v2962
      %2964 = vmatprep.mubr.bf16.mxu0 %v1344
      %2965 = vmatmul.mubr.bf16.gmra.mrb[0].mxu0 %v1341
      %v2966 = vpop.f32.mrb[0].mxu0
      %v2967 = vadd.f32 0.0, %v2966
      %v2968 = vpop.f32.mrb[0].mxu0
      %v2969 = vadd.f32 0.0, %v2968
      %v2970 = vpop.f32.mrb[0].mxu0
      %v2971 = vpop.f32.mrb[0].mxu0
      %2972 = vdwg.mxu0
      %2973 = vmatprep.subr.bf16.mxu0 %v590
      %2974 = vmatpush1.bf16.msra.mxu0 %v589
      %2975 = vmatprep.subr.bf16.mxu0 %v592
      %2976 = vmatpush1.bf16.msra.mxu0 %v591
      %2977 = vmatprep.subr.bf16.mxu0 %v594
      %2978 = vmatpush1.bf16.msra.mxu0 %v593
      %2979 = vmatprep.subr.bf16.mxu0 %v653
      %2980 = vmatpush1.bf16.msra.mxu0 %v650
      %2981 = vmatprep.subr.bf16.mxu0 0
      %2982 = vmatpush1.bf16.msra.mxu0 0
      %2983 = vmatprep.subr.bf16.mxu0 0
      %2984 = vmatpush1.bf16.msra.mxu0 0
      %2985 = vmatprep.subr.bf16.mxu0 0
      %2986 = vmatpush1.bf16.msra.mxu0 0
      %2987 = vmatprep.subr.bf16.mxu0 0
      %2988 = vmatpush1.bf16.msra.mxu0 0
      %2989 = vmatprep.subr.bf16.mxu0 0
      %2990 = vmatpush1.bf16.msra.mxu0 0
      %2991 = vmatprep.subr.bf16.mxu0 0
      %2992 = vmatpush1.bf16.msra.mxu0 0
      %2993 = vmatprep.subr.bf16.mxu0 0
      %2994 = vmatpush1.bf16.msra.mxu0 0
      %2995 = vmatprep.subr.bf16.mxu0 0
      %2996 = vmatpush1.bf16.msra.mxu0 0
      %2997 = vmatprep.subr.bf16.mxu0 0
      %2998 = vmatpush1.bf16.msra.mxu0 0
      %2999 = vmatprep.subr.bf16.mxu0 0
      %3000 = vmatpush1.bf16.msra.mxu0 0
      %3001 = vmatprep.subr.bf16.mxu0 0
      %3002 = vmatpush1.bf16.msra.mxu0 0
      %3003 = vmatprep.subr.bf16.mxu0 0
      %3004 = vmatpush1.bf16.msra.mxu0 0
      %3005 = vmatprep.mubr.bf16.mxu0 0
      %3006 = vmatmul.mubr.bf16.gmra.mrb[0].mxu0 %v1552
      %v3007 = vpop.f32.mrb[0].mxu0
      %v3008 = vadd.f32 %v2937, %v3007
      %v3009 = vpop.f32.mrb[0].mxu0
      %v3010 = vadd.f32 %v2939, %v3009
      %v3011 = vpop.f32.mrb[0].mxu0
      %v3012 = vadd.f32 %v2941, %v3011
      %v3013 = vpop.f32.mrb[0].mxu0
      %v3014 = vadd.f32 %v2943, %v3013
      %3015 = vmatprep.mubr.bf16.mxu0 0
      %3016 = vmatmul.mubr.bf16.gmra.mrb[0].mxu0 %v1555
      %v3017 = vpop.f32.mrb[0].mxu0
      %v3018 = vadd.f32 %v2947, %v3017
      %v3019 = vpop.f32.mrb[0].mxu0
      %v3020 = vadd.f32 %v2949, %v3019
      %v3021 = vpop.f32.mrb[0].mxu0
      %v3022 = vadd.f32 %v2951, %v3021
      %v3023 = vpop.f32.mrb[0].mxu0
      %v3024 = vadd.f32 %v2953, %v3023
      %3025 = vmatprep.mubr.bf16.mxu0 0
      %3026 = vmatmul.mubr.bf16.gmra.mrb[0].mxu0 %v1558
      %v3027 = vpop.f32.mrb[0].mxu0
      %v3028 = vadd.f32 %v2957, %v3027
      %v3029 = vpop.f32.mrb[0].mxu0
      %v3030 = vadd.f32 %v2959, %v3029
      %v3031 = vpop.f32.mrb[0].mxu0
      %v3032 = vadd.f32 %v2961, %v3031
      %v3033 = vpop.f32.mrb[0].mxu0
      %v3034 = vadd.f32 %v2963, %v3033
      %3035 = vmatprep.mubr.bf16.mxu0 0
      %3036 = vmatmul.mubr.bf16.gmra.mrb[0].mxu0 %v1561
      %v3037 = vpop.f32.mrb[0].mxu0
      %v3038 = vadd.f32 %v2967, %v3037
      %v3039 = vpop.f32.mrb[0].mxu0
      %v3040 = vadd.f32 %v2969, %v3039
      %v3041 = vpop.f32.mrb[0].mxu0
      %v3042 = vpop.f32.mrb[0].mxu0
      %3043 = vdwg.mxu0
      %3044 = vmatprep.subr.bf16.mxu0 %v970
      %3045 = vmatpush1.bf16.msra.mxu0 %v969
      %3046 = vmatprep.subr.bf16.mxu0 %v972
      %3047 = vmatpush1.bf16.msra.mxu0 %v971
      %3048 = vmatprep.subr.bf16.mxu0 %v974
      %3049 = vmatpush1.bf16.msra.mxu0 %v973
      %3050 = vmatprep.subr.bf16.mxu0 %v976
      %3051 = vmatpush1.bf16.msra.mxu0 %v975
      %3052 = vmatprep.subr.bf16.mxu0 %v978
      %3053 = vmatpush1.bf16.msra.mxu0 %v977
      %3054 = vmatprep.subr.bf16.mxu0 %v980
      %3055 = vmatpush1.bf16.msra.mxu0 %v979
      %3056 = vmatprep.subr.bf16.mxu0 %v982
      %3057 = vmatpush1.bf16.msra.mxu0 %v981
      %3058 = vmatprep.subr.bf16.mxu0 %v984
      %3059 = vmatpush1.bf16.msra.mxu0 %v983
      %3060 = vmatprep.subr.bf16.mxu0 %v986
      %3061 = vmatpush1.bf16.msra.mxu0 %v985
      %3062 = vmatprep.subr.bf16.mxu0 %v988
      %3063 = vmatpush1.bf16.msra.mxu0 %v987
      %3064 = vmatprep.subr.bf16.mxu0 %v990
      %3065 = vmatpush1.bf16.msra.mxu0 %v989
      %3066 = vmatprep.subr.bf16.mxu0 %v992
      %3067 = vmatpush1.bf16.msra.mxu0 %v991
      %3068 = vmatprep.subr.bf16.mxu0 %v994
      %3069 = vmatpush1.bf16.msra.mxu0 %v993
      %3070 = vmatprep.subr.bf16.mxu0 %v996
      %3071 = vmatpush1.bf16.msra.mxu0 %v995
      %3072 = vmatprep.subr.bf16.mxu0 %v998
      %3073 = vmatpush1.bf16.msra.mxu0 %v997
      %3074 = vmatprep.subr.bf16.mxu0 %v1000
      %3075 = vmatpush1.bf16.msra.mxu0 %v999
      %3076 = vmatprep.mubr.bf16.mxu0 %v360
      %3077 = vmatmul.mubr.bf16.gmra.mrb[0].mxu0 %v343
      %v3078 = vpop.f32.mrb[0].mxu0
      %v3079 = vadd.f32 %v3008, %v3078
      %v3080 = vpop.f32.mrb[0].mxu0
      %v3081 = vadd.f32 %v3010, %v3080
      %v3082 = vpop.f32.mrb[0].mxu0
      %v3083 = vadd.f32 %v3012, %v3082
      %v3084 = vpop.f32.mrb[0].mxu0
      %v3085 = vadd.f32 %v3014, %v3084
      %3086 = vmatprep.mubr.bf16.mxu0 %v395
      %3087 = vmatmul.mubr.bf16.gmra.mrb[0].mxu0 %v386
      %v3088 = vpop.f32.mrb[0].mxu0
      %v3089 = vadd.f32 %v3018, %v3088
      %v3090 = vpop.f32.mrb[0].mxu0
      %v3091 = vadd.f32 %v3020, %v3090
      %v3092 = vpop.f32.mrb[0].mxu0
      %v3093 = vadd.f32 %v3022, %v3092
      %v3094 = vpop.f32.mrb[0].mxu0
      %v3095 = vadd.f32 %v3024, %v3094
      %3096 = vmatprep.mubr.bf16.mxu0 %v422
      %3097 = vmatmul.mubr.bf16.gmra.mrb[0].mxu0 %v413
      %v3098 = vpop.f32.mrb[0].mxu0
      %v3099 = vadd.f32 %v3028, %v3098
      %v3100 = vpop.f32.mrb[0].mxu0
      %v3101 = vadd.f32 %v3030, %v3100
      %v3102 = vpop.f32.mrb[0].mxu0
      %v3103 = vadd.f32 %v3032, %v3102
      %v3104 = vpop.f32.mrb[0].mxu0
      %v3105 = vadd.f32 %v3034, %v3104
      %3106 = vmatprep.mubr.bf16.mxu0 %v421
      %3107 = vmatmul.mubr.bf16.gmra.mrb[0].mxu0 %v412
      %v3108 = vpop.f32.mrb[0].mxu0
      %v3109 = vadd.f32 %v3038, %v3108
      %v3110 = vpop.f32.mrb[0].mxu0
      %v3111 = vadd.f32 %v3040, %v3110
      %v3112 = vpop.f32.mrb[0].mxu0
      %v3113 = vpop.f32.mrb[0].mxu0
      %3114 = vdwg.mxu0
      %3115 = vmatprep.subr.bf16.mxu0 %v1002
      %3116 = vmatpush1.bf16.msra.mxu0 %v1001
      %3117 = vmatprep.subr.bf16.mxu0 %v1004
      %3118 = vmatpush1.bf16.msra.mxu0 %v1003
      %3119 = vmatprep.subr.bf16.mxu0 %v1006
      %3120 = vmatpush1.bf16.msra.mxu0 %v1005
      %3121 = vmatprep.subr.bf16.mxu0 %v1063
      %3122 = vmatpush1.bf16.msra.mxu0 %v1060
      %3123 = vmatprep.subr.bf16.mxu0 0
      %3124 = vmatpush1.bf16.msra.mxu0 0
      %3125 = vmatprep.subr.bf16.mxu0 0
      %3126 = vmatpush1.bf16.msra.mxu0 0
      %3127 = vmatprep.subr.bf16.mxu0 0
      %3128 = vmatpush1.bf16.msra.mxu0 0
      %3129 = vmatprep.subr.bf16.mxu0 0
      %3130 = vmatpush1.bf16.msra.mxu0 0
      %3131 = vmatprep.subr.bf16.mxu0 0
      %3132 = vmatpush1.bf16.msra.mxu0 0
      %3133 = vmatprep.subr.bf16.mxu0 0
      %3134 = vmatpush1.bf16.msra.mxu0 0
      %3135 = vmatprep.subr.bf16.mxu0 0
      %3136 = vmatpush1.bf16.msra.mxu0 0
      %3137 = vmatprep.subr.bf16.mxu0 0
      %3138 = vmatpush1.bf16.msra.mxu0 0
      %3139 = vmatprep.subr.bf16.mxu0 0
      %3140 = vmatpush1.bf16.msra.mxu0 0
      %3141 = vmatprep.subr.bf16.mxu0 0
      %3142 = vmatpush1.bf16.msra.mxu0 0
      %3143 = vmatprep.subr.bf16.mxu0 0
      %3144 = vmatpush1.bf16.msra.mxu0 0
      %3145 = vmatprep.subr.bf16.mxu0 0
      %3146 = vmatpush1.bf16.msra.mxu0 0
      %3147 = vmatprep.mubr.bf16.mxu0 0
      %3148 = vmatmul.mubr.bf16.gmra.mrb[0].mxu0 %v637
      %v3149 = vpop.f32.mrb[0].mxu0
      %v3150 = vadd.f32 %v3079, %v3149
      %v3151 = vpop.f32.mrb[0].mxu0
      %v3152 = vadd.f32 %v3081, %v3151
      %v3153 = vpop.f32.mrb[0].mxu0
      %v3154 = vadd.f32 %v3083, %v3153
      %v3155 = vpop.f32.mrb[0].mxu0
      %v3156 = vadd.f32 %v3085, %v3155
      %3157 = vmatprep.mubr.bf16.mxu0 0
      %3158 = vmatmul.mubr.bf16.gmra.mrb[0].mxu0 %v640
      %v3159 = vpop.f32.mrb[0].mxu0
      %v3160 = vadd.f32 %v3089, %v3159
      %v3161 = vpop.f32.mrb[0].mxu0
      %v3162 = vadd.f32 %v3091, %v3161
      %v3163 = vpop.f32.mrb[0].mxu0
      %v3164 = vadd.f32 %v3093, %v3163
      %v3165 = vpop.f32.mrb[0].mxu0
      %v3166 = vadd.f32 %v3095, %v3165
      %3167 = vmatprep.mubr.bf16.mxu0 0
      %3168 = vmatmul.mubr.bf16.gmra.mrb[0].mxu0 %v643
      %v3169 = vpop.f32.mrb[0].mxu0
      %v3170 = vadd.f32 %v3099, %v3169
      %v3171 = vpop.f32.mrb[0].mxu0
      %v3172 = vadd.f32 %v3101, %v3171
      %v3173 = vpop.f32.mrb[0].mxu0
      %v3174 = vadd.f32 %v3103, %v3173
      %v3175 = vpop.f32.mrb[0].mxu0
      %v3176 = vadd.f32 %v3105, %v3175
      %3177 = vmatprep.mubr.bf16.mxu0 0
      %3178 = vmatmul.mubr.bf16.gmra.mrb[0].mxu0 %v646
      %v3179 = vpop.f32.mrb[0].mxu0
      %v3180 = vadd.f32 %v3109, %v3179
      %v3181 = vpop.f32.mrb[0].mxu0
      %v3182 = vadd.f32 %v3111, %v3181
      %v3183 = vpop.f32.mrb[0].mxu0
      %v3184 = vpop.f32.mrb[0].mxu0
      %3185 = vdwg.mxu0
      %v3186 = vld [vmem:[%s165 + $0x48] sm:$0xcc]
      %v3187 = vld [vmem:[%s165 + $0x50] sm:$0xc]
      %v3190 = vunpack.c.l.b16 %v3186
      %v3191 = vunpack.c.h.b16 %v3186
      %v3192 = vunpack.c.l.b16 %v3187
      %v3193 = vpack.c.b16 %v296, %v3190
      %v3194 = vpack.c.b16 %v297, %v3191
      %v3195 = vpack.c.b16 %v298, %v3192
      %vm3196 = vcmask 1045504
      %v3197 = vrot.slane %v3193, 2
      %v3198 = vrot.slane %v317, 2
      %v3199 = vsel %vm3196, %v3197, %v3198
      %v3200 = vrot.slane %v3194, 2
      %v3201 = vrot.slane %v318, 2
      %v3202 = vsel %vm3196, %v3200, %v3201
      %v3203 = vrot.slane %v3195, 2
      %v3204 = vrot.slane %v319, 2
      %v3205 = vsel %vm3196, %v3203, %v3204
      %v3206 = vrot.slane %v320, 2
      %v3207 = vsel %vm3196, %v3198, %v3206
      %v3208 = vrot.slane %v321, 2
      %v3209 = vsel %vm3196, %v3201, %v3208
      %v3210 = vrot.slane %v322, 2
      %v3211 = vsel %vm3196, %v3204, %v3210
      %v3212 = vrot.slane %v323, 2
      %v3213 = vsel %vm3196, %v3206, %v3212
      %v3214 = vrot.slane %v324, 2
      %v3215 = vsel %vm3196, %v3208, %v3214
      %v3216 = vrot.slane %v325, 2
      %v3217 = vsel %vm3196, %v3210, %v3216
      %v3227 = vsel %vm635, %v3205, 0
      %v3230 = vsel %vm635, %v3211, 0
      %v3233 = vsel %vm635, %v3217, 0
      %v3236 = vsel %vm635, %v3216, 0
      %3238 = vmatprep.subr.bf16.mxu0 %v1474
      %3239 = vmatpush1.bf16.msra.mxu0 %v1473
      %3240 = vmatprep.subr.bf16.mxu0 %v1476
      %3241 = vmatpush1.bf16.msra.mxu0 %v1475
      %3242 = vmatprep.subr.bf16.mxu0 %v1478
      %3243 = vmatpush1.bf16.msra.mxu0 %v1477
      %3244 = vmatprep.subr.bf16.mxu0 %v1480
      %3245 = vmatpush1.bf16.msra.mxu0 %v1479
      %3246 = vmatprep.subr.bf16.mxu0 %v1482
      %3247 = vmatpush1.bf16.msra.mxu0 %v1481
      %3248 = vmatprep.subr.bf16.mxu0 %v1484
      %3249 = vmatpush1.bf16.msra.mxu0 %v1483
      %3250 = vmatprep.subr.bf16.mxu0 %v1486
      %3251 = vmatpush1.bf16.msra.mxu0 %v1485
      %3252 = vmatprep.subr.bf16.mxu0 %v1488
      %3253 = vmatpush1.bf16.msra.mxu0 %v1487
      %3254 = vmatprep.subr.bf16.mxu0 %v1490
      %3255 = vmatpush1.bf16.msra.mxu0 %v1489
      %3256 = vmatprep.subr.bf16.mxu0 %v1492
      %3257 = vmatpush1.bf16.msra.mxu0 %v1491
      %3258 = vmatprep.subr.bf16.mxu0 %v1494
      %3259 = vmatpush1.bf16.msra.mxu0 %v1493
      %3260 = vmatprep.subr.bf16.mxu0 %v1496
      %3261 = vmatpush1.bf16.msra.mxu0 %v1495
      %3262 = vmatprep.subr.bf16.mxu0 %v1498
      %3263 = vmatpush1.bf16.msra.mxu0 %v1497
      %3264 = vmatprep.subr.bf16.mxu0 %v1500
      %3265 = vmatpush1.bf16.msra.mxu0 %v1499
      %3266 = vmatprep.subr.bf16.mxu0 %v1502
      %3267 = vmatpush1.bf16.msra.mxu0 %v1501
      %3268 = vmatprep.subr.bf16.mxu0 %v1504
      %3269 = vmatpush1.bf16.msra.mxu0 %v1503
      %3270 = vmatprep.mubr.bf16.mxu0 %v3202
      %3271 = vmatmul.mubr.bf16.gmra.mrb[0].mxu0 %v3199
      %v3272 = vpop.f32.mrb[0].mxu0
      %v3273 = vadd.f32 0.0, %v3272
      %v3274 = vpop.f32.mrb[0].mxu0
      %v3275 = vadd.f32 0.0, %v3274
      %v3276 = vpop.f32.mrb[0].mxu0
      %v3277 = vadd.f32 0.0, %v3276
      %v3278 = vpop.f32.mrb[0].mxu0
      %v3279 = vadd.f32 0.0, %v3278
      %3280 = vmatprep.mubr.bf16.mxu0 %v3209
      %3281 = vmatmul.mubr.bf16.gmra.mrb[0].mxu0 %v3207
      %v3282 = vpop.f32.mrb[0].mxu0
      %v3283 = vadd.f32 0.0, %v3282
      %v3284 = vpop.f32.mrb[0].mxu0
      %v3285 = vadd.f32 0.0, %v3284
      %v3286 = vpop.f32.mrb[0].mxu0
      %v3287 = vadd.f32 0.0, %v3286
      %v3288 = vpop.f32.mrb[0].mxu0
      %v3289 = vadd.f32 0.0, %v3288
      %3290 = vmatprep.mubr.bf16.mxu0 %v3215
      %3291 = vmatmul.mubr.bf16.gmra.mrb[0].mxu0 %v3213
      %v3292 = vpop.f32.mrb[0].mxu0
      %v3293 = vadd.f32 0.0, %v3292
      %v3294 = vpop.f32.mrb[0].mxu0
      %v3295 = vadd.f32 0.0, %v3294
      %v3296 = vpop.f32.mrb[0].mxu0
      %v3297 = vadd.f32 0.0, %v3296
      %v3298 = vpop.f32.mrb[0].mxu0
      %v3299 = vadd.f32 0.0, %v3298
      %3300 = vmatprep.mubr.bf16.mxu0 %v3214
      %3301 = vmatmul.mubr.bf16.gmra.mrb[0].mxu0 %v3212
      %v3302 = vpop.f32.mrb[0].mxu0
      %v3303 = vadd.f32 0.0, %v3302
      %v3304 = vpop.f32.mrb[0].mxu0
      %v3305 = vadd.f32 0.0, %v3304
      %v3306 = vpop.f32.mrb[0].mxu0
      %v3307 = vpop.f32.mrb[0].mxu0
      %3308 = vdwg.mxu0
      %3309 = vmatprep.subr.bf16.mxu0 %v1506
      %3310 = vmatpush1.bf16.msra.mxu0 %v1505
      %3311 = vmatprep.subr.bf16.mxu0 %v1508
      %3312 = vmatpush1.bf16.msra.mxu0 %v1507
      %3313 = vmatprep.subr.bf16.mxu0 %v1510
      %3314 = vmatpush1.bf16.msra.mxu0 %v1509
      %3315 = vmatprep.subr.bf16.mxu0 %v1567
      %3316 = vmatpush1.bf16.msra.mxu0 %v1564
      %3317 = vmatprep.subr.bf16.mxu0 0
      %3318 = vmatpush1.bf16.msra.mxu0 0
      %3319 = vmatprep.subr.bf16.mxu0 0
      %3320 = vmatpush1.bf16.msra.mxu0 0
      %3321 = vmatprep.subr.bf16.mxu0 0
      %3322 = vmatpush1.bf16.msra.mxu0 0
      %3323 = vmatprep.subr.bf16.mxu0 0
      %3324 = vmatpush1.bf16.msra.mxu0 0
      %3325 = vmatprep.subr.bf16.mxu0 0
      %3326 = vmatpush1.bf16.msra.mxu0 0
      %3327 = vmatprep.subr.bf16.mxu0 0
      %3328 = vmatpush1.bf16.msra.mxu0 0
      %3329 = vmatprep.subr.bf16.mxu0 0
      %3330 = vmatpush1.bf16.msra.mxu0 0
      %3331 = vmatprep.subr.bf16.mxu0 0
      %3332 = vmatpush1.bf16.msra.mxu0 0
      %3333 = vmatprep.subr.bf16.mxu0 0
      %3334 = vmatpush1.bf16.msra.mxu0 0
      %3335 = vmatprep.subr.bf16.mxu0 0
      %3336 = vmatpush1.bf16.msra.mxu0 0
      %3337 = vmatprep.subr.bf16.mxu0 0
      %3338 = vmatpush1.bf16.msra.mxu0 0
      %3339 = vmatprep.subr.bf16.mxu0 0
      %3340 = vmatpush1.bf16.msra.mxu0 0
      %3341 = vmatprep.mubr.bf16.mxu0 0
      %3342 = vmatmul.mubr.bf16.gmra.mrb[0].mxu0 %v3227
      %v3343 = vpop.f32.mrb[0].mxu0
      %v3344 = vadd.f32 %v3273, %v3343
      %v3345 = vpop.f32.mrb[0].mxu0
      %v3346 = vadd.f32 %v3275, %v3345
      %v3347 = vpop.f32.mrb[0].mxu0
      %v3348 = vadd.f32 %v3277, %v3347
      %v3349 = vpop.f32.mrb[0].mxu0
      %v3350 = vadd.f32 %v3279, %v3349
      %3351 = vmatprep.mubr.bf16.mxu0 0
      %3352 = vmatmul.mubr.bf16.gmra.mrb[0].mxu0 %v3230
      %v3353 = vpop.f32.mrb[0].mxu0
      %v3354 = vadd.f32 %v3283, %v3353
      %v3355 = vpop.f32.mrb[0].mxu0
      %v3356 = vadd.f32 %v3285, %v3355
      %v3357 = vpop.f32.mrb[0].mxu0
      %v3358 = vadd.f32 %v3287, %v3357
      %v3359 = vpop.f32.mrb[0].mxu0
      %v3360 = vadd.f32 %v3289, %v3359
      %3361 = vmatprep.mubr.bf16.mxu0 0
      %3362 = vmatmul.mubr.bf16.gmra.mrb[0].mxu0 %v3233
      %v3363 = vpop.f32.mrb[0].mxu0
      %v3364 = vadd.f32 %v3293, %v3363
      %v3365 = vpop.f32.mrb[0].mxu0
      %v3366 = vadd.f32 %v3295, %v3365
      %v3367 = vpop.f32.mrb[0].mxu0
      %v3368 = vadd.f32 %v3297, %v3367
      %v3369 = vpop.f32.mrb[0].mxu0
      %v3370 = vadd.f32 %v3299, %v3369
      %3371 = vmatprep.mubr.bf16.mxu0 0
      %3372 = vmatmul.mubr.bf16.gmra.mrb[0].mxu0 %v3236
      %v3373 = vpop.f32.mrb[0].mxu0
      %v3374 = vadd.f32 %v3303, %v3373
      %v3375 = vpop.f32.mrb[0].mxu0
      %v3376 = vadd.f32 %v3305, %v3375
      %v3377 = vpop.f32.mrb[0].mxu0
      %v3378 = vpop.f32.mrb[0].mxu0
      %3379 = vdwg.mxu0
      %v3380 = vadd.f32 %v3150, %v3344
      %v3381 = vadd.f32 %v3152, %v3346
      %v3382 = vadd.f32 %v3154, %v3348
      %v3383 = vadd.f32 %v3156, %v3350
      %v3384 = vadd.f32 %v3160, %v3354
      %v3385 = vadd.f32 %v3162, %v3356
      %v3386 = vadd.f32 %v3164, %v3358
      %v3387 = vadd.f32 %v3166, %v3360
      %v3388 = vadd.f32 %v3170, %v3364
      %v3389 = vadd.f32 %v3172, %v3366
      %v3390 = vadd.f32 %v3174, %v3368
      %v3391 = vadd.f32 %v3176, %v3370
      %v3392 = vadd.f32 %v3180, %v3374
      %v3393 = vadd.f32 %v3182, %v3376
      %v3394 = vmax.f32 %v2888, %v3380
      %v3395 = vmax.f32 %v2889, %v3381
      %v3396 = vmax.f32 %v2890, %v3382
      %v3397 = vmax.f32 %v2891, %v3383
      %v3398 = vmax.f32 %v2892, %v3384
      %v3399 = vmax.f32 %v2893, %v3385
      %v3400 = vmax.f32 %v2894, %v3386
      %v3401 = vmax.f32 %v2895, %v3387
      %v3402 = vmax.f32 %v2896, %v3388
      %v3403 = vmax.f32 %v2897, %v3389
      %v3404 = vmax.f32 %v2898, %v3390
      %v3405 = vmax.f32 %v2899, %v3391
      %v3406 = vmax.f32 %v2900, %v3392
      %v3407 = vmax.f32 %v2901, %v3393
      %3408 = vmatprep.subr.bf16.mxu0 %v1923
      %3409 = vmatpush1.bf16.msra.mxu0 %v1922
      %3410 = vmatprep.subr.bf16.mxu0 %v1925
      %3411 = vmatpush1.bf16.msra.mxu0 %v1924
      %3412 = vmatprep.subr.bf16.mxu0 %v1927
      %3413 = vmatpush1.bf16.msra.mxu0 %v1926
      %3414 = vmatprep.subr.bf16.mxu0 %v1929
      %3415 = vmatpush1.bf16.msra.mxu0 %v1928
      %3416 = vmatprep.subr.bf16.mxu0 %v1931
      %3417 = vmatpush1.bf16.msra.mxu0 %v1930
      %3418 = vmatprep.subr.bf16.mxu0 %v1933
      %3419 = vmatpush1.bf16.msra.mxu0 %v1932
      %3420 = vmatprep.subr.bf16.mxu0 %v1935
      %3421 = vmatpush1.bf16.msra.mxu0 %v1934
      %3422 = vmatprep.subr.bf16.mxu0 %v1937
      %3423 = vmatpush1.bf16.msra.mxu0 %v1936
      %3424 = vmatprep.subr.bf16.mxu0 %v1939
      %3425 = vmatpush1.bf16.msra.mxu0 %v1938
      %3426 = vmatprep.subr.bf16.mxu0 %v1941
      %3427 = vmatpush1.bf16.msra.mxu0 %v1940
      %3428 = vmatprep.subr.bf16.mxu0 %v1943
      %3429 = vmatpush1.bf16.msra.mxu0 %v1942
      %3430 = vmatprep.subr.bf16.mxu0 %v1945
      %3431 = vmatpush1.bf16.msra.mxu0 %v1944
      %3432 = vmatprep.subr.bf16.mxu0 %v1947
      %3433 = vmatpush1.bf16.msra.mxu0 %v1946
      %3434 = vmatprep.subr.bf16.mxu0 %v1949
      %3435 = vmatpush1.bf16.msra.mxu0 %v1948
      %3436 = vmatprep.subr.bf16.mxu0 %v1951
      %3437 = vmatpush1.bf16.msra.mxu0 %v1950
      %3438 = vmatprep.subr.bf16.mxu0 %v1953
      %3439 = vmatpush1.bf16.msra.mxu0 %v1952
      %3440 = vmatprep.mubr.bf16.mxu0 %v1281
      %3441 = vmatmul.mubr.bf16.gmra.mrb[0].mxu0 %v1269
      %v3442 = vpop.f32.mrb[0].mxu0
      %v3443 = vadd.f32 0.0, %v3442
      %v3444 = vpop.f32.mrb[0].mxu0
      %v3445 = vadd.f32 0.0, %v3444
      %v3446 = vpop.f32.mrb[0].mxu0
      %v3447 = vadd.f32 0.0, %v3446
      %v3448 = vpop.f32.mrb[0].mxu0
      %v3449 = vadd.f32 0.0, %v3448
      %3450 = vmatprep.mubr.bf16.mxu0 %v1307
      %3451 = vmatmul.mubr.bf16.gmra.mrb[0].mxu0 %v1299
      %v3452 = vpop.f32.mrb[0].mxu0
      %v3453 = vadd.f32 0.0, %v3452
      %v3454 = vpop.f32.mrb[0].mxu0
      %v3455 = vadd.f32 0.0, %v3454
      %v3456 = vpop.f32.mrb[0].mxu0
      %v3457 = vadd.f32 0.0, %v3456
      %v3458 = vpop.f32.mrb[0].mxu0
      %v3459 = vadd.f32 0.0, %v3458
      %3460 = vmatprep.mubr.bf16.mxu0 %v1330
      %3461 = vmatmul.mubr.bf16.gmra.mrb[0].mxu0 %v1322
      %v3462 = vpop.f32.mrb[0].mxu0
      %v3463 = vadd.f32 0.0, %v3462
      %v3464 = vpop.f32.mrb[0].mxu0
      %v3465 = vadd.f32 0.0, %v3464
      %v3466 = vpop.f32.mrb[0].mxu0
      %v3467 = vadd.f32 0.0, %v3466
      %v3468 = vpop.f32.mrb[0].mxu0
      %v3469 = vadd.f32 0.0, %v3468
      %3470 = vmatprep.mubr.bf16.mxu0 %v1344
      %3471 = vmatmul.mubr.bf16.gmra.mrb[0].mxu0 %v1341
      %v3472 = vpop.f32.mrb[0].mxu0
      %v3473 = vadd.f32 0.0, %v3472
      %v3474 = vpop.f32.mrb[0].mxu0
      %v3475 = vadd.f32 0.0, %v3474
      %v3476 = vpop.f32.mrb[0].mxu0
      %v3477 = vpop.f32.mrb[0].mxu0
      %3478 = vdwg.mxu0
      %3479 = vmatprep.subr.bf16.mxu0 %v1955
      %3480 = vmatpush1.bf16.msra.mxu0 %v1954
      %3481 = vmatprep.subr.bf16.mxu0 %v1957
      %3482 = vmatpush1.bf16.msra.mxu0 %v1956
      %3483 = vmatprep.subr.bf16.mxu0 %v1959
      %3484 = vmatpush1.bf16.msra.mxu0 %v1958
      %3485 = vmatprep.subr.bf16.mxu0 %v2004
      %3486 = vmatpush1.bf16.msra.mxu0 %v2001
      %3487 = vmatprep.subr.bf16.mxu0 0
      %3488 = vmatpush1.bf16.msra.mxu0 0
      %3489 = vmatprep.subr.bf16.mxu0 0
      %3490 = vmatpush1.bf16.msra.mxu0 0
      %3491 = vmatprep.subr.bf16.mxu0 0
      %3492 = vmatpush1.bf16.msra.mxu0 0
      %3493 = vmatprep.subr.bf16.mxu0 0
      %3494 = vmatpush1.bf16.msra.mxu0 0
      %3495 = vmatprep.subr.bf16.mxu0 0
      %3496 = vmatpush1.bf16.msra.mxu0 0
      %3497 = vmatprep.subr.bf16.mxu0 0
      %3498 = vmatpush1.bf16.msra.mxu0 0
      %3499 = vmatprep.subr.bf16.mxu0 0
      %3500 = vmatpush1.bf16.msra.mxu0 0
      %3501 = vmatprep.subr.bf16.mxu0 0
      %3502 = vmatpush1.bf16.msra.mxu0 0
      %3503 = vmatprep.subr.bf16.mxu0 0
      %3504 = vmatpush1.bf16.msra.mxu0 0
      %3505 = vmatprep.subr.bf16.mxu0 0
      %3506 = vmatpush1.bf16.msra.mxu0 0
      %3507 = vmatprep.subr.bf16.mxu0 0
      %3508 = vmatpush1.bf16.msra.mxu0 0
      %3509 = vmatprep.subr.bf16.mxu0 0
      %3510 = vmatpush1.bf16.msra.mxu0 0
      %3511 = vmatprep.mubr.bf16.mxu0 0
      %3512 = vmatmul.mubr.bf16.gmra.mrb[0].mxu0 %v1552
      %v3513 = vpop.f32.mrb[0].mxu0
      %v3514 = vadd.f32 %v3443, %v3513
      %v3515 = vpop.f32.mrb[0].mxu0
      %v3516 = vadd.f32 %v3445, %v3515
      %v3517 = vpop.f32.mrb[0].mxu0
      %v3518 = vadd.f32 %v3447, %v3517
      %v3519 = vpop.f32.mrb[0].mxu0
      %v3520 = vadd.f32 %v3449, %v3519
      %3521 = vmatprep.mubr.bf16.mxu0 0
      %3522 = vmatmul.mubr.bf16.gmra.mrb[0].mxu0 %v1555
      %v3523 = vpop.f32.mrb[0].mxu0
      %v3524 = vadd.f32 %v3453, %v3523
      %v3525 = vpop.f32.mrb[0].mxu0
      %v3526 = vadd.f32 %v3455, %v3525
      %v3527 = vpop.f32.mrb[0].mxu0
      %v3528 = vadd.f32 %v3457, %v3527
      %v3529 = vpop.f32.mrb[0].mxu0
      %v3530 = vadd.f32 %v3459, %v3529
      %3531 = vmatprep.mubr.bf16.mxu0 0
      %3532 = vmatmul.mubr.bf16.gmra.mrb[0].mxu0 %v1558
      %v3533 = vpop.f32.mrb[0].mxu0
      %v3534 = vadd.f32 %v3463, %v3533
      %v3535 = vpop.f32.mrb[0].mxu0
      %v3536 = vadd.f32 %v3465, %v3535
      %v3537 = vpop.f32.mrb[0].mxu0
      %v3538 = vadd.f32 %v3467, %v3537
      %v3539 = vpop.f32.mrb[0].mxu0
      %v3540 = vadd.f32 %v3469, %v3539
      %3541 = vmatprep.mubr.bf16.mxu0 0
      %3542 = vmatmul.mubr.bf16.gmra.mrb[0].mxu0 %v1561
      %v3543 = vpop.f32.mrb[0].mxu0
      %v3544 = vadd.f32 %v3473, %v3543
      %v3545 = vpop.f32.mrb[0].mxu0
      %v3546 = vadd.f32 %v3475, %v3545
      %v3547 = vpop.f32.mrb[0].mxu0
      %v3548 = vpop.f32.mrb[0].mxu0
      %3549 = vdwg.mxu0
      %3550 = vmatprep.subr.bf16.mxu0 %v2266
      %3551 = vmatpush1.bf16.msra.mxu0 %v2265
      %3552 = vmatprep.subr.bf16.mxu0 %v2268
      %3553 = vmatpush1.bf16.msra.mxu0 %v2267
      %3554 = vmatprep.subr.bf16.mxu0 %v2270
      %3555 = vmatpush1.bf16.msra.mxu0 %v2269
      %3556 = vmatprep.subr.bf16.mxu0 %v2272
      %3557 = vmatpush1.bf16.msra.mxu0 %v2271
      %3558 = vmatprep.subr.bf16.mxu0 %v2274
      %3559 = vmatpush1.bf16.msra.mxu0 %v2273
      %3560 = vmatprep.subr.bf16.mxu0 %v2276
      %3561 = vmatpush1.bf16.msra.mxu0 %v2275
      %3562 = vmatprep.subr.bf16.mxu0 %v2278
      %3563 = vmatpush1.bf16.msra.mxu0 %v2277
      %3564 = vmatprep.subr.bf16.mxu0 %v2280
      %3565 = vmatpush1.bf16.msra.mxu0 %v2279
      %3566 = vmatprep.subr.bf16.mxu0 %v2282
      %3567 = vmatpush1.bf16.msra.mxu0 %v2281
      %3568 = vmatprep.subr.bf16.mxu0 %v2284
      %3569 = vmatpush1.bf16.msra.mxu0 %v2283
      %3570 = vmatprep.subr.bf16.mxu0 %v2286
      %3571 = vmatpush1.bf16.msra.mxu0 %v2285
      %3572 = vmatprep.subr.bf16.mxu0 %v2288
      %3573 = vmatpush1.bf16.msra.mxu0 %v2287
      %3574 = vmatprep.subr.bf16.mxu0 %v2290
      %3575 = vmatpush1.bf16.msra.mxu0 %v2289
      %3576 = vmatprep.subr.bf16.mxu0 %v2292
      %3577 = vmatpush1.bf16.msra.mxu0 %v2291
      %3578 = vmatprep.subr.bf16.mxu0 %v2294
      %3579 = vmatpush1.bf16.msra.mxu0 %v2293
      %3580 = vmatprep.subr.bf16.mxu0 %v2296
      %3581 = vmatpush1.bf16.msra.mxu0 %v2295
      %3582 = vmatprep.mubr.bf16.mxu0 %v360
      %3583 = vmatmul.mubr.bf16.gmra.mrb[0].mxu0 %v343
      %v3584 = vpop.f32.mrb[0].mxu0
      %v3585 = vadd.f32 %v3514, %v3584
      %v3586 = vpop.f32.mrb[0].mxu0
      %v3587 = vadd.f32 %v3516, %v3586
      %v3588 = vpop.f32.mrb[0].mxu0
      %v3589 = vadd.f32 %v3518, %v3588
      %v3590 = vpop.f32.mrb[0].mxu0
      %v3591 = vadd.f32 %v3520, %v3590
      %3592 = vmatprep.mubr.bf16.mxu0 %v395
      %3593 = vmatmul.mubr.bf16.gmra.mrb[0].mxu0 %v386
      %v3594 = vpop.f32.mrb[0].mxu0
      %v3595 = vadd.f32 %v3524, %v3594
      %v3596 = vpop.f32.mrb[0].mxu0
      %v3597 = vadd.f32 %v3526, %v3596
      %v3598 = vpop.f32.mrb[0].mxu0
      %v3599 = vadd.f32 %v3528, %v3598
      %v3600 = vpop.f32.mrb[0].mxu0
      %v3601 = vadd.f32 %v3530, %v3600
      %3602 = vmatprep.mubr.bf16.mxu0 %v422
      %3603 = vmatmul.mubr.bf16.gmra.mrb[0].mxu0 %v413
      %v3604 = vpop.f32.mrb[0].mxu0
      %v3605 = vadd.f32 %v3534, %v3604
      %v3606 = vpop.f32.mrb[0].mxu0
      %v3607 = vadd.f32 %v3536, %v3606
      %v3608 = vpop.f32.mrb[0].mxu0
      %v3609 = vadd.f32 %v3538, %v3608
      %v3610 = vpop.f32.mrb[0].mxu0
      %v3611 = vadd.f32 %v3540, %v3610
      %3612 = vmatprep.mubr.bf16.mxu0 %v421
      %3613 = vmatmul.mubr.bf16.gmra.mrb[0].mxu0 %v412
      %v3614 = vpop.f32.mrb[0].mxu0
      %v3615 = vadd.f32 %v3544, %v3614
      %v3616 = vpop.f32.mrb[0].mxu0
      %v3617 = vadd.f32 %v3546, %v3616
      %v3618 = vpop.f32.mrb[0].mxu0
      %v3619 = vpop.f32.mrb[0].mxu0
      %3620 = vdwg.mxu0
      %3621 = vmatprep.subr.bf16.mxu0 %v2298
      %3622 = vmatpush1.bf16.msra.mxu0 %v2297
      %3623 = vmatprep.subr.bf16.mxu0 %v2300
      %3624 = vmatpush1.bf16.msra.mxu0 %v2299
      %3625 = vmatprep.subr.bf16.mxu0 %v2302
      %3626 = vmatpush1.bf16.msra.mxu0 %v2301
      %3627 = vmatprep.subr.bf16.mxu0 %v2347
      %3628 = vmatpush1.bf16.msra.mxu0 %v2344
      %3629 = vmatprep.subr.bf16.mxu0 0
      %3630 = vmatpush1.bf16.msra.mxu0 0
      %3631 = vmatprep.subr.bf16.mxu0 0
      %3632 = vmatpush1.bf16.msra.mxu0 0
      %3633 = vmatprep.subr.bf16.mxu0 0
      %3634 = vmatpush1.bf16.msra.mxu0 0
      %3635 = vmatprep.subr.bf16.mxu0 0
      %3636 = vmatpush1.bf16.msra.mxu0 0
      %3637 = vmatprep.subr.bf16.mxu0 0
      %3638 = vmatpush1.bf16.msra.mxu0 0
      %3639 = vmatprep.subr.bf16.mxu0 0
      %3640 = vmatpush1.bf16.msra.mxu0 0
      %3641 = vmatprep.subr.bf16.mxu0 0
      %3642 = vmatpush1.bf16.msra.mxu0 0
      %3643 = vmatprep.subr.bf16.mxu0 0
      %3644 = vmatpush1.bf16.msra.mxu0 0
      %3645 = vmatprep.subr.bf16.mxu0 0
      %3646 = vmatpush1.bf16.msra.mxu0 0
      %3647 = vmatprep.subr.bf16.mxu0 0
      %3648 = vmatpush1.bf16.msra.mxu0 0
      %3649 = vmatprep.subr.bf16.mxu0 0
      %3650 = vmatpush1.bf16.msra.mxu0 0
      %3651 = vmatprep.subr.bf16.mxu0 0
      %3652 = vmatpush1.bf16.msra.mxu0 0
      %3653 = vmatprep.mubr.bf16.mxu0 0
      %3654 = vmatmul.mubr.bf16.gmra.mrb[0].mxu0 %v637
      %v3655 = vpop.f32.mrb[0].mxu0
      %v3656 = vadd.f32 %v3585, %v3655
      %v3657 = vpop.f32.mrb[0].mxu0
      %v3658 = vadd.f32 %v3587, %v3657
      %v3659 = vpop.f32.mrb[0].mxu0
      %v3660 = vadd.f32 %v3589, %v3659
      %v3661 = vpop.f32.mrb[0].mxu0
      %v3662 = vadd.f32 %v3591, %v3661
      %3663 = vmatprep.mubr.bf16.mxu0 0
      %3664 = vmatmul.mubr.bf16.gmra.mrb[0].mxu0 %v640
      %v3665 = vpop.f32.mrb[0].mxu0
      %v3666 = vadd.f32 %v3595, %v3665
      %v3667 = vpop.f32.mrb[0].mxu0
      %v3668 = vadd.f32 %v3597, %v3667
      %v3669 = vpop.f32.mrb[0].mxu0
      %v3670 = vadd.f32 %v3599, %v3669
      %v3671 = vpop.f32.mrb[0].mxu0
      %v3672 = vadd.f32 %v3601, %v3671
      %3673 = vmatprep.mubr.bf16.mxu0 0
      %3674 = vmatmul.mubr.bf16.gmra.mrb[0].mxu0 %v643
      %v3675 = vpop.f32.mrb[0].mxu0
      %v3676 = vadd.f32 %v3605, %v3675
      %v3677 = vpop.f32.mrb[0].mxu0
      %v3678 = vadd.f32 %v3607, %v3677
      %v3679 = vpop.f32.mrb[0].mxu0
      %v3680 = vadd.f32 %v3609, %v3679
      %v3681 = vpop.f32.mrb[0].mxu0
      %v3682 = vadd.f32 %v3611, %v3681
      %3683 = vmatprep.mubr.bf16.mxu0 0
      %3684 = vmatmul.mubr.bf16.gmra.mrb[0].mxu0 %v646
      %v3685 = vpop.f32.mrb[0].mxu0
      %v3686 = vadd.f32 %v3615, %v3685
      %v3687 = vpop.f32.mrb[0].mxu0
      %v3688 = vadd.f32 %v3617, %v3687
      %v3689 = vpop.f32.mrb[0].mxu0
      %v3690 = vpop.f32.mrb[0].mxu0
      %3691 = vdwg.mxu0
      %3692 = vmatprep.subr.bf16.mxu0 %v2649
      %3693 = vmatpush1.bf16.msra.mxu0 %v2648
      %3694 = vmatprep.subr.bf16.mxu0 %v2651
      %3695 = vmatpush1.bf16.msra.mxu0 %v2650
      %3696 = vmatprep.subr.bf16.mxu0 %v2653
      %3697 = vmatpush1.bf16.msra.mxu0 %v2652
      %3698 = vmatprep.subr.bf16.mxu0 %v2655
      %3699 = vmatpush1.bf16.msra.mxu0 %v2654
      %3700 = vmatprep.subr.bf16.mxu0 %v2657
      %3701 = vmatpush1.bf16.msra.mxu0 %v2656
      %3702 = vmatprep.subr.bf16.mxu0 %v2659
      %3703 = vmatpush1.bf16.msra.mxu0 %v2658
      %3704 = vmatprep.subr.bf16.mxu0 %v2661
      %3705 = vmatpush1.bf16.msra.mxu0 %v2660
      %3706 = vmatprep.subr.bf16.mxu0 %v2663
      %3707 = vmatpush1.bf16.msra.mxu0 %v2662
      %3708 = vmatprep.subr.bf16.mxu0 %v2665
      %3709 = vmatpush1.bf16.msra.mxu0 %v2664
      %3710 = vmatprep.subr.bf16.mxu0 %v2667
      %3711 = vmatpush1.bf16.msra.mxu0 %v2666
      %3712 = vmatprep.subr.bf16.mxu0 %v2669
      %3713 = vmatpush1.bf16.msra.mxu0 %v2668
      %3714 = vmatprep.subr.bf16.mxu0 %v2671
      %3715 = vmatpush1.bf16.msra.mxu0 %v2670
      %3716 = vmatprep.subr.bf16.mxu0 %v2673
      %3717 = vmatpush1.bf16.msra.mxu0 %v2672
      %3718 = vmatprep.subr.bf16.mxu0 %v2675
      %3719 = vmatpush1.bf16.msra.mxu0 %v2674
      %3720 = vmatprep.subr.bf16.mxu0 %v2677
      %3721 = vmatpush1.bf16.msra.mxu0 %v2676
      %3722 = vmatprep.subr.bf16.mxu0 %v2679
      %3723 = vmatpush1.bf16.msra.mxu0 %v2678
      %3724 = vmatprep.mubr.bf16.mxu0 %v3202
      %3725 = vmatmul.mubr.bf16.gmra.mrb[0].mxu0 %v3199
      %v3726 = vpop.f32.mrb[0].mxu0
      %v3727 = vadd.f32 0.0, %v3726
      %v3728 = vpop.f32.mrb[0].mxu0
      %v3729 = vadd.f32 0.0, %v3728
      %v3730 = vpop.f32.mrb[0].mxu0
      %v3731 = vadd.f32 0.0, %v3730
      %v3732 = vpop.f32.mrb[0].mxu0
      %v3733 = vadd.f32 0.0, %v3732
      %3734 = vmatprep.mubr.bf16.mxu0 %v3209
      %3735 = vmatmul.mubr.bf16.gmra.mrb[0].mxu0 %v3207
      %v3736 = vpop.f32.mrb[0].mxu0
      %v3737 = vadd.f32 0.0, %v3736
      %v3738 = vpop.f32.mrb[0].mxu0
      %v3739 = vadd.f32 0.0, %v3738
      %v3740 = vpop.f32.mrb[0].mxu0
      %v3741 = vadd.f32 0.0, %v3740
      %v3742 = vpop.f32.mrb[0].mxu0
      %v3743 = vadd.f32 0.0, %v3742
      %3744 = vmatprep.mubr.bf16.mxu0 %v3215
      %3745 = vmatmul.mubr.bf16.gmra.mrb[0].mxu0 %v3213
      %v3746 = vpop.f32.mrb[0].mxu0
      %v3747 = vadd.f32 0.0, %v3746
      %v3748 = vpop.f32.mrb[0].mxu0
      %v3749 = vadd.f32 0.0, %v3748
      %v3750 = vpop.f32.mrb[0].mxu0
      %v3751 = vadd.f32 0.0, %v3750
      %v3752 = vpop.f32.mrb[0].mxu0
      %v3753 = vadd.f32 0.0, %v3752
      %3754 = vmatprep.mubr.bf16.mxu0 %v3214
      %3755 = vmatmul.mubr.bf16.gmra.mrb[0].mxu0 %v3212
      %v3756 = vpop.f32.mrb[0].mxu0
      %v3757 = vadd.f32 0.0, %v3756
      %v3758 = vpop.f32.mrb[0].mxu0
      %v3759 = vadd.f32 0.0, %v3758
      %v3760 = vpop.f32.mrb[0].mxu0
      %v3761 = vpop.f32.mrb[0].mxu0
      %3762 = vdwg.mxu0
      %3763 = vmatprep.subr.bf16.mxu0 %v2681
      %3764 = vmatpush1.bf16.msra.mxu0 %v2680
      %3765 = vmatprep.subr.bf16.mxu0 %v2683
      %3766 = vmatpush1.bf16.msra.mxu0 %v2682
      %3767 = vmatprep.subr.bf16.mxu0 %v2685
      %3768 = vmatpush1.bf16.msra.mxu0 %v2684
      %3769 = vmatprep.subr.bf16.mxu0 %v2730
      %3770 = vmatpush1.bf16.msra.mxu0 %v2727
      %3771 = vmatprep.subr.bf16.mxu0 0
      %3772 = vmatpush1.bf16.msra.mxu0 0
      %3773 = vmatprep.subr.bf16.mxu0 0
      %3774 = vmatpush1.bf16.msra.mxu0 0
      %3775 = vmatprep.subr.bf16.mxu0 0
      %3776 = vmatpush1.bf16.msra.mxu0 0
      %3777 = vmatprep.subr.bf16.mxu0 0
      %3778 = vmatpush1.bf16.msra.mxu0 0
      %3779 = vmatprep.subr.bf16.mxu0 0
      %3780 = vmatpush1.bf16.msra.mxu0 0
      %3781 = vmatprep.subr.bf16.mxu0 0
      %3782 = vmatpush1.bf16.msra.mxu0 0
      %3783 = vmatprep.subr.bf16.mxu0 0
      %3784 = vmatpush1.bf16.msra.mxu0 0
      %3785 = vmatprep.subr.bf16.mxu0 0
      %3786 = vmatpush1.bf16.msra.mxu0 0
      %3787 = vmatprep.subr.bf16.mxu0 0
      %3788 = vmatpush1.bf16.msra.mxu0 0
      %3789 = vmatprep.subr.bf16.mxu0 0
      %3790 = vmatpush1.bf16.msra.mxu0 0
      %3791 = vmatprep.subr.bf16.mxu0 0
      %3792 = vmatpush1.bf16.msra.mxu0 0
      %3793 = vmatprep.subr.bf16.mxu0 0
      %3794 = vmatpush1.bf16.msra.mxu0 0
      %3795 = vmatprep.mubr.bf16.mxu0 0
      %3796 = vmatmul.mubr.bf16.gmra.mrb[0].mxu0 %v3227
      %v3797 = vpop.f32.mrb[0].mxu0
      %v3798 = vadd.f32 %v3727, %v3797
      %v3799 = vpop.f32.mrb[0].mxu0
      %v3800 = vadd.f32 %v3729, %v3799
      %v3801 = vpop.f32.mrb[0].mxu0
      %v3802 = vadd.f32 %v3731, %v3801
      %v3803 = vpop.f32.mrb[0].mxu0
      %v3804 = vadd.f32 %v3733, %v3803
      %3805 = vmatprep.mubr.bf16.mxu0 0
      %3806 = vmatmul.mubr.bf16.gmra.mrb[0].mxu0 %v3230
      %v3807 = vpop.f32.mrb[0].mxu0
      %v3808 = vadd.f32 %v3737, %v3807
      %v3809 = vpop.f32.mrb[0].mxu0
      %v3810 = vadd.f32 %v3739, %v3809
      %v3811 = vpop.f32.mrb[0].mxu0
      %v3812 = vadd.f32 %v3741, %v3811
      %v3813 = vpop.f32.mrb[0].mxu0
      %v3814 = vadd.f32 %v3743, %v3813
      %3815 = vmatprep.mubr.bf16.mxu0 0
      %3816 = vmatmul.mubr.bf16.gmra.mrb[0].mxu0 %v3233
      %v3817 = vpop.f32.mrb[0].mxu0
      %v3818 = vadd.f32 %v3747, %v3817
      %v3819 = vpop.f32.mrb[0].mxu0
      %v3820 = vadd.f32 %v3749, %v3819
      %v3821 = vpop.f32.mrb[0].mxu0
      %v3822 = vadd.f32 %v3751, %v3821
      %v3823 = vpop.f32.mrb[0].mxu0
      %v3824 = vadd.f32 %v3753, %v3823
      %3825 = vmatprep.mubr.bf16.mxu0 0
      %3826 = vmatmul.mubr.bf16.gmra.mrb[0].mxu0 %v3236
      %v3827 = vpop.f32.mrb[0].mxu0
      %v3828 = vadd.f32 %v3757, %v3827
      %v3829 = vpop.f32.mrb[0].mxu0
      %v3830 = vadd.f32 %v3759, %v3829
      %v3831 = vpop.f32.mrb[0].mxu0
      %v3832 = vpop.f32.mrb[0].mxu0
      %3833 = vdwg.mxu0
      %v3834 = vadd.f32 %v3656, %v3798
      %v3835 = vadd.f32 %v3658, %v3800
      %v3836 = vadd.f32 %v3660, %v3802
      %v3837 = vadd.f32 %v3662, %v3804
      %v3838 = vadd.f32 %v3666, %v3808
      %v3839 = vadd.f32 %v3668, %v3810
      %v3840 = vadd.f32 %v3670, %v3812
      %v3841 = vadd.f32 %v3672, %v3814
      %v3842 = vadd.f32 %v3676, %v3818
      %v3843 = vadd.f32 %v3678, %v3820
      %v3844 = vadd.f32 %v3680, %v3822
      %v3845 = vadd.f32 %v3682, %v3824
      %v3846 = vadd.f32 %v3686, %v3828
      %v3847 = vadd.f32 %v3688, %v3830
      %v3848 = vmax.f32 %v3394, %v3834
      %v3849 = vmax.f32 %v3395, %v3835
      %v3850 = vmax.f32 %v3396, %v3836
      %v3851 = vmax.f32 %v3397, %v3837
      %v3852 = vmax.f32 %v3398, %v3838
      %v3853 = vmax.f32 %v3399, %v3839
      %v3854 = vmax.f32 %v3400, %v3840
      %v3855 = vmax.f32 %v3401, %v3841
      %v3856 = vmax.f32 %v3402, %v3842
      %v3857 = vmax.f32 %v3403, %v3843
      %v3858 = vmax.f32 %v3404, %v3844
      %v3859 = vmax.f32 %v3405, %v3845
      %v3860 = vmax.f32 %v3406, %v3846
      %v3861 = vmax.f32 %v3407, %v3847
      %v3862 = vld [vmem:[%s2] sm:$0x3]
      %v3864 = vlaneseq
      %v3865 = vshrl.u32 %v3864, 7
      %v3866 = vsub.s32 0, %v3865
      %v3867 = vrot.slane %v3862, %v3866
      %v3868 = vlaneseq
      %v3869 = vshrl.u32 %v3868, 7
      %v3870 = vsub.s32 1, %v3869
      %v3871 = vrot.slane %v3862, %v3870
      %v3874 = vadd.f32 %v3848, %v3867
      %v3875 = vadd.f32 %v3849, %v3871
      %v3876 = vadd.f32 %v3850, %v3867
      %v3877 = vadd.f32 %v3851, %v3871
      %v3878 = vadd.f32 %v3852, %v3867
      %v3879 = vadd.f32 %v3853, %v3871
      %v3880 = vadd.f32 %v3854, %v3867
      %v3881 = vadd.f32 %v3855, %v3871
      %v3882 = vadd.f32 %v3856, %v3867
      %v3883 = vadd.f32 %v3857, %v3871
      %v3884 = vadd.f32 %v3858, %v3867
      %v3885 = vadd.f32 %v3859, %v3871
      %v3886 = vadd.f32 %v3860, %v3867
      %v3887 = vadd.f32 %v3861, %v3871
      %v3888 = vmax.f32 %v3874, 0.0
      %v3889 = vmax.f32 %v3875, 0.0
      %v3890 = vmax.f32 %v3876, 0.0
      %v3891 = vmax.f32 %v3877, 0.0
      %v3892 = vmax.f32 %v3878, 0.0
      %v3893 = vmax.f32 %v3879, 0.0
      %v3894 = vmax.f32 %v3880, 0.0
      %v3895 = vmax.f32 %v3881, 0.0
      %v3896 = vmax.f32 %v3882, 0.0
      %v3897 = vmax.f32 %v3883, 0.0
      %v3898 = vmax.f32 %v3884, 0.0
      %v3899 = vmax.f32 %v3885, 0.0
      %v3900 = vmax.f32 %v3886, 0.0
      %v3901 = vmax.f32 %v3887, 0.0
      %v3902 = vpack.c.bf16 %v3890, %v3888
      %v3903 = vpack.c.bf16 %v3891, %v3889
      %v3904 = vpack.c.bf16 %v3894, %v3892
      %v3905 = vpack.c.bf16 %v3895, %v3893
      %v3906 = vpack.c.bf16 %v3898, %v3896
      %v3907 = vpack.c.bf16 %v3899, %v3897
      %v3908 = vpack.c.bf16 %v3900, %v3900
      %v3909 = vpack.c.bf16 %v3901, %v3901
      %v3918 = vunpack.c.l.b16 %v3902
      %v3919 = vunpack.c.l.b16 %v3903
      %v3920 = vunpack.c.h.b16 %v3902
      %v3921 = vunpack.c.h.b16 %v3903
      %v3922 = vunpack.c.l.b16 %v3904
      %v3923 = vunpack.c.l.b16 %v3905
      %v3924 = vunpack.c.h.b16 %v3904
      %v3925 = vunpack.c.h.b16 %v3905
      %v3926 = vunpack.c.l.b16 %v3906
      %v3927 = vunpack.c.l.b16 %v3907
      %v3928 = vunpack.c.h.b16 %v3906
      %v3929 = vunpack.c.h.b16 %v3907
      %v3930 = vunpack.c.l.b16 %v3908
      %v3931 = vunpack.c.l.b16 %v3909
      %v3932 = vpack.c.b16 %v3919, %v3918
      %v3933 = vpack.c.b16 %v3921, %v3920
      %v3934 = vpack.c.b16 %v3923, %v3922
      %v3935 = vpack.c.b16 %v3925, %v3924
      %v3936 = vpack.c.b16 %v3927, %v3926
      %v3937 = vpack.c.b16 %v3929, %v3928
      %v3938 = vpack.c.b16 %v3931, %v3930
      %vm3946 = vcmask 1043456
      %vm3947 = vcmask 588804
      %vm3948 = vmor %vm3947, %vm3946
      %3949 = vst.msk [vmem:[%s170] sm:$0xff] %vm3948, %v3932
      %3950 = vst.msk [vmem:[%s170 + $0x8] sm:$0xff] %vm3948, %v3933
      %3951 = vst.msk [vmem:[%s170 + $0x10] sm:$0xff] %vm3948, %v3934
      %3952 = vst.msk [vmem:[%s170 + $0x18] sm:$0xff] %vm3948, %v3935
      %3953 = vst.msk [vmem:[%s170 + $0x20] sm:$0xff] %vm3948, %v3936
      %3954 = vst.msk [vmem:[%s170 + $0x28] sm:$0xff] %vm3948, %v3937
      %vm3955 = vcmask 585732
      %vm3956 = vmor %vm3955, %vm648
      %3957 = vst.msk [vmem:[%s170 + $0x30] sm:$0x11] %vm3956, %v3938
      %p3958 = scmp.lt.s32.totalorder %s14, 1
      %s3959 = scalar_select %p3958, %s14, 1
      %s3960 = smul.addr %s3959, 14
      %s3961 = smul.addr %s3960, 4
      %s3962 = scalar_lea.vmem %s3, %s3961
      // Predicated region
      $region33: #{fnet_forward.3} parent=31 // pred_check
        %p3963 = pneg %p100
      $region34: #{fnet_forward.3} parent=31 // pred_check_branch
        %3965 = sbr.rel (%p3963) target = $region36
      $region35: #{fnet_forward.3} parent=31 // pred_region
        _
      $region36: #{fnet_forward.3} parent=31 // pred_fallthru
        _
    $region32: #{fnet_forward.3} parent=5 // pred_fallthru
      _
    %p3966 = scmp.le.s32.totalorder 2, %s9
    // Predicated region
    $region37: #{fnet_forward.3} parent=5 // pred_check
      %p3967 = pneg %p3966
    $region38: #{fnet_forward.3} parent=5 // pred_check_branch
      %3969 = sbr.rel (%p3967) target = $region40
    $region39: #{fnet_forward.3} parent=5 // pred_region
      %s3970 = ssub.s32 %s9, 2
      // Predicated region
      $region41: #{fnet_forward.3} parent=39 // pred_check
        %p3971 = pneg %p106
      $region42: #{fnet_forward.3} parent=39 // pred_check_branch
        %3973 = sbr.rel (%p3971) target = $region44
      $region43: #{fnet_forward.3} parent=39 // pred_region
        %p3974 = scmp.lt.s32.totalorder %s15, 1
        %s3975 = scalar_select %p3974, %s15, 1
        %s3976 = smul.addr %s3975, 14
        %s3977 = smul.addr %s3976, 4
        %s3978 = scalar_lea.vmem %s3, %s3977
      $region44: #{fnet_forward.3} parent=39 // pred_fallthru
        _
    $region40: #{fnet_forward.3} parent=5 // pred_fallthru
      _
  $region6: #{fnet_forward.3} parent=0 // loop_footer
    %s13 = sadd.s32 1, %s9
  $region7: #{fnet_forward.3} parent=0 // loop_footer_branch
    %8 = sbr.rel target = $region3
  $region8: #{fnet_forward.3} parent=0 // loop_exit
    _

// kernel: fnet_forward.5
$region0: #{fnet_forward.5}
  #allocation0 [shape = 'u32[]', space=smem, size = 0x4, offset = 0x4, fixed_abs, tag = 'smem constant byte address 0x4 - core index']
  #allocation1 [shape = 'u32[144,128]{1,0:T(1,128)}', space=vmem, size = 0x12000, scoped, tag = 'internal scratch']
  %s0 = inlined_call_operand.vmem [shape: bf16[2,5000], index: 0, kind: input, shape index: {}]
  %s1 = inlined_call_operand.vmem [shape: bf16[5000,5], index: 1, kind: input, shape index: {}]
  %s2 = inlined_call_operand.vmem [shape: f32[1,5], index: 2, kind: input, shape index: {}]
  %s3 = inlined_call_operand.hbm [shape: f32[2,5], index: 3, kind: output, shape index: {}]
  %s4 = sld [smem:[#allocation0]]
  $region22: #{fnet_forward.5} parent=0
    _
  %s6 = ssub.s32 1, %s4
  %s7 = scalar_select 0, %s6, %s4
  $region1: #{fnet_forward.5} parent=0
    #allocation2 [shape = 'u8[1024]{0}', space=vmem, size = 0x400, scoped, tag = 'output window, operand 0, single buffered']
    #allocation3 [shape = 's32[1]{0}', space=sflag, size = 0x4, scoped, tag = 'scoped memory for fnet_forward.5']
    %8 = vsyncpa [#allocation3], 0
    // Predicated region
    $region2: #{fnet_forward.5} parent=1 // pred_check
      _
    $region3: #{fnet_forward.5} parent=1 // pred_check_branch
      %10 = sbr.rel (0) target = $region5
    $region4: #{fnet_forward.5} parent=1 // pred_region
      _
    $region5: #{fnet_forward.5} parent=1 // pred_fallthru
      _
    // Predicated region
    $region6: #{fnet_forward.5} parent=1 // pred_check
      _
    $region7: #{fnet_forward.5} parent=1 // pred_check_branch
      %12 = sbr.rel (0) target = $region9
    $region8: #{fnet_forward.5} parent=1 // pred_region
      _
    $region9: #{fnet_forward.5} parent=1 // pred_fallthru
      _
    // Predicated region
    $region10: #{fnet_forward.5} parent=1 // pred_check
      _
    $region11: #{fnet_forward.5} parent=1 // pred_check_branch
      %14 = sbr.rel (0) target = $region13
    $region12: #{fnet_forward.5} parent=1 // pred_region
      _
    $region13: #{fnet_forward.5} parent=1 // pred_fallthru
      _
    %v16 = vld [vmem:[%s0] sm:$0xff]
    %v17 = vld [vmem:[%s0 + $0x8] sm:$0xff]
    %v18 = vld [vmem:[%s0 + $0x10] sm:$0xff]
    %v19 = vld [vmem:[%s0 + $0x18] sm:$0xff]
    %v20 = vld [vmem:[%s0 + $0x20] sm:$0xff]
    %v21 = vld [vmem:[%s1] sm:$0xf]
    %v22 = vld [vmem:[%s1 + $0x4] sm:$0xf]
    %v23 = vld [vmem:[%s1 + $0x8] sm:$0xf]
    %v24 = vld [vmem:[%s1 + $0xc] sm:$0xf]
    %v25 = vld [vmem:[%s1 + $0x10] sm:$0xf]
    %v26 = vld [vmem:[%s1 + $0x14] sm:$0xf]
    %v27 = vld [vmem:[%s1 + $0x18] sm:$0xf]
    %v28 = vld [vmem:[%s1 + $0x1c] sm:$0xf]
    %v29 = vld [vmem:[%s1 + $0x20] sm:$0xf]
    %v30 = vld [vmem:[%s1 + $0x24] sm:$0xf]
    %v31 = vld [vmem:[%s1 + $0x28] sm:$0xf]
    %v32 = vld [vmem:[%s1 + $0x2c] sm:$0xf]
    %v33 = vld [vmem:[%s1 + $0x30] sm:$0xf]
    %v34 = vld [vmem:[%s1 + $0x34] sm:$0xf]
    %v35 = vld [vmem:[%s1 + $0x38] sm:$0xf]
    %v36 = vld [vmem:[%s1 + $0x3c] sm:$0xf]
    %v37 = vld [vmem:[%s1 + $0x40] sm:$0xf]
    %v38 = vld [vmem:[%s1 + $0x44] sm:$0xf]
    %v39 = vld [vmem:[%s1 + $0x48] sm:$0xf]
    %v40 = vld [vmem:[%s1 + $0x4c] sm:$0xf]
    %v41 = vld [vmem:[%s1 + $0x50] sm:$0xf]
    %v42 = vld [vmem:[%s1 + $0x54] sm:$0xf]
    %v43 = vld [vmem:[%s1 + $0x58] sm:$0xf]
    %v44 = vld [vmem:[%s1 + $0x5c] sm:$0xf]
    %v45 = vld [vmem:[%s1 + $0x60] sm:$0xf]
    %v46 = vld [vmem:[%s1 + $0x64] sm:$0xf]
    %v47 = vld [vmem:[%s1 + $0x68] sm:$0xf]
    %v48 = vld [vmem:[%s1 + $0x6c] sm:$0xf]
    %v49 = vld [vmem:[%s1 + $0x70] sm:$0xf]
    %v50 = vld [vmem:[%s1 + $0x74] sm:$0xf]
    %v51 = vld [vmem:[%s1 + $0x78] sm:$0xf]
    %v52 = vld [vmem:[%s1 + $0x7c] sm:$0xf]
    %v53 = vld [vmem:[%s1 + $0x80] sm:$0xf]
    %v54 = vld [vmem:[%s1 + $0x84] sm:$0xf]
    %v55 = vld [vmem:[%s1 + $0x88] sm:$0xf]
    %v56 = vld [vmem:[%s1 + $0x8c] sm:$0xf]
    %v57 = vld [vmem:[%s1 + $0x90] sm:$0xf]
    %v58 = vld [vmem:[%s1 + $0x94] sm:$0xf]
    %v59 = vld [vmem:[%s1 + $0x98] sm:$0xf]
    %v60 = vld [vmem:[%s1 + $0x9c] sm:$0xf]
    %v61 = vld [vmem:[%s1 + $0xa0] sm:$0xf]
    %v62 = vld [vmem:[%s1 + $0xa4] sm:$0xf]
    %v63 = vld [vmem:[%s1 + $0xa8] sm:$0xf]
    %v64 = vld [vmem:[%s1 + $0xac] sm:$0xf]
    %v65 = vld [vmem:[%s1 + $0xb0] sm:$0xf]
    %v66 = vld [vmem:[%s1 + $0xb4] sm:$0xf]
    %v67 = vld [vmem:[%s1 + $0xb8] sm:$0xf]
    %v68 = vld [vmem:[%s1 + $0xbc] sm:$0xf]
    %v69 = vld [vmem:[%s1 + $0xc0] sm:$0xf]
    %v70 = vld [vmem:[%s1 + $0xc4] sm:$0xf]
    %v71 = vld [vmem:[%s1 + $0xc8] sm:$0xf]
    %v72 = vld [vmem:[%s1 + $0xcc] sm:$0xf]
    %v73 = vld [vmem:[%s1 + $0xd0] sm:$0xf]
    %v74 = vld [vmem:[%s1 + $0xd4] sm:$0xf]
    %v75 = vld [vmem:[%s1 + $0xd8] sm:$0xf]
    %v76 = vld [vmem:[%s1 + $0xdc] sm:$0xf]
    %v77 = vld [vmem:[%s1 + $0xe0] sm:$0xf]
    %v78 = vld [vmem:[%s1 + $0xe4] sm:$0xf]
    %v79 = vld [vmem:[%s1 + $0xe8] sm:$0xf]
    %v80 = vld [vmem:[%s1 + $0xec] sm:$0xf]
    %v81 = vld [vmem:[%s1 + $0xf0] sm:$0xf]
    %v82 = vld [vmem:[%s1 + $0xf4] sm:$0xf]
    %v83 = vld [vmem:[%s1 + $0xf8] sm:$0xf]
    %v84 = vld [vmem:[%s1 + $0xfc] sm:$0xf]
    %v85 = vld [vmem:[%s1 + $0x100] sm:$0xf]
    %v86 = vld [vmem:[%s1 + $0x104] sm:$0xf]
    %v87 = vld [vmem:[%s1 + $0x108] sm:$0xf]
    %v88 = vld [vmem:[%s1 + $0x10c] sm:$0xf]
    %v89 = vld [vmem:[%s1 + $0x110] sm:$0xf]
    %v90 = vld [vmem:[%s1 + $0x114] sm:$0xf]
    %v91 = vld [vmem:[%s1 + $0x118] sm:$0xf]
    %v92 = vld [vmem:[%s1 + $0x11c] sm:$0xf]
    %v93 = vld [vmem:[%s1 + $0x120] sm:$0xf]
    %v94 = vld [vmem:[%s1 + $0x124] sm:$0xf]
    %v95 = vld [vmem:[%s1 + $0x128] sm:$0xf]
    %v96 = vld [vmem:[%s1 + $0x12c] sm:$0xf]
    %v97 = vld [vmem:[%s1 + $0x130] sm:$0xf]
    %v98 = vld [vmem:[%s1 + $0x134] sm:$0xf]
    %v99 = vld [vmem:[%s1 + $0x138] sm:$0xf]
    %v100 = vld [vmem:[%s1 + $0x13c] sm:$0xf]
    %v101 = vld [vmem:[%s1 + $0x140] sm:$0xf]
    %v102 = vld [vmem:[%s1 + $0x144] sm:$0xf]
    %v103 = vld [vmem:[%s1 + $0x148] sm:$0xf]
    %v104 = vld [vmem:[%s1 + $0x14c] sm:$0xf]
    %v105 = vld [vmem:[%s1 + $0x150] sm:$0xf]
    %v106 = vld [vmem:[%s1 + $0x154] sm:$0xf]
    %v107 = vld [vmem:[%s1 + $0x158] sm:$0xf]
    %v108 = vld [vmem:[%s1 + $0x15c] sm:$0xf]
    %v109 = vld [vmem:[%s1 + $0x160] sm:$0xf]
    %v110 = vld [vmem:[%s1 + $0x164] sm:$0xf]
    %v111 = vld [vmem:[%s1 + $0x168] sm:$0xf]
    %v112 = vld [vmem:[%s1 + $0x16c] sm:$0xf]
    %v113 = vld [vmem:[%s1 + $0x170] sm:$0xf]
    %v114 = vld [vmem:[%s1 + $0x174] sm:$0xf]
    %v115 = vld [vmem:[%s1 + $0x178] sm:$0xf]
    %v116 = vld [vmem:[%s1 + $0x17c] sm:$0xf]
    %v117 = vld [vmem:[%s1 + $0x180] sm:$0xf]
    %v118 = vld [vmem:[%s1 + $0x184] sm:$0xf]
    %v119 = vld [vmem:[%s1 + $0x188] sm:$0xf]
    %v120 = vld [vmem:[%s1 + $0x18c] sm:$0xf]
    %v121 = vld [vmem:[%s1 + $0x190] sm:$0xf]
    %v122 = vld [vmem:[%s1 + $0x194] sm:$0xf]
    %v123 = vld [vmem:[%s1 + $0x198] sm:$0xf]
    %v124 = vld [vmem:[%s1 + $0x19c] sm:$0xf]
    %v125 = vld [vmem:[%s1 + $0x1a0] sm:$0xf]
    %v126 = vld [vmem:[%s1 + $0x1a4] sm:$0xf]
    %v127 = vld [vmem:[%s1 + $0x1a8] sm:$0xf]
    %v128 = vld [vmem:[%s1 + $0x1ac] sm:$0xf]
    %v129 = vld [vmem:[%s1 + $0x1b0] sm:$0xf]
    %v130 = vld [vmem:[%s1 + $0x1b4] sm:$0xf]
    %v131 = vld [vmem:[%s1 + $0x1b8] sm:$0xf]
    %v132 = vld [vmem:[%s1 + $0x1bc] sm:$0xf]
    %v133 = vld [vmem:[%s1 + $0x1c0] sm:$0xf]
    %v134 = vld [vmem:[%s1 + $0x1c4] sm:$0xf]
    %v135 = vld [vmem:[%s1 + $0x1c8] sm:$0xf]
    %v136 = vld [vmem:[%s1 + $0x1cc] sm:$0xf]
    %v137 = vld [vmem:[%s1 + $0x1d0] sm:$0xf]
    %v138 = vld [vmem:[%s1 + $0x1d4] sm:$0xf]
    %v139 = vld [vmem:[%s1 + $0x1d8] sm:$0xf]
    %v140 = vld [vmem:[%s1 + $0x1dc] sm:$0xf]
    %v141 = vld [vmem:[%s1 + $0x1e0] sm:$0xf]
    %v142 = vld [vmem:[%s1 + $0x1e4] sm:$0xf]
    %v143 = vld [vmem:[%s1 + $0x1e8] sm:$0xf]
    %v144 = vld [vmem:[%s1 + $0x1ec] sm:$0xf]
    %v145 = vld [vmem:[%s1 + $0x1f0] sm:$0xf]
    %v146 = vld [vmem:[%s1 + $0x1f4] sm:$0xf]
    %v147 = vld [vmem:[%s1 + $0x1f8] sm:$0xf]
    %v148 = vld [vmem:[%s1 + $0x1fc] sm:$0xf]
    %v149 = vld [vmem:[%s1 + $0x200] sm:$0xf]
    %v150 = vld [vmem:[%s1 + $0x204] sm:$0xf]
    %v151 = vld [vmem:[%s1 + $0x208] sm:$0xf]
    %v152 = vld [vmem:[%s1 + $0x20c] sm:$0xf]
    %v153 = vld [vmem:[%s1 + $0x210] sm:$0xf]
    %v154 = vld [vmem:[%s1 + $0x214] sm:$0xf]
    %v155 = vld [vmem:[%s1 + $0x218] sm:$0xf]
    %v156 = vld [vmem:[%s1 + $0x21c] sm:$0xf]
    %v157 = vld [vmem:[%s1 + $0x220] sm:$0xf]
    %v158 = vld [vmem:[%s1 + $0x224] sm:$0xf]
    %v159 = vld [vmem:[%s1 + $0x228] sm:$0xf]
    %v160 = vld [vmem:[%s1 + $0x22c] sm:$0xf]
    %v161 = vld [vmem:[%s1 + $0x230] sm:$0xf]
    %v162 = vld [vmem:[%s1 + $0x234] sm:$0xf]
    %v163 = vld [vmem:[%s1 + $0x238] sm:$0xf]
    %v164 = vld [vmem:[%s1 + $0x23c] sm:$0xf]
    %v165 = vld [vmem:[%s1 + $0x240] sm:$0xf]
    %v166 = vld [vmem:[%s1 + $0x244] sm:$0xf]
    %v167 = vld [vmem:[%s1 + $0x248] sm:$0xf]
    %v168 = vld [vmem:[%s1 + $0x24c] sm:$0xf]
    %v169 = vld [vmem:[%s1 + $0x250] sm:$0xf]
    %v170 = vld [vmem:[%s1 + $0x254] sm:$0xf]
    %v171 = vld [vmem:[%s1 + $0x258] sm:$0xf]
    %v172 = vld [vmem:[%s1 + $0x25c] sm:$0xf]
    %v173 = vld [vmem:[%s1 + $0x260] sm:$0xf]
    %v174 = vld [vmem:[%s1 + $0x264] sm:$0xf]
    %v175 = vld [vmem:[%s1 + $0x268] sm:$0xf]
    %v176 = vld [vmem:[%s1 + $0x26c] sm:$0xf]
    %v177 = vld [vmem:[%s1 + $0x270] sm:$0xf]
    %v178 = vld [vmem:[%s1 + $0x274] sm:$0xf]
    %v179 = vld [vmem:[%s1 + $0x278] sm:$0xf]
    %v180 = vld [vmem:[%s1 + $0x27c] sm:$0xf]
    %v181 = vld [vmem:[%s1 + $0x280] sm:$0xf]
    %v182 = vld [vmem:[%s1 + $0x284] sm:$0xf]
    %v183 = vld [vmem:[%s1 + $0x288] sm:$0xf]
    %v184 = vld [vmem:[%s1 + $0x28c] sm:$0xf]
    %v185 = vld [vmem:[%s1 + $0x290] sm:$0xf]
    %v186 = vld [vmem:[%s1 + $0x294] sm:$0xf]
    %v187 = vld [vmem:[%s1 + $0x298] sm:$0xf]
    %v188 = vld [vmem:[%s1 + $0x29c] sm:$0xf]
    %v189 = vld [vmem:[%s1 + $0x2a0] sm:$0xf]
    %v190 = vld [vmem:[%s1 + $0x2a4] sm:$0xf]
    %v191 = vld [vmem:[%s1 + $0x2a8] sm:$0xf]
    %v192 = vld [vmem:[%s1 + $0x2ac] sm:$0xf]
    %v193 = vld [vmem:[%s1 + $0x2b0] sm:$0xf]
    %v194 = vld [vmem:[%s1 + $0x2b4] sm:$0xf]
    %v195 = vld [vmem:[%s1 + $0x2b8] sm:$0xf]
    %v196 = vld [vmem:[%s1 + $0x2bc] sm:$0xf]
    %v197 = vld [vmem:[%s1 + $0x2c0] sm:$0xf]
    %v198 = vld [vmem:[%s1 + $0x2c4] sm:$0xf]
    %v199 = vld [vmem:[%s1 + $0x2c8] sm:$0xf]
    %v200 = vld [vmem:[%s1 + $0x2cc] sm:$0xf]
    %v201 = vld [vmem:[%s1 + $0x2d0] sm:$0xf]
    %v202 = vld [vmem:[%s1 + $0x2d4] sm:$0xf]
    %v203 = vld [vmem:[%s1 + $0x2d8] sm:$0xf]
    %v204 = vld [vmem:[%s1 + $0x2dc] sm:$0xf]
    %v205 = vld [vmem:[%s1 + $0x2e0] sm:$0xf]
    %v206 = vld [vmem:[%s1 + $0x2e4] sm:$0xf]
    %v207 = vld [vmem:[%s1 + $0x2e8] sm:$0xf]
    %v208 = vld [vmem:[%s1 + $0x2ec] sm:$0xf]
    %v209 = vld [vmem:[%s1 + $0x2f0] sm:$0xf]
    %v210 = vld [vmem:[%s1 + $0x2f4] sm:$0xf]
    %v211 = vld [vmem:[%s1 + $0x2f8] sm:$0xf]
    %v212 = vld [vmem:[%s1 + $0x2fc] sm:$0xf]
    %v213 = vld [vmem:[%s1 + $0x300] sm:$0xf]
    %v214 = vld [vmem:[%s1 + $0x304] sm:$0xf]
    %v215 = vld [vmem:[%s1 + $0x308] sm:$0xf]
    %v216 = vld [vmem:[%s1 + $0x30c] sm:$0xf]
    %v217 = vld [vmem:[%s1 + $0x310] sm:$0xf]
    %v218 = vld [vmem:[%s1 + $0x314] sm:$0xf]
    %v219 = vld [vmem:[%s1 + $0x318] sm:$0xf]
    %v220 = vld [vmem:[%s1 + $0x31c] sm:$0xf]
    %v221 = vld [vmem:[%s1 + $0x320] sm:$0xf]
    %v222 = vld [vmem:[%s1 + $0x324] sm:$0xf]
    %v223 = vld [vmem:[%s1 + $0x328] sm:$0xf]
    %v224 = vld [vmem:[%s1 + $0x32c] sm:$0xf]
    %v225 = vld [vmem:[%s1 + $0x330] sm:$0xf]
    %v226 = vld [vmem:[%s1 + $0x334] sm:$0xf]
    %v227 = vld [vmem:[%s1 + $0x338] sm:$0xf]
    %v228 = vld [vmem:[%s1 + $0x33c] sm:$0xf]
    %v229 = vld [vmem:[%s1 + $0x340] sm:$0xf]
    %v230 = vld [vmem:[%s1 + $0x344] sm:$0xf]
    %v231 = vld [vmem:[%s1 + $0x348] sm:$0xf]
    %v232 = vld [vmem:[%s1 + $0x34c] sm:$0xf]
    %v233 = vld [vmem:[%s1 + $0x350] sm:$0xf]
    %v234 = vld [vmem:[%s1 + $0x354] sm:$0xf]
    %v235 = vld [vmem:[%s1 + $0x358] sm:$0xf]
    %v236 = vld [vmem:[%s1 + $0x35c] sm:$0xf]
    %v237 = vld [vmem:[%s1 + $0x360] sm:$0xf]
    %v238 = vld [vmem:[%s1 + $0x364] sm:$0xf]
    %v239 = vld [vmem:[%s1 + $0x368] sm:$0xf]
    %v240 = vld [vmem:[%s1 + $0x36c] sm:$0xf]
    %v241 = vld [vmem:[%s1 + $0x370] sm:$0xf]
    %v242 = vld [vmem:[%s1 + $0x374] sm:$0xf]
    %v243 = vld [vmem:[%s1 + $0x378] sm:$0xf]
    %v244 = vld [vmem:[%s1 + $0x37c] sm:$0xf]
    %v245 = vld [vmem:[%s1 + $0x380] sm:$0xf]
    %v246 = vld [vmem:[%s1 + $0x384] sm:$0xf]
    %v247 = vld [vmem:[%s1 + $0x388] sm:$0xf]
    %v248 = vld [vmem:[%s1 + $0x38c] sm:$0xf]
    %v249 = vld [vmem:[%s1 + $0x390] sm:$0xf]
    %v250 = vld [vmem:[%s1 + $0x394] sm:$0xf]
    %v251 = vld [vmem:[%s1 + $0x398] sm:$0xf]
    %v252 = vld [vmem:[%s1 + $0x39c] sm:$0xf]
    %v253 = vld [vmem:[%s1 + $0x3a0] sm:$0xf]
    %v254 = vld [vmem:[%s1 + $0x3a4] sm:$0xf]
    %v255 = vld [vmem:[%s1 + $0x3a8] sm:$0xf]
    %v256 = vld [vmem:[%s1 + $0x3ac] sm:$0xf]
    %v257 = vld [vmem:[%s1 + $0x3b0] sm:$0xf]
    %v258 = vld [vmem:[%s1 + $0x3b4] sm:$0xf]
    %v259 = vld [vmem:[%s1 + $0x3b8] sm:$0xf]
    %v260 = vld [vmem:[%s1 + $0x3bc] sm:$0xf]
    %v261 = vld [vmem:[%s1 + $0x3c0] sm:$0xf]
    %v262 = vld [vmem:[%s1 + $0x3c4] sm:$0xf]
    %v263 = vld [vmem:[%s1 + $0x3c8] sm:$0xf]
    %v264 = vld [vmem:[%s1 + $0x3cc] sm:$0xf]
    %v265 = vld [vmem:[%s1 + $0x3d0] sm:$0xf]
    %v266 = vld [vmem:[%s1 + $0x3d4] sm:$0xf]
    %v267 = vld [vmem:[%s1 + $0x3d8] sm:$0xf]
    %v268 = vld [vmem:[%s1 + $0x3dc] sm:$0xf]
    %v269 = vld [vmem:[%s1 + $0x3e0] sm:$0xf]
    %v270 = vld [vmem:[%s1 + $0x3e4] sm:$0xf]
    %v271 = vld [vmem:[%s1 + $0x3e8] sm:$0xf]
    %v272 = vld [vmem:[%s1 + $0x3ec] sm:$0xf]
    %v273 = vld [vmem:[%s1 + $0x3f0] sm:$0xf]
    %v274 = vld [vmem:[%s1 + $0x3f4] sm:$0xf]
    %v275 = vld [vmem:[%s1 + $0x3f8] sm:$0xf]
    %v276 = vld [vmem:[%s1 + $0x3fc] sm:$0xf]
    %v277 = vld [vmem:[%s1 + $0x400] sm:$0xf]
    %v278 = vld [vmem:[%s1 + $0x404] sm:$0xf]
    %v279 = vld [vmem:[%s1 + $0x408] sm:$0xf]
    %v280 = vld [vmem:[%s1 + $0x40c] sm:$0xf]
    %v281 = vld [vmem:[%s1 + $0x410] sm:$0xf]
    %v282 = vld [vmem:[%s1 + $0x414] sm:$0xf]
    %v283 = vld [vmem:[%s1 + $0x418] sm:$0xf]
    %v284 = vld [vmem:[%s1 + $0x41c] sm:$0xf]
    %v285 = vld [vmem:[%s1 + $0x420] sm:$0xf]
    %v286 = vld [vmem:[%s1 + $0x424] sm:$0xf]
    %v287 = vld [vmem:[%s1 + $0x428] sm:$0xf]
    %v288 = vld [vmem:[%s1 + $0x42c] sm:$0xf]
    %v289 = vld [vmem:[%s1 + $0x430] sm:$0xf]
    %v290 = vld [vmem:[%s1 + $0x434] sm:$0xf]
    %v291 = vld [vmem:[%s1 + $0x438] sm:$0xf]
    %v292 = vld [vmem:[%s1 + $0x43c] sm:$0xf]
    %v293 = vld [vmem:[%s1 + $0x440] sm:$0xf]
    %v294 = vld [vmem:[%s1 + $0x444] sm:$0xf]
    %v295 = vld [vmem:[%s1 + $0x448] sm:$0xf]
    %v296 = vld [vmem:[%s1 + $0x44c] sm:$0xf]
    %v297 = vld [vmem:[%s1 + $0x450] sm:$0xf]
    %v298 = vld [vmem:[%s1 + $0x454] sm:$0xf]
    %v299 = vld [vmem:[%s1 + $0x458] sm:$0xf]
    %v300 = vld [vmem:[%s1 + $0x45c] sm:$0xf]
    %v301 = vld [vmem:[%s1 + $0x460] sm:$0xf]
    %v302 = vld [vmem:[%s1 + $0x464] sm:$0xf]
    %v303 = vld [vmem:[%s1 + $0x468] sm:$0xf]
    %v304 = vld [vmem:[%s1 + $0x46c] sm:$0xf]
    %v305 = vld [vmem:[%s1 + $0x470] sm:$0xf]
    %v306 = vld [vmem:[%s1 + $0x474] sm:$0xf]
    %v307 = vld [vmem:[%s1 + $0x478] sm:$0xf]
    %v308 = vld [vmem:[%s1 + $0x47c] sm:$0xf]
    %v309 = vld [vmem:[%s1 + $0x480] sm:$0xf]
    %v310 = vld [vmem:[%s1 + $0x484] sm:$0xf]
    %v311 = vld [vmem:[%s1 + $0x488] sm:$0xf]
    %v312 = vld [vmem:[%s1 + $0x48c] sm:$0xf]
    %v313 = vld [vmem:[%s1 + $0x490] sm:$0xf]
    %v314 = vld [vmem:[%s1 + $0x494] sm:$0xf]
    %v315 = vld [vmem:[%s1 + $0x498] sm:$0xf]
    %v316 = vld [vmem:[%s1 + $0x49c] sm:$0xf]
    %v317 = vld [vmem:[%s1 + $0x4a0] sm:$0xf]
    %v318 = vld [vmem:[%s1 + $0x4a4] sm:$0xf]
    %v319 = vld [vmem:[%s1 + $0x4a8] sm:$0xf]
    %v320 = vld [vmem:[%s1 + $0x4ac] sm:$0xf]
    %v321 = vld [vmem:[%s1 + $0x4b0] sm:$0xf]
    %v322 = vld [vmem:[%s1 + $0x4b4] sm:$0xf]
    %v323 = vld [vmem:[%s1 + $0x4b8] sm:$0xf]
    %v324 = vld [vmem:[%s1 + $0x4bc] sm:$0xf]
    %v325 = vld [vmem:[%s1 + $0x4c0] sm:$0xf]
    %v326 = vld [vmem:[%s1 + $0x4c4] sm:$0xf]
    %v327 = vld [vmem:[%s1 + $0x4c8] sm:$0xf]
    %v328 = vld [vmem:[%s1 + $0x4cc] sm:$0xf]
    %v329 = vld [vmem:[%s1 + $0x4d0] sm:$0xf]
    %v330 = vld [vmem:[%s1 + $0x4d4] sm:$0xf]
    %v331 = vld [vmem:[%s1 + $0x4d8] sm:$0xf]
    %v332 = vld [vmem:[%s1 + $0x4dc] sm:$0xf]
    %v333 = vld [vmem:[%s1 + $0x4e0] sm:$0xf]
    %v334 = vld [vmem:[%s1 + $0x4e4] sm:$0xf]
    %v335 = vld [vmem:[%s1 + $0x4e8] sm:$0xf]
    %v336 = vld [vmem:[%s1 + $0x4ec] sm:$0xf]
    %v337 = vld [vmem:[%s1 + $0x4f0] sm:$0xf]
    %v338 = vld [vmem:[%s1 + $0x4f4] sm:$0xf]
    %v339 = vld [vmem:[%s1 + $0x4f8] sm:$0xf]
    %v340 = vld [vmem:[%s1 + $0x4fc] sm:$0xf]
    %v341 = vld [vmem:[%s1 + $0x500] sm:$0xf]
    %v342 = vld [vmem:[%s1 + $0x504] sm:$0xf]
    %v343 = vld [vmem:[%s1 + $0x508] sm:$0xf]
    %v344 = vld [vmem:[%s1 + $0x50c] sm:$0xf]
    %v345 = vld [vmem:[%s1 + $0x510] sm:$0xf]
    %v346 = vld [vmem:[%s1 + $0x514] sm:$0xf]
    %v347 = vld [vmem:[%s1 + $0x518] sm:$0xf]
    %v348 = vld [vmem:[%s1 + $0x51c] sm:$0xf]
    %v349 = vld [vmem:[%s1 + $0x520] sm:$0xf]
    %v350 = vld [vmem:[%s1 + $0x524] sm:$0xf]
    %v351 = vld [vmem:[%s1 + $0x528] sm:$0xf]
    %v352 = vld [vmem:[%s1 + $0x52c] sm:$0xf]
    %v353 = vld [vmem:[%s1 + $0x530] sm:$0xf]
    %v354 = vld [vmem:[%s1 + $0x534] sm:$0xf]
    %v355 = vld [vmem:[%s1 + $0x538] sm:$0xf]
    %v356 = vld [vmem:[%s1 + $0x53c] sm:$0xf]
    %v357 = vld [vmem:[%s1 + $0x540] sm:$0xf]
    %v358 = vld [vmem:[%s1 + $0x544] sm:$0xf]
    %v359 = vld [vmem:[%s1 + $0x548] sm:$0xf]
    %v360 = vld [vmem:[%s1 + $0x54c] sm:$0xf]
    %v361 = vld [vmem:[%s1 + $0x550] sm:$0xf]
    %v362 = vld [vmem:[%s1 + $0x554] sm:$0xf]
    %v363 = vld [vmem:[%s1 + $0x558] sm:$0xf]
    %v364 = vld [vmem:[%s1 + $0x55c] sm:$0xf]
    %v365 = vld [vmem:[%s1 + $0x560] sm:$0xf]
    %v366 = vld [vmem:[%s1 + $0x564] sm:$0xf]
    %v367 = vld [vmem:[%s1 + $0x568] sm:$0xf]
    %v368 = vld [vmem:[%s1 + $0x56c] sm:$0xf]
    %v369 = vld [vmem:[%s1 + $0x570] sm:$0xf]
    %v370 = vld [vmem:[%s1 + $0x574] sm:$0xf]
    %v371 = vld [vmem:[%s1 + $0x578] sm:$0xf]
    %v372 = vld [vmem:[%s1 + $0x57c] sm:$0xf]
    %v373 = vld [vmem:[%s1 + $0x580] sm:$0xf]
    %v374 = vld [vmem:[%s1 + $0x584] sm:$0xf]
    %v375 = vld [vmem:[%s1 + $0x588] sm:$0xf]
    %v376 = vld [vmem:[%s1 + $0x58c] sm:$0xf]
    %v377 = vld [vmem:[%s1 + $0x590] sm:$0xf]
    %v378 = vld [vmem:[%s1 + $0x594] sm:$0xf]
    %v379 = vld [vmem:[%s1 + $0x598] sm:$0xf]
    %v380 = vld [vmem:[%s1 + $0x59c] sm:$0xf]
    %v381 = vld [vmem:[%s1 + $0x5a0] sm:$0xf]
    %v382 = vld [vmem:[%s1 + $0x5a4] sm:$0xf]
    %v383 = vld [vmem:[%s1 + $0x5a8] sm:$0xf]
    %v384 = vld [vmem:[%s1 + $0x5ac] sm:$0xf]
    %v385 = vld [vmem:[%s1 + $0x5b0] sm:$0xf]
    %v386 = vld [vmem:[%s1 + $0x5b4] sm:$0xf]
    %v387 = vld [vmem:[%s1 + $0x5b8] sm:$0xf]
    %v388 = vld [vmem:[%s1 + $0x5bc] sm:$0xf]
    %v389 = vld [vmem:[%s1 + $0x5c0] sm:$0xf]
    %v390 = vld [vmem:[%s1 + $0x5c4] sm:$0xf]
    %v391 = vld [vmem:[%s1 + $0x5c8] sm:$0xf]
    %v392 = vld [vmem:[%s1 + $0x5cc] sm:$0xf]
    %v393 = vld [vmem:[%s1 + $0x5d0] sm:$0xf]
    %v394 = vld [vmem:[%s1 + $0x5d4] sm:$0xf]
    %v395 = vld [vmem:[%s1 + $0x5d8] sm:$0xf]
    %v396 = vld [vmem:[%s1 + $0x5dc] sm:$0xf]
    %v397 = vld [vmem:[%s1 + $0x5e0] sm:$0xf]
    %v398 = vld [vmem:[%s1 + $0x5e4] sm:$0xf]
    %v399 = vld [vmem:[%s1 + $0x5e8] sm:$0xf]
    %v400 = vld [vmem:[%s1 + $0x5ec] sm:$0xf]
    %v401 = vld [vmem:[%s1 + $0x5f0] sm:$0xf]
    %v402 = vld [vmem:[%s1 + $0x5f4] sm:$0xf]
    %v403 = vld [vmem:[%s1 + $0x5f8] sm:$0xf]
    %v404 = vld [vmem:[%s1 + $0x5fc] sm:$0xf]
    %v405 = vld [vmem:[%s1 + $0x600] sm:$0xf]
    %v406 = vld [vmem:[%s1 + $0x604] sm:$0xf]
    %v407 = vld [vmem:[%s1 + $0x608] sm:$0xf]
    %v408 = vld [vmem:[%s1 + $0x60c] sm:$0xf]
    %v409 = vld [vmem:[%s1 + $0x610] sm:$0xf]
    %v410 = vld [vmem:[%s1 + $0x614] sm:$0xf]
    %v411 = vld [vmem:[%s1 + $0x618] sm:$0xf]
    %v412 = vld [vmem:[%s1 + $0x61c] sm:$0xf]
    %v413 = vld [vmem:[%s1 + $0x620] sm:$0xf]
    %v414 = vld [vmem:[%s1 + $0x624] sm:$0xf]
    %v415 = vld [vmem:[%s1 + $0x628] sm:$0xf]
    %v416 = vld [vmem:[%s1 + $0x62c] sm:$0xf]
    %v417 = vld [vmem:[%s1 + $0x630] sm:$0xf]
    %v418 = vld [vmem:[%s1 + $0x634] sm:$0xf]
    %v419 = vld [vmem:[%s1 + $0x638] sm:$0xf]
    %v420 = vld [vmem:[%s1 + $0x63c] sm:$0xf]
    %v421 = vld [vmem:[%s1 + $0x640] sm:$0xf]
    %v422 = vld [vmem:[%s1 + $0x644] sm:$0xf]
    %v423 = vld [vmem:[%s1 + $0x648] sm:$0xf]
    %v424 = vld [vmem:[%s1 + $0x64c] sm:$0xf]
    %v425 = vld [vmem:[%s1 + $0x650] sm:$0xf]
    %v426 = vld [vmem:[%s1 + $0x654] sm:$0xf]
    %v427 = vld [vmem:[%s1 + $0x658] sm:$0xf]
    %v428 = vld [vmem:[%s1 + $0x65c] sm:$0xf]
    %v429 = vld [vmem:[%s1 + $0x660] sm:$0xf]
    %v430 = vld [vmem:[%s1 + $0x664] sm:$0xf]
    %v431 = vld [vmem:[%s1 + $0x668] sm:$0xf]
    %v432 = vld [vmem:[%s1 + $0x66c] sm:$0xf]
    %v433 = vld [vmem:[%s1 + $0x670] sm:$0xf]
    %v434 = vld [vmem:[%s1 + $0x674] sm:$0xf]
    %v435 = vld [vmem:[%s1 + $0x678] sm:$0xf]
    %v436 = vld [vmem:[%s1 + $0x67c] sm:$0xf]
    %v437 = vld [vmem:[%s1 + $0x680] sm:$0xf]
    %v438 = vld [vmem:[%s1 + $0x684] sm:$0xf]
    %v439 = vld [vmem:[%s1 + $0x688] sm:$0xf]
    %v440 = vld [vmem:[%s1 + $0x68c] sm:$0xf]
    %v441 = vld [vmem:[%s1 + $0x690] sm:$0xf]
    %v442 = vld [vmem:[%s1 + $0x694] sm:$0xf]
    %v443 = vld [vmem:[%s1 + $0x698] sm:$0xf]
    %v444 = vld [vmem:[%s1 + $0x69c] sm:$0xf]
    %v445 = vld [vmem:[%s1 + $0x6a0] sm:$0xf]
    %v446 = vld [vmem:[%s1 + $0x6a4] sm:$0xf]
    %v447 = vld [vmem:[%s1 + $0x6a8] sm:$0xf]
    %v448 = vld [vmem:[%s1 + $0x6ac] sm:$0xf]
    %v449 = vld [vmem:[%s1 + $0x6b0] sm:$0xf]
    %v450 = vld [vmem:[%s1 + $0x6b4] sm:$0xf]
    %v451 = vld [vmem:[%s1 + $0x6b8] sm:$0xf]
    %v452 = vld [vmem:[%s1 + $0x6bc] sm:$0xf]
    %v453 = vld [vmem:[%s1 + $0x6c0] sm:$0xf]
    %v454 = vld [vmem:[%s1 + $0x6c4] sm:$0xf]
    %v455 = vld [vmem:[%s1 + $0x6c8] sm:$0xf]
    %v456 = vld [vmem:[%s1 + $0x6cc] sm:$0xf]
    %v457 = vld [vmem:[%s1 + $0x6d0] sm:$0xf]
    %v458 = vld [vmem:[%s1 + $0x6d4] sm:$0xf]
    %v459 = vld [vmem:[%s1 + $0x6d8] sm:$0xf]
    %v460 = vld [vmem:[%s1 + $0x6dc] sm:$0xf]
    %v461 = vld [vmem:[%s1 + $0x6e0] sm:$0xf]
    %v462 = vld [vmem:[%s1 + $0x6e4] sm:$0xf]
    %v463 = vld [vmem:[%s1 + $0x6e8] sm:$0xf]
    %v464 = vld [vmem:[%s1 + $0x6ec] sm:$0xf]
    %v465 = vld [vmem:[%s1 + $0x6f0] sm:$0xf]
    %v466 = vld [vmem:[%s1 + $0x6f4] sm:$0xf]
    %v467 = vld [vmem:[%s1 + $0x6f8] sm:$0xf]
    %v468 = vld [vmem:[%s1 + $0x6fc] sm:$0xf]
    %v469 = vld [vmem:[%s1 + $0x700] sm:$0xf]
    %v470 = vld [vmem:[%s1 + $0x704] sm:$0xf]
    %v471 = vld [vmem:[%s1 + $0x708] sm:$0xf]
    %v472 = vld [vmem:[%s1 + $0x70c] sm:$0xf]
    %v473 = vld [vmem:[%s1 + $0x710] sm:$0xf]
    %v474 = vld [vmem:[%s1 + $0x714] sm:$0xf]
    %v475 = vld [vmem:[%s1 + $0x718] sm:$0xf]
    %v476 = vld [vmem:[%s1 + $0x71c] sm:$0xf]
    %v477 = vld [vmem:[%s1 + $0x720] sm:$0xf]
    %v478 = vld [vmem:[%s1 + $0x724] sm:$0xf]
    %v479 = vld [vmem:[%s1 + $0x728] sm:$0xf]
    %v480 = vld [vmem:[%s1 + $0x72c] sm:$0xf]
    %v481 = vld [vmem:[%s1 + $0x730] sm:$0xf]
    %v482 = vld [vmem:[%s1 + $0x734] sm:$0xf]
    %v483 = vld [vmem:[%s1 + $0x738] sm:$0xf]
    %v484 = vld [vmem:[%s1 + $0x73c] sm:$0xf]
    %v485 = vld [vmem:[%s1 + $0x740] sm:$0xf]
    %v486 = vld [vmem:[%s1 + $0x744] sm:$0xf]
    %v487 = vld [vmem:[%s1 + $0x748] sm:$0xf]
    %v488 = vld [vmem:[%s1 + $0x74c] sm:$0xf]
    %v489 = vld [vmem:[%s1 + $0x750] sm:$0xf]
    %v490 = vld [vmem:[%s1 + $0x754] sm:$0xf]
    %v491 = vld [vmem:[%s1 + $0x758] sm:$0xf]
    %v492 = vld [vmem:[%s1 + $0x75c] sm:$0xf]
    %v493 = vld [vmem:[%s1 + $0x760] sm:$0xf]
    %v494 = vld [vmem:[%s1 + $0x764] sm:$0xf]
    %v495 = vld [vmem:[%s1 + $0x768] sm:$0xf]
    %v496 = vld [vmem:[%s1 + $0x76c] sm:$0xf]
    %v497 = vld [vmem:[%s1 + $0x770] sm:$0xf]
    %v498 = vld [vmem:[%s1 + $0x774] sm:$0xf]
    %v499 = vld [vmem:[%s1 + $0x778] sm:$0xf]
    %v500 = vld [vmem:[%s1 + $0x77c] sm:$0xf]
    %v501 = vld [vmem:[%s1 + $0x780] sm:$0xf]
    %v502 = vld [vmem:[%s1 + $0x784] sm:$0xf]
    %v503 = vld [vmem:[%s1 + $0x788] sm:$0xf]
    %v504 = vld [vmem:[%s1 + $0x78c] sm:$0xf]
    %v505 = vld [vmem:[%s1 + $0x790] sm:$0xf]
    %v506 = vld [vmem:[%s1 + $0x794] sm:$0xf]
    %v507 = vld [vmem:[%s1 + $0x798] sm:$0xf]
    %v508 = vld [vmem:[%s1 + $0x79c] sm:$0xf]
    %v509 = vld [vmem:[%s1 + $0x7a0] sm:$0xf]
    %v510 = vld [vmem:[%s1 + $0x7a4] sm:$0xf]
    %v511 = vld [vmem:[%s1 + $0x7a8] sm:$0xf]
    %v512 = vld [vmem:[%s1 + $0x7ac] sm:$0xf]
    %v513 = vld [vmem:[%s1 + $0x7b0] sm:$0xf]
    %v514 = vld [vmem:[%s1 + $0x7b4] sm:$0xf]
    %v515 = vld [vmem:[%s1 + $0x7b8] sm:$0xf]
    %v516 = vld [vmem:[%s1 + $0x7bc] sm:$0xf]
    %v517 = vld [vmem:[%s1 + $0x7c0] sm:$0xf]
    %v518 = vld [vmem:[%s1 + $0x7c4] sm:$0xf]
    %v519 = vld [vmem:[%s1 + $0x7c8] sm:$0xf]
    %v520 = vld [vmem:[%s1 + $0x7cc] sm:$0xf]
    %v521 = vld [vmem:[%s1 + $0x7d0] sm:$0xf]
    %v522 = vld [vmem:[%s1 + $0x7d4] sm:$0xf]
    %v523 = vld [vmem:[%s1 + $0x7d8] sm:$0xf]
    %v524 = vld [vmem:[%s1 + $0x7dc] sm:$0xf]
    %v525 = vld [vmem:[%s1 + $0x7e0] sm:$0xf]
    %v526 = vld [vmem:[%s1 + $0x7e4] sm:$0xf]
    %v527 = vld [vmem:[%s1 + $0x7e8] sm:$0xf]
    %v528 = vld [vmem:[%s1 + $0x7ec] sm:$0xf]
    %v529 = vld [vmem:[%s1 + $0x7f0] sm:$0xf]
    %v530 = vld [vmem:[%s1 + $0x7f4] sm:$0xf]
    %v531 = vld [vmem:[%s1 + $0x7f8] sm:$0xf]
    %v532 = vld [vmem:[%s1 + $0x7fc] sm:$0xf]
    %v533 = vld [vmem:[%s1 + $0x800] sm:$0xf]
    %v534 = vld [vmem:[%s1 + $0x804] sm:$0xf]
    %v535 = vld [vmem:[%s1 + $0x808] sm:$0xf]
    %v536 = vld [vmem:[%s1 + $0x80c] sm:$0xf]
    %v537 = vld [vmem:[%s1 + $0x810] sm:$0xf]
    %v538 = vld [vmem:[%s1 + $0x814] sm:$0xf]
    %v539 = vld [vmem:[%s1 + $0x818] sm:$0xf]
    %v540 = vld [vmem:[%s1 + $0x81c] sm:$0xf]
    %v541 = vld [vmem:[%s1 + $0x820] sm:$0xf]
    %v542 = vld [vmem:[%s1 + $0x824] sm:$0xf]
    %v543 = vld [vmem:[%s1 + $0x828] sm:$0xf]
    %v544 = vld [vmem:[%s1 + $0x82c] sm:$0xf]
    %v545 = vld [vmem:[%s1 + $0x830] sm:$0xf]
    %v546 = vld [vmem:[%s1 + $0x834] sm:$0xf]
    %v547 = vld [vmem:[%s1 + $0x838] sm:$0xf]
    %v548 = vld [vmem:[%s1 + $0x83c] sm:$0xf]
    %v549 = vld [vmem:[%s1 + $0x840] sm:$0xf]
    %v550 = vld [vmem:[%s1 + $0x844] sm:$0xf]
    %v551 = vld [vmem:[%s1 + $0x848] sm:$0xf]
    %v552 = vld [vmem:[%s1 + $0x84c] sm:$0xf]
    %v553 = vld [vmem:[%s1 + $0x850] sm:$0xf]
    %v554 = vld [vmem:[%s1 + $0x854] sm:$0xf]
    %v555 = vld [vmem:[%s1 + $0x858] sm:$0xf]
    %v556 = vld [vmem:[%s1 + $0x85c] sm:$0xf]
    %v557 = vld [vmem:[%s1 + $0x860] sm:$0xf]
    %v558 = vld [vmem:[%s1 + $0x864] sm:$0xf]
    %v559 = vld [vmem:[%s1 + $0x868] sm:$0xf]
    %v560 = vld [vmem:[%s1 + $0x86c] sm:$0xf]
    %v561 = vld [vmem:[%s1 + $0x870] sm:$0xf]
    %v562 = vld [vmem:[%s1 + $0x874] sm:$0xf]
    %v563 = vld [vmem:[%s1 + $0x878] sm:$0xf]
    %v564 = vld [vmem:[%s1 + $0x87c] sm:$0xf]
    %v565 = vld [vmem:[%s1 + $0x880] sm:$0xf]
    %v566 = vld [vmem:[%s1 + $0x884] sm:$0xf]
    %v567 = vld [vmem:[%s1 + $0x888] sm:$0xf]
    %v568 = vld [vmem:[%s1 + $0x88c] sm:$0xf]
    %v569 = vld [vmem:[%s1 + $0x890] sm:$0xf]
    %v570 = vld [vmem:[%s1 + $0x894] sm:$0xf]
    %v571 = vld [vmem:[%s1 + $0x898] sm:$0xf]
    %v572 = vld [vmem:[%s1 + $0x89c] sm:$0xf]
    %v573 = vld [vmem:[%s1 + $0x8a0] sm:$0xf]
    %v574 = vld [vmem:[%s1 + $0x8a4] sm:$0xf]
    %v575 = vld [vmem:[%s1 + $0x8a8] sm:$0xf]
    %v576 = vld [vmem:[%s1 + $0x8ac] sm:$0xf]
    %v577 = vld [vmem:[%s1 + $0x8b0] sm:$0xf]
    %v578 = vld [vmem:[%s1 + $0x8b4] sm:$0xf]
    %v579 = vld [vmem:[%s1 + $0x8b8] sm:$0xf]
    %v580 = vld [vmem:[%s1 + $0x8bc] sm:$0xf]
    %v581 = vld [vmem:[%s1 + $0x8c0] sm:$0xf]
    %v582 = vld [vmem:[%s1 + $0x8c4] sm:$0xf]
    %v583 = vld [vmem:[%s1 + $0x8c8] sm:$0xf]
    %v584 = vld [vmem:[%s1 + $0x8cc] sm:$0xf]
    %v585 = vld [vmem:[%s1 + $0x8d0] sm:$0xf]
    %v586 = vld [vmem:[%s1 + $0x8d4] sm:$0xf]
    %v587 = vld [vmem:[%s1 + $0x8d8] sm:$0xf]
    %v588 = vld [vmem:[%s1 + $0x8dc] sm:$0xf]
    %v589 = vld [vmem:[%s1 + $0x8e0] sm:$0xf]
    %v590 = vld [vmem:[%s1 + $0x8e4] sm:$0xf]
    %v591 = vld [vmem:[%s1 + $0x8e8] sm:$0xf]
    %v592 = vld [vmem:[%s1 + $0x8ec] sm:$0xf]
    %v593 = vld [vmem:[%s1 + $0x8f0] sm:$0xf]
    %v594 = vld [vmem:[%s1 + $0x8f4] sm:$0xf]
    %v595 = vld [vmem:[%s1 + $0x8f8] sm:$0xf]
    %v596 = vld [vmem:[%s1 + $0x8fc] sm:$0xf]
    %v597 = vld [vmem:[%s1 + $0x900] sm:$0xf]
    %v598 = vld [vmem:[%s1 + $0x904] sm:$0xf]
    %v599 = vld [vmem:[%s1 + $0x908] sm:$0xf]
    %v600 = vld [vmem:[%s1 + $0x90c] sm:$0xf]
    %v601 = vld [vmem:[%s1 + $0x910] sm:$0xf]
    %v602 = vld [vmem:[%s1 + $0x914] sm:$0xf]
    %v603 = vld [vmem:[%s1 + $0x918] sm:$0xf]
    %v604 = vld [vmem:[%s1 + $0x91c] sm:$0xf]
    %v605 = vld [vmem:[%s1 + $0x920] sm:$0xf]
    %v606 = vld [vmem:[%s1 + $0x924] sm:$0xf]
    %v607 = vld [vmem:[%s1 + $0x928] sm:$0xf]
    %v608 = vld [vmem:[%s1 + $0x92c] sm:$0xf]
    %v609 = vld [vmem:[%s1 + $0x930] sm:$0xf]
    %v610 = vld [vmem:[%s1 + $0x934] sm:$0xf]
    %v611 = vld [vmem:[%s1 + $0x938] sm:$0xf]
    %v612 = vld [vmem:[%s1 + $0x93c] sm:$0xf]
    %v613 = vld [vmem:[%s1 + $0x940] sm:$0xf]
    %v614 = vld [vmem:[%s1 + $0x944] sm:$0xf]
    %v615 = vld [vmem:[%s1 + $0x948] sm:$0xf]
    %v616 = vld [vmem:[%s1 + $0x94c] sm:$0xf]
    %v617 = vld [vmem:[%s1 + $0x950] sm:$0xf]
    %v618 = vld [vmem:[%s1 + $0x954] sm:$0xf]
    %v619 = vld [vmem:[%s1 + $0x958] sm:$0xf]
    %v620 = vld [vmem:[%s1 + $0x95c] sm:$0xf]
    %v621 = vld [vmem:[%s1 + $0x960] sm:$0xf]
    %v622 = vld [vmem:[%s1 + $0x964] sm:$0xf]
    %v623 = vld [vmem:[%s1 + $0x968] sm:$0xf]
    %v624 = vld [vmem:[%s1 + $0x96c] sm:$0xf]
    %v625 = vld [vmem:[%s1 + $0x970] sm:$0xf]
    %v626 = vld [vmem:[%s1 + $0x974] sm:$0xf]
    %v627 = vld [vmem:[%s1 + $0x978] sm:$0xf]
    %v628 = vld [vmem:[%s1 + $0x97c] sm:$0xf]
    %v629 = vld [vmem:[%s1 + $0x980] sm:$0xf]
    %v630 = vld [vmem:[%s1 + $0x984] sm:$0xf]
    %v631 = vld [vmem:[%s1 + $0x988] sm:$0xf]
    %v632 = vld [vmem:[%s1 + $0x98c] sm:$0xf]
    %v633 = vld [vmem:[%s1 + $0x990] sm:$0xf]
    %v634 = vld [vmem:[%s1 + $0x994] sm:$0xf]
    %v635 = vld [vmem:[%s1 + $0x998] sm:$0xf]
    %v636 = vld [vmem:[%s1 + $0x99c] sm:$0xf]
    %v637 = vld [vmem:[%s1 + $0x9a0] sm:$0xf]
    %v638 = vld [vmem:[%s1 + $0x9a4] sm:$0xf]
    %v639 = vld [vmem:[%s1 + $0x9a8] sm:$0xf]
    %v640 = vld [vmem:[%s1 + $0x9ac] sm:$0xf]
    %v641 = vld [vmem:[%s1 + $0x9b0] sm:$0xf]
    %v642 = vld [vmem:[%s1 + $0x9b4] sm:$0xf]
    %v643 = vld [vmem:[%s1 + $0x9b8] sm:$0xf]
    %v644 = vld [vmem:[%s1 + $0x9bc] sm:$0xf]
    %v645 = vld [vmem:[%s1 + $0x9c0] sm:$0xf]
    %v646 = vld [vmem:[%s2] sm:$0x1]
    %v648 = vlaneseq
    %v649 = vshrl.u32 %v648, 7
    %v650 = vsub.s32 0, %v649
    %v651 = vrot.slane %v646, %v650
    %v658 = vcombine.high %v16, %v16
    %v660 = vunpack.c.l.s4 1966171168
    %v661 = vunpack.c.0.s8 %v660
    %v662 = vlaneseq
    %v663 = vshrl.u32 %v662, 7
    %v664 = vsub.s32 %v661, %v663
    %v665 = vrot.slane %v16, %v664
    %v667 = vunpack.c.l.s4 1966171168
    %v668 = vunpack.c.0.s8 %v667
    %v669 = vlaneseq
    %v670 = vshrl.u32 %v669, 7
    %v671 = vsub.s32 %v668, %v670
    %v672 = vrot.slane %v658, %v671
    %v673 = vcombine.high %v665, %v665
    %v674 = vcombine.high %v672, %v672
    %v676 = vunpack.c.l.s4 1966171168
    %v677 = vunpack.c.0.s8 %v676
    %v678 = vlaneseq
    %v679 = vshrl.u32 %v678, 7
    %v680 = vsub.s32 %v677, %v679
    %v681 = vrot.slane %v665, %v680
    %v683 = vunpack.c.l.s4 1966171168
    %v684 = vunpack.c.0.s8 %v683
    %v685 = vlaneseq
    %v686 = vshrl.u32 %v685, 7
    %v687 = vsub.s32 %v684, %v686
    %v688 = vrot.slane %v672, %v687
    %v690 = vunpack.c.l.s4 1966171168
    %v691 = vunpack.c.0.s8 %v690
    %v692 = vlaneseq
    %v693 = vshrl.u32 %v692, 7
    %v694 = vsub.s32 %v691, %v693
    %v695 = vrot.slane %v673, %v694
    %v697 = vunpack.c.l.s4 1966171168
    %v698 = vunpack.c.0.s8 %v697
    %v699 = vlaneseq
    %v700 = vshrl.u32 %v699, 7
    %v701 = vsub.s32 %v698, %v700
    %v702 = vrot.slane %v674, %v701
    %v703 = vcombine.high %v681, %v681
    %v704 = vcombine.high %v688, %v688
    %v705 = vcombine.high %v695, %v695
    %v706 = vcombine.high %v702, %v702
    %v707 = vcombine.high %v17, %v17
    %v709 = vunpack.c.l.s4 1966171168
    %v710 = vunpack.c.0.s8 %v709
    %v711 = vlaneseq
    %v712 = vshrl.u32 %v711, 7
    %v713 = vsub.s32 %v710, %v712
    %v714 = vrot.slane %v17, %v713
    %v716 = vunpack.c.l.s4 1966171168
    %v717 = vunpack.c.0.s8 %v716
    %v718 = vlaneseq
    %v719 = vshrl.u32 %v718, 7
    %v720 = vsub.s32 %v717, %v719
    %v721 = vrot.slane %v707, %v720
    %v722 = vcombine.high %v714, %v714
    %v723 = vcombine.high %v721, %v721
    %v725 = vunpack.c.l.s4 1966171168
    %v726 = vunpack.c.0.s8 %v725
    %v727 = vlaneseq
    %v728 = vshrl.u32 %v727, 7
    %v729 = vsub.s32 %v726, %v728
    %v730 = vrot.slane %v714, %v729
    %v732 = vunpack.c.l.s4 1966171168
    %v733 = vunpack.c.0.s8 %v732
    %v734 = vlaneseq
    %v735 = vshrl.u32 %v734, 7
    %v736 = vsub.s32 %v733, %v735
    %v737 = vrot.slane %v721, %v736
    %v739 = vunpack.c.l.s4 1966171168
    %v740 = vunpack.c.0.s8 %v739
    %v741 = vlaneseq
    %v742 = vshrl.u32 %v741, 7
    %v743 = vsub.s32 %v740, %v742
    %v744 = vrot.slane %v722, %v743
    %v746 = vunpack.c.l.s4 1966171168
    %v747 = vunpack.c.0.s8 %v746
    %v748 = vlaneseq
    %v749 = vshrl.u32 %v748, 7
    %v750 = vsub.s32 %v747, %v749
    %v751 = vrot.slane %v723, %v750
    %v752 = vcombine.high %v730, %v730
    %v753 = vcombine.high %v737, %v737
    %v754 = vcombine.high %v744, %v744
    %v755 = vcombine.high %v751, %v751
    %v756 = vcombine.high %v18, %v18
    %v758 = vunpack.c.l.s4 1966171168
    %v759 = vunpack.c.0.s8 %v758
    %v760 = vlaneseq
    %v761 = vshrl.u32 %v760, 7
    %v762 = vsub.s32 %v759, %v761
    %v763 = vrot.slane %v18, %v762
    %v765 = vunpack.c.l.s4 1966171168
    %v766 = vunpack.c.0.s8 %v765
    %v767 = vlaneseq
    %v768 = vshrl.u32 %v767, 7
    %v769 = vsub.s32 %v766, %v768
    %v770 = vrot.slane %v756, %v769
    %v771 = vcombine.high %v763, %v763
    %v772 = vcombine.high %v770, %v770
    %v774 = vunpack.c.l.s4 1966171168
    %v775 = vunpack.c.0.s8 %v774
    %v776 = vlaneseq
    %v777 = vshrl.u32 %v776, 7
    %v778 = vsub.s32 %v775, %v777
    %v779 = vrot.slane %v763, %v778
    %v781 = vunpack.c.l.s4 1966171168
    %v782 = vunpack.c.0.s8 %v781
    %v783 = vlaneseq
    %v784 = vshrl.u32 %v783, 7
    %v785 = vsub.s32 %v782, %v784
    %v786 = vrot.slane %v770, %v785
    %v788 = vunpack.c.l.s4 1966171168
    %v789 = vunpack.c.0.s8 %v788
    %v790 = vlaneseq
    %v791 = vshrl.u32 %v790, 7
    %v792 = vsub.s32 %v789, %v791
    %v793 = vrot.slane %v771, %v792
    %v795 = vunpack.c.l.s4 1966171168
    %v796 = vunpack.c.0.s8 %v795
    %v797 = vlaneseq
    %v798 = vshrl.u32 %v797, 7
    %v799 = vsub.s32 %v796, %v798
    %v800 = vrot.slane %v772, %v799
    %v801 = vcombine.high %v779, %v779
    %v802 = vcombine.high %v786, %v786
    %v803 = vcombine.high %v793, %v793
    %v804 = vcombine.high %v800, %v800
    %v805 = vcombine.high %v19, %v19
    %v807 = vunpack.c.l.s4 1966171168
    %v808 = vunpack.c.0.s8 %v807
    %v809 = vlaneseq
    %v810 = vshrl.u32 %v809, 7
    %v811 = vsub.s32 %v808, %v810
    %v812 = vrot.slane %v19, %v811
    %v814 = vunpack.c.l.s4 1966171168
    %v815 = vunpack.c.0.s8 %v814
    %v816 = vlaneseq
    %v817 = vshrl.u32 %v816, 7
    %v818 = vsub.s32 %v815, %v817
    %v819 = vrot.slane %v805, %v818
    %v820 = vcombine.high %v812, %v812
    %v821 = vcombine.high %v819, %v819
    %v823 = vunpack.c.l.s4 1966171168
    %v824 = vunpack.c.0.s8 %v823
    %v825 = vlaneseq
    %v826 = vshrl.u32 %v825, 7
    %v827 = vsub.s32 %v824, %v826
    %v828 = vrot.slane %v812, %v827
    %v830 = vunpack.c.l.s4 1966171168
    %v831 = vunpack.c.0.s8 %v830
    %v832 = vlaneseq
    %v833 = vshrl.u32 %v832, 7
    %v834 = vsub.s32 %v831, %v833
    %v835 = vrot.slane %v819, %v834
    %v837 = vunpack.c.l.s4 1966171168
    %v838 = vunpack.c.0.s8 %v837
    %v839 = vlaneseq
    %v840 = vshrl.u32 %v839, 7
    %v841 = vsub.s32 %v838, %v840
    %v842 = vrot.slane %v820, %v841
    %v844 = vunpack.c.l.s4 1966171168
    %v845 = vunpack.c.0.s8 %v844
    %v846 = vlaneseq
    %v847 = vshrl.u32 %v846, 7
    %v848 = vsub.s32 %v845, %v847
    %v849 = vrot.slane %v821, %v848
    %v850 = vcombine.high %v828, %v828
    %v851 = vcombine.high %v835, %v835
    %v852 = vcombine.high %v842, %v842
    %v853 = vcombine.high %v849, %v849
    %v854 = vcombine.high %v20, %v20
    %v856 = vunpack.c.l.s4 1966171168
    %v857 = vunpack.c.0.s8 %v856
    %v858 = vlaneseq
    %v859 = vshrl.u32 %v858, 7
    %v860 = vsub.s32 %v857, %v859
    %v861 = vrot.slane %v20, %v860
    %v863 = vunpack.c.l.s4 1966171168
    %v864 = vunpack.c.0.s8 %v863
    %v865 = vlaneseq
    %v866 = vshrl.u32 %v865, 7
    %v867 = vsub.s32 %v864, %v866
    %v868 = vrot.slane %v854, %v867
    %v869 = vcombine.high %v861, %v861
    %v870 = vcombine.high %v868, %v868
    %v872 = vunpack.c.l.s4 1966171168
    %v873 = vunpack.c.0.s8 %v872
    %v874 = vlaneseq
    %v875 = vshrl.u32 %v874, 7
    %v876 = vsub.s32 %v873, %v875
    %v877 = vrot.slane %v861, %v876
    %v879 = vunpack.c.l.s4 1966171168
    %v880 = vunpack.c.0.s8 %v879
    %v881 = vlaneseq
    %v882 = vshrl.u32 %v881, 7
    %v883 = vsub.s32 %v880, %v882
    %v884 = vrot.slane %v868, %v883
    %v886 = vunpack.c.l.s4 1966171168
    %v887 = vunpack.c.0.s8 %v886
    %v888 = vlaneseq
    %v889 = vshrl.u32 %v888, 7
    %v890 = vsub.s32 %v887, %v889
    %v891 = vrot.slane %v869, %v890
    %v893 = vunpack.c.l.s4 1966171168
    %v894 = vunpack.c.0.s8 %v893
    %v895 = vlaneseq
    %v896 = vshrl.u32 %v895, 7
    %v897 = vsub.s32 %v894, %v896
    %v898 = vrot.slane %v870, %v897
    %v899 = vcombine.high %v877, %v877
    %v900 = vcombine.high %v884, %v884
    %v901 = vcombine.high %v891, %v891
    %v902 = vcombine.high %v898, %v898
    %v1567 = vunpack.c.l.b16 %v21
    %v1568 = vunpack.c.l.b16 %v22
    %v1569 = vunpack.c.l.b16 %v23
    %v1570 = vunpack.c.l.b16 %v24
    %v1571 = vunpack.c.l.b16 %v25
    %v1572 = vunpack.c.l.b16 %v26
    %v1573 = vunpack.c.l.b16 %v27
    %v1574 = vunpack.c.l.b16 %v28
    %v1575 = vunpack.c.l.b16 %v29
    %v1576 = vunpack.c.l.b16 %v30
    %v1577 = vunpack.c.l.b16 %v31
    %v1578 = vunpack.c.l.b16 %v32
    %v1579 = vunpack.c.l.b16 %v33
    %v1580 = vunpack.c.l.b16 %v34
    %v1581 = vunpack.c.l.b16 %v35
    %v1582 = vunpack.c.l.b16 %v36
    %v1583 = vunpack.c.l.b16 %v37
    %v1584 = vunpack.c.l.b16 %v38
    %v1585 = vunpack.c.l.b16 %v39
    %v1586 = vunpack.c.l.b16 %v40
    %v1587 = vunpack.c.l.b16 %v41
    %v1588 = vunpack.c.l.b16 %v42
    %v1589 = vunpack.c.l.b16 %v43
    %v1590 = vunpack.c.l.b16 %v44
    %v1591 = vunpack.c.l.b16 %v45
    %v1592 = vunpack.c.l.b16 %v46
    %v1593 = vunpack.c.l.b16 %v47
    %v1594 = vunpack.c.l.b16 %v48
    %v1595 = vunpack.c.l.b16 %v49
    %v1596 = vunpack.c.l.b16 %v50
    %v1597 = vunpack.c.l.b16 %v51
    %v1598 = vunpack.c.l.b16 %v52
    %v1599 = vunpack.c.l.b16 %v53
    %v1600 = vunpack.c.l.b16 %v54
    %v1601 = vunpack.c.l.b16 %v55
    %v1602 = vunpack.c.l.b16 %v56
    %v1603 = vunpack.c.l.b16 %v57
    %v1604 = vunpack.c.l.b16 %v58
    %v1605 = vunpack.c.l.b16 %v59
    %v1606 = vunpack.c.l.b16 %v60
    %v1607 = vunpack.c.l.b16 %v61
    %v1608 = vunpack.c.l.b16 %v62
    %v1609 = vunpack.c.l.b16 %v63
    %v1610 = vunpack.c.l.b16 %v64
    %v1611 = vunpack.c.l.b16 %v65
    %v1612 = vunpack.c.l.b16 %v66
    %v1613 = vunpack.c.l.b16 %v67
    %v1614 = vunpack.c.l.b16 %v68
    %v1615 = vunpack.c.l.b16 %v69
    %v1616 = vunpack.c.l.b16 %v70
    %v1617 = vunpack.c.l.b16 %v71
    %v1618 = vunpack.c.l.b16 %v72
    %v1619 = vunpack.c.l.b16 %v73
    %v1620 = vunpack.c.l.b16 %v74
    %v1621 = vunpack.c.l.b16 %v75
    %v1622 = vunpack.c.l.b16 %v76
    %v1623 = vunpack.c.l.b16 %v77
    %v1624 = vunpack.c.l.b16 %v78
    %v1625 = vunpack.c.l.b16 %v79
    %v1626 = vunpack.c.l.b16 %v80
    %v1627 = vunpack.c.l.b16 %v81
    %v1628 = vunpack.c.l.b16 %v82
    %v1629 = vunpack.c.l.b16 %v83
    %v1630 = vunpack.c.l.b16 %v84
    %v1631 = vunpack.c.l.b16 %v85
    %v1632 = vunpack.c.l.b16 %v86
    %v1633 = vunpack.c.l.b16 %v87
    %v1634 = vunpack.c.l.b16 %v88
    %v1635 = vunpack.c.l.b16 %v89
    %v1636 = vunpack.c.l.b16 %v90
    %v1637 = vunpack.c.l.b16 %v91
    %v1638 = vunpack.c.l.b16 %v92
    %v1639 = vunpack.c.l.b16 %v93
    %v1640 = vunpack.c.l.b16 %v94
    %v1641 = vunpack.c.l.b16 %v95
    %v1642 = vunpack.c.l.b16 %v96
    %v1643 = vunpack.c.l.b16 %v97
    %v1644 = vunpack.c.l.b16 %v98
    %v1645 = vunpack.c.l.b16 %v99
    %v1646 = vunpack.c.l.b16 %v100
    %v1647 = vunpack.c.l.b16 %v101
    %v1648 = vunpack.c.l.b16 %v102
    %v1649 = vunpack.c.l.b16 %v103
    %v1650 = vunpack.c.l.b16 %v104
    %v1651 = vunpack.c.l.b16 %v105
    %v1652 = vunpack.c.l.b16 %v106
    %v1653 = vunpack.c.l.b16 %v107
    %v1654 = vunpack.c.l.b16 %v108
    %v1655 = vunpack.c.l.b16 %v109
    %v1656 = vunpack.c.l.b16 %v110
    %v1657 = vunpack.c.l.b16 %v111
    %v1658 = vunpack.c.l.b16 %v112
    %v1659 = vunpack.c.l.b16 %v113
    %v1660 = vunpack.c.l.b16 %v114
    %v1661 = vunpack.c.l.b16 %v115
    %v1662 = vunpack.c.l.b16 %v116
    %v1663 = vunpack.c.l.b16 %v117
    %v1664 = vunpack.c.l.b16 %v118
    %v1665 = vunpack.c.l.b16 %v119
    %v1666 = vunpack.c.l.b16 %v120
    %v1667 = vunpack.c.l.b16 %v121
    %v1668 = vunpack.c.l.b16 %v122
    %v1669 = vunpack.c.l.b16 %v123
    %v1670 = vunpack.c.l.b16 %v124
    %v1671 = vunpack.c.l.b16 %v125
    %v1672 = vunpack.c.l.b16 %v126
    %v1673 = vunpack.c.l.b16 %v127
    %v1674 = vunpack.c.l.b16 %v128
    %v1675 = vunpack.c.l.b16 %v129
    %v1676 = vunpack.c.l.b16 %v130
    %v1677 = vunpack.c.l.b16 %v131
    %v1678 = vunpack.c.l.b16 %v132
    %v1679 = vunpack.c.l.b16 %v133
    %v1680 = vunpack.c.l.b16 %v134
    %v1681 = vunpack.c.l.b16 %v135
    %v1682 = vunpack.c.l.b16 %v136
    %v1683 = vunpack.c.l.b16 %v137
    %v1684 = vunpack.c.l.b16 %v138
    %v1685 = vunpack.c.l.b16 %v139
    %v1686 = vunpack.c.l.b16 %v140
    %v1687 = vunpack.c.l.b16 %v141
    %v1688 = vunpack.c.l.b16 %v142
    %v1689 = vunpack.c.l.b16 %v143
    %v1690 = vunpack.c.l.b16 %v144
    %v1691 = vunpack.c.l.b16 %v145
    %v1692 = vunpack.c.l.b16 %v146
    %v1693 = vunpack.c.l.b16 %v147
    %v1694 = vunpack.c.l.b16 %v148
    %v1695 = vunpack.c.l.b16 %v149
    %v1696 = vunpack.c.l.b16 %v150
    %v1697 = vunpack.c.l.b16 %v151
    %v1698 = vunpack.c.l.b16 %v152
    %v1699 = vunpack.c.l.b16 %v153
    %v1700 = vunpack.c.l.b16 %v154
    %v1701 = vunpack.c.l.b16 %v155
    %v1702 = vunpack.c.l.b16 %v156
    %v1703 = vunpack.c.l.b16 %v157
    %v1704 = vunpack.c.l.b16 %v158
    %v1705 = vunpack.c.l.b16 %v159
    %v1706 = vunpack.c.l.b16 %v160
    %v1707 = vunpack.c.l.b16 %v161
    %v1708 = vunpack.c.l.b16 %v162
    %v1709 = vunpack.c.l.b16 %v163
    %v1710 = vunpack.c.l.b16 %v164
    %v1711 = vunpack.c.l.b16 %v165
    %v1712 = vunpack.c.l.b16 %v166
    %v1713 = vunpack.c.l.b16 %v167
    %v1714 = vunpack.c.l.b16 %v168
    %v1715 = vunpack.c.l.b16 %v169
    %v1716 = vunpack.c.l.b16 %v170
    %v1717 = vunpack.c.l.b16 %v171
    %v1718 = vunpack.c.l.b16 %v172
    %v1719 = vunpack.c.l.b16 %v173
    %v1720 = vunpack.c.l.b16 %v174
    %v1721 = vunpack.c.l.b16 %v175
    %v1722 = vunpack.c.l.b16 %v176
    %v1723 = vunpack.c.l.b16 %v177
    %v1724 = vunpack.c.l.b16 %v178
    %v1725 = vunpack.c.l.b16 %v179
    %v1726 = vunpack.c.l.b16 %v180
    %v1727 = vunpack.c.l.b16 %v181
    %v1728 = vunpack.c.l.b16 %v182
    %v1729 = vunpack.c.l.b16 %v183
    %v1730 = vunpack.c.l.b16 %v184
    %v1731 = vunpack.c.l.b16 %v185
    %v1732 = vunpack.c.l.b16 %v186
    %v1733 = vunpack.c.l.b16 %v187
    %v1734 = vunpack.c.l.b16 %v188
    %v1735 = vunpack.c.l.b16 %v189
    %v1736 = vunpack.c.l.b16 %v190
    %v1737 = vunpack.c.l.b16 %v191
    %v1738 = vunpack.c.l.b16 %v192
    %v1739 = vunpack.c.l.b16 %v193
    %v1740 = vunpack.c.l.b16 %v194
    %v1741 = vunpack.c.l.b16 %v195
    %v1742 = vunpack.c.l.b16 %v196
    %v1743 = vunpack.c.l.b16 %v197
    %v1744 = vunpack.c.l.b16 %v198
    %v1745 = vunpack.c.l.b16 %v199
    %v1746 = vunpack.c.l.b16 %v200
    %v1747 = vunpack.c.l.b16 %v201
    %v1748 = vunpack.c.l.b16 %v202
    %v1749 = vunpack.c.l.b16 %v203
    %v1750 = vunpack.c.l.b16 %v204
    %v1751 = vunpack.c.l.b16 %v205
    %v1752 = vunpack.c.l.b16 %v206
    %v1753 = vunpack.c.l.b16 %v207
    %v1754 = vunpack.c.l.b16 %v208
    %v1755 = vunpack.c.l.b16 %v209
    %v1756 = vunpack.c.l.b16 %v210
    %v1757 = vunpack.c.l.b16 %v211
    %v1758 = vunpack.c.l.b16 %v212
    %v1759 = vunpack.c.l.b16 %v213
    %v1760 = vunpack.c.l.b16 %v214
    %v1761 = vunpack.c.l.b16 %v215
    %v1762 = vunpack.c.l.b16 %v216
    %v1763 = vunpack.c.l.b16 %v217
    %v1764 = vunpack.c.l.b16 %v218
    %v1765 = vunpack.c.l.b16 %v219
    %v1766 = vunpack.c.l.b16 %v220
    %v1767 = vunpack.c.l.b16 %v221
    %v1768 = vunpack.c.l.b16 %v222
    %v1769 = vunpack.c.l.b16 %v223
    %v1770 = vunpack.c.l.b16 %v224
    %v1771 = vunpack.c.l.b16 %v225
    %v1772 = vunpack.c.l.b16 %v226
    %v1773 = vunpack.c.l.b16 %v227
    %v1774 = vunpack.c.l.b16 %v228
    %v1775 = vunpack.c.l.b16 %v229
    %v1776 = vunpack.c.l.b16 %v230
    %v1777 = vunpack.c.l.b16 %v231
    %v1778 = vunpack.c.l.b16 %v232
    %v1779 = vunpack.c.l.b16 %v233
    %v1780 = vunpack.c.l.b16 %v234
    %v1781 = vunpack.c.l.b16 %v235
    %v1782 = vunpack.c.l.b16 %v236
    %v1783 = vunpack.c.l.b16 %v237
    %v1784 = vunpack.c.l.b16 %v238
    %v1785 = vunpack.c.l.b16 %v239
    %v1786 = vunpack.c.l.b16 %v240
    %v1787 = vunpack.c.l.b16 %v241
    %v1788 = vunpack.c.l.b16 %v242
    %v1789 = vunpack.c.l.b16 %v243
    %v1790 = vunpack.c.l.b16 %v244
    %v1791 = vunpack.c.l.b16 %v245
    %v1792 = vunpack.c.l.b16 %v246
    %v1793 = vunpack.c.l.b16 %v247
    %v1794 = vunpack.c.l.b16 %v248
    %v1795 = vunpack.c.l.b16 %v249
    %v1796 = vunpack.c.l.b16 %v250
    %v1797 = vunpack.c.l.b16 %v251
    %v1798 = vunpack.c.l.b16 %v252
    %v1799 = vunpack.c.l.b16 %v253
    %v1800 = vunpack.c.l.b16 %v254
    %v1801 = vunpack.c.l.b16 %v255
    %v1802 = vunpack.c.l.b16 %v256
    %v1803 = vunpack.c.l.b16 %v257
    %v1804 = vunpack.c.l.b16 %v258
    %v1805 = vunpack.c.l.b16 %v259
    %v1806 = vunpack.c.l.b16 %v260
    %v1807 = vunpack.c.l.b16 %v261
    %v1808 = vunpack.c.l.b16 %v262
    %v1809 = vunpack.c.l.b16 %v263
    %v1810 = vunpack.c.l.b16 %v264
    %v1811 = vunpack.c.l.b16 %v265
    %v1812 = vunpack.c.l.b16 %v266
    %v1813 = vunpack.c.l.b16 %v267
    %v1814 = vunpack.c.l.b16 %v268
    %v1815 = vunpack.c.l.b16 %v269
    %v1816 = vunpack.c.l.b16 %v270
    %v1817 = vunpack.c.l.b16 %v271
    %v1818 = vunpack.c.l.b16 %v272
    %v1819 = vunpack.c.l.b16 %v273
    %v1820 = vunpack.c.l.b16 %v274
    %v1821 = vunpack.c.l.b16 %v275
    %v1822 = vunpack.c.l.b16 %v276
    %v1823 = vunpack.c.l.b16 %v277
    %v1824 = vunpack.c.l.b16 %v278
    %v1825 = vunpack.c.l.b16 %v279
    %v1826 = vunpack.c.l.b16 %v280
    %v1827 = vunpack.c.l.b16 %v281
    %v1828 = vunpack.c.l.b16 %v282
    %v1829 = vunpack.c.l.b16 %v283
    %v1830 = vunpack.c.l.b16 %v284
    %v1831 = vunpack.c.l.b16 %v285
    %v1832 = vunpack.c.l.b16 %v286
    %v1833 = vunpack.c.l.b16 %v287
    %v1834 = vunpack.c.l.b16 %v288
    %v1835 = vunpack.c.l.b16 %v289
    %v1836 = vunpack.c.l.b16 %v290
    %v1837 = vunpack.c.l.b16 %v291
    %v1838 = vunpack.c.l.b16 %v292
    %v1839 = vunpack.c.l.b16 %v293
    %v1840 = vunpack.c.l.b16 %v294
    %v1841 = vunpack.c.l.b16 %v295
    %v1842 = vunpack.c.l.b16 %v296
    %v1843 = vunpack.c.l.b16 %v297
    %v1844 = vunpack.c.l.b16 %v298
    %v1845 = vunpack.c.l.b16 %v299
    %v1846 = vunpack.c.l.b16 %v300
    %v1847 = vunpack.c.l.b16 %v301
    %v1848 = vunpack.c.l.b16 %v302
    %v1849 = vunpack.c.l.b16 %v303
    %v1850 = vunpack.c.l.b16 %v304
    %v1851 = vunpack.c.l.b16 %v305
    %v1852 = vunpack.c.l.b16 %v306
    %v1853 = vunpack.c.l.b16 %v307
    %v1854 = vunpack.c.l.b16 %v308
    %v1855 = vunpack.c.l.b16 %v309
    %v1856 = vunpack.c.l.b16 %v310
    %v1857 = vunpack.c.l.b16 %v311
    %v1858 = vunpack.c.l.b16 %v312
    %v1859 = vunpack.c.l.b16 %v313
    %v1860 = vunpack.c.l.b16 %v314
    %v1861 = vunpack.c.l.b16 %v315
    %v1862 = vunpack.c.l.b16 %v316
    %v1863 = vunpack.c.l.b16 %v317
    %v1864 = vunpack.c.l.b16 %v318
    %v1865 = vunpack.c.l.b16 %v319
    %v1866 = vunpack.c.l.b16 %v320
    %v1867 = vunpack.c.l.b16 %v321
    %v1868 = vunpack.c.l.b16 %v322
    %v1869 = vunpack.c.l.b16 %v323
    %v1870 = vunpack.c.l.b16 %v324
    %v1871 = vunpack.c.l.b16 %v325
    %v1872 = vunpack.c.l.b16 %v326
    %v1873 = vunpack.c.l.b16 %v327
    %v1874 = vunpack.c.l.b16 %v328
    %v1875 = vunpack.c.l.b16 %v329
    %v1876 = vunpack.c.l.b16 %v330
    %v1877 = vunpack.c.l.b16 %v331
    %v1878 = vunpack.c.l.b16 %v332
    %v1879 = vunpack.c.l.b16 %v333
    %v1880 = vunpack.c.l.b16 %v334
    %v1881 = vunpack.c.l.b16 %v335
    %v1882 = vunpack.c.l.b16 %v336
    %v1883 = vunpack.c.l.b16 %v337
    %v1884 = vunpack.c.l.b16 %v338
    %v1885 = vunpack.c.l.b16 %v339
    %v1886 = vunpack.c.l.b16 %v340
    %v1887 = vunpack.c.l.b16 %v341
    %v1888 = vunpack.c.l.b16 %v342
    %v1889 = vunpack.c.l.b16 %v343
    %v1890 = vunpack.c.l.b16 %v344
    %v1891 = vunpack.c.l.b16 %v345
    %v1892 = vunpack.c.l.b16 %v346
    %v1893 = vunpack.c.l.b16 %v347
    %v1894 = vunpack.c.l.b16 %v348
    %v1895 = vunpack.c.l.b16 %v349
    %v1896 = vunpack.c.l.b16 %v350
    %v1897 = vunpack.c.l.b16 %v351
    %v1898 = vunpack.c.l.b16 %v352
    %v1899 = vunpack.c.l.b16 %v353
    %v1900 = vunpack.c.l.b16 %v354
    %v1901 = vunpack.c.l.b16 %v355
    %v1902 = vunpack.c.l.b16 %v356
    %v1903 = vunpack.c.l.b16 %v357
    %v1904 = vunpack.c.l.b16 %v358
    %v1905 = vunpack.c.l.b16 %v359
    %v1906 = vunpack.c.l.b16 %v360
    %v1907 = vunpack.c.l.b16 %v361
    %v1908 = vunpack.c.l.b16 %v362
    %v1909 = vunpack.c.l.b16 %v363
    %v1910 = vunpack.c.l.b16 %v364
    %v1911 = vunpack.c.l.b16 %v365
    %v1912 = vunpack.c.l.b16 %v366
    %v1913 = vunpack.c.l.b16 %v367
    %v1914 = vunpack.c.l.b16 %v368
    %v1915 = vunpack.c.l.b16 %v369
    %v1916 = vunpack.c.l.b16 %v370
    %v1917 = vunpack.c.l.b16 %v371
    %v1918 = vunpack.c.l.b16 %v372
    %v1919 = vunpack.c.l.b16 %v373
    %v1920 = vunpack.c.l.b16 %v374
    %v1921 = vunpack.c.l.b16 %v375
    %v1922 = vunpack.c.l.b16 %v376
    %v1923 = vunpack.c.l.b16 %v377
    %v1924 = vunpack.c.l.b16 %v378
    %v1925 = vunpack.c.l.b16 %v379
    %v1926 = vunpack.c.l.b16 %v380
    %v1927 = vunpack.c.l.b16 %v381
    %v1928 = vunpack.c.l.b16 %v382
    %v1929 = vunpack.c.l.b16 %v383
    %v1930 = vunpack.c.l.b16 %v384
    %v1931 = vunpack.c.l.b16 %v385
    %v1932 = vunpack.c.l.b16 %v386
    %v1933 = vunpack.c.l.b16 %v387
    %v1934 = vunpack.c.l.b16 %v388
    %v1935 = vunpack.c.l.b16 %v389
    %v1936 = vunpack.c.l.b16 %v390
    %v1937 = vunpack.c.l.b16 %v391
    %v1938 = vunpack.c.l.b16 %v392
    %v1939 = vunpack.c.l.b16 %v393
    %v1940 = vunpack.c.l.b16 %v394
    %v1941 = vunpack.c.l.b16 %v395
    %v1942 = vunpack.c.l.b16 %v396
    %v1943 = vunpack.c.l.b16 %v397
    %v1944 = vunpack.c.l.b16 %v398
    %v1945 = vunpack.c.l.b16 %v399
    %v1946 = vunpack.c.l.b16 %v400
    %v1947 = vunpack.c.l.b16 %v401
    %v1948 = vunpack.c.l.b16 %v402
    %v1949 = vunpack.c.l.b16 %v403
    %v1950 = vunpack.c.l.b16 %v404
    %v1951 = vunpack.c.l.b16 %v405
    %v1952 = vunpack.c.l.b16 %v406
    %v1953 = vunpack.c.l.b16 %v407
    %v1954 = vunpack.c.l.b16 %v408
    %v1955 = vunpack.c.l.b16 %v409
    %v1956 = vunpack.c.l.b16 %v410
    %v1957 = vunpack.c.l.b16 %v411
    %v1958 = vunpack.c.l.b16 %v412
    %v1959 = vunpack.c.l.b16 %v413
    %v1960 = vunpack.c.l.b16 %v414
    %v1961 = vunpack.c.l.b16 %v415
    %v1962 = vunpack.c.l.b16 %v416
    %v1963 = vunpack.c.l.b16 %v417
    %v1964 = vunpack.c.l.b16 %v418
    %v1965 = vunpack.c.l.b16 %v419
    %v1966 = vunpack.c.l.b16 %v420
    %v1967 = vunpack.c.l.b16 %v421
    %v1968 = vunpack.c.l.b16 %v422
    %v1969 = vunpack.c.l.b16 %v423
    %v1970 = vunpack.c.l.b16 %v424
    %v1971 = vunpack.c.l.b16 %v425
    %v1972 = vunpack.c.l.b16 %v426
    %v1973 = vunpack.c.l.b16 %v427
    %v1974 = vunpack.c.l.b16 %v428
    %v1975 = vunpack.c.l.b16 %v429
    %v1976 = vunpack.c.l.b16 %v430
    %v1977 = vunpack.c.l.b16 %v431
    %v1978 = vunpack.c.l.b16 %v432
    %v1979 = vunpack.c.l.b16 %v433
    %v1980 = vunpack.c.l.b16 %v434
    %v1981 = vunpack.c.l.b16 %v435
    %v1982 = vunpack.c.l.b16 %v436
    %v1983 = vunpack.c.l.b16 %v437
    %v1984 = vunpack.c.l.b16 %v438
    %v1985 = vunpack.c.l.b16 %v439
    %v1986 = vunpack.c.l.b16 %v440
    %v1987 = vunpack.c.l.b16 %v441
    %v1988 = vunpack.c.l.b16 %v442
    %v1989 = vunpack.c.l.b16 %v443
    %v1990 = vunpack.c.l.b16 %v444
    %v1991 = vunpack.c.l.b16 %v445
    %v1992 = vunpack.c.l.b16 %v446
    %v1993 = vunpack.c.l.b16 %v447
    %v1994 = vunpack.c.l.b16 %v448
    %v1995 = vunpack.c.l.b16 %v449
    %v1996 = vunpack.c.l.b16 %v450
    %v1997 = vunpack.c.l.b16 %v451
    %v1998 = vunpack.c.l.b16 %v452
    %v1999 = vunpack.c.l.b16 %v453
    %v2000 = vunpack.c.l.b16 %v454
    %v2001 = vunpack.c.l.b16 %v455
    %v2002 = vunpack.c.l.b16 %v456
    %v2003 = vunpack.c.l.b16 %v457
    %v2004 = vunpack.c.l.b16 %v458
    %v2005 = vunpack.c.l.b16 %v459
    %v2006 = vunpack.c.l.b16 %v460
    %v2007 = vunpack.c.l.b16 %v461
    %v2008 = vunpack.c.l.b16 %v462
    %v2009 = vunpack.c.l.b16 %v463
    %v2010 = vunpack.c.l.b16 %v464
    %v2011 = vunpack.c.l.b16 %v465
    %v2012 = vunpack.c.l.b16 %v466
    %v2013 = vunpack.c.l.b16 %v467
    %v2014 = vunpack.c.l.b16 %v468
    %v2015 = vunpack.c.l.b16 %v469
    %v2016 = vunpack.c.l.b16 %v470
    %v2017 = vunpack.c.l.b16 %v471
    %v2018 = vunpack.c.l.b16 %v472
    %v2019 = vunpack.c.l.b16 %v473
    %v2020 = vunpack.c.l.b16 %v474
    %v2021 = vunpack.c.l.b16 %v475
    %v2022 = vunpack.c.l.b16 %v476
    %v2023 = vunpack.c.l.b16 %v477
    %v2024 = vunpack.c.l.b16 %v478
    %v2025 = vunpack.c.l.b16 %v479
    %v2026 = vunpack.c.l.b16 %v480
    %v2027 = vunpack.c.l.b16 %v481
    %v2028 = vunpack.c.l.b16 %v482
    %v2029 = vunpack.c.l.b16 %v483
    %v2030 = vunpack.c.l.b16 %v484
    %v2031 = vunpack.c.l.b16 %v485
    %v2032 = vunpack.c.l.b16 %v486
    %v2033 = vunpack.c.l.b16 %v487
    %v2034 = vunpack.c.l.b16 %v488
    %v2035 = vunpack.c.l.b16 %v489
    %v2036 = vunpack.c.l.b16 %v490
    %v2037 = vunpack.c.l.b16 %v491
    %v2038 = vunpack.c.l.b16 %v492
    %v2039 = vunpack.c.l.b16 %v493
    %v2040 = vunpack.c.l.b16 %v494
    %v2041 = vunpack.c.l.b16 %v495
    %v2042 = vunpack.c.l.b16 %v496
    %v2043 = vunpack.c.l.b16 %v497
    %v2044 = vunpack.c.l.b16 %v498
    %v2045 = vunpack.c.l.b16 %v499
    %v2046 = vunpack.c.l.b16 %v500
    %v2047 = vunpack.c.l.b16 %v501
    %v2048 = vunpack.c.l.b16 %v502
    %v2049 = vunpack.c.l.b16 %v503
    %v2050 = vunpack.c.l.b16 %v504
    %v2051 = vunpack.c.l.b16 %v505
    %v2052 = vunpack.c.l.b16 %v506
    %v2053 = vunpack.c.l.b16 %v507
    %v2054 = vunpack.c.l.b16 %v508
    %v2055 = vunpack.c.l.b16 %v509
    %v2056 = vunpack.c.l.b16 %v510
    %v2057 = vunpack.c.l.b16 %v511
    %v2058 = vunpack.c.l.b16 %v512
    %v2059 = vunpack.c.l.b16 %v513
    %v2060 = vunpack.c.l.b16 %v514
    %v2061 = vunpack.c.l.b16 %v515
    %v2062 = vunpack.c.l.b16 %v516
    %v2063 = vunpack.c.l.b16 %v517
    %v2064 = vunpack.c.l.b16 %v518
    %v2065 = vunpack.c.l.b16 %v519
    %v2066 = vunpack.c.l.b16 %v520
    %v2067 = vunpack.c.l.b16 %v521
    %v2068 = vunpack.c.l.b16 %v522
    %v2069 = vunpack.c.l.b16 %v523
    %v2070 = vunpack.c.l.b16 %v524
    %v2071 = vunpack.c.l.b16 %v525
    %v2072 = vunpack.c.l.b16 %v526
    %v2073 = vunpack.c.l.b16 %v527
    %v2074 = vunpack.c.l.b16 %v528
    %v2075 = vunpack.c.l.b16 %v529
    %v2076 = vunpack.c.l.b16 %v530
    %v2077 = vunpack.c.l.b16 %v531
    %v2078 = vunpack.c.l.b16 %v532
    %v2079 = vunpack.c.l.b16 %v533
    %v2080 = vunpack.c.l.b16 %v534
    %v2081 = vunpack.c.l.b16 %v535
    %v2082 = vunpack.c.l.b16 %v536
    %v2083 = vunpack.c.l.b16 %v537
    %v2084 = vunpack.c.l.b16 %v538
    %v2085 = vunpack.c.l.b16 %v539
    %v2086 = vunpack.c.l.b16 %v540
    %v2087 = vunpack.c.l.b16 %v541
    %v2088 = vunpack.c.l.b16 %v542
    %v2089 = vunpack.c.l.b16 %v543
    %v2090 = vunpack.c.l.b16 %v544
    %v2091 = vunpack.c.l.b16 %v545
    %v2092 = vunpack.c.l.b16 %v546
    %v2093 = vunpack.c.l.b16 %v547
    %v2094 = vunpack.c.l.b16 %v548
    %v2095 = vunpack.c.l.b16 %v549
    %v2096 = vunpack.c.l.b16 %v550
    %v2097 = vunpack.c.l.b16 %v551
    %v2098 = vunpack.c.l.b16 %v552
    %v2099 = vunpack.c.l.b16 %v553
    %v2100 = vunpack.c.l.b16 %v554
    %v2101 = vunpack.c.l.b16 %v555
    %v2102 = vunpack.c.l.b16 %v556
    %v2103 = vunpack.c.l.b16 %v557
    %v2104 = vunpack.c.l.b16 %v558
    %v2105 = vunpack.c.l.b16 %v559
    %v2106 = vunpack.c.l.b16 %v560
    %v2107 = vunpack.c.l.b16 %v561
    %v2108 = vunpack.c.l.b16 %v562
    %v2109 = vunpack.c.l.b16 %v563
    %v2110 = vunpack.c.l.b16 %v564
    %v2111 = vunpack.c.l.b16 %v565
    %v2112 = vunpack.c.l.b16 %v566
    %v2113 = vunpack.c.l.b16 %v567
    %v2114 = vunpack.c.l.b16 %v568
    %v2115 = vunpack.c.l.b16 %v569
    %v2116 = vunpack.c.l.b16 %v570
    %v2117 = vunpack.c.l.b16 %v571
    %v2118 = vunpack.c.l.b16 %v572
    %v2119 = vunpack.c.l.b16 %v573
    %v2120 = vunpack.c.l.b16 %v574
    %v2121 = vunpack.c.l.b16 %v575
    %v2122 = vunpack.c.l.b16 %v576
    %v2123 = vunpack.c.l.b16 %v577
    %v2124 = vunpack.c.l.b16 %v578
    %v2125 = vunpack.c.l.b16 %v579
    %v2126 = vunpack.c.l.b16 %v580
    %v2127 = vunpack.c.l.b16 %v581
    %v2128 = vunpack.c.l.b16 %v582
    %v2129 = vunpack.c.l.b16 %v583
    %v2130 = vunpack.c.l.b16 %v584
    %v2131 = vunpack.c.l.b16 %v585
    %v2132 = vunpack.c.l.b16 %v586
    %v2133 = vunpack.c.l.b16 %v587
    %v2134 = vunpack.c.l.b16 %v588
    %v2135 = vunpack.c.l.b16 %v589
    %v2136 = vunpack.c.l.b16 %v590
    %v2137 = vunpack.c.l.b16 %v591
    %v2138 = vunpack.c.l.b16 %v592
    %v2139 = vunpack.c.l.b16 %v593
    %v2140 = vunpack.c.l.b16 %v594
    %v2141 = vunpack.c.l.b16 %v595
    %v2142 = vunpack.c.l.b16 %v596
    %v2143 = vunpack.c.l.b16 %v597
    %v2144 = vunpack.c.l.b16 %v598
    %v2145 = vunpack.c.l.b16 %v599
    %v2146 = vunpack.c.l.b16 %v600
    %v2147 = vunpack.c.l.b16 %v601
    %v2148 = vunpack.c.l.b16 %v602
    %v2149 = vunpack.c.l.b16 %v603
    %v2150 = vunpack.c.l.b16 %v604
    %v2151 = vunpack.c.l.b16 %v605
    %v2152 = vunpack.c.l.b16 %v606
    %v2153 = vunpack.c.l.b16 %v607
    %v2154 = vunpack.c.l.b16 %v608
    %v2155 = vunpack.c.l.b16 %v609
    %v2156 = vunpack.c.l.b16 %v610
    %v2157 = vunpack.c.l.b16 %v611
    %v2158 = vunpack.c.l.b16 %v612
    %v2159 = vunpack.c.l.b16 %v613
    %v2160 = vunpack.c.l.b16 %v614
    %v2161 = vunpack.c.l.b16 %v615
    %v2162 = vunpack.c.l.b16 %v616
    %v2163 = vunpack.c.l.b16 %v617
    %v2164 = vunpack.c.l.b16 %v618
    %v2165 = vunpack.c.l.b16 %v619
    %v2166 = vunpack.c.l.b16 %v620
    %v2167 = vunpack.c.l.b16 %v621
    %v2168 = vunpack.c.l.b16 %v622
    %v2169 = vunpack.c.l.b16 %v623
    %v2170 = vunpack.c.l.b16 %v624
    %v2171 = vunpack.c.l.b16 %v625
    %v2172 = vunpack.c.l.b16 %v626
    %v2173 = vunpack.c.l.b16 %v627
    %v2174 = vunpack.c.l.b16 %v628
    %v2175 = vunpack.c.l.b16 %v629
    %v2176 = vunpack.c.l.b16 %v630
    %v2177 = vunpack.c.l.b16 %v631
    %v2178 = vunpack.c.l.b16 %v632
    %v2179 = vunpack.c.l.b16 %v633
    %v2180 = vunpack.c.l.b16 %v634
    %v2181 = vunpack.c.l.b16 %v635
    %v2182 = vunpack.c.l.b16 %v636
    %v2183 = vunpack.c.l.b16 %v637
    %v2184 = vunpack.c.l.b16 %v638
    %v2185 = vunpack.c.l.b16 %v639
    %v2186 = vunpack.c.l.b16 %v640
    %v2187 = vunpack.c.l.b16 %v641
    %v2188 = vunpack.c.l.b16 %v642
    %v2189 = vunpack.c.l.b16 %v643
    %v2190 = vunpack.c.l.b16 %v644
    %v2191 = vunpack.c.l.b16 %v645
    %v2192 = vpack.c.b16 %v1568, %v1567
    %v2193 = vpack.c.b16 %v1570, %v1569
    %v2194 = vpack.c.b16 %v1572, %v1571
    %v2195 = vpack.c.b16 %v1574, %v1573
    %v2196 = vpack.c.b16 %v1576, %v1575
    %v2197 = vpack.c.b16 %v1578, %v1577
    %v2198 = vpack.c.b16 %v1580, %v1579
    %v2199 = vpack.c.b16 %v1582, %v1581
    %v2200 = vpack.c.b16 %v1584, %v1583
    %v2201 = vpack.c.b16 %v1586, %v1585
    %v2202 = vpack.c.b16 %v1588, %v1587
    %v2203 = vpack.c.b16 %v1590, %v1589
    %v2204 = vpack.c.b16 %v1592, %v1591
    %v2205 = vpack.c.b16 %v1594, %v1593
    %v2206 = vpack.c.b16 %v1596, %v1595
    %v2207 = vpack.c.b16 %v1598, %v1597
    %v2208 = vpack.c.b16 %v1600, %v1599
    %v2209 = vpack.c.b16 %v1602, %v1601
    %v2210 = vpack.c.b16 %v1604, %v1603
    %v2211 = vpack.c.b16 %v1606, %v1605
    %v2212 = vpack.c.b16 %v1608, %v1607
    %v2213 = vpack.c.b16 %v1610, %v1609
    %v2214 = vpack.c.b16 %v1612, %v1611
    %v2215 = vpack.c.b16 %v1614, %v1613
    %v2216 = vpack.c.b16 %v1616, %v1615
    %v2217 = vpack.c.b16 %v1618, %v1617
    %v2218 = vpack.c.b16 %v1620, %v1619
    %v2219 = vpack.c.b16 %v1622, %v1621
    %v2220 = vpack.c.b16 %v1624, %v1623
    %v2221 = vpack.c.b16 %v1626, %v1625
    %v2222 = vpack.c.b16 %v1628, %v1627
    %v2223 = vpack.c.b16 %v1630, %v1629
    %v2224 = vpack.c.b16 %v1632, %v1631
    %v2225 = vpack.c.b16 %v1634, %v1633
    %v2226 = vpack.c.b16 %v1636, %v1635
    %v2227 = vpack.c.b16 %v1638, %v1637
    %v2228 = vpack.c.b16 %v1640, %v1639
    %v2229 = vpack.c.b16 %v1642, %v1641
    %v2230 = vpack.c.b16 %v1644, %v1643
    %v2231 = vpack.c.b16 %v1646, %v1645
    %v2232 = vpack.c.b16 %v1648, %v1647
    %v2233 = vpack.c.b16 %v1650, %v1649
    %v2234 = vpack.c.b16 %v1652, %v1651
    %v2235 = vpack.c.b16 %v1654, %v1653
    %v2236 = vpack.c.b16 %v1656, %v1655
    %v2237 = vpack.c.b16 %v1658, %v1657
    %v2238 = vpack.c.b16 %v1660, %v1659
    %v2239 = vpack.c.b16 %v1662, %v1661
    %v2240 = vpack.c.b16 %v1664, %v1663
    %v2241 = vpack.c.b16 %v1666, %v1665
    %v2242 = vpack.c.b16 %v1668, %v1667
    %v2243 = vpack.c.b16 %v1670, %v1669
    %v2244 = vpack.c.b16 %v1672, %v1671
    %v2245 = vpack.c.b16 %v1674, %v1673
    %v2246 = vpack.c.b16 %v1676, %v1675
    %v2247 = vpack.c.b16 %v1678, %v1677
    %v2248 = vpack.c.b16 %v1680, %v1679
    %v2249 = vpack.c.b16 %v1682, %v1681
    %v2250 = vpack.c.b16 %v1684, %v1683
    %v2251 = vpack.c.b16 %v1686, %v1685
    %v2252 = vpack.c.b16 %v1688, %v1687
    %v2253 = vpack.c.b16 %v1690, %v1689
    %v2254 = vpack.c.b16 %v1692, %v1691
    %v2255 = vpack.c.b16 %v1694, %v1693
    %v2256 = vpack.c.b16 %v1696, %v1695
    %v2257 = vpack.c.b16 %v1698, %v1697
    %v2258 = vpack.c.b16 %v1700, %v1699
    %v2259 = vpack.c.b16 %v1702, %v1701
    %v2260 = vpack.c.b16 %v1704, %v1703
    %v2261 = vpack.c.b16 %v1706, %v1705
    %v2262 = vpack.c.b16 %v1708, %v1707
    %v2263 = vpack.c.b16 %v1710, %v1709
    %v2264 = vpack.c.b16 %v1712, %v1711
    %v2265 = vpack.c.b16 %v1714, %v1713
    %v2266 = vpack.c.b16 %v1716, %v1715
    %v2267 = vpack.c.b16 %v1718, %v1717
    %v2268 = vpack.c.b16 %v1720, %v1719
    %v2269 = vpack.c.b16 %v1722, %v1721
    %v2270 = vpack.c.b16 %v1724, %v1723
    %v2271 = vpack.c.b16 %v1726, %v1725
    %v2272 = vpack.c.b16 %v1728, %v1727
    %v2273 = vpack.c.b16 %v1730, %v1729
    %v2274 = vpack.c.b16 %v1732, %v1731
    %v2275 = vpack.c.b16 %v1734, %v1733
    %v2276 = vpack.c.b16 %v1736, %v1735
    %v2277 = vpack.c.b16 %v1738, %v1737
    %v2278 = vpack.c.b16 %v1740, %v1739
    %v2279 = vpack.c.b16 %v1742, %v1741
    %v2280 = vpack.c.b16 %v1744, %v1743
    %v2281 = vpack.c.b16 %v1746, %v1745
    %v2282 = vpack.c.b16 %v1748, %v1747
    %v2283 = vpack.c.b16 %v1750, %v1749
    %v2284 = vpack.c.b16 %v1752, %v1751
    %v2285 = vpack.c.b16 %v1754, %v1753
    %v2286 = vpack.c.b16 %v1756, %v1755
    %v2287 = vpack.c.b16 %v1758, %v1757
    %v2288 = vpack.c.b16 %v1760, %v1759
    %v2289 = vpack.c.b16 %v1762, %v1761
    %v2290 = vpack.c.b16 %v1764, %v1763
    %v2291 = vpack.c.b16 %v1766, %v1765
    %v2292 = vpack.c.b16 %v1768, %v1767
    %v2293 = vpack.c.b16 %v1770, %v1769
    %v2294 = vpack.c.b16 %v1772, %v1771
    %v2295 = vpack.c.b16 %v1774, %v1773
    %v2296 = vpack.c.b16 %v1776, %v1775
    %v2297 = vpack.c.b16 %v1778, %v1777
    %v2298 = vpack.c.b16 %v1780, %v1779
    %v2299 = vpack.c.b16 %v1782, %v1781
    %v2300 = vpack.c.b16 %v1784, %v1783
    %v2301 = vpack.c.b16 %v1786, %v1785
    %v2302 = vpack.c.b16 %v1788, %v1787
    %v2303 = vpack.c.b16 %v1790, %v1789
    %v2304 = vpack.c.b16 %v1792, %v1791
    %v2305 = vpack.c.b16 %v1794, %v1793
    %v2306 = vpack.c.b16 %v1796, %v1795
    %v2307 = vpack.c.b16 %v1798, %v1797
    %v2308 = vpack.c.b16 %v1800, %v1799
    %v2309 = vpack.c.b16 %v1802, %v1801
    %v2310 = vpack.c.b16 %v1804, %v1803
    %v2311 = vpack.c.b16 %v1806, %v1805
    %v2312 = vpack.c.b16 %v1808, %v1807
    %v2313 = vpack.c.b16 %v1810, %v1809
    %v2314 = vpack.c.b16 %v1812, %v1811
    %v2315 = vpack.c.b16 %v1814, %v1813
    %v2316 = vpack.c.b16 %v1816, %v1815
    %v2317 = vpack.c.b16 %v1818, %v1817
    %v2318 = vpack.c.b16 %v1820, %v1819
    %v2319 = vpack.c.b16 %v1822, %v1821
    %v2320 = vpack.c.b16 %v1824, %v1823
    %v2321 = vpack.c.b16 %v1826, %v1825
    %v2322 = vpack.c.b16 %v1828, %v1827
    %v2323 = vpack.c.b16 %v1830, %v1829
    %v2324 = vpack.c.b16 %v1832, %v1831
    %v2325 = vpack.c.b16 %v1834, %v1833
    %v2326 = vpack.c.b16 %v1836, %v1835
    %v2327 = vpack.c.b16 %v1838, %v1837
    %v2328 = vpack.c.b16 %v1840, %v1839
    %v2329 = vpack.c.b16 %v1842, %v1841
    %v2330 = vpack.c.b16 %v1844, %v1843
    %v2331 = vpack.c.b16 %v1846, %v1845
    %v2332 = vpack.c.b16 %v1848, %v1847
    %v2333 = vpack.c.b16 %v1850, %v1849
    %v2334 = vpack.c.b16 %v1852, %v1851
    %v2335 = vpack.c.b16 %v1854, %v1853
    %v2336 = vpack.c.b16 %v1856, %v1855
    %v2337 = vpack.c.b16 %v1858, %v1857
    %v2338 = vpack.c.b16 %v1860, %v1859
    %v2339 = vpack.c.b16 %v1862, %v1861
    %v2340 = vpack.c.b16 %v1864, %v1863
    %v2341 = vpack.c.b16 %v1866, %v1865
    %v2342 = vpack.c.b16 %v1868, %v1867
    %v2343 = vpack.c.b16 %v1870, %v1869
    %v2344 = vpack.c.b16 %v1872, %v1871
    %v2345 = vpack.c.b16 %v1874, %v1873
    %v2346 = vpack.c.b16 %v1876, %v1875
    %v2347 = vpack.c.b16 %v1878, %v1877
    %v2348 = vpack.c.b16 %v1880, %v1879
    %v2349 = vpack.c.b16 %v1882, %v1881
    %v2350 = vpack.c.b16 %v1884, %v1883
    %v2351 = vpack.c.b16 %v1886, %v1885
    %v2352 = vpack.c.b16 %v1888, %v1887
    %v2353 = vpack.c.b16 %v1890, %v1889
    %v2354 = vpack.c.b16 %v1892, %v1891
    %v2355 = vpack.c.b16 %v1894, %v1893
    %v2356 = vpack.c.b16 %v1896, %v1895
    %v2357 = vpack.c.b16 %v1898, %v1897
    %v2358 = vpack.c.b16 %v1900, %v1899
    %v2359 = vpack.c.b16 %v1902, %v1901
    %v2360 = vpack.c.b16 %v1904, %v1903
    %v2361 = vpack.c.b16 %v1906, %v1905
    %v2362 = vpack.c.b16 %v1908, %v1907
    %v2363 = vpack.c.b16 %v1910, %v1909
    %v2364 = vpack.c.b16 %v1912, %v1911
    %v2365 = vpack.c.b16 %v1914, %v1913
    %v2366 = vpack.c.b16 %v1916, %v1915
    %v2367 = vpack.c.b16 %v1918, %v1917
    %v2368 = vpack.c.b16 %v1920, %v1919
    %v2369 = vpack.c.b16 %v1922, %v1921
    %v2370 = vpack.c.b16 %v1924, %v1923
    %v2371 = vpack.c.b16 %v1926, %v1925
    %v2372 = vpack.c.b16 %v1928, %v1927
    %v2373 = vpack.c.b16 %v1930, %v1929
    %v2374 = vpack.c.b16 %v1932, %v1931
    %v2375 = vpack.c.b16 %v1934, %v1933
    %v2376 = vpack.c.b16 %v1936, %v1935
    %v2377 = vpack.c.b16 %v1938, %v1937
    %v2378 = vpack.c.b16 %v1940, %v1939
    %v2379 = vpack.c.b16 %v1942, %v1941
    %v2380 = vpack.c.b16 %v1944, %v1943
    %v2381 = vpack.c.b16 %v1946, %v1945
    %v2382 = vpack.c.b16 %v1948, %v1947
    %v2383 = vpack.c.b16 %v1950, %v1949
    %v2384 = vpack.c.b16 %v1952, %v1951
    %v2385 = vpack.c.b16 %v1954, %v1953
    %v2386 = vpack.c.b16 %v1956, %v1955
    %v2387 = vpack.c.b16 %v1958, %v1957
    %v2388 = vpack.c.b16 %v1960, %v1959
    %v2389 = vpack.c.b16 %v1962, %v1961
    %v2390 = vpack.c.b16 %v1964, %v1963
    %v2391 = vpack.c.b16 %v1966, %v1965
    %v2392 = vpack.c.b16 %v1968, %v1967
    %v2393 = vpack.c.b16 %v1970, %v1969
    %v2394 = vpack.c.b16 %v1972, %v1971
    %v2395 = vpack.c.b16 %v1974, %v1973
    %v2396 = vpack.c.b16 %v1976, %v1975
    %v2397 = vpack.c.b16 %v1978, %v1977
    %v2398 = vpack.c.b16 %v1980, %v1979
    %v2399 = vpack.c.b16 %v1982, %v1981
    %v2400 = vpack.c.b16 %v1984, %v1983
    %v2401 = vpack.c.b16 %v1986, %v1985
    %v2402 = vpack.c.b16 %v1988, %v1987
    %v2403 = vpack.c.b16 %v1990, %v1989
    %v2404 = vpack.c.b16 %v1992, %v1991
    %v2405 = vpack.c.b16 %v1994, %v1993
    %v2406 = vpack.c.b16 %v1996, %v1995
    %v2407 = vpack.c.b16 %v1998, %v1997
    %v2408 = vpack.c.b16 %v2000, %v1999
    %v2409 = vpack.c.b16 %v2002, %v2001
    %v2410 = vpack.c.b16 %v2004, %v2003
    %v2411 = vpack.c.b16 %v2006, %v2005
    %v2412 = vpack.c.b16 %v2008, %v2007
    %v2413 = vpack.c.b16 %v2010, %v2009
    %v2414 = vpack.c.b16 %v2012, %v2011
    %v2415 = vpack.c.b16 %v2014, %v2013
    %v2416 = vpack.c.b16 %v2016, %v2015
    %v2417 = vpack.c.b16 %v2018, %v2017
    %v2418 = vpack.c.b16 %v2020, %v2019
    %v2419 = vpack.c.b16 %v2022, %v2021
    %v2420 = vpack.c.b16 %v2024, %v2023
    %v2421 = vpack.c.b16 %v2026, %v2025
    %v2422 = vpack.c.b16 %v2028, %v2027
    %v2423 = vpack.c.b16 %v2030, %v2029
    %v2424 = vpack.c.b16 %v2032, %v2031
    %v2425 = vpack.c.b16 %v2034, %v2033
    %v2426 = vpack.c.b16 %v2036, %v2035
    %v2427 = vpack.c.b16 %v2038, %v2037
    %v2428 = vpack.c.b16 %v2040, %v2039
    %v2429 = vpack.c.b16 %v2042, %v2041
    %v2430 = vpack.c.b16 %v2044, %v2043
    %v2431 = vpack.c.b16 %v2046, %v2045
    %v2432 = vpack.c.b16 %v2048, %v2047
    %v2433 = vpack.c.b16 %v2050, %v2049
    %v2434 = vpack.c.b16 %v2052, %v2051
    %v2435 = vpack.c.b16 %v2054, %v2053
    %v2436 = vpack.c.b16 %v2056, %v2055
    %v2437 = vpack.c.b16 %v2058, %v2057
    %v2438 = vpack.c.b16 %v2060, %v2059
    %v2439 = vpack.c.b16 %v2062, %v2061
    %v2440 = vpack.c.b16 %v2064, %v2063
    %v2441 = vpack.c.b16 %v2066, %v2065
    %v2442 = vpack.c.b16 %v2068, %v2067
    %v2443 = vpack.c.b16 %v2070, %v2069
    %v2444 = vpack.c.b16 %v2072, %v2071
    %v2445 = vpack.c.b16 %v2074, %v2073
    %v2446 = vpack.c.b16 %v2076, %v2075
    %v2447 = vpack.c.b16 %v2078, %v2077
    %v2448 = vpack.c.b16 %v2080, %v2079
    %v2449 = vpack.c.b16 %v2082, %v2081
    %v2450 = vpack.c.b16 %v2084, %v2083
    %v2451 = vpack.c.b16 %v2086, %v2085
    %v2452 = vpack.c.b16 %v2088, %v2087
    %v2453 = vpack.c.b16 %v2090, %v2089
    %v2454 = vpack.c.b16 %v2092, %v2091
    %v2455 = vpack.c.b16 %v2094, %v2093
    %v2456 = vpack.c.b16 %v2096, %v2095
    %v2457 = vpack.c.b16 %v2098, %v2097
    %v2458 = vpack.c.b16 %v2100, %v2099
    %v2459 = vpack.c.b16 %v2102, %v2101
    %v2460 = vpack.c.b16 %v2104, %v2103
    %v2461 = vpack.c.b16 %v2106, %v2105
    %v2462 = vpack.c.b16 %v2108, %v2107
    %v2463 = vpack.c.b16 %v2110, %v2109
    %v2464 = vpack.c.b16 %v2112, %v2111
    %v2465 = vpack.c.b16 %v2114, %v2113
    %v2466 = vpack.c.b16 %v2116, %v2115
    %v2467 = vpack.c.b16 %v2118, %v2117
    %v2468 = vpack.c.b16 %v2120, %v2119
    %v2469 = vpack.c.b16 %v2122, %v2121
    %v2470 = vpack.c.b16 %v2124, %v2123
    %v2471 = vpack.c.b16 %v2126, %v2125
    %v2472 = vpack.c.b16 %v2128, %v2127
    %v2473 = vpack.c.b16 %v2130, %v2129
    %v2474 = vpack.c.b16 %v2132, %v2131
    %v2475 = vpack.c.b16 %v2134, %v2133
    %v2476 = vpack.c.b16 %v2136, %v2135
    %v2477 = vpack.c.b16 %v2138, %v2137
    %v2478 = vpack.c.b16 %v2140, %v2139
    %v2479 = vpack.c.b16 %v2142, %v2141
    %v2480 = vpack.c.b16 %v2144, %v2143
    %v2481 = vpack.c.b16 %v2146, %v2145
    %v2482 = vpack.c.b16 %v2148, %v2147
    %v2483 = vpack.c.b16 %v2150, %v2149
    %v2484 = vpack.c.b16 %v2152, %v2151
    %v2485 = vpack.c.b16 %v2154, %v2153
    %v2486 = vpack.c.b16 %v2156, %v2155
    %v2487 = vpack.c.b16 %v2158, %v2157
    %v2488 = vpack.c.b16 %v2160, %v2159
    %v2489 = vpack.c.b16 %v2162, %v2161
    %v2490 = vpack.c.b16 %v2164, %v2163
    %v2491 = vpack.c.b16 %v2166, %v2165
    %v2492 = vpack.c.b16 %v2168, %v2167
    %v2493 = vpack.c.b16 %v2170, %v2169
    %v2494 = vpack.c.b16 %v2172, %v2171
    %v2495 = vpack.c.b16 %v2174, %v2173
    %v2496 = vpack.c.b16 %v2176, %v2175
    %v2497 = vpack.c.b16 %v2178, %v2177
    %v2498 = vpack.c.b16 %v2180, %v2179
    %v2499 = vpack.c.b16 %v2182, %v2181
    %v2500 = vpack.c.b16 %v2184, %v2183
    %v2501 = vpack.c.b16 %v2186, %v2185
    %v2502 = vpack.c.b16 %v2188, %v2187
    %v2503 = vpack.c.b16 %v2190, %v2189
    %v2504 = vpack.c.b16 %v2191, %v2191
    %vm2817 = vcmask 64512
    %v2819 = vsel %vm2817, %v902, 0
    %vm2821 = vcmask 1043456
    %v2823 = vsel %vm2821, %v2504, 0
    %2825 = vmatprep.subr.bf16.mxu0 0
    %2826 = vmatpush1.bf16.msra.mxu0 %v2192
    %2827 = vmatprep.subr.bf16.mxu0 0
    %2828 = vmatpush1.bf16.msra.mxu0 %v2193
    %2829 = vmatprep.subr.bf16.mxu0 0
    %2830 = vmatpush1.bf16.msra.mxu0 %v2194
    %2831 = vmatprep.subr.bf16.mxu0 0
    %2832 = vmatpush1.bf16.msra.mxu0 %v2195
    %2833 = vmatprep.subr.bf16.mxu0 0
    %2834 = vmatpush1.bf16.msra.mxu0 %v2196
    %2835 = vmatprep.subr.bf16.mxu0 0
    %2836 = vmatpush1.bf16.msra.mxu0 %v2197
    %2837 = vmatprep.subr.bf16.mxu0 0
    %2838 = vmatpush1.bf16.msra.mxu0 %v2198
    %2839 = vmatprep.subr.bf16.mxu0 0
    %2840 = vmatpush1.bf16.msra.mxu0 %v2199
    %2841 = vmatprep.subr.bf16.mxu0 0
    %2842 = vmatpush1.bf16.msra.mxu0 %v2200
    %2843 = vmatprep.subr.bf16.mxu0 0
    %2844 = vmatpush1.bf16.msra.mxu0 %v2201
    %2845 = vmatprep.subr.bf16.mxu0 0
    %2846 = vmatpush1.bf16.msra.mxu0 %v2202
    %2847 = vmatprep.subr.bf16.mxu0 0
    %2848 = vmatpush1.bf16.msra.mxu0 %v2203
    %2849 = vmatprep.subr.bf16.mxu0 0
    %2850 = vmatpush1.bf16.msra.mxu0 %v2204
    %2851 = vmatprep.subr.bf16.mxu0 0
    %2852 = vmatpush1.bf16.msra.mxu0 %v2205
    %2853 = vmatprep.subr.bf16.mxu0 0
    %2854 = vmatpush1.bf16.msra.mxu0 %v2206
    %2855 = vmatprep.subr.bf16.mxu0 0
    %2856 = vmatpush1.bf16.msra.mxu0 %v2207
    %2857 = vmatprep.mubr.bf16.mxu0 %v695
    %2858 = vmatmul.mubr.bf16.gmra.mrb[0].mxu0 %v681
    %v2859 = vpop.f32.mrb[0].mxu0
    %v2860 = vadd.f32 %v651, %v2859
    %v2861 = vpop.f32.mrb[0].mxu0
    %v2862 = vpop.f32.mrb[0].mxu0
    %v2863 = vpop.f32.mrb[0].mxu0
    %2864 = vdwg.mxu0
    %2865 = vmatprep.subr.bf16.mxu0 0
    %2866 = vmatpush1.bf16.msra.mxu0 %v2208
    %2867 = vmatprep.subr.bf16.mxu0 0
    %2868 = vmatpush1.bf16.msra.mxu0 %v2209
    %2869 = vmatprep.subr.bf16.mxu0 0
    %2870 = vmatpush1.bf16.msra.mxu0 %v2210
    %2871 = vmatprep.subr.bf16.mxu0 0
    %2872 = vmatpush1.bf16.msra.mxu0 %v2211
    %2873 = vmatprep.subr.bf16.mxu0 0
    %2874 = vmatpush1.bf16.msra.mxu0 %v2212
    %2875 = vmatprep.subr.bf16.mxu0 0
    %2876 = vmatpush1.bf16.msra.mxu0 %v2213
    %2877 = vmatprep.subr.bf16.mxu0 0
    %2878 = vmatpush1.bf16.msra.mxu0 %v2214
    %2879 = vmatprep.subr.bf16.mxu0 0
    %2880 = vmatpush1.bf16.msra.mxu0 %v2215
    %2881 = vmatprep.subr.bf16.mxu0 0
    %2882 = vmatpush1.bf16.msra.mxu0 %v2216
    %2883 = vmatprep.subr.bf16.mxu0 0
    %2884 = vmatpush1.bf16.msra.mxu0 %v2217
    %2885 = vmatprep.subr.bf16.mxu0 0
    %2886 = vmatpush1.bf16.msra.mxu0 %v2218
    %2887 = vmatprep.subr.bf16.mxu0 0
    %2888 = vmatpush1.bf16.msra.mxu0 %v2219
    %2889 = vmatprep.subr.bf16.mxu0 0
    %2890 = vmatpush1.bf16.msra.mxu0 %v2220
    %2891 = vmatprep.subr.bf16.mxu0 0
    %2892 = vmatpush1.bf16.msra.mxu0 %v2221
    %2893 = vmatprep.subr.bf16.mxu0 0
    %2894 = vmatpush1.bf16.msra.mxu0 %v2222
    %2895 = vmatprep.subr.bf16.mxu0 0
    %2896 = vmatpush1.bf16.msra.mxu0 %v2223
    %2897 = vmatprep.mubr.bf16.mxu0 %v705
    %2898 = vmatmul.mubr.bf16.gmra.mrb[0].mxu0 %v703
    %v2899 = vpop.f32.mrb[0].mxu0
    %v2900 = vadd.f32 %v2860, %v2899
    %v2901 = vpop.f32.mrb[0].mxu0
    %v2902 = vpop.f32.mrb[0].mxu0
    %v2903 = vpop.f32.mrb[0].mxu0
    %2904 = vdwg.mxu0
    %2905 = vmatprep.subr.bf16.mxu0 0
    %2906 = vmatpush1.bf16.msra.mxu0 %v2224
    %2907 = vmatprep.subr.bf16.mxu0 0
    %2908 = vmatpush1.bf16.msra.mxu0 %v2225
    %2909 = vmatprep.subr.bf16.mxu0 0
    %2910 = vmatpush1.bf16.msra.mxu0 %v2226
    %2911 = vmatprep.subr.bf16.mxu0 0
    %2912 = vmatpush1.bf16.msra.mxu0 %v2227
    %2913 = vmatprep.subr.bf16.mxu0 0
    %2914 = vmatpush1.bf16.msra.mxu0 %v2228
    %2915 = vmatprep.subr.bf16.mxu0 0
    %2916 = vmatpush1.bf16.msra.mxu0 %v2229
    %2917 = vmatprep.subr.bf16.mxu0 0
    %2918 = vmatpush1.bf16.msra.mxu0 %v2230
    %2919 = vmatprep.subr.bf16.mxu0 0
    %2920 = vmatpush1.bf16.msra.mxu0 %v2231
    %2921 = vmatprep.subr.bf16.mxu0 0
    %2922 = vmatpush1.bf16.msra.mxu0 %v2232
    %2923 = vmatprep.subr.bf16.mxu0 0
    %2924 = vmatpush1.bf16.msra.mxu0 %v2233
    %2925 = vmatprep.subr.bf16.mxu0 0
    %2926 = vmatpush1.bf16.msra.mxu0 %v2234
    %2927 = vmatprep.subr.bf16.mxu0 0
    %2928 = vmatpush1.bf16.msra.mxu0 %v2235
    %2929 = vmatprep.subr.bf16.mxu0 0
    %2930 = vmatpush1.bf16.msra.mxu0 %v2236
    %2931 = vmatprep.subr.bf16.mxu0 0
    %2932 = vmatpush1.bf16.msra.mxu0 %v2237
    %2933 = vmatprep.subr.bf16.mxu0 0
    %2934 = vmatpush1.bf16.msra.mxu0 %v2238
    %2935 = vmatprep.subr.bf16.mxu0 0
    %2936 = vmatpush1.bf16.msra.mxu0 %v2239
    %2937 = vmatprep.mubr.bf16.mxu0 %v702
    %2938 = vmatmul.mubr.bf16.gmra.mrb[0].mxu0 %v688
    %v2939 = vpop.f32.mrb[0].mxu0
    %v2940 = vadd.f32 %v2900, %v2939
    %v2941 = vpop.f32.mrb[0].mxu0
    %v2942 = vpop.f32.mrb[0].mxu0
    %v2943 = vpop.f32.mrb[0].mxu0
    %2944 = vdwg.mxu0
    %2945 = vmatprep.subr.bf16.mxu0 0
    %2946 = vmatpush1.bf16.msra.mxu0 %v2240
    %2947 = vmatprep.subr.bf16.mxu0 0
    %2948 = vmatpush1.bf16.msra.mxu0 %v2241
    %2949 = vmatprep.subr.bf16.mxu0 0
    %2950 = vmatpush1.bf16.msra.mxu0 %v2242
    %2951 = vmatprep.subr.bf16.mxu0 0
    %2952 = vmatpush1.bf16.msra.mxu0 %v2243
    %2953 = vmatprep.subr.bf16.mxu0 0
    %2954 = vmatpush1.bf16.msra.mxu0 %v2244
    %2955 = vmatprep.subr.bf16.mxu0 0
    %2956 = vmatpush1.bf16.msra.mxu0 %v2245
    %2957 = vmatprep.subr.bf16.mxu0 0
    %2958 = vmatpush1.bf16.msra.mxu0 %v2246
    %2959 = vmatprep.subr.bf16.mxu0 0
    %2960 = vmatpush1.bf16.msra.mxu0 %v2247
    %2961 = vmatprep.subr.bf16.mxu0 0
    %2962 = vmatpush1.bf16.msra.mxu0 %v2248
    %2963 = vmatprep.subr.bf16.mxu0 0
    %2964 = vmatpush1.bf16.msra.mxu0 %v2249
    %2965 = vmatprep.subr.bf16.mxu0 0
    %2966 = vmatpush1.bf16.msra.mxu0 %v2250
    %2967 = vmatprep.subr.bf16.mxu0 0
    %2968 = vmatpush1.bf16.msra.mxu0 %v2251
    %2969 = vmatprep.subr.bf16.mxu0 0
    %2970 = vmatpush1.bf16.msra.mxu0 %v2252
    %2971 = vmatprep.subr.bf16.mxu0 0
    %2972 = vmatpush1.bf16.msra.mxu0 %v2253
    %2973 = vmatprep.subr.bf16.mxu0 0
    %2974 = vmatpush1.bf16.msra.mxu0 %v2254
    %2975 = vmatprep.subr.bf16.mxu0 0
    %2976 = vmatpush1.bf16.msra.mxu0 %v2255
    %2977 = vmatprep.mubr.bf16.mxu0 %v706
    %2978 = vmatmul.mubr.bf16.gmra.mrb[0].mxu0 %v704
    %v2979 = vpop.f32.mrb[0].mxu0
    %v2980 = vadd.f32 %v2940, %v2979
    %v2981 = vpop.f32.mrb[0].mxu0
    %v2982 = vpop.f32.mrb[0].mxu0
    %v2983 = vpop.f32.mrb[0].mxu0
    %2984 = vdwg.mxu0
    %2985 = vmatprep.subr.bf16.mxu0 0
    %2986 = vmatpush1.bf16.msra.mxu0 %v2256
    %2987 = vmatprep.subr.bf16.mxu0 0
    %2988 = vmatpush1.bf16.msra.mxu0 %v2257
    %2989 = vmatprep.subr.bf16.mxu0 0
    %2990 = vmatpush1.bf16.msra.mxu0 %v2258
    %2991 = vmatprep.subr.bf16.mxu0 0
    %2992 = vmatpush1.bf16.msra.mxu0 %v2259
    %2993 = vmatprep.subr.bf16.mxu0 0
    %2994 = vmatpush1.bf16.msra.mxu0 %v2260
    %2995 = vmatprep.subr.bf16.mxu0 0
    %2996 = vmatpush1.bf16.msra.mxu0 %v2261
    %2997 = vmatprep.subr.bf16.mxu0 0
    %2998 = vmatpush1.bf16.msra.mxu0 %v2262
    %2999 = vmatprep.subr.bf16.mxu0 0
    %3000 = vmatpush1.bf16.msra.mxu0 %v2263
    %3001 = vmatprep.subr.bf16.mxu0 0
    %3002 = vmatpush1.bf16.msra.mxu0 %v2264
    %3003 = vmatprep.subr.bf16.mxu0 0
    %3004 = vmatpush1.bf16.msra.mxu0 %v2265
    %3005 = vmatprep.subr.bf16.mxu0 0
    %3006 = vmatpush1.bf16.msra.mxu0 %v2266
    %3007 = vmatprep.subr.bf16.mxu0 0
    %3008 = vmatpush1.bf16.msra.mxu0 %v2267
    %3009 = vmatprep.subr.bf16.mxu0 0
    %3010 = vmatpush1.bf16.msra.mxu0 %v2268
    %3011 = vmatprep.subr.bf16.mxu0 0
    %3012 = vmatpush1.bf16.msra.mxu0 %v2269
    %3013 = vmatprep.subr.bf16.mxu0 0
    %3014 = vmatpush1.bf16.msra.mxu0 %v2270
    %3015 = vmatprep.subr.bf16.mxu0 0
    %3016 = vmatpush1.bf16.msra.mxu0 %v2271
    %3017 = vmatprep.mubr.bf16.mxu0 %v744
    %3018 = vmatmul.mubr.bf16.gmra.mrb[0].mxu0 %v730
    %v3019 = vpop.f32.mrb[0].mxu0
    %v3020 = vadd.f32 %v2980, %v3019
    %v3021 = vpop.f32.mrb[0].mxu0
    %v3022 = vpop.f32.mrb[0].mxu0
    %v3023 = vpop.f32.mrb[0].mxu0
    %3024 = vdwg.mxu0
    %3025 = vmatprep.subr.bf16.mxu0 0
    %3026 = vmatpush1.bf16.msra.mxu0 %v2272
    %3027 = vmatprep.subr.bf16.mxu0 0
    %3028 = vmatpush1.bf16.msra.mxu0 %v2273
    %3029 = vmatprep.subr.bf16.mxu0 0
    %3030 = vmatpush1.bf16.msra.mxu0 %v2274
    %3031 = vmatprep.subr.bf16.mxu0 0
    %3032 = vmatpush1.bf16.msra.mxu0 %v2275
    %3033 = vmatprep.subr.bf16.mxu0 0
    %3034 = vmatpush1.bf16.msra.mxu0 %v2276
    %3035 = vmatprep.subr.bf16.mxu0 0
    %3036 = vmatpush1.bf16.msra.mxu0 %v2277
    %3037 = vmatprep.subr.bf16.mxu0 0
    %3038 = vmatpush1.bf16.msra.mxu0 %v2278
    %3039 = vmatprep.subr.bf16.mxu0 0
    %3040 = vmatpush1.bf16.msra.mxu0 %v2279
    %3041 = vmatprep.subr.bf16.mxu0 0
    %3042 = vmatpush1.bf16.msra.mxu0 %v2280
    %3043 = vmatprep.subr.bf16.mxu0 0
    %3044 = vmatpush1.bf16.msra.mxu0 %v2281
    %3045 = vmatprep.subr.bf16.mxu0 0
    %3046 = vmatpush1.bf16.msra.mxu0 %v2282
    %3047 = vmatprep.subr.bf16.mxu0 0
    %3048 = vmatpush1.bf16.msra.mxu0 %v2283
    %3049 = vmatprep.subr.bf16.mxu0 0
    %3050 = vmatpush1.bf16.msra.mxu0 %v2284
    %3051 = vmatprep.subr.bf16.mxu0 0
    %3052 = vmatpush1.bf16.msra.mxu0 %v2285
    %3053 = vmatprep.subr.bf16.mxu0 0
    %3054 = vmatpush1.bf16.msra.mxu0 %v2286
    %3055 = vmatprep.subr.bf16.mxu0 0
    %3056 = vmatpush1.bf16.msra.mxu0 %v2287
    %3057 = vmatprep.mubr.bf16.mxu0 %v754
    %3058 = vmatmul.mubr.bf16.gmra.mrb[0].mxu0 %v752
    %v3059 = vpop.f32.mrb[0].mxu0
    %v3060 = vadd.f32 %v3020, %v3059
    %v3061 = vpop.f32.mrb[0].mxu0
    %v3062 = vpop.f32.mrb[0].mxu0
    %v3063 = vpop.f32.mrb[0].mxu0
    %3064 = vdwg.mxu0
    %3065 = vmatprep.subr.bf16.mxu0 0
    %3066 = vmatpush1.bf16.msra.mxu0 %v2288
    %3067 = vmatprep.subr.bf16.mxu0 0
    %3068 = vmatpush1.bf16.msra.mxu0 %v2289
    %3069 = vmatprep.subr.bf16.mxu0 0
    %3070 = vmatpush1.bf16.msra.mxu0 %v2290
    %3071 = vmatprep.subr.bf16.mxu0 0
    %3072 = vmatpush1.bf16.msra.mxu0 %v2291
    %3073 = vmatprep.subr.bf16.mxu0 0
    %3074 = vmatpush1.bf16.msra.mxu0 %v2292
    %3075 = vmatprep.subr.bf16.mxu0 0
    %3076 = vmatpush1.bf16.msra.mxu0 %v2293
    %3077 = vmatprep.subr.bf16.mxu0 0
    %3078 = vmatpush1.bf16.msra.mxu0 %v2294
    %3079 = vmatprep.subr.bf16.mxu0 0
    %3080 = vmatpush1.bf16.msra.mxu0 %v2295
    %3081 = vmatprep.subr.bf16.mxu0 0
    %3082 = vmatpush1.bf16.msra.mxu0 %v2296
    %3083 = vmatprep.subr.bf16.mxu0 0
    %3084 = vmatpush1.bf16.msra.mxu0 %v2297
    %3085 = vmatprep.subr.bf16.mxu0 0
    %3086 = vmatpush1.bf16.msra.mxu0 %v2298
    %3087 = vmatprep.subr.bf16.mxu0 0
    %3088 = vmatpush1.bf16.msra.mxu0 %v2299
    %3089 = vmatprep.subr.bf16.mxu0 0
    %3090 = vmatpush1.bf16.msra.mxu0 %v2300
    %3091 = vmatprep.subr.bf16.mxu0 0
    %3092 = vmatpush1.bf16.msra.mxu0 %v2301
    %3093 = vmatprep.subr.bf16.mxu0 0
    %3094 = vmatpush1.bf16.msra.mxu0 %v2302
    %3095 = vmatprep.subr.bf16.mxu0 0
    %3096 = vmatpush1.bf16.msra.mxu0 %v2303
    %3097 = vmatprep.mubr.bf16.mxu0 %v751
    %3098 = vmatmul.mubr.bf16.gmra.mrb[0].mxu0 %v737
    %v3099 = vpop.f32.mrb[0].mxu0
    %v3100 = vadd.f32 %v3060, %v3099
    %v3101 = vpop.f32.mrb[0].mxu0
    %v3102 = vpop.f32.mrb[0].mxu0
    %v3103 = vpop.f32.mrb[0].mxu0
    %3104 = vdwg.mxu0
    %3105 = vmatprep.subr.bf16.mxu0 0
    %3106 = vmatpush1.bf16.msra.mxu0 %v2304
    %3107 = vmatprep.subr.bf16.mxu0 0
    %3108 = vmatpush1.bf16.msra.mxu0 %v2305
    %3109 = vmatprep.subr.bf16.mxu0 0
    %3110 = vmatpush1.bf16.msra.mxu0 %v2306
    %3111 = vmatprep.subr.bf16.mxu0 0
    %3112 = vmatpush1.bf16.msra.mxu0 %v2307
    %3113 = vmatprep.subr.bf16.mxu0 0
    %3114 = vmatpush1.bf16.msra.mxu0 %v2308
    %3115 = vmatprep.subr.bf16.mxu0 0
    %3116 = vmatpush1.bf16.msra.mxu0 %v2309
    %3117 = vmatprep.subr.bf16.mxu0 0
    %3118 = vmatpush1.bf16.msra.mxu0 %v2310
    %3119 = vmatprep.subr.bf16.mxu0 0
    %3120 = vmatpush1.bf16.msra.mxu0 %v2311
    %3121 = vmatprep.subr.bf16.mxu0 0
    %3122 = vmatpush1.bf16.msra.mxu0 %v2312
    %3123 = vmatprep.subr.bf16.mxu0 0
    %3124 = vmatpush1.bf16.msra.mxu0 %v2313
    %3125 = vmatprep.subr.bf16.mxu0 0
    %3126 = vmatpush1.bf16.msra.mxu0 %v2314
    %3127 = vmatprep.subr.bf16.mxu0 0
    %3128 = vmatpush1.bf16.msra.mxu0 %v2315
    %3129 = vmatprep.subr.bf16.mxu0 0
    %3130 = vmatpush1.bf16.msra.mxu0 %v2316
    %3131 = vmatprep.subr.bf16.mxu0 0
    %3132 = vmatpush1.bf16.msra.mxu0 %v2317
    %3133 = vmatprep.subr.bf16.mxu0 0
    %3134 = vmatpush1.bf16.msra.mxu0 %v2318
    %3135 = vmatprep.subr.bf16.mxu0 0
    %3136 = vmatpush1.bf16.msra.mxu0 %v2319
    %3137 = vmatprep.mubr.bf16.mxu0 %v755
    %3138 = vmatmul.mubr.bf16.gmra.mrb[0].mxu0 %v753
    %v3139 = vpop.f32.mrb[0].mxu0
    %v3140 = vadd.f32 %v3100, %v3139
    %v3141 = vpop.f32.mrb[0].mxu0
    %v3142 = vpop.f32.mrb[0].mxu0
    %v3143 = vpop.f32.mrb[0].mxu0
    %3144 = vdwg.mxu0
    %3145 = vmatprep.subr.bf16.mxu0 0
    %3146 = vmatpush1.bf16.msra.mxu0 %v2320
    %3147 = vmatprep.subr.bf16.mxu0 0
    %3148 = vmatpush1.bf16.msra.mxu0 %v2321
    %3149 = vmatprep.subr.bf16.mxu0 0
    %3150 = vmatpush1.bf16.msra.mxu0 %v2322
    %3151 = vmatprep.subr.bf16.mxu0 0
    %3152 = vmatpush1.bf16.msra.mxu0 %v2323
    %3153 = vmatprep.subr.bf16.mxu0 0
    %3154 = vmatpush1.bf16.msra.mxu0 %v2324
    %3155 = vmatprep.subr.bf16.mxu0 0
    %3156 = vmatpush1.bf16.msra.mxu0 %v2325
    %3157 = vmatprep.subr.bf16.mxu0 0
    %3158 = vmatpush1.bf16.msra.mxu0 %v2326
    %3159 = vmatprep.subr.bf16.mxu0 0
    %3160 = vmatpush1.bf16.msra.mxu0 %v2327
    %3161 = vmatprep.subr.bf16.mxu0 0
    %3162 = vmatpush1.bf16.msra.mxu0 %v2328
    %3163 = vmatprep.subr.bf16.mxu0 0
    %3164 = vmatpush1.bf16.msra.mxu0 %v2329
    %3165 = vmatprep.subr.bf16.mxu0 0
    %3166 = vmatpush1.bf16.msra.mxu0 %v2330
    %3167 = vmatprep.subr.bf16.mxu0 0
    %3168 = vmatpush1.bf16.msra.mxu0 %v2331
    %3169 = vmatprep.subr.bf16.mxu0 0
    %3170 = vmatpush1.bf16.msra.mxu0 %v2332
    %3171 = vmatprep.subr.bf16.mxu0 0
    %3172 = vmatpush1.bf16.msra.mxu0 %v2333
    %3173 = vmatprep.subr.bf16.mxu0 0
    %3174 = vmatpush1.bf16.msra.mxu0 %v2334
    %3175 = vmatprep.subr.bf16.mxu0 0
    %3176 = vmatpush1.bf16.msra.mxu0 %v2335
    %3177 = vmatprep.mubr.bf16.mxu0 %v793
    %3178 = vmatmul.mubr.bf16.gmra.mrb[0].mxu0 %v779
    %v3179 = vpop.f32.mrb[0].mxu0
    %v3180 = vadd.f32 %v3140, %v3179
    %v3181 = vpop.f32.mrb[0].mxu0
    %v3182 = vpop.f32.mrb[0].mxu0
    %v3183 = vpop.f32.mrb[0].mxu0
    %3184 = vdwg.mxu0
    %3185 = vmatprep.subr.bf16.mxu0 0
    %3186 = vmatpush1.bf16.msra.mxu0 %v2336
    %3187 = vmatprep.subr.bf16.mxu0 0
    %3188 = vmatpush1.bf16.msra.mxu0 %v2337
    %3189 = vmatprep.subr.bf16.mxu0 0
    %3190 = vmatpush1.bf16.msra.mxu0 %v2338
    %3191 = vmatprep.subr.bf16.mxu0 0
    %3192 = vmatpush1.bf16.msra.mxu0 %v2339
    %3193 = vmatprep.subr.bf16.mxu0 0
    %3194 = vmatpush1.bf16.msra.mxu0 %v2340
    %3195 = vmatprep.subr.bf16.mxu0 0
    %3196 = vmatpush1.bf16.msra.mxu0 %v2341
    %3197 = vmatprep.subr.bf16.mxu0 0
    %3198 = vmatpush1.bf16.msra.mxu0 %v2342
    %3199 = vmatprep.subr.bf16.mxu0 0
    %3200 = vmatpush1.bf16.msra.mxu0 %v2343
    %3201 = vmatprep.subr.bf16.mxu0 0
    %3202 = vmatpush1.bf16.msra.mxu0 %v2344
    %3203 = vmatprep.subr.bf16.mxu0 0
    %3204 = vmatpush1.bf16.msra.mxu0 %v2345
    %3205 = vmatprep.subr.bf16.mxu0 0
    %3206 = vmatpush1.bf16.msra.mxu0 %v2346
    %3207 = vmatprep.subr.bf16.mxu0 0
    %3208 = vmatpush1.bf16.msra.mxu0 %v2347
    %3209 = vmatprep.subr.bf16.mxu0 0
    %3210 = vmatpush1.bf16.msra.mxu0 %v2348
    %3211 = vmatprep.subr.bf16.mxu0 0
    %3212 = vmatpush1.bf16.msra.mxu0 %v2349
    %3213 = vmatprep.subr.bf16.mxu0 0
    %3214 = vmatpush1.bf16.msra.mxu0 %v2350
    %3215 = vmatprep.subr.bf16.mxu0 0
    %3216 = vmatpush1.bf16.msra.mxu0 %v2351
    %3217 = vmatprep.mubr.bf16.mxu0 %v803
    %3218 = vmatmul.mubr.bf16.gmra.mrb[0].mxu0 %v801
    %v3219 = vpop.f32.mrb[0].mxu0
    %v3220 = vadd.f32 %v3180, %v3219
    %v3221 = vpop.f32.mrb[0].mxu0
    %v3222 = vpop.f32.mrb[0].mxu0
    %v3223 = vpop.f32.mrb[0].mxu0
    %3224 = vdwg.mxu0
    %3225 = vmatprep.subr.bf16.mxu0 0
    %3226 = vmatpush1.bf16.msra.mxu0 %v2352
    %3227 = vmatprep.subr.bf16.mxu0 0
    %3228 = vmatpush1.bf16.msra.mxu0 %v2353
    %3229 = vmatprep.subr.bf16.mxu0 0
    %3230 = vmatpush1.bf16.msra.mxu0 %v2354
    %3231 = vmatprep.subr.bf16.mxu0 0
    %3232 = vmatpush1.bf16.msra.mxu0 %v2355
    %3233 = vmatprep.subr.bf16.mxu0 0
    %3234 = vmatpush1.bf16.msra.mxu0 %v2356
    %3235 = vmatprep.subr.bf16.mxu0 0
    %3236 = vmatpush1.bf16.msra.mxu0 %v2357
    %3237 = vmatprep.subr.bf16.mxu0 0
    %3238 = vmatpush1.bf16.msra.mxu0 %v2358
    %3239 = vmatprep.subr.bf16.mxu0 0
    %3240 = vmatpush1.bf16.msra.mxu0 %v2359
    %3241 = vmatprep.subr.bf16.mxu0 0
    %3242 = vmatpush1.bf16.msra.mxu0 %v2360
    %3243 = vmatprep.subr.bf16.mxu0 0
    %3244 = vmatpush1.bf16.msra.mxu0 %v2361
    %3245 = vmatprep.subr.bf16.mxu0 0
    %3246 = vmatpush1.bf16.msra.mxu0 %v2362
    %3247 = vmatprep.subr.bf16.mxu0 0
    %3248 = vmatpush1.bf16.msra.mxu0 %v2363
    %3249 = vmatprep.subr.bf16.mxu0 0
    %3250 = vmatpush1.bf16.msra.mxu0 %v2364
    %3251 = vmatprep.subr.bf16.mxu0 0
    %3252 = vmatpush1.bf16.msra.mxu0 %v2365
    %3253 = vmatprep.subr.bf16.mxu0 0
    %3254 = vmatpush1.bf16.msra.mxu0 %v2366
    %3255 = vmatprep.subr.bf16.mxu0 0
    %3256 = vmatpush1.bf16.msra.mxu0 %v2367
    %3257 = vmatprep.mubr.bf16.mxu0 %v800
    %3258 = vmatmul.mubr.bf16.gmra.mrb[0].mxu0 %v786
    %v3259 = vpop.f32.mrb[0].mxu0
    %v3260 = vadd.f32 %v3220, %v3259
    %v3261 = vpop.f32.mrb[0].mxu0
    %v3262 = vpop.f32.mrb[0].mxu0
    %v3263 = vpop.f32.mrb[0].mxu0
    %3264 = vdwg.mxu0
    %3265 = vmatprep.subr.bf16.mxu0 0
    %3266 = vmatpush1.bf16.msra.mxu0 %v2368
    %3267 = vmatprep.subr.bf16.mxu0 0
    %3268 = vmatpush1.bf16.msra.mxu0 %v2369
    %3269 = vmatprep.subr.bf16.mxu0 0
    %3270 = vmatpush1.bf16.msra.mxu0 %v2370
    %3271 = vmatprep.subr.bf16.mxu0 0
    %3272 = vmatpush1.bf16.msra.mxu0 %v2371
    %3273 = vmatprep.subr.bf16.mxu0 0
    %3274 = vmatpush1.bf16.msra.mxu0 %v2372
    %3275 = vmatprep.subr.bf16.mxu0 0
    %3276 = vmatpush1.bf16.msra.mxu0 %v2373
    %3277 = vmatprep.subr.bf16.mxu0 0
    %3278 = vmatpush1.bf16.msra.mxu0 %v2374
    %3279 = vmatprep.subr.bf16.mxu0 0
    %3280 = vmatpush1.bf16.msra.mxu0 %v2375
    %3281 = vmatprep.subr.bf16.mxu0 0
    %3282 = vmatpush1.bf16.msra.mxu0 %v2376
    %3283 = vmatprep.subr.bf16.mxu0 0
    %3284 = vmatpush1.bf16.msra.mxu0 %v2377
    %3285 = vmatprep.subr.bf16.mxu0 0
    %3286 = vmatpush1.bf16.msra.mxu0 %v2378
    %3287 = vmatprep.subr.bf16.mxu0 0
    %3288 = vmatpush1.bf16.msra.mxu0 %v2379
    %3289 = vmatprep.subr.bf16.mxu0 0
    %3290 = vmatpush1.bf16.msra.mxu0 %v2380
    %3291 = vmatprep.subr.bf16.mxu0 0
    %3292 = vmatpush1.bf16.msra.mxu0 %v2381
    %3293 = vmatprep.subr.bf16.mxu0 0
    %3294 = vmatpush1.bf16.msra.mxu0 %v2382
    %3295 = vmatprep.subr.bf16.mxu0 0
    %3296 = vmatpush1.bf16.msra.mxu0 %v2383
    %3297 = vmatprep.mubr.bf16.mxu0 %v804
    %3298 = vmatmul.mubr.bf16.gmra.mrb[0].mxu0 %v802
    %v3299 = vpop.f32.mrb[0].mxu0
    %v3300 = vadd.f32 %v3260, %v3299
    %v3301 = vpop.f32.mrb[0].mxu0
    %v3302 = vpop.f32.mrb[0].mxu0
    %v3303 = vpop.f32.mrb[0].mxu0
    %3304 = vdwg.mxu0
    %3305 = vmatprep.subr.bf16.mxu0 0
    %3306 = vmatpush1.bf16.msra.mxu0 %v2384
    %3307 = vmatprep.subr.bf16.mxu0 0
    %3308 = vmatpush1.bf16.msra.mxu0 %v2385
    %3309 = vmatprep.subr.bf16.mxu0 0
    %3310 = vmatpush1.bf16.msra.mxu0 %v2386
    %3311 = vmatprep.subr.bf16.mxu0 0
    %3312 = vmatpush1.bf16.msra.mxu0 %v2387
    %3313 = vmatprep.subr.bf16.mxu0 0
    %3314 = vmatpush1.bf16.msra.mxu0 %v2388
    %3315 = vmatprep.subr.bf16.mxu0 0
    %3316 = vmatpush1.bf16.msra.mxu0 %v2389
    %3317 = vmatprep.subr.bf16.mxu0 0
    %3318 = vmatpush1.bf16.msra.mxu0 %v2390
    %3319 = vmatprep.subr.bf16.mxu0 0
    %3320 = vmatpush1.bf16.msra.mxu0 %v2391
    %3321 = vmatprep.subr.bf16.mxu0 0
    %3322 = vmatpush1.bf16.msra.mxu0 %v2392
    %3323 = vmatprep.subr.bf16.mxu0 0
    %3324 = vmatpush1.bf16.msra.mxu0 %v2393
    %3325 = vmatprep.subr.bf16.mxu0 0
    %3326 = vmatpush1.bf16.msra.mxu0 %v2394
    %3327 = vmatprep.subr.bf16.mxu0 0
    %3328 = vmatpush1.bf16.msra.mxu0 %v2395
    %3329 = vmatprep.subr.bf16.mxu0 0
    %3330 = vmatpush1.bf16.msra.mxu0 %v2396
    %3331 = vmatprep.subr.bf16.mxu0 0
    %3332 = vmatpush1.bf16.msra.mxu0 %v2397
    %3333 = vmatprep.subr.bf16.mxu0 0
    %3334 = vmatpush1.bf16.msra.mxu0 %v2398
    %3335 = vmatprep.subr.bf16.mxu0 0
    %3336 = vmatpush1.bf16.msra.mxu0 %v2399
    %3337 = vmatprep.mubr.bf16.mxu0 %v842
    %3338 = vmatmul.mubr.bf16.gmra.mrb[0].mxu0 %v828
    %v3339 = vpop.f32.mrb[0].mxu0
    %v3340 = vadd.f32 %v3300, %v3339
    %v3341 = vpop.f32.mrb[0].mxu0
    %v3342 = vpop.f32.mrb[0].mxu0
    %v3343 = vpop.f32.mrb[0].mxu0
    %3344 = vdwg.mxu0
    %3345 = vmatprep.subr.bf16.mxu0 0
    %3346 = vmatpush1.bf16.msra.mxu0 %v2400
    %3347 = vmatprep.subr.bf16.mxu0 0
    %3348 = vmatpush1.bf16.msra.mxu0 %v2401
    %3349 = vmatprep.subr.bf16.mxu0 0
    %3350 = vmatpush1.bf16.msra.mxu0 %v2402
    %3351 = vmatprep.subr.bf16.mxu0 0
    %3352 = vmatpush1.bf16.msra.mxu0 %v2403
    %3353 = vmatprep.subr.bf16.mxu0 0
    %3354 = vmatpush1.bf16.msra.mxu0 %v2404
    %3355 = vmatprep.subr.bf16.mxu0 0
    %3356 = vmatpush1.bf16.msra.mxu0 %v2405
    %3357 = vmatprep.subr.bf16.mxu0 0
    %3358 = vmatpush1.bf16.msra.mxu0 %v2406
    %3359 = vmatprep.subr.bf16.mxu0 0
    %3360 = vmatpush1.bf16.msra.mxu0 %v2407
    %3361 = vmatprep.subr.bf16.mxu0 0
    %3362 = vmatpush1.bf16.msra.mxu0 %v2408
    %3363 = vmatprep.subr.bf16.mxu0 0
    %3364 = vmatpush1.bf16.msra.mxu0 %v2409
    %3365 = vmatprep.subr.bf16.mxu0 0
    %3366 = vmatpush1.bf16.msra.mxu0 %v2410
    %3367 = vmatprep.subr.bf16.mxu0 0
    %3368 = vmatpush1.bf16.msra.mxu0 %v2411
    %3369 = vmatprep.subr.bf16.mxu0 0
    %3370 = vmatpush1.bf16.msra.mxu0 %v2412
    %3371 = vmatprep.subr.bf16.mxu0 0
    %3372 = vmatpush1.bf16.msra.mxu0 %v2413
    %3373 = vmatprep.subr.bf16.mxu0 0
    %3374 = vmatpush1.bf16.msra.mxu0 %v2414
    %3375 = vmatprep.subr.bf16.mxu0 0
    %3376 = vmatpush1.bf16.msra.mxu0 %v2415
    %3377 = vmatprep.mubr.bf16.mxu0 %v852
    %3378 = vmatmul.mubr.bf16.gmra.mrb[0].mxu0 %v850
    %v3379 = vpop.f32.mrb[0].mxu0
    %v3380 = vadd.f32 %v3340, %v3379
    %v3381 = vpop.f32.mrb[0].mxu0
    %v3382 = vpop.f32.mrb[0].mxu0
    %v3383 = vpop.f32.mrb[0].mxu0
    %3384 = vdwg.mxu0
    %3385 = vmatprep.subr.bf16.mxu0 0
    %3386 = vmatpush1.bf16.msra.mxu0 %v2416
    %3387 = vmatprep.subr.bf16.mxu0 0
    %3388 = vmatpush1.bf16.msra.mxu0 %v2417
    %3389 = vmatprep.subr.bf16.mxu0 0
    %3390 = vmatpush1.bf16.msra.mxu0 %v2418
    %3391 = vmatprep.subr.bf16.mxu0 0
    %3392 = vmatpush1.bf16.msra.mxu0 %v2419
    %3393 = vmatprep.subr.bf16.mxu0 0
    %3394 = vmatpush1.bf16.msra.mxu0 %v2420
    %3395 = vmatprep.subr.bf16.mxu0 0
    %3396 = vmatpush1.bf16.msra.mxu0 %v2421
    %3397 = vmatprep.subr.bf16.mxu0 0
    %3398 = vmatpush1.bf16.msra.mxu0 %v2422
    %3399 = vmatprep.subr.bf16.mxu0 0
    %3400 = vmatpush1.bf16.msra.mxu0 %v2423
    %3401 = vmatprep.subr.bf16.mxu0 0
    %3402 = vmatpush1.bf16.msra.mxu0 %v2424
    %3403 = vmatprep.subr.bf16.mxu0 0
    %3404 = vmatpush1.bf16.msra.mxu0 %v2425
    %3405 = vmatprep.subr.bf16.mxu0 0
    %3406 = vmatpush1.bf16.msra.mxu0 %v2426
    %3407 = vmatprep.subr.bf16.mxu0 0
    %3408 = vmatpush1.bf16.msra.mxu0 %v2427
    %3409 = vmatprep.subr.bf16.mxu0 0
    %3410 = vmatpush1.bf16.msra.mxu0 %v2428
    %3411 = vmatprep.subr.bf16.mxu0 0
    %3412 = vmatpush1.bf16.msra.mxu0 %v2429
    %3413 = vmatprep.subr.bf16.mxu0 0
    %3414 = vmatpush1.bf16.msra.mxu0 %v2430
    %3415 = vmatprep.subr.bf16.mxu0 0
    %3416 = vmatpush1.bf16.msra.mxu0 %v2431
    %3417 = vmatprep.mubr.bf16.mxu0 %v849
    %3418 = vmatmul.mubr.bf16.gmra.mrb[0].mxu0 %v835
    %v3419 = vpop.f32.mrb[0].mxu0
    %v3420 = vadd.f32 %v3380, %v3419
    %v3421 = vpop.f32.mrb[0].mxu0
    %v3422 = vpop.f32.mrb[0].mxu0
    %v3423 = vpop.f32.mrb[0].mxu0
    %3424 = vdwg.mxu0
    %3425 = vmatprep.subr.bf16.mxu0 0
    %3426 = vmatpush1.bf16.msra.mxu0 %v2432
    %3427 = vmatprep.subr.bf16.mxu0 0
    %3428 = vmatpush1.bf16.msra.mxu0 %v2433
    %3429 = vmatprep.subr.bf16.mxu0 0
    %3430 = vmatpush1.bf16.msra.mxu0 %v2434
    %3431 = vmatprep.subr.bf16.mxu0 0
    %3432 = vmatpush1.bf16.msra.mxu0 %v2435
    %3433 = vmatprep.subr.bf16.mxu0 0
    %3434 = vmatpush1.bf16.msra.mxu0 %v2436
    %3435 = vmatprep.subr.bf16.mxu0 0
    %3436 = vmatpush1.bf16.msra.mxu0 %v2437
    %3437 = vmatprep.subr.bf16.mxu0 0
    %3438 = vmatpush1.bf16.msra.mxu0 %v2438
    %3439 = vmatprep.subr.bf16.mxu0 0
    %3440 = vmatpush1.bf16.msra.mxu0 %v2439
    %3441 = vmatprep.subr.bf16.mxu0 0
    %3442 = vmatpush1.bf16.msra.mxu0 %v2440
    %3443 = vmatprep.subr.bf16.mxu0 0
    %3444 = vmatpush1.bf16.msra.mxu0 %v2441
    %3445 = vmatprep.subr.bf16.mxu0 0
    %3446 = vmatpush1.bf16.msra.mxu0 %v2442
    %3447 = vmatprep.subr.bf16.mxu0 0
    %3448 = vmatpush1.bf16.msra.mxu0 %v2443
    %3449 = vmatprep.subr.bf16.mxu0 0
    %3450 = vmatpush1.bf16.msra.mxu0 %v2444
    %3451 = vmatprep.subr.bf16.mxu0 0
    %3452 = vmatpush1.bf16.msra.mxu0 %v2445
    %3453 = vmatprep.subr.bf16.mxu0 0
    %3454 = vmatpush1.bf16.msra.mxu0 %v2446
    %3455 = vmatprep.subr.bf16.mxu0 0
    %3456 = vmatpush1.bf16.msra.mxu0 %v2447
    %3457 = vmatprep.mubr.bf16.mxu0 %v853
    %3458 = vmatmul.mubr.bf16.gmra.mrb[0].mxu0 %v851
    %v3459 = vpop.f32.mrb[0].mxu0
    %v3460 = vadd.f32 %v3420, %v3459
    %v3461 = vpop.f32.mrb[0].mxu0
    %v3462 = vpop.f32.mrb[0].mxu0
    %v3463 = vpop.f32.mrb[0].mxu0
    %3464 = vdwg.mxu0
    %3465 = vmatprep.subr.bf16.mxu0 0
    %3466 = vmatpush1.bf16.msra.mxu0 %v2448
    %3467 = vmatprep.subr.bf16.mxu0 0
    %3468 = vmatpush1.bf16.msra.mxu0 %v2449
    %3469 = vmatprep.subr.bf16.mxu0 0
    %3470 = vmatpush1.bf16.msra.mxu0 %v2450
    %3471 = vmatprep.subr.bf16.mxu0 0
    %3472 = vmatpush1.bf16.msra.mxu0 %v2451
    %3473 = vmatprep.subr.bf16.mxu0 0
    %3474 = vmatpush1.bf16.msra.mxu0 %v2452
    %3475 = vmatprep.subr.bf16.mxu0 0
    %3476 = vmatpush1.bf16.msra.mxu0 %v2453
    %3477 = vmatprep.subr.bf16.mxu0 0
    %3478 = vmatpush1.bf16.msra.mxu0 %v2454
    %3479 = vmatprep.subr.bf16.mxu0 0
    %3480 = vmatpush1.bf16.msra.mxu0 %v2455
    %3481 = vmatprep.subr.bf16.mxu0 0
    %3482 = vmatpush1.bf16.msra.mxu0 %v2456
    %3483 = vmatprep.subr.bf16.mxu0 0
    %3484 = vmatpush1.bf16.msra.mxu0 %v2457
    %3485 = vmatprep.subr.bf16.mxu0 0
    %3486 = vmatpush1.bf16.msra.mxu0 %v2458
    %3487 = vmatprep.subr.bf16.mxu0 0
    %3488 = vmatpush1.bf16.msra.mxu0 %v2459
    %3489 = vmatprep.subr.bf16.mxu0 0
    %3490 = vmatpush1.bf16.msra.mxu0 %v2460
    %3491 = vmatprep.subr.bf16.mxu0 0
    %3492 = vmatpush1.bf16.msra.mxu0 %v2461
    %3493 = vmatprep.subr.bf16.mxu0 0
    %3494 = vmatpush1.bf16.msra.mxu0 %v2462
    %3495 = vmatprep.subr.bf16.mxu0 0
    %3496 = vmatpush1.bf16.msra.mxu0 %v2463
    %3497 = vmatprep.mubr.bf16.mxu0 %v891
    %3498 = vmatmul.mubr.bf16.gmra.mrb[0].mxu0 %v877
    %v3499 = vpop.f32.mrb[0].mxu0
    %v3500 = vadd.f32 %v3460, %v3499
    %v3501 = vpop.f32.mrb[0].mxu0
    %v3502 = vpop.f32.mrb[0].mxu0
    %v3503 = vpop.f32.mrb[0].mxu0
    %3504 = vdwg.mxu0
    %3505 = vmatprep.subr.bf16.mxu0 0
    %3506 = vmatpush1.bf16.msra.mxu0 %v2464
    %3507 = vmatprep.subr.bf16.mxu0 0
    %3508 = vmatpush1.bf16.msra.mxu0 %v2465
    %3509 = vmatprep.subr.bf16.mxu0 0
    %3510 = vmatpush1.bf16.msra.mxu0 %v2466
    %3511 = vmatprep.subr.bf16.mxu0 0
    %3512 = vmatpush1.bf16.msra.mxu0 %v2467
    %3513 = vmatprep.subr.bf16.mxu0 0
    %3514 = vmatpush1.bf16.msra.mxu0 %v2468
    %3515 = vmatprep.subr.bf16.mxu0 0
    %3516 = vmatpush1.bf16.msra.mxu0 %v2469
    %3517 = vmatprep.subr.bf16.mxu0 0
    %3518 = vmatpush1.bf16.msra.mxu0 %v2470
    %3519 = vmatprep.subr.bf16.mxu0 0
    %3520 = vmatpush1.bf16.msra.mxu0 %v2471
    %3521 = vmatprep.subr.bf16.mxu0 0
    %3522 = vmatpush1.bf16.msra.mxu0 %v2472
    %3523 = vmatprep.subr.bf16.mxu0 0
    %3524 = vmatpush1.bf16.msra.mxu0 %v2473
    %3525 = vmatprep.subr.bf16.mxu0 0
    %3526 = vmatpush1.bf16.msra.mxu0 %v2474
    %3527 = vmatprep.subr.bf16.mxu0 0
    %3528 = vmatpush1.bf16.msra.mxu0 %v2475
    %3529 = vmatprep.subr.bf16.mxu0 0
    %3530 = vmatpush1.bf16.msra.mxu0 %v2476
    %3531 = vmatprep.subr.bf16.mxu0 0
    %3532 = vmatpush1.bf16.msra.mxu0 %v2477
    %3533 = vmatprep.subr.bf16.mxu0 0
    %3534 = vmatpush1.bf16.msra.mxu0 %v2478
    %3535 = vmatprep.subr.bf16.mxu0 0
    %3536 = vmatpush1.bf16.msra.mxu0 %v2479
    %3537 = vmatprep.mubr.bf16.mxu0 %v901
    %3538 = vmatmul.mubr.bf16.gmra.mrb[0].mxu0 %v899
    %v3539 = vpop.f32.mrb[0].mxu0
    %v3540 = vadd.f32 %v3500, %v3539
    %v3541 = vpop.f32.mrb[0].mxu0
    %v3542 = vpop.f32.mrb[0].mxu0
    %v3543 = vpop.f32.mrb[0].mxu0
    %3544 = vdwg.mxu0
    %3545 = vmatprep.subr.bf16.mxu0 0
    %3546 = vmatpush1.bf16.msra.mxu0 %v2480
    %3547 = vmatprep.subr.bf16.mxu0 0
    %3548 = vmatpush1.bf16.msra.mxu0 %v2481
    %3549 = vmatprep.subr.bf16.mxu0 0
    %3550 = vmatpush1.bf16.msra.mxu0 %v2482
    %3551 = vmatprep.subr.bf16.mxu0 0
    %3552 = vmatpush1.bf16.msra.mxu0 %v2483
    %3553 = vmatprep.subr.bf16.mxu0 0
    %3554 = vmatpush1.bf16.msra.mxu0 %v2484
    %3555 = vmatprep.subr.bf16.mxu0 0
    %3556 = vmatpush1.bf16.msra.mxu0 %v2485
    %3557 = vmatprep.subr.bf16.mxu0 0
    %3558 = vmatpush1.bf16.msra.mxu0 %v2486
    %3559 = vmatprep.subr.bf16.mxu0 0
    %3560 = vmatpush1.bf16.msra.mxu0 %v2487
    %3561 = vmatprep.subr.bf16.mxu0 0
    %3562 = vmatpush1.bf16.msra.mxu0 %v2488
    %3563 = vmatprep.subr.bf16.mxu0 0
    %3564 = vmatpush1.bf16.msra.mxu0 %v2489
    %3565 = vmatprep.subr.bf16.mxu0 0
    %3566 = vmatpush1.bf16.msra.mxu0 %v2490
    %3567 = vmatprep.subr.bf16.mxu0 0
    %3568 = vmatpush1.bf16.msra.mxu0 %v2491
    %3569 = vmatprep.subr.bf16.mxu0 0
    %3570 = vmatpush1.bf16.msra.mxu0 %v2492
    %3571 = vmatprep.subr.bf16.mxu0 0
    %3572 = vmatpush1.bf16.msra.mxu0 %v2493
    %3573 = vmatprep.subr.bf16.mxu0 0
    %3574 = vmatpush1.bf16.msra.mxu0 %v2494
    %3575 = vmatprep.subr.bf16.mxu0 0
    %3576 = vmatpush1.bf16.msra.mxu0 %v2495
    %3577 = vmatprep.mubr.bf16.mxu0 %v898
    %3578 = vmatmul.mubr.bf16.gmra.mrb[0].mxu0 %v884
    %v3579 = vpop.f32.mrb[0].mxu0
    %v3580 = vadd.f32 %v3540, %v3579
    %v3581 = vpop.f32.mrb[0].mxu0
    %v3582 = vpop.f32.mrb[0].mxu0
    %v3583 = vpop.f32.mrb[0].mxu0
    %3584 = vdwg.mxu0
    %3585 = vmatprep.subr.bf16.mxu0 0
    %3586 = vmatpush1.bf16.msra.mxu0 %v2496
    %3587 = vmatprep.subr.bf16.mxu0 0
    %3588 = vmatpush1.bf16.msra.mxu0 %v2497
    %3589 = vmatprep.subr.bf16.mxu0 0
    %3590 = vmatpush1.bf16.msra.mxu0 %v2498
    %3591 = vmatprep.subr.bf16.mxu0 0
    %3592 = vmatpush1.bf16.msra.mxu0 %v2499
    %3593 = vmatprep.subr.bf16.mxu0 0
    %3594 = vmatpush1.bf16.msra.mxu0 %v2500
    %3595 = vmatprep.subr.bf16.mxu0 0
    %3596 = vmatpush1.bf16.msra.mxu0 %v2501
    %3597 = vmatprep.subr.bf16.mxu0 0
    %3598 = vmatpush1.bf16.msra.mxu0 %v2502
    %3599 = vmatprep.subr.bf16.mxu0 0
    %3600 = vmatpush1.bf16.msra.mxu0 %v2503
    %3601 = vmatprep.subr.bf16.mxu0 0
    %3602 = vmatpush1.bf16.msra.mxu0 %v2823
    %3603 = vmatprep.subr.bf16.mxu0 0
    %3604 = vmatpush1.bf16.msra.mxu0 0
    %3605 = vmatprep.subr.bf16.mxu0 0
    %3606 = vmatpush1.bf16.msra.mxu0 0
    %3607 = vmatprep.subr.bf16.mxu0 0
    %3608 = vmatpush1.bf16.msra.mxu0 0
    %3609 = vmatprep.subr.bf16.mxu0 0
    %3610 = vmatpush1.bf16.msra.mxu0 0
    %3611 = vmatprep.subr.bf16.mxu0 0
    %3612 = vmatpush1.bf16.msra.mxu0 0
    %3613 = vmatprep.subr.bf16.mxu0 0
    %3614 = vmatpush1.bf16.msra.mxu0 0
    %3615 = vmatprep.subr.bf16.mxu0 0
    %3616 = vmatpush1.bf16.msra.mxu0 0
    %3617 = vmatprep.mubr.bf16.mxu0 %v2819
    %3618 = vmatmul.mubr.bf16.gmra.mrb[0].mxu0 %v900
    %v3619 = vpop.f32.mrb[0].mxu0
    %v3620 = vadd.f32 %v3580, %v3619
    %v3621 = vpop.f32.mrb[0].mxu0
    %v3622 = vpop.f32.mrb[0].mxu0
    %v3623 = vpop.f32.mrb[0].mxu0
    %3624 = vdwg.mxu0
    %vm3625 = vcmask 33792
    %3626 = vst.msk [vmem:[#allocation2] sm:$0x3] %vm3625, %v3620
    // Predicated region
    $region14: #{fnet_forward.5} parent=1 // pred_check
      _
    $region15: #{fnet_forward.5} parent=1 // pred_check_branch
      %3628 = sbr.rel (0) target = $region17
    $region16: #{fnet_forward.5} parent=1 // pred_region
      %s3630 = ssub.s32 32, 32
      %3631 = vsyncadd [#allocation3], %s3630
      %s3633 = sshll.u32 [#allocation2], 4
      %s3634 = int_to_ptr.vmem [resolvable:$true] %s3633
      %3636 = dma.vmem_to_hbm [thread:$0]  %s3634, 32, %s3, [#allocation3]
    $region17: #{fnet_forward.5} parent=1 // pred_fallthru
      _
    // Predicated region
    $region18: #{fnet_forward.5} parent=1 // pred_check
      _
    $region19: #{fnet_forward.5} parent=1 // pred_check_branch
      %3638 = sbr.rel (0) target = $region21
    $region20: #{fnet_forward.5} parent=1 // pred_region
      %3639 = dma.done [#allocation3], 32
    $region21: #{fnet_forward.5} parent=1 // pred_fallthru
      _
    %3640 = vsyncpa [#allocation3], 1

</llo_original>
